<compile_context>
chip_gen: v5e
topology: v5e:2x2
jax: 0.10.0
libtpu: 0.0.40
codegen_flags: <defaults>
</compile_context>

<pallas_src>
import functools
import re

import jax
import jax.numpy as jnp
import numpy as np
from jax.experimental import pallas as pl
from jax.experimental.pallas import tpu as pltpu


def _tpu_generation():
    """Best-effort TPU generation sniff (5 -> v5e/v5p, 6 -> v6e, 7 -> v7x); 0 if unknown."""
    try:
        kind = jax.devices()[0].device_kind.lower()
    except Exception:
        return 0
    m = re.search(r"(\d+)", kind)
    return int(m.group(1)) if m else 0


def _pick_tile(n, cap):
    """Largest multiple of 128 that divides n and is <= cap (n must be a multiple of 128)."""
    if n <= cap:
        return n
    best = 128
    for t in range(256, cap + 1, 128):
        if n % t == 0:
            best = t
    return best


def _flash_attn_kernel(q_ref, k_ref, v_ref, o_ref, m_sc, l_sc, acc_sc, *, heads, exp_dtype):
    """Online-softmax attention over one (batch, query-tile) with streamed, lane-dense KV tiles.

    q_ref  : (1, heads, tq, dh)   bf16  (softmax scale pre-folded into the q projection)
    k_ref  : (1, heads, dh, tk)   bf16  lane-dense (tk on lanes)
    v_ref  : (1, heads, dh, tk)   bf16  lane-dense
    o_ref  : (1, tq, heads*dh)    bf16  lane-dense output, written on the last kv step
    m_sc   : (heads, tq, 1)       f32   running row max
    l_sc   : (heads, tq, 1)       f32   running row sum
    acc_sc : (heads, tq, dh)      f32   unnormalized output accumulator
    """
    ki = pl.program_id(2)

    @pl.when(ki == 0)
    def _():
        m_sc[...] = jnp.full_like(m_sc, -jnp.inf)
        l_sc[...] = jnp.zeros_like(l_sc)
        acc_sc[...] = jnp.zeros_like(acc_sc)

    q = q_ref[0]                                                      # (h, tq, dh) bf16
    k = k_ref[0]                                                      # (h, dh, tk) bf16
    v = v_ref[0]                                                      # (h, dh, tk) bf16

    # Standard (M,K)x(K,N) batched matmul: q's contraction dim on lanes, k's on sublanes.
    s = jnp.einsum('hqd,hdk->hqk', q, k,
                   preferred_element_type=jnp.float32)                # (h, tq, tk) f32

    m_prev = m_sc[...]                                                # (h, tq, 1)
    m_new = jnp.maximum(m_prev, jnp.max(s, axis=-1, keepdims=True))
    alpha = jnp.exp(m_prev - m_new)                                   # f32 rescale factor

    # exp in bf16 on v6e/v7x (2x EUP throughput); f32 elsewhere. Row-sum accumulates in f32.
    p = jnp.exp((s - m_new).astype(exp_dtype))                        # (h, tq, tk)
    l_sc[...] = alpha * l_sc[...] + jnp.sum(p.astype(jnp.float32), axis=-1, keepdims=True)

    # p @ v^T with the contraction on the last dims of both operands (no explicit transpose).
    pv = jnp.einsum('hqk,hdk->hqd', p.astype(jnp.bfloat16), v,
                    preferred_element_type=jnp.float32)               # (h, tq, dh) f32
    acc_sc[...] = alpha * acc_sc[...] + pv
    m_sc[...] = m_new

    @pl.when(ki == pl.num_programs(2) - 1)
    def _():
        # Deferred normalization: EUP reciprocal on (h, tq, 1) instead of dividing p.
        out = acc_sc[...] * pl.reciprocal(l_sc[...], approx=True)     # (h, tq, dh) f32
        # Concatenate heads along lanes once -> full-lane (tq, heads*dh=128) bf16 store.
        o_ref[0] = jnp.concatenate(
            [out[h] for h in range(heads)], axis=-1).astype(o_ref.dtype)


def _flash_attention(q, k, v, *, q_tile, kv_tile, exp_dtype, vmem_limit_bytes):
    """q: (B, heads, N, dh) bf16; k, v: (B, heads, dh, N) bf16. Returns (B, N, heads*dh) bf16."""
    B, heads, N, dh = q.shape
    hidden = heads * dh
    grid = (B, N // q_tile, N // kv_tile)

    kernel = functools.partial(_flash_attn_kernel, heads=heads, exp_dtype=exp_dtype)

    cost = pl.CostEstimate(
        flops=int(4 * B * heads * N * N * dh),
        transcendentals=int(B * heads * N * N),
        bytes_accessed=int(2 * (q.size + (N // q_tile) * (k.size + v.size) + B * N * hidden)),
    )

    return pl.pallas_call(
        kernel,
        out_shape=jax.ShapeDtypeStruct((B, N, hidden), jnp.bfloat16),
        grid_spec=pltpu.PrefetchScalarGridSpec(
            num_scalar_prefetch=0,
            grid=grid,
            in_specs=[
                # q block resident per (b, qi); dh stays minor for the (M,K)x(K,N) QK matmul.
                pl.BlockSpec((1, heads, q_tile, dh), lambda b, qi, ki: (b, 0, qi, 0)),
                # k/v streamed lane-dense: kv_tile (multiple of 128) is the minor dim.
                pl.BlockSpec((1, heads, dh, kv_tile), lambda b, qi, ki: (b, 0, 0, ki)),
                pl.BlockSpec((1, heads, dh, kv_tile), lambda b, qi, ki: (b, 0, 0, ki)),
            ],
            out_specs=pl.BlockSpec((1, q_tile, hidden), lambda b, qi, ki: (b, qi, 0)),
            scratch_shapes=[
                pltpu.VMEM((heads, q_tile, 1), jnp.float32),          # running max
                pltpu.VMEM((heads, q_tile, 1), jnp.float32),          # running sum
                pltpu.VMEM((heads, q_tile, dh), jnp.float32),         # output accumulator
            ],
        ),
        compiler_params=pltpu.CompilerParams(
            dimension_semantics=("parallel", "parallel", "arbitrary"),
            vmem_limit_bytes=vmem_limit_bytes,
        ),
        cost_estimate=cost,
    )(q, k, v)


def _attention_xla(q, k, v):
    """Small-N fallback. q: (B,h,N,dh) bf16 (scale folded); k, v: (B,h,dh,N) bf16."""
    qf, kf, vf = (t.astype(jnp.float32) for t in (q, k, v))
    s = jnp.einsum('bhqd,bhdk->bhqk', qf, kf)
    p = jax.nn.softmax(s, axis=-1)
    o = jnp.einsum('bhqk,bhdk->bhqd', p, vf)                           # (B, h, N, dh)
    B, h, N, dh = o.shape
    return jnp.transpose(o, (0, 2, 1, 3)).reshape(B, N, h * dh)


def attention3d_pallas(x, w_qkv, w_out, b_out, *, heads=4, dim_head=32,
                       q_tile_cap=None, kv_tile_cap=None, min_pallas_seq=256):
    """x: (B, C, H, W, D) f32; conv weights in PyTorch Conv3d layout."""
    B, C, H, W, D = x.shape
    N = H * W * D
    hidden = heads * dim_head
    scale = float(dim_head) ** -0.5
    hp = jax.lax.Precision.HIGHEST

    gen = _tpu_generation()
    exp_dtype = jnp.bfloat16 if gen >= 6 else jnp.float32              # f32 exp on v5e/older
    if gen in (4, 5, 6):                                               # 128 MiB VMEM chips
        vmem_limit = 100 * 1024 * 1024
        kv_cap_default = 2048
    else:                                                              # v7x (64 MiB) / unknown
        vmem_limit = 48 * 1024 * 1024
        kv_cap_default = 1024
    q_cap = max(128, q_tile_cap) if q_tile_cap else 512
    kv_cap = max(128, kv_tile_cap) if kv_tile_cap else kv_cap_default

    # ---- fused qkv projection (1x1x1 Conv3d, K = C) straight into kernel layouts -----------
    x_flat = x.reshape(B, C, N).astype(jnp.float32)                    # (B, C, N), N on lanes
    w = w_qkv.reshape(3 * hidden, C).astype(jnp.float32)
    wq = (w[:hidden] * scale).reshape(heads, dim_head, C)              # fold softmax scale
    wk = w[hidden:2 * hidden].reshape(heads, dim_head, C)
    wv = w[2 * hidden:].reshape(heads, dim_head, C)
    q = jnp.einsum('hdc,bcn->bhnd', wq, x_flat, precision=hp).astype(jnp.bfloat16)
    k = jnp.einsum('hdc,bcn->bhdn', wk, x_flat, precision=hp).astype(jnp.bfloat16)
    v = jnp.einsum('hdc,bcn->bhdn', wv, x_flat, precision=hp).astype(jnp.bfloat16)

    if N % 128 == 0 and N >= min_pallas_seq:
        tq = _pick_tile(N, q_cap)
        while B * (N // tq) < 2 and tq >= 256:   # keep >= 2 parallel programs for v7x dual-TC
            tq //= 2
        tk = _pick_tile(N, kv_cap)
        out_flat = _flash_attention(q, k, v, q_tile=tq, kv_tile=tk,
                                    exp_dtype=exp_dtype, vmem_limit_bytes=vmem_limit)
    else:
        # TODO(synk): pad N up to a multiple of 128 and mask padded keys instead of falling back.
        out_flat = _attention_xla(q, k, v)

    # ---- output projection (1x1x1 Conv3d with bias) in XLA ---------------------------------
    wo = w_out.reshape(C, hidden).astype(jnp.float32)
    y = jnp.einsum('ch,bnh->bcn', wo, out_flat.astype(jnp.float32), precision=hp)
    y = y + b_out.reshape(1, C, 1).astype(jnp.float32)
    return y.reshape(B, C, H, W, D)


def attention3d_ref(x, w_qkv, w_out, b_out, *, heads=4, dim_head=32):
    """Pure-JAX f32 reference of the canonical 3-D attention (for the correctness check)."""
    B, C, H, W, D = x.shape
    hidden = heads * dim_head
    N = H * W * D
    scale = float(dim_head) ** -0.5
    hp = jax.lax.Precision.HIGHEST

    wq = w_qkv.reshape(3 * hidden, C)
    qkv = jnp.einsum('bchwd,oc->bohwd', x, wq, precision=hp)
    q, k, v = jnp.split(qkv, 3, axis=1)
    q = q.reshape(B, heads, dim_head, N) * scale
    k = k.reshape(B, heads, dim_head, N)
    v = v.reshape(B, heads, dim_head, N)
    sim = jnp.einsum('bhdi,bhdj->bhij', q, k, precision=hp)
    sim = sim - jnp.max(sim, axis=-1, keepdims=True)
    attn = jax.nn.softmax(sim, axis=-1)
    out = jnp.einsum('bhij,bhdj->bhid', attn, v, precision=hp)         # (B, heads, N, dh)
    out = jnp.transpose(out, (0, 1, 3, 2)).reshape(B, hidden, H, W, D)
    wo = w_out.reshape(C, hidden)
    y = jnp.einsum('bchwd,oc->bohwd', out, wo, precision=hp) + b_out.reshape(1, C, 1, 1, 1)
    return y


if __name__ == "__main__":
    B, C = 2, 4
    HEADS, DIM_HEAD = 4, 32
    HIDDEN = HEADS * DIM_HEAD

    key = jax.random.PRNGKey(0)
    kx, kq, ko, kb = jax.random.split(key, 4)

    # Conv3d weights in PyTorch layout (out_ch, in_ch, 1, 1, 1); deterministic init.
    w_qkv = 0.05 * jax.random.normal(kq, (3 * HIDDEN, C, 1, 1, 1), dtype=jnp.float32)
    w_out = 0.05 * jax.random.normal(ko, (C, HIDDEN, 1, 1, 1), dtype=jnp.float32)
    b_out = 0.01 * jax.random.normal(kb, (C,), dtype=jnp.float32)

    # Spatial 8x8x8 -> N = 512 (multiple of 128) so the Pallas flash path is exercised.
    x = jax.random.normal(kx, (B, C, 8, 8, 8), dtype=jnp.float32)
    y_ref = attention3d_ref(x, w_qkv, w_out, b_out, heads=HEADS, dim_head=DIM_HEAD)

    # (a) Pallas path with forced small tiles -> multi-step online-softmax pipeline.
    y = attention3d_pallas(x, w_qkv, w_out, b_out, heads=HEADS, dim_head=DIM_HEAD,
                           q_tile_cap=256, kv_tile_cap=128)
    y = jax.block_until_ready(y)
    np.testing.assert_allclose(np.asarray(y), np.asarray(y_ref), rtol=2e-2, atol=2e-3)

    # (b) Pallas path with auto (large) tiles.
    y2 = attention3d_pallas(x, w_qkv, w_out, b_out, heads=HEADS, dim_head=DIM_HEAD)
    y2 = jax.block_until_ready(y2)
    np.testing.assert_allclose(np.asarray(y2), np.asarray(y_ref), rtol=2e-2, atol=2e-3)

    # (c) Tiny N (4x4x4 = 64) -> small-N XLA fallback path.
    x_small = jax.random.normal(kx, (B, C, 4, 4, 4), dtype=jnp.float32)
    y3 = attention3d_pallas(x_small, w_qkv, w_out, b_out, heads=HEADS, dim_head=DIM_HEAD)
    y3 = jax.block_until_ready(y3)
    y3_ref = attention3d_ref(x_small, w_qkv, w_out, b_out, heads=HEADS, dim_head=DIM_HEAD)
    np.testing.assert_allclose(np.asarray(y3), np.asarray(y3_ref), rtol=2e-2, atol=2e-3)

    print("KERNEL_OK")
</pallas_src>

<mosaic_0001>
module attributes {stable_mosaic.version = 11 : i64} {
  func.func @_flash_attn_kernel(%arg0: i32, %arg1: i32, %arg2: i32, %arg3: memref<1x4x256x32xbf16, #tpu.memory_space<vmem>>, %arg4: memref<1x4x32x128xbf16, #tpu.memory_space<vmem>>, %arg5: memref<1x4x32x128xbf16, #tpu.memory_space<vmem>>, %arg6: memref<1x256x128xbf16, #tpu.memory_space<vmem>>, %arg7: memref<4x256x1xf32, #tpu.memory_space<vmem>>, %arg8: memref<4x256x1xf32, #tpu.memory_space<vmem>>, %arg9: memref<4x256x32xf32, #tpu.memory_space<vmem>>) attributes {dimension_semantics = [#tpu.dimension_semantics<parallel>, #tpu.dimension_semantics<parallel>, #tpu.dimension_semantics<arbitrary>], iteration_bounds = array<i64: 2, 2, 4>, scalar_prefetch = 0 : i64, scratch_operands = 3 : i64, tpu.core_type = #tpu.core_type<tc>, window_params = [{transform_indices = @transform_0, window_bounds = array<i64: 1, 4, 256, 32>}, {transform_indices = @transform_1, window_bounds = array<i64: 1, 4, 32, 128>}, {transform_indices = @transform_2, window_bounds = array<i64: 1, 4, 32, 128>}, {transform_indices = @transform_3, window_bounds = array<i64: 1, 256, 128>}]} {
    %c0_i32 = arith.constant 0 : i32
    %0 = arith.cmpi eq, %arg2, %c0_i32 : i32
    %1 = arith.extui %0 : i1 to i32
    %c0_i32_0 = arith.constant 0 : i32
    %2 = arith.cmpi ne, %1, %c0_i32_0 : i32
    scf.if %2 {
      %cst_34 = arith.constant 0xFF800000 : f32
      %36 = vector.broadcast %cst_34 : f32 to vector<4x256x1xf32>
      %c0_35 = arith.constant 0 : index
      %c0_36 = arith.constant 0 : index
      %c0_37 = arith.constant 0 : index
      %37 = vector.load %arg7[%c0_35, %c0_36, %c0_37] : memref<4x256x1xf32, #tpu.memory_space<vmem>>, vector<4x256x1xf32>
      tpu.vector_store %arg7[%c0_35, %c0_36, %c0_37], %36 {strides = array<i32>} : memref<4x256x1xf32, #tpu.memory_space<vmem>>, vector<4x256x1xf32>,
      %cst_38 = arith.constant 0.000000e+00 : f32
      %38 = vector.broadcast %cst_38 : f32 to vector<4x256x1xf32>
      %c0_39 = arith.constant 0 : index
      %c0_40 = arith.constant 0 : index
      %c0_41 = arith.constant 0 : index
      %39 = vector.load %arg8[%c0_39, %c0_40, %c0_41] : memref<4x256x1xf32, #tpu.memory_space<vmem>>, vector<4x256x1xf32>
      tpu.vector_store %arg8[%c0_39, %c0_40, %c0_41], %38 {strides = array<i32>} : memref<4x256x1xf32, #tpu.memory_space<vmem>>, vector<4x256x1xf32>,
      %cst_42 = arith.constant 0.000000e+00 : f32
      %40 = vector.broadcast %cst_42 : f32 to vector<4x256x32xf32>
      %c0_43 = arith.constant 0 : index
      %c0_44 = arith.constant 0 : index
      %c0_45 = arith.constant 0 : index
      %41 = vector.load %arg9[%c0_43, %c0_44, %c0_45] : memref<4x256x32xf32, #tpu.memory_space<vmem>>, vector<4x256x32xf32>
      tpu.vector_store %arg9[%c0_43, %c0_44, %c0_45], %40 {strides = array<i32>} : memref<4x256x32xf32, #tpu.memory_space<vmem>>, vector<4x256x32xf32>,
    } else {
    }
    %c0 = arith.constant 0 : index
    %c0_1 = arith.constant 0 : index
    %c0_2 = arith.constant 0 : index
    %c0_3 = arith.constant 0 : index
    %3 = vector.load %arg3[%c0, %c0_1, %c0_2, %c0_3] : memref<1x4x256x32xbf16, #tpu.memory_space<vmem>>, vector<1x4x256x32xbf16>
    %4 = vector.shape_cast %3 : vector<1x4x256x32xbf16> to vector<4x256x32xbf16>
    %c0_4 = arith.constant 0 : index
    %c0_5 = arith.constant 0 : index
    %c0_6 = arith.constant 0 : index
    %c0_7 = arith.constant 0 : index
    %5 = vector.load %arg4[%c0_4, %c0_5, %c0_6, %c0_7] : memref<1x4x32x128xbf16, #tpu.memory_space<vmem>>, vector<1x4x32x128xbf16>
    %6 = vector.shape_cast %5 : vector<1x4x32x128xbf16> to vector<4x32x128xbf16>
    %c0_8 = arith.constant 0 : index
    %c0_9 = arith.constant 0 : index
    %c0_10 = arith.constant 0 : index
    %c0_11 = arith.constant 0 : index
    %7 = vector.load %arg5[%c0_8, %c0_9, %c0_10, %c0_11] : memref<1x4x32x128xbf16, #tpu.memory_space<vmem>>, vector<1x4x32x128xbf16>
    %8 = vector.shape_cast %7 : vector<1x4x32x128xbf16> to vector<4x32x128xbf16>
    "tpu.trace_start"() <{level = 10 : i32, message = "hqd,hdk->hqk"}> : () -> ()
    %cst = arith.constant dense<0.000000e+00> : vector<4x256x128xf32>
    %9 = tpu.matmul %4, %6, %cst {dimension_numbers = #tpu.dot_dimension_numbers<[2], [1], [1], [2], [0, 0, 0, 1, 1, 2], [0], [0]>} : vector<4x256x32xbf16>, vector<4x32x128xbf16>, vector<4x256x128xf32> -> vector<4x256x128xf32>
    "tpu.trace_stop"() : () -> ()
    %c0_12 = arith.constant 0 : index
    %c0_13 = arith.constant 0 : index
    %c0_14 = arith.constant 0 : index
    %10 = vector.load %arg7[%c0_12, %c0_13, %c0_14] : memref<4x256x1xf32, #tpu.memory_space<vmem>>, vector<4x256x1xf32>
    %cst_15 = arith.constant dense<0xFF800000> : vector<4x256xf32>
    %11 = vector.multi_reduction <maximumf>, %9, %cst_15 [2] : vector<4x256x128xf32> to vector<4x256xf32>
    %12 = vector.shape_cast %11 : vector<4x256xf32> to vector<4x256x1xf32>
    %13 = arith.maximumf %10, %12 : vector<4x256x1xf32>
    %14 = arith.subf %10, %13 : vector<4x256x1xf32>
    %15 = math.exp %14 : vector<4x256x1xf32>
    %16 = vector.broadcast %13 : vector<4x256x1xf32> to vector<4x256x128xf32>
    %17 = arith.subf %9, %16 : vector<4x256x128xf32>
    %18 = math.exp %17 : vector<4x256x128xf32>
    %c0_16 = arith.constant 0 : index
    %c0_17 = arith.constant 0 : index
    %c0_18 = arith.constant 0 : index
    %19 = vector.load %arg8[%c0_16, %c0_17, %c0_18] : memref<4x256x1xf32, #tpu.memory_space<vmem>>, vector<4x256x1xf32>
    %20 = arith.mulf %15, %19 : vector<4x256x1xf32>
    %cst_19 = arith.constant dense<0.000000e+00> : vector<4x256xf32>
    %21 = vector.multi_reduction <add>, %18, %cst_19 [2] : vector<4x256x128xf32> to vector<4x256xf32>
    %22 = vector.shape_cast %21 : vector<4x256xf32> to vector<4x256x1xf32>
    %23 = arith.addf %20, %22 : vector<4x256x1xf32>
    %c0_20 = arith.constant 0 : index
    %c0_21 = arith.constant 0 : index
    %c0_22 = arith.constant 0 : index
    %24 = vector.load %arg8[%c0_20, %c0_21, %c0_22] : memref<4x256x1xf32, #tpu.memory_space<vmem>>, vector<4x256x1xf32>
    tpu.vector_store %arg8[%c0_20, %c0_21, %c0_22], %23 {strides = array<i32>} : memref<4x256x1xf32, #tpu.memory_space<vmem>>, vector<4x256x1xf32>,
    %25 = arith.truncf %18 : vector<4x256x128xf32> to vector<4x256x128xbf16>
    "tpu.trace_start"() <{level = 10 : i32, message = "hqk,hdk->hqd"}> : () -> ()
    %cst_23 = arith.constant dense<0.000000e+00> : vector<4x256x32xf32>
    %26 = tpu.matmul %25, %8, %cst_23 {dimension_numbers = #tpu.dot_dimension_numbers<[2], [2], [1], [1], [0, 0, 0, 1, 1, 1], [0], [0]>} : vector<4x256x128xbf16>, vector<4x32x128xbf16>, vector<4x256x32xf32> -> vector<4x256x32xf32>
    "tpu.trace_stop"() : () -> ()
    %c0_24 = arith.constant 0 : index
    %c0_25 = arith.constant 0 : index
    %c0_26 = arith.constant 0 : index
    %27 = vector.load %arg9[%c0_24, %c0_25, %c0_26] : memref<4x256x32xf32, #tpu.memory_space<vmem>>, vector<4x256x32xf32>
    %28 = vector.broadcast %15 : vector<4x256x1xf32> to vector<4x256x32xf32>
    %29 = arith.mulf %28, %27 : vector<4x256x32xf32>
    %30 = arith.addf %29, %26 : vector<4x256x32xf32>
    %c0_27 = arith.constant 0 : index
    %c0_28 = arith.constant 0 : index
    %c0_29 = arith.constant 0 : index
    %31 = vector.load %arg9[%c0_27, %c0_28, %c0_29] : memref<4x256x32xf32, #tpu.memory_space<vmem>>, vector<4x256x32xf32>
    tpu.vector_store %arg9[%c0_27, %c0_28, %c0_29], %30 {strides = array<i32>} : memref<4x256x32xf32, #tpu.memory_space<vmem>>, vector<4x256x32xf32>,
    %c0_30 = arith.constant 0 : index
    %c0_31 = arith.constant 0 : index
    %c0_32 = arith.constant 0 : index
    %32 = vector.load %arg7[%c0_30, %c0_31, %c0_32] : memref<4x256x1xf32, #tpu.memory_space<vmem>>, vector<4x256x1xf32>
    tpu.vector_store %arg7[%c0_30, %c0_31, %c0_32], %13 {strides = array<i32>} : memref<4x256x1xf32, #tpu.memory_space<vmem>>, vector<4x256x1xf32>,
    %c3_i32 = arith.constant 3 : i32
    %33 = arith.cmpi eq, %arg2, %c3_i32 : i32
    %34 = arith.extui %33 : i1 to i32
    %c0_i32_33 = arith.constant 0 : i32
    %35 = arith.cmpi ne, %34, %c0_i32_33 : i32
    scf.if %35 {
      %c0_34 = arith.constant 0 : index
      %c0_35 = arith.constant 0 : index
      %c0_36 = arith.constant 0 : index
      %36 = vector.load %arg9[%c0_34, %c0_35, %c0_36] : memref<4x256x32xf32, #tpu.memory_space<vmem>>, vector<4x256x32xf32>
      %c0_37 = arith.constant 0 : index
      %c0_38 = arith.constant 0 : index
      %c0_39 = arith.constant 0 : index
      %37 = vector.load %arg8[%c0_37, %c0_38, %c0_39] : memref<4x256x1xf32, #tpu.memory_space<vmem>>, vector<4x256x1xf32>
      %38 = tpu.reciprocal %37 {approx = true} : vector<4x256x1xf32> -> vector<4x256x1xf32>
      %39 = vector.broadcast %38 : vector<4x256x1xf32> to vector<4x256x32xf32>
      %40 = arith.mulf %36, %39 : vector<4x256x32xf32>
      %41 = vector.extract_strided_slice %40 {offsets = [0, 0, 0], sizes = [1, 256, 32], strides = [1, 1, 1]} : vector<4x256x32xf32> to vector<1x256x32xf32>
      %42 = vector.shape_cast %41 : vector<1x256x32xf32> to vector<256x32xf32>
      %43 = vector.extract_strided_slice %40 {offsets = [1, 0, 0], sizes = [1, 256, 32], strides = [1, 1, 1]} : vector<4x256x32xf32> to vector<1x256x32xf32>
      %44 = vector.shape_cast %43 : vector<1x256x32xf32> to vector<256x32xf32>
      %45 = vector.extract_strided_slice %40 {offsets = [2, 0, 0], sizes = [1, 256, 32], strides = [1, 1, 1]} : vector<4x256x32xf32> to vector<1x256x32xf32>
      %46 = vector.shape_cast %45 : vector<1x256x32xf32> to vector<256x32xf32>
      %47 = vector.extract_strided_slice %40 {offsets = [3, 0, 0], sizes = [1, 256, 32], strides = [1, 1, 1]} : vector<4x256x32xf32> to vector<1x256x32xf32>
      %48 = vector.shape_cast %47 : vector<1x256x32xf32> to vector<256x32xf32>
      %49 = tpu.concatenate %42, %44, %46, %48 in 1 : vector<256x32xf32>, vector<256x32xf32>, vector<256x32xf32>, vector<256x32xf32> -> vector<256x128xf32>
      %50 = arith.truncf %49 : vector<256x128xf32> to vector<256x128xbf16>
      %c0_40 = arith.constant 0 : index
      %c0_41 = arith.constant 0 : index
      %c0_42 = arith.constant 0 : index
      %51 = vector.load %arg6[%c0_40, %c0_41, %c0_42] : memref<1x256x128xbf16, #tpu.memory_space<vmem>>, vector<1x256x128xbf16>
      %52 = vector.shape_cast %51 : vector<1x256x128xbf16> to vector<256x128xbf16>
      %53 = vector.shape_cast %50 : vector<256x128xbf16> to vector<1x256x128xbf16>
      tpu.vector_store %arg6[%c0_40, %c0_41, %c0_42], %53 {strides = array<i32>} : memref<1x256x128xbf16, #tpu.memory_space<vmem>>, vector<1x256x128xbf16>,
    } else {
    }
    return
  }
  func.func @transform_0(%arg0: i32, %arg1: i32, %arg2: i32) -> (i32, i32, i32, i32) {
    %c0_i32 = arith.constant 0 : i32
    %c0_i32_0 = arith.constant 0 : i32
    %c0_i32_1 = arith.constant 0 : i32
    return %arg0, %c0_i32, %arg1, %c0_i32_0 : i32, i32, i32, i32
  }
  func.func @transform_1(%arg0: i32, %arg1: i32, %arg2: i32) -> (i32, i32, i32, i32) {
    %c0_i32 = arith.constant 0 : i32
    %c0_i32_0 = arith.constant 0 : i32
    %c0_i32_1 = arith.constant 0 : i32
    return %arg0, %c0_i32, %c0_i32_0, %arg2 : i32, i32, i32, i32
  }
  func.func @transform_2(%arg0: i32, %arg1: i32, %arg2: i32) -> (i32, i32, i32, i32) {
    %c0_i32 = arith.constant 0 : i32
    %c0_i32_0 = arith.constant 0 : i32
    %c0_i32_1 = arith.constant 0 : i32
    return %arg0, %c0_i32, %c0_i32_0, %arg2 : i32, i32, i32, i32
  }
  func.func @transform_3(%arg0: i32, %arg1: i32, %arg2: i32) -> (i32, i32, i32) {
    %c0_i32 = arith.constant 0 : i32
    %c0_i32_0 = arith.constant 0 : i32
    return %arg0, %arg1, %c0_i32 : i32, i32, i32
  }
}

</mosaic_0001>

<llo_original>
// kernel: tpu_custom_call.1
$region0: #{tpu_custom_call.1}
  #allocation0 [shape = 'u32[]', space=smem, size = 0x4, offset = 0x4, fixed_abs, tag = 'smem constant byte address 0x4 - core index']
  #allocation1 [shape = 'u32[72,128]{1,0:T(1,128)}', space=vmem, size = 0x9000, scoped, tag = 'internal scratch']
  #allocation2 [shape = 'f32[4,256,1]{2,1,0:T(8,128)}', space=vmem, size = 0x80000, scoped, tag = 'scratch operand']
  #allocation3 [shape = 'f32[4,256,1]{2,1,0:T(8,128)}', space=vmem, size = 0x80000, scoped, tag = 'scratch operand']
  #allocation4 [shape = 'f32[4,256,32]{2,1,0:T(8,128)}', space=vmem, size = 0x80000, scoped, tag = 'scratch operand']
  %s0 = inlined_call_operand.vmem [shape: bf16[2,4,512,32], index: 0, kind: input, shape index: {}]
  %s1 = inlined_call_operand.vmem [shape: bf16[2,4,32,512], index: 1, kind: input, shape index: {}]
  %s2 = inlined_call_operand.vmem [shape: bf16[2,4,32,512], index: 2, kind: input, shape index: {}]
  %s3 = inlined_call_operand.hbm [shape: bf16[2,512,128], index: 3, kind: output, shape index: {}]
  %s4 = sld [smem:[#allocation0]]
  $region176: #{tpu_custom_call.1} parent=0
    _
  %s6 = ssub.s32 1, %s4
  %s7 = scalar_select 0, %s6, %s4
  $region1: #{tpu_custom_call.1} parent=0
    #allocation5 [shape = 'u8[524288]{0}', space=vmem, size = 0x80000, scoped, tag = 'input window, operand 0']
    #allocation6 [shape = 'u8[65536]{0}', space=vmem, size = 0x10000, scoped, tag = 'input window, operand 1']
    #allocation7 [shape = 'u8[65536]{0}', space=vmem, size = 0x10000, scoped, tag = 'input window, operand 2']
    #allocation8 [shape = 'u8[131072]{0}', space=vmem, size = 0x20000, scoped, tag = 'output window, operand 0']
    #allocation9 [shape = 's32[2]{0}', space=sflag, size = 0x8, scoped, tag = 'scoped memory for tpu_custom_call.1']
    %8 = vsyncpa [#allocation9], 0
    %s9 = scalar_lea.sflag [#allocation9], 1
    %10 = vsyncpa %s9, 0
    loop: start=0, step=1, limit=18
    $region2: #{tpu_custom_call.1} parent=1 // loop_pre_header
      _
    $region3: #{tpu_custom_call.1} parent=1 // loop_header
      %s12 = sphi 0, %s16
      %p13 = scmp.ge.s32.totalorder %s12, 18
      %s19 = sphi 0, %s38
      %s20 = sphi 0, %s34
      %s21 = sphi 0, %s30
      %s22 = sphi 0, %s19
      %s23 = sphi 0, %s20
      %s24 = sphi 0, %s21
      %s25 = sphi 0, %s22
      %s26 = sphi 0, %s23
      %s27 = sphi 0, %s24
      %s43 = sphi 0, %s45
      %s46 = sphi 0, %s43
      %s47 = sphi 0, %s46
      %s63 = sphi 0, %s47
      %s71 = sphi 0, %s73
      %s74 = sphi 0, %s71
      %s75 = sphi 0, %s74
      %s91 = sphi 0, %s75
      %s99 = sphi 0, %s101
      %s102 = sphi 0, %s99
      %s103 = sphi 0, %s102
      %s119 = sphi 0, %s103
      %s127 = sphi 0, %s129
      %s130 = sphi 0, %s127
      %s131 = sphi 0, %s130
      %s147 = sphi 0, %s131
    $region4: #{tpu_custom_call.1} parent=1 // loop_header_branch
      %15 = sbr.rel (%p13) target = $region8
    $region5: #{tpu_custom_call.1} parent=1 // loop_body
      %s17 = ssub.s32 %s12, 1
      %s18 = ssub.s32 %s12, 2
      %s28 = sadd.s32 1, %s21
      %p29 = scmp.ge.s32.totalorder %s28, 4
      %s30 = scalar_select %p29, 0, %s28
      %s31 = sadd.s32 1, %s20
      %s32 = scalar_select %p29, %s31, %s20
      %p33 = scmp.ge.s32.totalorder %s32, 2
      %s34 = scalar_select %p33, 0, %s32
      %s35 = sadd.s32 1, %s19
      %s36 = scalar_select %p33, %s35, %s19
      %p37 = scmp.ge.s32.totalorder %s36, 2
      %s38 = scalar_select %p37, 0, %s36
      %s39 = ssub.s32 %s19, %s38
      %s40 = ssub.s32 %s20, %s34
      %s41 = sor.u32 %s39, %s40
      %p42 = scmp.eq.s32.totalorder %s41, 0
      %s44 = sadd.s32 %s43, 1
      %s45 = scalar_select %p42, %s43, %s44
      %p48 = pneg %p42
      %p49 = scmp.eq.s32.totalorder %s12, 15
      %p50 = por %p48, %p49
      %p51 = scmp.ne.s32.totalorder %s43, %s46
      %p52 = scmp.eq.s32.totalorder %s12, 0
      %p53 = por %p51, %p52
      %p54 = scmp.ne.s32.totalorder %s43, %s46
      %p55 = scmp.eq.s32.totalorder %s17, 15
      %p56 = por %p54, %p55
      %p57 = scmp.ne.s32.totalorder %s46, %s47
      %p58 = scmp.eq.s32.totalorder %s17, 0
      %p59 = por %p57, %p58
      %p60 = scmp.ne.s32.totalorder %s46, %s47
      %p61 = scmp.eq.s32.totalorder %s18, 15
      %p62 = por %p60, %p61
      %p64 = scmp.ne.s32.totalorder %s47, %s63
      %p65 = scmp.eq.s32.totalorder %s18, 0
      %p66 = por %p64, %p65
      %s67 = ssub.s32 %s19, %s38
      %s68 = ssub.s32 %s21, %s30
      %s69 = sor.u32 %s67, %s68
      %p70 = scmp.eq.s32.totalorder %s69, 0
      %s72 = sadd.s32 %s71, 1
      %s73 = scalar_select %p70, %s71, %s72
      %p76 = pneg %p70
      %p77 = scmp.eq.s32.totalorder %s12, 15
      %p78 = por %p76, %p77
      %p79 = scmp.ne.s32.totalorder %s71, %s74
      %p80 = scmp.eq.s32.totalorder %s12, 0
      %p81 = por %p79, %p80
      %p82 = scmp.ne.s32.totalorder %s71, %s74
      %p83 = scmp.eq.s32.totalorder %s17, 15
      %p84 = por %p82, %p83
      %p85 = scmp.ne.s32.totalorder %s74, %s75
      %p86 = scmp.eq.s32.totalorder %s17, 0
      %p87 = por %p85, %p86
      %p88 = scmp.ne.s32.totalorder %s74, %s75
      %p89 = scmp.eq.s32.totalorder %s18, 15
      %p90 = por %p88, %p89
      %p92 = scmp.ne.s32.totalorder %s75, %s91
      %p93 = scmp.eq.s32.totalorder %s18, 0
      %p94 = por %p92, %p93
      %s95 = ssub.s32 %s19, %s38
      %s96 = ssub.s32 %s21, %s30
      %s97 = sor.u32 %s95, %s96
      %p98 = scmp.eq.s32.totalorder %s97, 0
      %s100 = sadd.s32 %s99, 1
      %s101 = scalar_select %p98, %s99, %s100
      %p104 = pneg %p98
      %p105 = scmp.eq.s32.totalorder %s12, 15
      %p106 = por %p104, %p105
      %p107 = scmp.ne.s32.totalorder %s99, %s102
      %p108 = scmp.eq.s32.totalorder %s12, 0
      %p109 = por %p107, %p108
      %p110 = scmp.ne.s32.totalorder %s99, %s102
      %p111 = scmp.eq.s32.totalorder %s17, 15
      %p112 = por %p110, %p111
      %p113 = scmp.ne.s32.totalorder %s102, %s103
      %p114 = scmp.eq.s32.totalorder %s17, 0
      %p115 = por %p113, %p114
      %p116 = scmp.ne.s32.totalorder %s102, %s103
      %p117 = scmp.eq.s32.totalorder %s18, 15
      %p118 = por %p116, %p117
      %p120 = scmp.ne.s32.totalorder %s103, %s119
      %p121 = scmp.eq.s32.totalorder %s18, 0
      %p122 = por %p120, %p121
      %s123 = ssub.s32 %s19, %s38
      %s124 = ssub.s32 %s20, %s34
      %s125 = sor.u32 %s123, %s124
      %p126 = scmp.eq.s32.totalorder %s125, 0
      %s128 = sadd.s32 %s127, 1
      %s129 = scalar_select %p126, %s127, %s128
      %p132 = pneg %p126
      %p133 = scmp.eq.s32.totalorder %s12, 15
      %p134 = por %p132, %p133
      %p135 = scmp.ne.s32.totalorder %s127, %s130
      %p136 = scmp.eq.s32.totalorder %s12, 0
      %p137 = por %p135, %p136
      %p138 = scmp.ne.s32.totalorder %s127, %s130
      %p139 = scmp.eq.s32.totalorder %s17, 15
      %p140 = por %p138, %p139
      %p141 = scmp.ne.s32.totalorder %s130, %s131
      %p142 = scmp.eq.s32.totalorder %s17, 0
      %p143 = por %p141, %p142
      %p144 = scmp.ne.s32.totalorder %s130, %s131
      %p145 = scmp.eq.s32.totalorder %s18, 15
      %p146 = por %p144, %p145
      %p148 = scmp.ne.s32.totalorder %s131, %s147
      %p149 = scmp.eq.s32.totalorder %s18, 0
      %p150 = por %p148, %p149
      %p151 = scmp.le.s32.totalorder 1, %s12
      %p152 = scmp.lt.s32.totalorder %s12, 17
      %p153 = pnand %p151, %p152
      %p154 = pneg %p153
      // Predicated region
      $region9: #{tpu_custom_call.1} parent=5 // pred_check
        _
      $region10: #{tpu_custom_call.1} parent=5 // pred_check_branch
        %156 = sbr.rel (%p153) target = $region12
      $region11: #{tpu_custom_call.1} parent=5 // pred_region
        %s157 = ssub.s32 %s12, 1
      $region12: #{tpu_custom_call.1} parent=5 // pred_fallthru
        _
      %p158 = scmp.lt.s32.totalorder %s12, 16
      // Predicated region
      $region13: #{tpu_custom_call.1} parent=5 // pred_check
        %p159 = pneg %p158
      $region14: #{tpu_custom_call.1} parent=5 // pred_check_branch
        %161 = sbr.rel (%p159) target = $region16
      $region15: #{tpu_custom_call.1} parent=5 // pred_region
        // Predicated region
        $region17: #{tpu_custom_call.1} parent=15 // pred_check
          %p162 = pneg %p53
        $region18: #{tpu_custom_call.1} parent=15 // pred_check_branch
          %164 = sbr.rel (%p162) target = $region20
        $region19: #{tpu_custom_call.1} parent=15 // pred_region
          %s165 = sand.u32 %s43, 1
          %s166 = sand.u32 %s43, 1
          %s167 = smul.addr %s166, 512
          %s168 = scalar_lea.vmem [#allocation5], %s167
          %s169 = smul.u32 32, %s20
          %s170 = smul.addr %s19, 256
          %s171 = sadd.s32 %s169, %s170
          %s172 = smul.addr %s171, 4
          %s173 = scalar_lea.vmem %s0, %s172
          // Predicated region
          $region21: #{tpu_custom_call.1} parent=19 // pred_check
            _
          $region22: #{tpu_custom_call.1} parent=19 // pred_check_branch
            %175 = sbr.rel (0) target = $region24
          $region23: #{tpu_custom_call.1} parent=19 // pred_region
            // Predicated region
            $region25: #{tpu_custom_call.1} parent=23 // pred_check
              _
            $region26: #{tpu_custom_call.1} parent=23 // pred_check_branch
              %177 = sbr.rel target = $region28
            $region27: #{tpu_custom_call.1} parent=23 // pred_region
              // Predicated region
              $region40: #{tpu_custom_call.1} parent=27 // pred_check
                _
              $region41: #{tpu_custom_call.1} parent=27 // pred_check_branch
                %447 = sbr.rel (0) target = $region43
              $region42: #{tpu_custom_call.1} parent=27 // pred_region
                loop: start=0, step=1, limit=1
                $region44: #{tpu_custom_call.1} parent=42 // loop_pre_header
                  _
                $region45: #{tpu_custom_call.1} parent=42 // loop_header
                  %s449 = sphi 0, %s453
                  %p450 = scmp.ge.s32.totalorder %s449, 1
                  %s454 = sphi %s173, %s173
                  %s455 = sphi %s168, %s168
                $region46: #{tpu_custom_call.1} parent=42 // loop_header_branch
                  %452 = sbr.rel (%p450) target = $region50
                $region47: #{tpu_custom_call.1} parent=42 // loop_body
                  _
                $region48: #{tpu_custom_call.1} parent=42 // loop_footer
                  %s453 = sadd.s32 1, %s449
                $region49: #{tpu_custom_call.1} parent=42 // loop_footer_branch
                  %448 = sbr.rel target = $region45
                $region50: #{tpu_custom_call.1} parent=42 // loop_exit
                  _
                %s457 = ssub.s32 16, 1
                loop: start=0, step=1, limit=1
                $region51: #{tpu_custom_call.1} parent=42 // loop_pre_header
                  _
                $region52: #{tpu_custom_call.1} parent=42 // loop_header
                  %s459 = sphi 0, %s463
                  %p460 = scmp.ge.s32.totalorder %s459, 1
                  %s464 = sphi %s173, %s173
                  %s465 = sphi %s168, %s168
                $region53: #{tpu_custom_call.1} parent=42 // loop_header_branch
                  %462 = sbr.rel (%p460) target = $region57
                $region54: #{tpu_custom_call.1} parent=42 // loop_body
                  %v466 = vld [vmem:[%s464] sm:%s457]
                  %467 = vst [vmem:[%s465] sm:%s457] %v466
                  %v468 = vld [vmem:[%s464 + $0x4] sm:%s457]
                  %469 = vst [vmem:[%s465 + $0x4] sm:%s457] %v468
                  %v470 = vld [vmem:[%s464 + $0x8] sm:%s457]
                  %471 = vst [vmem:[%s465 + $0x8] sm:%s457] %v470
                  %v472 = vld [vmem:[%s464 + $0xc] sm:%s457]
                  %473 = vst [vmem:[%s465 + $0xc] sm:%s457] %v472
                  %v474 = vld [vmem:[%s464 + $0x10] sm:%s457]
                  %475 = vst [vmem:[%s465 + $0x10] sm:%s457] %v474
                  %v476 = vld [vmem:[%s464 + $0x14] sm:%s457]
                  %477 = vst [vmem:[%s465 + $0x14] sm:%s457] %v476
                  %v478 = vld [vmem:[%s464 + $0x18] sm:%s457]
                  %479 = vst [vmem:[%s465 + $0x18] sm:%s457] %v478
                  %v480 = vld [vmem:[%s464 + $0x1c] sm:%s457]
                  %481 = vst [vmem:[%s465 + $0x1c] sm:%s457] %v480
                  %v482 = vld [vmem:[%s464 + $0x20] sm:%s457]
                  %483 = vst [vmem:[%s465 + $0x20] sm:%s457] %v482
                  %v484 = vld [vmem:[%s464 + $0x24] sm:%s457]
                  %485 = vst [vmem:[%s465 + $0x24] sm:%s457] %v484
                  %v486 = vld [vmem:[%s464 + $0x28] sm:%s457]
                  %487 = vst [vmem:[%s465 + $0x28] sm:%s457] %v486
                  %v488 = vld [vmem:[%s464 + $0x2c] sm:%s457]
                  %489 = vst [vmem:[%s465 + $0x2c] sm:%s457] %v488
                  %v490 = vld [vmem:[%s464 + $0x30] sm:%s457]
                  %491 = vst [vmem:[%s465 + $0x30] sm:%s457] %v490
                  %v492 = vld [vmem:[%s464 + $0x34] sm:%s457]
                  %493 = vst [vmem:[%s465 + $0x34] sm:%s457] %v492
                  %v494 = vld [vmem:[%s464 + $0x38] sm:%s457]
                  %495 = vst [vmem:[%s465 + $0x38] sm:%s457] %v494
                  %v496 = vld [vmem:[%s464 + $0x3c] sm:%s457]
                  %497 = vst [vmem:[%s465 + $0x3c] sm:%s457] %v496
                  %v498 = vld [vmem:[%s464 + $0x40] sm:%s457]
                  %499 = vst [vmem:[%s465 + $0x40] sm:%s457] %v498
                  %v500 = vld [vmem:[%s464 + $0x44] sm:%s457]
                  %501 = vst [vmem:[%s465 + $0x44] sm:%s457] %v500
                  %v502 = vld [vmem:[%s464 + $0x48] sm:%s457]
                  %503 = vst [vmem:[%s465 + $0x48] sm:%s457] %v502
                  %v504 = vld [vmem:[%s464 + $0x4c] sm:%s457]
                  %505 = vst [vmem:[%s465 + $0x4c] sm:%s457] %v504
                  %v506 = vld [vmem:[%s464 + $0x50] sm:%s457]
                  %507 = vst [vmem:[%s465 + $0x50] sm:%s457] %v506
                  %v508 = vld [vmem:[%s464 + $0x54] sm:%s457]
                  %509 = vst [vmem:[%s465 + $0x54] sm:%s457] %v508
                  %v510 = vld [vmem:[%s464 + $0x58] sm:%s457]
                  %511 = vst [vmem:[%s465 + $0x58] sm:%s457] %v510
                  %v512 = vld [vmem:[%s464 + $0x5c] sm:%s457]
                  %513 = vst [vmem:[%s465 + $0x5c] sm:%s457] %v512
                  %v514 = vld [vmem:[%s464 + $0x60] sm:%s457]
                  %515 = vst [vmem:[%s465 + $0x60] sm:%s457] %v514
                  %v516 = vld [vmem:[%s464 + $0x64] sm:%s457]
                  %517 = vst [vmem:[%s465 + $0x64] sm:%s457] %v516
                  %v518 = vld [vmem:[%s464 + $0x68] sm:%s457]
                  %519 = vst [vmem:[%s465 + $0x68] sm:%s457] %v518
                  %v520 = vld [vmem:[%s464 + $0x6c] sm:%s457]
                  %521 = vst [vmem:[%s465 + $0x6c] sm:%s457] %v520
                  %v522 = vld [vmem:[%s464 + $0x70] sm:%s457]
                  %523 = vst [vmem:[%s465 + $0x70] sm:%s457] %v522
                  %v524 = vld [vmem:[%s464 + $0x74] sm:%s457]
                  %525 = vst [vmem:[%s465 + $0x74] sm:%s457] %v524
                  %v526 = vld [vmem:[%s464 + $0x78] sm:%s457]
                  %527 = vst [vmem:[%s465 + $0x78] sm:%s457] %v526
                  %v528 = vld [vmem:[%s464 + $0x7c] sm:%s457]
                  %529 = vst [vmem:[%s465 + $0x7c] sm:%s457] %v528
                  %v530 = vld [vmem:[%s464 + $0x100] sm:%s457]
                  %531 = vst [vmem:[%s465 + $0x80] sm:%s457] %v530
                  %v532 = vld [vmem:[%s464 + $0x104] sm:%s457]
                  %533 = vst [vmem:[%s465 + $0x84] sm:%s457] %v532
                  %v534 = vld [vmem:[%s464 + $0x108] sm:%s457]
                  %535 = vst [vmem:[%s465 + $0x88] sm:%s457] %v534
                  %v536 = vld [vmem:[%s464 + $0x10c] sm:%s457]
                  %537 = vst [vmem:[%s465 + $0x8c] sm:%s457] %v536
                  %v538 = vld [vmem:[%s464 + $0x110] sm:%s457]
                  %539 = vst [vmem:[%s465 + $0x90] sm:%s457] %v538
                  %v540 = vld [vmem:[%s464 + $0x114] sm:%s457]
                  %541 = vst [vmem:[%s465 + $0x94] sm:%s457] %v540
                  %v542 = vld [vmem:[%s464 + $0x118] sm:%s457]
                  %543 = vst [vmem:[%s465 + $0x98] sm:%s457] %v542
                  %v544 = vld [vmem:[%s464 + $0x11c] sm:%s457]
                  %545 = vst [vmem:[%s465 + $0x9c] sm:%s457] %v544
                  %v546 = vld [vmem:[%s464 + $0x120] sm:%s457]
                  %547 = vst [vmem:[%s465 + $0xa0] sm:%s457] %v546
                  %v548 = vld [vmem:[%s464 + $0x124] sm:%s457]
                  %549 = vst [vmem:[%s465 + $0xa4] sm:%s457] %v548
                  %v550 = vld [vmem:[%s464 + $0x128] sm:%s457]
                  %551 = vst [vmem:[%s465 + $0xa8] sm:%s457] %v550
                  %v552 = vld [vmem:[%s464 + $0x12c] sm:%s457]
                  %553 = vst [vmem:[%s465 + $0xac] sm:%s457] %v552
                  %v554 = vld [vmem:[%s464 + $0x130] sm:%s457]
                  %555 = vst [vmem:[%s465 + $0xb0] sm:%s457] %v554
                  %v556 = vld [vmem:[%s464 + $0x134] sm:%s457]
                  %557 = vst [vmem:[%s465 + $0xb4] sm:%s457] %v556
                  %v558 = vld [vmem:[%s464 + $0x138] sm:%s457]
                  %559 = vst [vmem:[%s465 + $0xb8] sm:%s457] %v558
                  %v560 = vld [vmem:[%s464 + $0x13c] sm:%s457]
                  %561 = vst [vmem:[%s465 + $0xbc] sm:%s457] %v560
                  %v562 = vld [vmem:[%s464 + $0x140] sm:%s457]
                  %563 = vst [vmem:[%s465 + $0xc0] sm:%s457] %v562
                  %v564 = vld [vmem:[%s464 + $0x144] sm:%s457]
                  %565 = vst [vmem:[%s465 + $0xc4] sm:%s457] %v564
                  %v566 = vld [vmem:[%s464 + $0x148] sm:%s457]
                  %567 = vst [vmem:[%s465 + $0xc8] sm:%s457] %v566
                  %v568 = vld [vmem:[%s464 + $0x14c] sm:%s457]
                  %569 = vst [vmem:[%s465 + $0xcc] sm:%s457] %v568
                  %v570 = vld [vmem:[%s464 + $0x150] sm:%s457]
                  %571 = vst [vmem:[%s465 + $0xd0] sm:%s457] %v570
                  %v572 = vld [vmem:[%s464 + $0x154] sm:%s457]
                  %573 = vst [vmem:[%s465 + $0xd4] sm:%s457] %v572
                  %v574 = vld [vmem:[%s464 + $0x158] sm:%s457]
                  %575 = vst [vmem:[%s465 + $0xd8] sm:%s457] %v574
                  %v576 = vld [vmem:[%s464 + $0x15c] sm:%s457]
                  %577 = vst [vmem:[%s465 + $0xdc] sm:%s457] %v576
                  %v578 = vld [vmem:[%s464 + $0x160] sm:%s457]
                  %579 = vst [vmem:[%s465 + $0xe0] sm:%s457] %v578
                  %v580 = vld [vmem:[%s464 + $0x164] sm:%s457]
                  %581 = vst [vmem:[%s465 + $0xe4] sm:%s457] %v580
                  %v582 = vld [vmem:[%s464 + $0x168] sm:%s457]
                  %583 = vst [vmem:[%s465 + $0xe8] sm:%s457] %v582
                  %v584 = vld [vmem:[%s464 + $0x16c] sm:%s457]
                  %585 = vst [vmem:[%s465 + $0xec] sm:%s457] %v584
                  %v586 = vld [vmem:[%s464 + $0x170] sm:%s457]
                  %587 = vst [vmem:[%s465 + $0xf0] sm:%s457] %v586
                  %v588 = vld [vmem:[%s464 + $0x174] sm:%s457]
                  %589 = vst [vmem:[%s465 + $0xf4] sm:%s457] %v588
                  %v590 = vld [vmem:[%s464 + $0x178] sm:%s457]
                  %591 = vst [vmem:[%s465 + $0xf8] sm:%s457] %v590
                  %v592 = vld [vmem:[%s464 + $0x17c] sm:%s457]
                  %593 = vst [vmem:[%s465 + $0xfc] sm:%s457] %v592
                  %v594 = vld [vmem:[%s464 + $0x200] sm:%s457]
                  %595 = vst [vmem:[%s465 + $0x100] sm:%s457] %v594
                  %v596 = vld [vmem:[%s464 + $0x204] sm:%s457]
                  %597 = vst [vmem:[%s465 + $0x104] sm:%s457] %v596
                  %v598 = vld [vmem:[%s464 + $0x208] sm:%s457]
                  %599 = vst [vmem:[%s465 + $0x108] sm:%s457] %v598
                  %v600 = vld [vmem:[%s464 + $0x20c] sm:%s457]
                  %601 = vst [vmem:[%s465 + $0x10c] sm:%s457] %v600
                  %v602 = vld [vmem:[%s464 + $0x210] sm:%s457]
                  %603 = vst [vmem:[%s465 + $0x110] sm:%s457] %v602
                  %v604 = vld [vmem:[%s464 + $0x214] sm:%s457]
                  %605 = vst [vmem:[%s465 + $0x114] sm:%s457] %v604
                  %v606 = vld [vmem:[%s464 + $0x218] sm:%s457]
                  %607 = vst [vmem:[%s465 + $0x118] sm:%s457] %v606
                  %v608 = vld [vmem:[%s464 + $0x21c] sm:%s457]
                  %609 = vst [vmem:[%s465 + $0x11c] sm:%s457] %v608
                  %v610 = vld [vmem:[%s464 + $0x220] sm:%s457]
                  %611 = vst [vmem:[%s465 + $0x120] sm:%s457] %v610
                  %v612 = vld [vmem:[%s464 + $0x224] sm:%s457]
                  %613 = vst [vmem:[%s465 + $0x124] sm:%s457] %v612
                  %v614 = vld [vmem:[%s464 + $0x228] sm:%s457]
                  %615 = vst [vmem:[%s465 + $0x128] sm:%s457] %v614
                  %v616 = vld [vmem:[%s464 + $0x22c] sm:%s457]
                  %617 = vst [vmem:[%s465 + $0x12c] sm:%s457] %v616
                  %v618 = vld [vmem:[%s464 + $0x230] sm:%s457]
                  %619 = vst [vmem:[%s465 + $0x130] sm:%s457] %v618
                  %v620 = vld [vmem:[%s464 + $0x234] sm:%s457]
                  %621 = vst [vmem:[%s465 + $0x134] sm:%s457] %v620
                  %v622 = vld [vmem:[%s464 + $0x238] sm:%s457]
                  %623 = vst [vmem:[%s465 + $0x138] sm:%s457] %v622
                  %v624 = vld [vmem:[%s464 + $0x23c] sm:%s457]
                  %625 = vst [vmem:[%s465 + $0x13c] sm:%s457] %v624
                  %v626 = vld [vmem:[%s464 + $0x240] sm:%s457]
                  %627 = vst [vmem:[%s465 + $0x140] sm:%s457] %v626
                  %v628 = vld [vmem:[%s464 + $0x244] sm:%s457]
                  %629 = vst [vmem:[%s465 + $0x144] sm:%s457] %v628
                  %v630 = vld [vmem:[%s464 + $0x248] sm:%s457]
                  %631 = vst [vmem:[%s465 + $0x148] sm:%s457] %v630
                  %v632 = vld [vmem:[%s464 + $0x24c] sm:%s457]
                  %633 = vst [vmem:[%s465 + $0x14c] sm:%s457] %v632
                  %v634 = vld [vmem:[%s464 + $0x250] sm:%s457]
                  %635 = vst [vmem:[%s465 + $0x150] sm:%s457] %v634
                  %v636 = vld [vmem:[%s464 + $0x254] sm:%s457]
                  %637 = vst [vmem:[%s465 + $0x154] sm:%s457] %v636
                  %v638 = vld [vmem:[%s464 + $0x258] sm:%s457]
                  %639 = vst [vmem:[%s465 + $0x158] sm:%s457] %v638
                  %v640 = vld [vmem:[%s464 + $0x25c] sm:%s457]
                  %641 = vst [vmem:[%s465 + $0x15c] sm:%s457] %v640
                  %v642 = vld [vmem:[%s464 + $0x260] sm:%s457]
                  %643 = vst [vmem:[%s465 + $0x160] sm:%s457] %v642
                  %v644 = vld [vmem:[%s464 + $0x264] sm:%s457]
                  %645 = vst [vmem:[%s465 + $0x164] sm:%s457] %v644
                  %v646 = vld [vmem:[%s464 + $0x268] sm:%s457]
                  %647 = vst [vmem:[%s465 + $0x168] sm:%s457] %v646
                  %v648 = vld [vmem:[%s464 + $0x26c] sm:%s457]
                  %649 = vst [vmem:[%s465 + $0x16c] sm:%s457] %v648
                  %v650 = vld [vmem:[%s464 + $0x270] sm:%s457]
                  %651 = vst [vmem:[%s465 + $0x170] sm:%s457] %v650
                  %v652 = vld [vmem:[%s464 + $0x274] sm:%s457]
                  %653 = vst [vmem:[%s465 + $0x174] sm:%s457] %v652
                  %v654 = vld [vmem:[%s464 + $0x278] sm:%s457]
                  %655 = vst [vmem:[%s465 + $0x178] sm:%s457] %v654
                  %v656 = vld [vmem:[%s464 + $0x27c] sm:%s457]
                  %657 = vst [vmem:[%s465 + $0x17c] sm:%s457] %v656
                  %v658 = vld [vmem:[%s464 + $0x300] sm:%s457]
                  %659 = vst [vmem:[%s465 + $0x180] sm:%s457] %v658
                  %v660 = vld [vmem:[%s464 + $0x304] sm:%s457]
                  %661 = vst [vmem:[%s465 + $0x184] sm:%s457] %v660
                  %v662 = vld [vmem:[%s464 + $0x308] sm:%s457]
                  %663 = vst [vmem:[%s465 + $0x188] sm:%s457] %v662
                  %v664 = vld [vmem:[%s464 + $0x30c] sm:%s457]
                  %665 = vst [vmem:[%s465 + $0x18c] sm:%s457] %v664
                  %v666 = vld [vmem:[%s464 + $0x310] sm:%s457]
                  %667 = vst [vmem:[%s465 + $0x190] sm:%s457] %v666
                  %v668 = vld [vmem:[%s464 + $0x314] sm:%s457]
                  %669 = vst [vmem:[%s465 + $0x194] sm:%s457] %v668
                  %v670 = vld [vmem:[%s464 + $0x318] sm:%s457]
                  %671 = vst [vmem:[%s465 + $0x198] sm:%s457] %v670
                  %v672 = vld [vmem:[%s464 + $0x31c] sm:%s457]
                  %673 = vst [vmem:[%s465 + $0x19c] sm:%s457] %v672
                  %v674 = vld [vmem:[%s464 + $0x320] sm:%s457]
                  %675 = vst [vmem:[%s465 + $0x1a0] sm:%s457] %v674
                  %v676 = vld [vmem:[%s464 + $0x324] sm:%s457]
                  %677 = vst [vmem:[%s465 + $0x1a4] sm:%s457] %v676
                  %v678 = vld [vmem:[%s464 + $0x328] sm:%s457]
                  %679 = vst [vmem:[%s465 + $0x1a8] sm:%s457] %v678
                  %v680 = vld [vmem:[%s464 + $0x32c] sm:%s457]
                  %681 = vst [vmem:[%s465 + $0x1ac] sm:%s457] %v680
                  %v682 = vld [vmem:[%s464 + $0x330] sm:%s457]
                  %683 = vst [vmem:[%s465 + $0x1b0] sm:%s457] %v682
                  %v684 = vld [vmem:[%s464 + $0x334] sm:%s457]
                  %685 = vst [vmem:[%s465 + $0x1b4] sm:%s457] %v684
                  %v686 = vld [vmem:[%s464 + $0x338] sm:%s457]
                  %687 = vst [vmem:[%s465 + $0x1b8] sm:%s457] %v686
                  %v688 = vld [vmem:[%s464 + $0x33c] sm:%s457]
                  %689 = vst [vmem:[%s465 + $0x1bc] sm:%s457] %v688
                  %v690 = vld [vmem:[%s464 + $0x340] sm:%s457]
                  %691 = vst [vmem:[%s465 + $0x1c0] sm:%s457] %v690
                  %v692 = vld [vmem:[%s464 + $0x344] sm:%s457]
                  %693 = vst [vmem:[%s465 + $0x1c4] sm:%s457] %v692
                  %v694 = vld [vmem:[%s464 + $0x348] sm:%s457]
                  %695 = vst [vmem:[%s465 + $0x1c8] sm:%s457] %v694
                  %v696 = vld [vmem:[%s464 + $0x34c] sm:%s457]
                  %697 = vst [vmem:[%s465 + $0x1cc] sm:%s457] %v696
                  %v698 = vld [vmem:[%s464 + $0x350] sm:%s457]
                  %699 = vst [vmem:[%s465 + $0x1d0] sm:%s457] %v698
                  %v700 = vld [vmem:[%s464 + $0x354] sm:%s457]
                  %701 = vst [vmem:[%s465 + $0x1d4] sm:%s457] %v700
                  %v702 = vld [vmem:[%s464 + $0x358] sm:%s457]
                  %703 = vst [vmem:[%s465 + $0x1d8] sm:%s457] %v702
                  %v704 = vld [vmem:[%s464 + $0x35c] sm:%s457]
                  %705 = vst [vmem:[%s465 + $0x1dc] sm:%s457] %v704
                  %v706 = vld [vmem:[%s464 + $0x360] sm:%s457]
                  %707 = vst [vmem:[%s465 + $0x1e0] sm:%s457] %v706
                  %v708 = vld [vmem:[%s464 + $0x364] sm:%s457]
                  %709 = vst [vmem:[%s465 + $0x1e4] sm:%s457] %v708
                  %v710 = vld [vmem:[%s464 + $0x368] sm:%s457]
                  %711 = vst [vmem:[%s465 + $0x1e8] sm:%s457] %v710
                  %v712 = vld [vmem:[%s464 + $0x36c] sm:%s457]
                  %713 = vst [vmem:[%s465 + $0x1ec] sm:%s457] %v712
                  %v714 = vld [vmem:[%s464 + $0x370] sm:%s457]
                  %715 = vst [vmem:[%s465 + $0x1f0] sm:%s457] %v714
                  %v716 = vld [vmem:[%s464 + $0x374] sm:%s457]
                  %717 = vst [vmem:[%s465 + $0x1f4] sm:%s457] %v716
                  %v718 = vld [vmem:[%s464 + $0x378] sm:%s457]
                  %719 = vst [vmem:[%s465 + $0x1f8] sm:%s457] %v718
                  %v720 = vld [vmem:[%s464 + $0x37c] sm:%s457]
                  %721 = vst [vmem:[%s465 + $0x1fc] sm:%s457] %v720
                $region55: #{tpu_custom_call.1} parent=42 // loop_footer
                  %s463 = sadd.s32 1, %s459
                $region56: #{tpu_custom_call.1} parent=42 // loop_footer_branch
                  %458 = sbr.rel target = $region52
                $region57: #{tpu_custom_call.1} parent=42 // loop_exit
                  _
              $region43: #{tpu_custom_call.1} parent=27 // pred_fallthru
                _
            $region28: #{tpu_custom_call.1} parent=23 // pred_fallthru
              _
            // Predicated region
            $region29: #{tpu_custom_call.1} parent=23 // pred_check
              _
            $region30: #{tpu_custom_call.1} parent=23 // pred_check_branch
              %179 = sbr.rel (0) target = $region32
            $region31: #{tpu_custom_call.1} parent=23 // pred_region
              %s181 = ssub.s32 16, 1
              loop: start=0, step=1, limit=1
              $region33: #{tpu_custom_call.1} parent=31 // loop_pre_header
                _
              $region34: #{tpu_custom_call.1} parent=31 // loop_header
                %s183 = sphi 0, %s187
                %p184 = scmp.ge.s32.totalorder %s183, 1
                %s188 = sphi %s173, %s173
                %s189 = sphi %s168, %s168
              $region35: #{tpu_custom_call.1} parent=31 // loop_header_branch
                %186 = sbr.rel (%p184) target = $region39
              $region36: #{tpu_custom_call.1} parent=31 // loop_body
                %v190 = vld [vmem:[%s188] sm:%s181]
                %191 = vst [vmem:[%s189] sm:%s181] %v190
                %v192 = vld [vmem:[%s188 + $0x4] sm:%s181]
                %193 = vst [vmem:[%s189 + $0x4] sm:%s181] %v192
                %v194 = vld [vmem:[%s188 + $0x8] sm:%s181]
                %195 = vst [vmem:[%s189 + $0x8] sm:%s181] %v194
                %v196 = vld [vmem:[%s188 + $0xc] sm:%s181]
                %197 = vst [vmem:[%s189 + $0xc] sm:%s181] %v196
                %v198 = vld [vmem:[%s188 + $0x10] sm:%s181]
                %199 = vst [vmem:[%s189 + $0x10] sm:%s181] %v198
                %v200 = vld [vmem:[%s188 + $0x14] sm:%s181]
                %201 = vst [vmem:[%s189 + $0x14] sm:%s181] %v200
                %v202 = vld [vmem:[%s188 + $0x18] sm:%s181]
                %203 = vst [vmem:[%s189 + $0x18] sm:%s181] %v202
                %v204 = vld [vmem:[%s188 + $0x1c] sm:%s181]
                %205 = vst [vmem:[%s189 + $0x1c] sm:%s181] %v204
                %v206 = vld [vmem:[%s188 + $0x20] sm:%s181]
                %207 = vst [vmem:[%s189 + $0x20] sm:%s181] %v206
                %v208 = vld [vmem:[%s188 + $0x24] sm:%s181]
                %209 = vst [vmem:[%s189 + $0x24] sm:%s181] %v208
                %v210 = vld [vmem:[%s188 + $0x28] sm:%s181]
                %211 = vst [vmem:[%s189 + $0x28] sm:%s181] %v210
                %v212 = vld [vmem:[%s188 + $0x2c] sm:%s181]
                %213 = vst [vmem:[%s189 + $0x2c] sm:%s181] %v212
                %v214 = vld [vmem:[%s188 + $0x30] sm:%s181]
                %215 = vst [vmem:[%s189 + $0x30] sm:%s181] %v214
                %v216 = vld [vmem:[%s188 + $0x34] sm:%s181]
                %217 = vst [vmem:[%s189 + $0x34] sm:%s181] %v216
                %v218 = vld [vmem:[%s188 + $0x38] sm:%s181]
                %219 = vst [vmem:[%s189 + $0x38] sm:%s181] %v218
                %v220 = vld [vmem:[%s188 + $0x3c] sm:%s181]
                %221 = vst [vmem:[%s189 + $0x3c] sm:%s181] %v220
                %v222 = vld [vmem:[%s188 + $0x40] sm:%s181]
                %223 = vst [vmem:[%s189 + $0x40] sm:%s181] %v222
                %v224 = vld [vmem:[%s188 + $0x44] sm:%s181]
                %225 = vst [vmem:[%s189 + $0x44] sm:%s181] %v224
                %v226 = vld [vmem:[%s188 + $0x48] sm:%s181]
                %227 = vst [vmem:[%s189 + $0x48] sm:%s181] %v226
                %v228 = vld [vmem:[%s188 + $0x4c] sm:%s181]
                %229 = vst [vmem:[%s189 + $0x4c] sm:%s181] %v228
                %v230 = vld [vmem:[%s188 + $0x50] sm:%s181]
                %231 = vst [vmem:[%s189 + $0x50] sm:%s181] %v230
                %v232 = vld [vmem:[%s188 + $0x54] sm:%s181]
                %233 = vst [vmem:[%s189 + $0x54] sm:%s181] %v232
                %v234 = vld [vmem:[%s188 + $0x58] sm:%s181]
                %235 = vst [vmem:[%s189 + $0x58] sm:%s181] %v234
                %v236 = vld [vmem:[%s188 + $0x5c] sm:%s181]
                %237 = vst [vmem:[%s189 + $0x5c] sm:%s181] %v236
                %v238 = vld [vmem:[%s188 + $0x60] sm:%s181]
                %239 = vst [vmem:[%s189 + $0x60] sm:%s181] %v238
                %v240 = vld [vmem:[%s188 + $0x64] sm:%s181]
                %241 = vst [vmem:[%s189 + $0x64] sm:%s181] %v240
                %v242 = vld [vmem:[%s188 + $0x68] sm:%s181]
                %243 = vst [vmem:[%s189 + $0x68] sm:%s181] %v242
                %v244 = vld [vmem:[%s188 + $0x6c] sm:%s181]
                %245 = vst [vmem:[%s189 + $0x6c] sm:%s181] %v244
                %v246 = vld [vmem:[%s188 + $0x70] sm:%s181]
                %247 = vst [vmem:[%s189 + $0x70] sm:%s181] %v246
                %v248 = vld [vmem:[%s188 + $0x74] sm:%s181]
                %249 = vst [vmem:[%s189 + $0x74] sm:%s181] %v248
                %v250 = vld [vmem:[%s188 + $0x78] sm:%s181]
                %251 = vst [vmem:[%s189 + $0x78] sm:%s181] %v250
                %v252 = vld [vmem:[%s188 + $0x7c] sm:%s181]
                %253 = vst [vmem:[%s189 + $0x7c] sm:%s181] %v252
                %v254 = vld [vmem:[%s188 + $0x100] sm:%s181]
                %255 = vst [vmem:[%s189 + $0x80] sm:%s181] %v254
                %v256 = vld [vmem:[%s188 + $0x104] sm:%s181]
                %257 = vst [vmem:[%s189 + $0x84] sm:%s181] %v256
                %v258 = vld [vmem:[%s188 + $0x108] sm:%s181]
                %259 = vst [vmem:[%s189 + $0x88] sm:%s181] %v258
                %v260 = vld [vmem:[%s188 + $0x10c] sm:%s181]
                %261 = vst [vmem:[%s189 + $0x8c] sm:%s181] %v260
                %v262 = vld [vmem:[%s188 + $0x110] sm:%s181]
                %263 = vst [vmem:[%s189 + $0x90] sm:%s181] %v262
                %v264 = vld [vmem:[%s188 + $0x114] sm:%s181]
                %265 = vst [vmem:[%s189 + $0x94] sm:%s181] %v264
                %v266 = vld [vmem:[%s188 + $0x118] sm:%s181]
                %267 = vst [vmem:[%s189 + $0x98] sm:%s181] %v266
                %v268 = vld [vmem:[%s188 + $0x11c] sm:%s181]
                %269 = vst [vmem:[%s189 + $0x9c] sm:%s181] %v268
                %v270 = vld [vmem:[%s188 + $0x120] sm:%s181]
                %271 = vst [vmem:[%s189 + $0xa0] sm:%s181] %v270
                %v272 = vld [vmem:[%s188 + $0x124] sm:%s181]
                %273 = vst [vmem:[%s189 + $0xa4] sm:%s181] %v272
                %v274 = vld [vmem:[%s188 + $0x128] sm:%s181]
                %275 = vst [vmem:[%s189 + $0xa8] sm:%s181] %v274
                %v276 = vld [vmem:[%s188 + $0x12c] sm:%s181]
                %277 = vst [vmem:[%s189 + $0xac] sm:%s181] %v276
                %v278 = vld [vmem:[%s188 + $0x130] sm:%s181]
                %279 = vst [vmem:[%s189 + $0xb0] sm:%s181] %v278
                %v280 = vld [vmem:[%s188 + $0x134] sm:%s181]
                %281 = vst [vmem:[%s189 + $0xb4] sm:%s181] %v280
                %v282 = vld [vmem:[%s188 + $0x138] sm:%s181]
                %283 = vst [vmem:[%s189 + $0xb8] sm:%s181] %v282
                %v284 = vld [vmem:[%s188 + $0x13c] sm:%s181]
                %285 = vst [vmem:[%s189 + $0xbc] sm:%s181] %v284
                %v286 = vld [vmem:[%s188 + $0x140] sm:%s181]
                %287 = vst [vmem:[%s189 + $0xc0] sm:%s181] %v286
                %v288 = vld [vmem:[%s188 + $0x144] sm:%s181]
                %289 = vst [vmem:[%s189 + $0xc4] sm:%s181] %v288
                %v290 = vld [vmem:[%s188 + $0x148] sm:%s181]
                %291 = vst [vmem:[%s189 + $0xc8] sm:%s181] %v290
                %v292 = vld [vmem:[%s188 + $0x14c] sm:%s181]
                %293 = vst [vmem:[%s189 + $0xcc] sm:%s181] %v292
                %v294 = vld [vmem:[%s188 + $0x150] sm:%s181]
                %295 = vst [vmem:[%s189 + $0xd0] sm:%s181] %v294
                %v296 = vld [vmem:[%s188 + $0x154] sm:%s181]
                %297 = vst [vmem:[%s189 + $0xd4] sm:%s181] %v296
                %v298 = vld [vmem:[%s188 + $0x158] sm:%s181]
                %299 = vst [vmem:[%s189 + $0xd8] sm:%s181] %v298
                %v300 = vld [vmem:[%s188 + $0x15c] sm:%s181]
                %301 = vst [vmem:[%s189 + $0xdc] sm:%s181] %v300
                %v302 = vld [vmem:[%s188 + $0x160] sm:%s181]
                %303 = vst [vmem:[%s189 + $0xe0] sm:%s181] %v302
                %v304 = vld [vmem:[%s188 + $0x164] sm:%s181]
                %305 = vst [vmem:[%s189 + $0xe4] sm:%s181] %v304
                %v306 = vld [vmem:[%s188 + $0x168] sm:%s181]
                %307 = vst [vmem:[%s189 + $0xe8] sm:%s181] %v306
                %v308 = vld [vmem:[%s188 + $0x16c] sm:%s181]
                %309 = vst [vmem:[%s189 + $0xec] sm:%s181] %v308
                %v310 = vld [vmem:[%s188 + $0x170] sm:%s181]
                %311 = vst [vmem:[%s189 + $0xf0] sm:%s181] %v310
                %v312 = vld [vmem:[%s188 + $0x174] sm:%s181]
                %313 = vst [vmem:[%s189 + $0xf4] sm:%s181] %v312
                %v314 = vld [vmem:[%s188 + $0x178] sm:%s181]
                %315 = vst [vmem:[%s189 + $0xf8] sm:%s181] %v314
                %v316 = vld [vmem:[%s188 + $0x17c] sm:%s181]
                %317 = vst [vmem:[%s189 + $0xfc] sm:%s181] %v316
                %v318 = vld [vmem:[%s188 + $0x200] sm:%s181]
                %319 = vst [vmem:[%s189 + $0x100] sm:%s181] %v318
                %v320 = vld [vmem:[%s188 + $0x204] sm:%s181]
                %321 = vst [vmem:[%s189 + $0x104] sm:%s181] %v320
                %v322 = vld [vmem:[%s188 + $0x208] sm:%s181]
                %323 = vst [vmem:[%s189 + $0x108] sm:%s181] %v322
                %v324 = vld [vmem:[%s188 + $0x20c] sm:%s181]
                %325 = vst [vmem:[%s189 + $0x10c] sm:%s181] %v324
                %v326 = vld [vmem:[%s188 + $0x210] sm:%s181]
                %327 = vst [vmem:[%s189 + $0x110] sm:%s181] %v326
                %v328 = vld [vmem:[%s188 + $0x214] sm:%s181]
                %329 = vst [vmem:[%s189 + $0x114] sm:%s181] %v328
                %v330 = vld [vmem:[%s188 + $0x218] sm:%s181]
                %331 = vst [vmem:[%s189 + $0x118] sm:%s181] %v330
                %v332 = vld [vmem:[%s188 + $0x21c] sm:%s181]
                %333 = vst [vmem:[%s189 + $0x11c] sm:%s181] %v332
                %v334 = vld [vmem:[%s188 + $0x220] sm:%s181]
                %335 = vst [vmem:[%s189 + $0x120] sm:%s181] %v334
                %v336 = vld [vmem:[%s188 + $0x224] sm:%s181]
                %337 = vst [vmem:[%s189 + $0x124] sm:%s181] %v336
                %v338 = vld [vmem:[%s188 + $0x228] sm:%s181]
                %339 = vst [vmem:[%s189 + $0x128] sm:%s181] %v338
                %v340 = vld [vmem:[%s188 + $0x22c] sm:%s181]
                %341 = vst [vmem:[%s189 + $0x12c] sm:%s181] %v340
                %v342 = vld [vmem:[%s188 + $0x230] sm:%s181]
                %343 = vst [vmem:[%s189 + $0x130] sm:%s181] %v342
                %v344 = vld [vmem:[%s188 + $0x234] sm:%s181]
                %345 = vst [vmem:[%s189 + $0x134] sm:%s181] %v344
                %v346 = vld [vmem:[%s188 + $0x238] sm:%s181]
                %347 = vst [vmem:[%s189 + $0x138] sm:%s181] %v346
                %v348 = vld [vmem:[%s188 + $0x23c] sm:%s181]
                %349 = vst [vmem:[%s189 + $0x13c] sm:%s181] %v348
                %v350 = vld [vmem:[%s188 + $0x240] sm:%s181]
                %351 = vst [vmem:[%s189 + $0x140] sm:%s181] %v350
                %v352 = vld [vmem:[%s188 + $0x244] sm:%s181]
                %353 = vst [vmem:[%s189 + $0x144] sm:%s181] %v352
                %v354 = vld [vmem:[%s188 + $0x248] sm:%s181]
                %355 = vst [vmem:[%s189 + $0x148] sm:%s181] %v354
                %v356 = vld [vmem:[%s188 + $0x24c] sm:%s181]
                %357 = vst [vmem:[%s189 + $0x14c] sm:%s181] %v356
                %v358 = vld [vmem:[%s188 + $0x250] sm:%s181]
                %359 = vst [vmem:[%s189 + $0x150] sm:%s181] %v358
                %v360 = vld [vmem:[%s188 + $0x254] sm:%s181]
                %361 = vst [vmem:[%s189 + $0x154] sm:%s181] %v360
                %v362 = vld [vmem:[%s188 + $0x258] sm:%s181]
                %363 = vst [vmem:[%s189 + $0x158] sm:%s181] %v362
                %v364 = vld [vmem:[%s188 + $0x25c] sm:%s181]
                %365 = vst [vmem:[%s189 + $0x15c] sm:%s181] %v364
                %v366 = vld [vmem:[%s188 + $0x260] sm:%s181]
                %367 = vst [vmem:[%s189 + $0x160] sm:%s181] %v366
                %v368 = vld [vmem:[%s188 + $0x264] sm:%s181]
                %369 = vst [vmem:[%s189 + $0x164] sm:%s181] %v368
                %v370 = vld [vmem:[%s188 + $0x268] sm:%s181]
                %371 = vst [vmem:[%s189 + $0x168] sm:%s181] %v370
                %v372 = vld [vmem:[%s188 + $0x26c] sm:%s181]
                %373 = vst [vmem:[%s189 + $0x16c] sm:%s181] %v372
                %v374 = vld [vmem:[%s188 + $0x270] sm:%s181]
                %375 = vst [vmem:[%s189 + $0x170] sm:%s181] %v374
                %v376 = vld [vmem:[%s188 + $0x274] sm:%s181]
                %377 = vst [vmem:[%s189 + $0x174] sm:%s181] %v376
                %v378 = vld [vmem:[%s188 + $0x278] sm:%s181]
                %379 = vst [vmem:[%s189 + $0x178] sm:%s181] %v378
                %v380 = vld [vmem:[%s188 + $0x27c] sm:%s181]
                %381 = vst [vmem:[%s189 + $0x17c] sm:%s181] %v380
                %v382 = vld [vmem:[%s188 + $0x300] sm:%s181]
                %383 = vst [vmem:[%s189 + $0x180] sm:%s181] %v382
                %v384 = vld [vmem:[%s188 + $0x304] sm:%s181]
                %385 = vst [vmem:[%s189 + $0x184] sm:%s181] %v384
                %v386 = vld [vmem:[%s188 + $0x308] sm:%s181]
                %387 = vst [vmem:[%s189 + $0x188] sm:%s181] %v386
                %v388 = vld [vmem:[%s188 + $0x30c] sm:%s181]
                %389 = vst [vmem:[%s189 + $0x18c] sm:%s181] %v388
                %v390 = vld [vmem:[%s188 + $0x310] sm:%s181]
                %391 = vst [vmem:[%s189 + $0x190] sm:%s181] %v390
                %v392 = vld [vmem:[%s188 + $0x314] sm:%s181]
                %393 = vst [vmem:[%s189 + $0x194] sm:%s181] %v392
                %v394 = vld [vmem:[%s188 + $0x318] sm:%s181]
                %395 = vst [vmem:[%s189 + $0x198] sm:%s181] %v394
                %v396 = vld [vmem:[%s188 + $0x31c] sm:%s181]
                %397 = vst [vmem:[%s189 + $0x19c] sm:%s181] %v396
                %v398 = vld [vmem:[%s188 + $0x320] sm:%s181]
                %399 = vst [vmem:[%s189 + $0x1a0] sm:%s181] %v398
                %v400 = vld [vmem:[%s188 + $0x324] sm:%s181]
                %401 = vst [vmem:[%s189 + $0x1a4] sm:%s181] %v400
                %v402 = vld [vmem:[%s188 + $0x328] sm:%s181]
                %403 = vst [vmem:[%s189 + $0x1a8] sm:%s181] %v402
                %v404 = vld [vmem:[%s188 + $0x32c] sm:%s181]
                %405 = vst [vmem:[%s189 + $0x1ac] sm:%s181] %v404
                %v406 = vld [vmem:[%s188 + $0x330] sm:%s181]
                %407 = vst [vmem:[%s189 + $0x1b0] sm:%s181] %v406
                %v408 = vld [vmem:[%s188 + $0x334] sm:%s181]
                %409 = vst [vmem:[%s189 + $0x1b4] sm:%s181] %v408
                %v410 = vld [vmem:[%s188 + $0x338] sm:%s181]
                %411 = vst [vmem:[%s189 + $0x1b8] sm:%s181] %v410
                %v412 = vld [vmem:[%s188 + $0x33c] sm:%s181]
                %413 = vst [vmem:[%s189 + $0x1bc] sm:%s181] %v412
                %v414 = vld [vmem:[%s188 + $0x340] sm:%s181]
                %415 = vst [vmem:[%s189 + $0x1c0] sm:%s181] %v414
                %v416 = vld [vmem:[%s188 + $0x344] sm:%s181]
                %417 = vst [vmem:[%s189 + $0x1c4] sm:%s181] %v416
                %v418 = vld [vmem:[%s188 + $0x348] sm:%s181]
                %419 = vst [vmem:[%s189 + $0x1c8] sm:%s181] %v418
                %v420 = vld [vmem:[%s188 + $0x34c] sm:%s181]
                %421 = vst [vmem:[%s189 + $0x1cc] sm:%s181] %v420
                %v422 = vld [vmem:[%s188 + $0x350] sm:%s181]
                %423 = vst [vmem:[%s189 + $0x1d0] sm:%s181] %v422
                %v424 = vld [vmem:[%s188 + $0x354] sm:%s181]
                %425 = vst [vmem:[%s189 + $0x1d4] sm:%s181] %v424
                %v426 = vld [vmem:[%s188 + $0x358] sm:%s181]
                %427 = vst [vmem:[%s189 + $0x1d8] sm:%s181] %v426
                %v428 = vld [vmem:[%s188 + $0x35c] sm:%s181]
                %429 = vst [vmem:[%s189 + $0x1dc] sm:%s181] %v428
                %v430 = vld [vmem:[%s188 + $0x360] sm:%s181]
                %431 = vst [vmem:[%s189 + $0x1e0] sm:%s181] %v430
                %v432 = vld [vmem:[%s188 + $0x364] sm:%s181]
                %433 = vst [vmem:[%s189 + $0x1e4] sm:%s181] %v432
                %v434 = vld [vmem:[%s188 + $0x368] sm:%s181]
                %435 = vst [vmem:[%s189 + $0x1e8] sm:%s181] %v434
                %v436 = vld [vmem:[%s188 + $0x36c] sm:%s181]
                %437 = vst [vmem:[%s189 + $0x1ec] sm:%s181] %v436
                %v438 = vld [vmem:[%s188 + $0x370] sm:%s181]
                %439 = vst [vmem:[%s189 + $0x1f0] sm:%s181] %v438
                %v440 = vld [vmem:[%s188 + $0x374] sm:%s181]
                %441 = vst [vmem:[%s189 + $0x1f4] sm:%s181] %v440
                %v442 = vld [vmem:[%s188 + $0x378] sm:%s181]
                %443 = vst [vmem:[%s189 + $0x1f8] sm:%s181] %v442
                %v444 = vld [vmem:[%s188 + $0x37c] sm:%s181]
                %445 = vst [vmem:[%s189 + $0x1fc] sm:%s181] %v444
              $region37: #{tpu_custom_call.1} parent=31 // loop_footer
                %s187 = sadd.s32 1, %s183
              $region38: #{tpu_custom_call.1} parent=31 // loop_footer_branch
                %182 = sbr.rel target = $region34
              $region39: #{tpu_custom_call.1} parent=31 // loop_exit
                _
            $region32: #{tpu_custom_call.1} parent=23 // pred_fallthru
              _
          $region24: #{tpu_custom_call.1} parent=19 // pred_fallthru
            _
          %722 = vnop
        $region20: #{tpu_custom_call.1} parent=15 // pred_fallthru
          _
        // Predicated region
        $region58: #{tpu_custom_call.1} parent=15 // pred_check
          %p723 = pneg %p81
        $region59: #{tpu_custom_call.1} parent=15 // pred_check_branch
          %725 = sbr.rel (%p723) target = $region61
        $region60: #{tpu_custom_call.1} parent=15 // pred_region
          %s726 = sand.u32 %s71, 1
          %s727 = sand.u32 %s71, 1
          %s728 = smul.addr %s727, 64
          %s729 = scalar_lea.vmem [#allocation6], %s728
          %s730 = smul.addr %s19, 64
          %s731 = sadd.s32 %s21, %s730
          %s732 = smul.addr %s731, 4
          %s733 = scalar_lea.vmem %s1, %s732
          // Predicated region
          $region62: #{tpu_custom_call.1} parent=60 // pred_check
            _
          $region63: #{tpu_custom_call.1} parent=60 // pred_check_branch
            %735 = sbr.rel (0) target = $region65
          $region64: #{tpu_custom_call.1} parent=60 // pred_region
            // Predicated region
            $region66: #{tpu_custom_call.1} parent=64 // pred_check
              _
            $region67: #{tpu_custom_call.1} parent=64 // pred_check_branch
              %737 = sbr.rel target = $region69
            $region68: #{tpu_custom_call.1} parent=64 // pred_region
              // Predicated region
              $region81: #{tpu_custom_call.1} parent=68 // pred_check
                _
              $region82: #{tpu_custom_call.1} parent=68 // pred_check_branch
                %783 = sbr.rel (0) target = $region84
              $region83: #{tpu_custom_call.1} parent=68 // pred_region
                loop: start=0, step=1, limit=1
                $region85: #{tpu_custom_call.1} parent=83 // loop_pre_header
                  _
                $region86: #{tpu_custom_call.1} parent=83 // loop_header
                  %s785 = sphi 0, %s789
                  %p786 = scmp.ge.s32.totalorder %s785, 1
                  %s790 = sphi %s733, %s733
                  %s791 = sphi %s729, %s729
                $region87: #{tpu_custom_call.1} parent=83 // loop_header_branch
                  %788 = sbr.rel (%p786) target = $region91
                $region88: #{tpu_custom_call.1} parent=83 // loop_body
                  _
                $region89: #{tpu_custom_call.1} parent=83 // loop_footer
                  %s789 = sadd.s32 1, %s785
                $region90: #{tpu_custom_call.1} parent=83 // loop_footer_branch
                  %784 = sbr.rel target = $region86
                $region91: #{tpu_custom_call.1} parent=83 // loop_exit
                  _
                %s793 = ssub.s32 16, 1
                loop: start=0, step=1, limit=1
                $region92: #{tpu_custom_call.1} parent=83 // loop_pre_header
                  _
                $region93: #{tpu_custom_call.1} parent=83 // loop_header
                  %s795 = sphi 0, %s799
                  %p796 = scmp.ge.s32.totalorder %s795, 1
                  %s800 = sphi %s733, %s733
                  %s801 = sphi %s729, %s729
                $region94: #{tpu_custom_call.1} parent=83 // loop_header_branch
                  %798 = sbr.rel (%p796) target = $region98
                $region95: #{tpu_custom_call.1} parent=83 // loop_body
                  %v802 = vld [vmem:[%s800] sm:%s793]
                  %803 = vst [vmem:[%s801] sm:%s793] %v802
                  %v804 = vld [vmem:[%s800 + $0x10] sm:%s793]
                  %805 = vst [vmem:[%s801 + $0x4] sm:%s793] %v804
                  %v806 = vld [vmem:[%s800 + $0x20] sm:%s793]
                  %807 = vst [vmem:[%s801 + $0x8] sm:%s793] %v806
                  %v808 = vld [vmem:[%s800 + $0x30] sm:%s793]
                  %809 = vst [vmem:[%s801 + $0xc] sm:%s793] %v808
                  %v810 = vld [vmem:[%s800 + $0x40] sm:%s793]
                  %811 = vst [vmem:[%s801 + $0x10] sm:%s793] %v810
                  %v812 = vld [vmem:[%s800 + $0x50] sm:%s793]
                  %813 = vst [vmem:[%s801 + $0x14] sm:%s793] %v812
                  %v814 = vld [vmem:[%s800 + $0x60] sm:%s793]
                  %815 = vst [vmem:[%s801 + $0x18] sm:%s793] %v814
                  %v816 = vld [vmem:[%s800 + $0x70] sm:%s793]
                  %817 = vst [vmem:[%s801 + $0x1c] sm:%s793] %v816
                  %v818 = vld [vmem:[%s800 + $0x80] sm:%s793]
                  %819 = vst [vmem:[%s801 + $0x20] sm:%s793] %v818
                  %v820 = vld [vmem:[%s800 + $0x90] sm:%s793]
                  %821 = vst [vmem:[%s801 + $0x24] sm:%s793] %v820
                  %v822 = vld [vmem:[%s800 + $0xa0] sm:%s793]
                  %823 = vst [vmem:[%s801 + $0x28] sm:%s793] %v822
                  %v824 = vld [vmem:[%s800 + $0xb0] sm:%s793]
                  %825 = vst [vmem:[%s801 + $0x2c] sm:%s793] %v824
                  %v826 = vld [vmem:[%s800 + $0xc0] sm:%s793]
                  %827 = vst [vmem:[%s801 + $0x30] sm:%s793] %v826
                  %v828 = vld [vmem:[%s800 + $0xd0] sm:%s793]
                  %829 = vst [vmem:[%s801 + $0x34] sm:%s793] %v828
                  %v830 = vld [vmem:[%s800 + $0xe0] sm:%s793]
                  %831 = vst [vmem:[%s801 + $0x38] sm:%s793] %v830
                  %v832 = vld [vmem:[%s800 + $0xf0] sm:%s793]
                  %833 = vst [vmem:[%s801 + $0x3c] sm:%s793] %v832
                $region96: #{tpu_custom_call.1} parent=83 // loop_footer
                  %s799 = sadd.s32 1, %s795
                $region97: #{tpu_custom_call.1} parent=83 // loop_footer_branch
                  %794 = sbr.rel target = $region93
                $region98: #{tpu_custom_call.1} parent=83 // loop_exit
                  _
              $region84: #{tpu_custom_call.1} parent=68 // pred_fallthru
                _
            $region69: #{tpu_custom_call.1} parent=64 // pred_fallthru
              _
            // Predicated region
            $region70: #{tpu_custom_call.1} parent=64 // pred_check
              _
            $region71: #{tpu_custom_call.1} parent=64 // pred_check_branch
              %739 = sbr.rel (0) target = $region73
            $region72: #{tpu_custom_call.1} parent=64 // pred_region
              %s741 = ssub.s32 16, 1
              loop: start=0, step=1, limit=1
              $region74: #{tpu_custom_call.1} parent=72 // loop_pre_header
                _
              $region75: #{tpu_custom_call.1} parent=72 // loop_header
                %s743 = sphi 0, %s747
                %p744 = scmp.ge.s32.totalorder %s743, 1
                %s748 = sphi %s733, %s733
                %s749 = sphi %s729, %s729
              $region76: #{tpu_custom_call.1} parent=72 // loop_header_branch
                %746 = sbr.rel (%p744) target = $region80
              $region77: #{tpu_custom_call.1} parent=72 // loop_body
                %v750 = vld [vmem:[%s748] sm:%s741]
                %751 = vst [vmem:[%s749] sm:%s741] %v750
                %v752 = vld [vmem:[%s748 + $0x10] sm:%s741]
                %753 = vst [vmem:[%s749 + $0x4] sm:%s741] %v752
                %v754 = vld [vmem:[%s748 + $0x20] sm:%s741]
                %755 = vst [vmem:[%s749 + $0x8] sm:%s741] %v754
                %v756 = vld [vmem:[%s748 + $0x30] sm:%s741]
                %757 = vst [vmem:[%s749 + $0xc] sm:%s741] %v756
                %v758 = vld [vmem:[%s748 + $0x40] sm:%s741]
                %759 = vst [vmem:[%s749 + $0x10] sm:%s741] %v758
                %v760 = vld [vmem:[%s748 + $0x50] sm:%s741]
                %761 = vst [vmem:[%s749 + $0x14] sm:%s741] %v760
                %v762 = vld [vmem:[%s748 + $0x60] sm:%s741]
                %763 = vst [vmem:[%s749 + $0x18] sm:%s741] %v762
                %v764 = vld [vmem:[%s748 + $0x70] sm:%s741]
                %765 = vst [vmem:[%s749 + $0x1c] sm:%s741] %v764
                %v766 = vld [vmem:[%s748 + $0x80] sm:%s741]
                %767 = vst [vmem:[%s749 + $0x20] sm:%s741] %v766
                %v768 = vld [vmem:[%s748 + $0x90] sm:%s741]
                %769 = vst [vmem:[%s749 + $0x24] sm:%s741] %v768
                %v770 = vld [vmem:[%s748 + $0xa0] sm:%s741]
                %771 = vst [vmem:[%s749 + $0x28] sm:%s741] %v770
                %v772 = vld [vmem:[%s748 + $0xb0] sm:%s741]
                %773 = vst [vmem:[%s749 + $0x2c] sm:%s741] %v772
                %v774 = vld [vmem:[%s748 + $0xc0] sm:%s741]
                %775 = vst [vmem:[%s749 + $0x30] sm:%s741] %v774
                %v776 = vld [vmem:[%s748 + $0xd0] sm:%s741]
                %777 = vst [vmem:[%s749 + $0x34] sm:%s741] %v776
                %v778 = vld [vmem:[%s748 + $0xe0] sm:%s741]
                %779 = vst [vmem:[%s749 + $0x38] sm:%s741] %v778
                %v780 = vld [vmem:[%s748 + $0xf0] sm:%s741]
                %781 = vst [vmem:[%s749 + $0x3c] sm:%s741] %v780
              $region78: #{tpu_custom_call.1} parent=72 // loop_footer
                %s747 = sadd.s32 1, %s743
              $region79: #{tpu_custom_call.1} parent=72 // loop_footer_branch
                %742 = sbr.rel target = $region75
              $region80: #{tpu_custom_call.1} parent=72 // loop_exit
                _
            $region73: #{tpu_custom_call.1} parent=64 // pred_fallthru
              _
          $region65: #{tpu_custom_call.1} parent=60 // pred_fallthru
            _
          %834 = vnop
        $region61: #{tpu_custom_call.1} parent=15 // pred_fallthru
          _
        // Predicated region
        $region99: #{tpu_custom_call.1} parent=15 // pred_check
          %p835 = pneg %p109
        $region100: #{tpu_custom_call.1} parent=15 // pred_check_branch
          %837 = sbr.rel (%p835) target = $region102
        $region101: #{tpu_custom_call.1} parent=15 // pred_region
          %s838 = sand.u32 %s99, 1
          %s839 = sand.u32 %s99, 1
          %s840 = smul.addr %s839, 64
          %s841 = scalar_lea.vmem [#allocation7], %s840
          %s842 = smul.addr %s19, 64
          %s843 = sadd.s32 %s21, %s842
          %s844 = smul.addr %s843, 4
          %s845 = scalar_lea.vmem %s2, %s844
          // Predicated region
          $region103: #{tpu_custom_call.1} parent=101 // pred_check
            _
          $region104: #{tpu_custom_call.1} parent=101 // pred_check_branch
            %847 = sbr.rel (0) target = $region106
          $region105: #{tpu_custom_call.1} parent=101 // pred_region
            // Predicated region
            $region107: #{tpu_custom_call.1} parent=105 // pred_check
              _
            $region108: #{tpu_custom_call.1} parent=105 // pred_check_branch
              %849 = sbr.rel target = $region110
            $region109: #{tpu_custom_call.1} parent=105 // pred_region
              // Predicated region
              $region122: #{tpu_custom_call.1} parent=109 // pred_check
                _
              $region123: #{tpu_custom_call.1} parent=109 // pred_check_branch
                %895 = sbr.rel (0) target = $region125
              $region124: #{tpu_custom_call.1} parent=109 // pred_region
                loop: start=0, step=1, limit=1
                $region126: #{tpu_custom_call.1} parent=124 // loop_pre_header
                  _
                $region127: #{tpu_custom_call.1} parent=124 // loop_header
                  %s897 = sphi 0, %s901
                  %p898 = scmp.ge.s32.totalorder %s897, 1
                  %s902 = sphi %s845, %s845
                  %s903 = sphi %s841, %s841
                $region128: #{tpu_custom_call.1} parent=124 // loop_header_branch
                  %900 = sbr.rel (%p898) target = $region132
                $region129: #{tpu_custom_call.1} parent=124 // loop_body
                  _
                $region130: #{tpu_custom_call.1} parent=124 // loop_footer
                  %s901 = sadd.s32 1, %s897
                $region131: #{tpu_custom_call.1} parent=124 // loop_footer_branch
                  %896 = sbr.rel target = $region127
                $region132: #{tpu_custom_call.1} parent=124 // loop_exit
                  _
                %s905 = ssub.s32 16, 1
                loop: start=0, step=1, limit=1
                $region133: #{tpu_custom_call.1} parent=124 // loop_pre_header
                  _
                $region134: #{tpu_custom_call.1} parent=124 // loop_header
                  %s907 = sphi 0, %s911
                  %p908 = scmp.ge.s32.totalorder %s907, 1
                  %s912 = sphi %s845, %s845
                  %s913 = sphi %s841, %s841
                $region135: #{tpu_custom_call.1} parent=124 // loop_header_branch
                  %910 = sbr.rel (%p908) target = $region139
                $region136: #{tpu_custom_call.1} parent=124 // loop_body
                  %v914 = vld [vmem:[%s912] sm:%s905]
                  %915 = vst [vmem:[%s913] sm:%s905] %v914
                  %v916 = vld [vmem:[%s912 + $0x10] sm:%s905]
                  %917 = vst [vmem:[%s913 + $0x4] sm:%s905] %v916
                  %v918 = vld [vmem:[%s912 + $0x20] sm:%s905]
                  %919 = vst [vmem:[%s913 + $0x8] sm:%s905] %v918
                  %v920 = vld [vmem:[%s912 + $0x30] sm:%s905]
                  %921 = vst [vmem:[%s913 + $0xc] sm:%s905] %v920
                  %v922 = vld [vmem:[%s912 + $0x40] sm:%s905]
                  %923 = vst [vmem:[%s913 + $0x10] sm:%s905] %v922
                  %v924 = vld [vmem:[%s912 + $0x50] sm:%s905]
                  %925 = vst [vmem:[%s913 + $0x14] sm:%s905] %v924
                  %v926 = vld [vmem:[%s912 + $0x60] sm:%s905]
                  %927 = vst [vmem:[%s913 + $0x18] sm:%s905] %v926
                  %v928 = vld [vmem:[%s912 + $0x70] sm:%s905]
                  %929 = vst [vmem:[%s913 + $0x1c] sm:%s905] %v928
                  %v930 = vld [vmem:[%s912 + $0x80] sm:%s905]
                  %931 = vst [vmem:[%s913 + $0x20] sm:%s905] %v930
                  %v932 = vld [vmem:[%s912 + $0x90] sm:%s905]
                  %933 = vst [vmem:[%s913 + $0x24] sm:%s905] %v932
                  %v934 = vld [vmem:[%s912 + $0xa0] sm:%s905]
                  %935 = vst [vmem:[%s913 + $0x28] sm:%s905] %v934
                  %v936 = vld [vmem:[%s912 + $0xb0] sm:%s905]
                  %937 = vst [vmem:[%s913 + $0x2c] sm:%s905] %v936
                  %v938 = vld [vmem:[%s912 + $0xc0] sm:%s905]
                  %939 = vst [vmem:[%s913 + $0x30] sm:%s905] %v938
                  %v940 = vld [vmem:[%s912 + $0xd0] sm:%s905]
                  %941 = vst [vmem:[%s913 + $0x34] sm:%s905] %v940
                  %v942 = vld [vmem:[%s912 + $0xe0] sm:%s905]
                  %943 = vst [vmem:[%s913 + $0x38] sm:%s905] %v942
                  %v944 = vld [vmem:[%s912 + $0xf0] sm:%s905]
                  %945 = vst [vmem:[%s913 + $0x3c] sm:%s905] %v944
                $region137: #{tpu_custom_call.1} parent=124 // loop_footer
                  %s911 = sadd.s32 1, %s907
                $region138: #{tpu_custom_call.1} parent=124 // loop_footer_branch
                  %906 = sbr.rel target = $region134
                $region139: #{tpu_custom_call.1} parent=124 // loop_exit
                  _
              $region125: #{tpu_custom_call.1} parent=109 // pred_fallthru
                _
            $region110: #{tpu_custom_call.1} parent=105 // pred_fallthru
              _
            // Predicated region
            $region111: #{tpu_custom_call.1} parent=105 // pred_check
              _
            $region112: #{tpu_custom_call.1} parent=105 // pred_check_branch
              %851 = sbr.rel (0) target = $region114
            $region113: #{tpu_custom_call.1} parent=105 // pred_region
              %s853 = ssub.s32 16, 1
              loop: start=0, step=1, limit=1
              $region115: #{tpu_custom_call.1} parent=113 // loop_pre_header
                _
              $region116: #{tpu_custom_call.1} parent=113 // loop_header
                %s855 = sphi 0, %s859
                %p856 = scmp.ge.s32.totalorder %s855, 1
                %s860 = sphi %s845, %s845
                %s861 = sphi %s841, %s841
              $region117: #{tpu_custom_call.1} parent=113 // loop_header_branch
                %858 = sbr.rel (%p856) target = $region121
              $region118: #{tpu_custom_call.1} parent=113 // loop_body
                %v862 = vld [vmem:[%s860] sm:%s853]
                %863 = vst [vmem:[%s861] sm:%s853] %v862
                %v864 = vld [vmem:[%s860 + $0x10] sm:%s853]
                %865 = vst [vmem:[%s861 + $0x4] sm:%s853] %v864
                %v866 = vld [vmem:[%s860 + $0x20] sm:%s853]
                %867 = vst [vmem:[%s861 + $0x8] sm:%s853] %v866
                %v868 = vld [vmem:[%s860 + $0x30] sm:%s853]
                %869 = vst [vmem:[%s861 + $0xc] sm:%s853] %v868
                %v870 = vld [vmem:[%s860 + $0x40] sm:%s853]
                %871 = vst [vmem:[%s861 + $0x10] sm:%s853] %v870
                %v872 = vld [vmem:[%s860 + $0x50] sm:%s853]
                %873 = vst [vmem:[%s861 + $0x14] sm:%s853] %v872
                %v874 = vld [vmem:[%s860 + $0x60] sm:%s853]
                %875 = vst [vmem:[%s861 + $0x18] sm:%s853] %v874
                %v876 = vld [vmem:[%s860 + $0x70] sm:%s853]
                %877 = vst [vmem:[%s861 + $0x1c] sm:%s853] %v876
                %v878 = vld [vmem:[%s860 + $0x80] sm:%s853]
                %879 = vst [vmem:[%s861 + $0x20] sm:%s853] %v878
                %v880 = vld [vmem:[%s860 + $0x90] sm:%s853]
                %881 = vst [vmem:[%s861 + $0x24] sm:%s853] %v880
                %v882 = vld [vmem:[%s860 + $0xa0] sm:%s853]
                %883 = vst [vmem:[%s861 + $0x28] sm:%s853] %v882
                %v884 = vld [vmem:[%s860 + $0xb0] sm:%s853]
                %885 = vst [vmem:[%s861 + $0x2c] sm:%s853] %v884
                %v886 = vld [vmem:[%s860 + $0xc0] sm:%s853]
                %887 = vst [vmem:[%s861 + $0x30] sm:%s853] %v886
                %v888 = vld [vmem:[%s860 + $0xd0] sm:%s853]
                %889 = vst [vmem:[%s861 + $0x34] sm:%s853] %v888
                %v890 = vld [vmem:[%s860 + $0xe0] sm:%s853]
                %891 = vst [vmem:[%s861 + $0x38] sm:%s853] %v890
                %v892 = vld [vmem:[%s860 + $0xf0] sm:%s853]
                %893 = vst [vmem:[%s861 + $0x3c] sm:%s853] %v892
              $region119: #{tpu_custom_call.1} parent=113 // loop_footer
                %s859 = sadd.s32 1, %s855
              $region120: #{tpu_custom_call.1} parent=113 // loop_footer_branch
                %854 = sbr.rel target = $region116
              $region121: #{tpu_custom_call.1} parent=113 // loop_exit
                _
            $region114: #{tpu_custom_call.1} parent=105 // pred_fallthru
              _
          $region106: #{tpu_custom_call.1} parent=101 // pred_fallthru
            _
          %946 = vnop
        $region102: #{tpu_custom_call.1} parent=15 // pred_fallthru
          _
      $region16: #{tpu_custom_call.1} parent=5 // pred_fallthru
        _
      %p947 = scmp.le.s32.totalorder 1, %s12
      %p948 = scmp.lt.s32.totalorder %s12, 17
      %p949 = pnand %p947, %p948
      %p950 = pneg %p949
      // Predicated region
      $region140: #{tpu_custom_call.1} parent=5 // pred_check
        _
      $region141: #{tpu_custom_call.1} parent=5 // pred_check_branch
        %952 = sbr.rel (%p949) target = $region143
      $region142: #{tpu_custom_call.1} parent=5 // pred_region
        %s953 = ssub.s32 %s12, 1
        %s954 = sand.u32 %s46, 1
        %s955 = sand.u32 %s46, 1
        %s956 = smul.addr %s955, 512
        %s957 = scalar_lea.vmem [#allocation5], %s956
        // Predicated region
        $region144: #{tpu_custom_call.1} parent=142 // pred_check
          %p958 = pneg %p59
        $region145: #{tpu_custom_call.1} parent=142 // pred_check_branch
          %960 = sbr.rel (%p958) target = $region147
        $region146: #{tpu_custom_call.1} parent=142 // pred_region
          _
        $region147: #{tpu_custom_call.1} parent=142 // pred_fallthru
          _
        %s961 = sand.u32 %s74, 1
        %s962 = sand.u32 %s74, 1
        %s963 = smul.addr %s962, 64
        %s964 = scalar_lea.vmem [#allocation6], %s963
        // Predicated region
        $region148: #{tpu_custom_call.1} parent=142 // pred_check
          %p965 = pneg %p87
        $region149: #{tpu_custom_call.1} parent=142 // pred_check_branch
          %967 = sbr.rel (%p965) target = $region151
        $region150: #{tpu_custom_call.1} parent=142 // pred_region
          _
        $region151: #{tpu_custom_call.1} parent=142 // pred_fallthru
          _
        %s968 = sand.u32 %s102, 1
        %s969 = sand.u32 %s102, 1
        %s970 = smul.addr %s969, 64
        %s971 = scalar_lea.vmem [#allocation7], %s970
        // Predicated region
        $region152: #{tpu_custom_call.1} parent=142 // pred_check
          %p972 = pneg %p115
        $region153: #{tpu_custom_call.1} parent=142 // pred_check_branch
          %974 = sbr.rel (%p972) target = $region155
        $region154: #{tpu_custom_call.1} parent=142 // pred_region
          _
        $region155: #{tpu_custom_call.1} parent=142 // pred_fallthru
          _
        %s975 = sand.u32 %s46, 1
        %s976 = sand.u32 %s46, 1
        %s977 = smul.addr %s976, 512
        %s978 = scalar_lea.vmem [#allocation5], %s977
        %p979 = pneg %p59
        %p980 = pneg %p56
        %s981 = sand.u32 %s74, 1
        %s982 = sand.u32 %s74, 1
        %s983 = smul.addr %s982, 64
        %s984 = scalar_lea.vmem [#allocation6], %s983
        %p985 = pneg %p87
        %p986 = pneg %p84
        %s987 = sand.u32 %s102, 1
        %s988 = sand.u32 %s102, 1
        %s989 = smul.addr %s988, 64
        %s990 = scalar_lea.vmem [#allocation7], %s989
        %p991 = pneg %p115
        %p992 = pneg %p112
        %p993 = pneg %p143
        %p994 = pneg %p140
        %s995 = sand.u32 %s130, 1
        %s996 = scalar_lea.sflag [#allocation9], %s995
        %s997 = sand.u32 %s130, 1
        %s998 = smul.addr %s997, 128
        %s999 = scalar_lea.vmem [#allocation8], %s998
        %s1000 = smul.u32 32, %s23
        %s1001 = smul.u32 32, %s23
        %p1003 = scmp.eq.s32.totalorder %s24, 0
        // Predicated region
        $region156: #{tpu_custom_call.1} parent=142 // pred_check
          %p1004 = pneg %p1003
        $region157: #{tpu_custom_call.1} parent=142 // pred_check_branch
          %1006 = sbr.rel (%p1004) target = $region159
        $region158: #{tpu_custom_call.1} parent=142 // pred_region
          %vm1007 = vcmask 7168
          %1008 = vst.msk [vmem:[#allocation2] sm:$0xff] %vm1007, -inf
          %1009 = vst.msk [vmem:[#allocation2 + $0x8] sm:$0xff] %vm1007, -inf
          %1010 = vst.msk [vmem:[#allocation2 + $0x10] sm:$0xff] %vm1007, -inf
          %1011 = vst.msk [vmem:[#allocation2 + $0x18] sm:$0xff] %vm1007, -inf
          %1012 = vst.msk [vmem:[#allocation2 + $0x20] sm:$0xff] %vm1007, -inf
          %1013 = vst.msk [vmem:[#allocation2 + $0x28] sm:$0xff] %vm1007, -inf
          %1014 = vst.msk [vmem:[#allocation2 + $0x30] sm:$0xff] %vm1007, -inf
          %1015 = vst.msk [vmem:[#allocation2 + $0x38] sm:$0xff] %vm1007, -inf
          %1016 = vst.msk [vmem:[#allocation2 + $0x40] sm:$0xff] %vm1007, -inf
          %1017 = vst.msk [vmem:[#allocation2 + $0x48] sm:$0xff] %vm1007, -inf
          %1018 = vst.msk [vmem:[#allocation2 + $0x50] sm:$0xff] %vm1007, -inf
          %1019 = vst.msk [vmem:[#allocation2 + $0x58] sm:$0xff] %vm1007, -inf
          %1020 = vst.msk [vmem:[#allocation2 + $0x60] sm:$0xff] %vm1007, -inf
          %1021 = vst.msk [vmem:[#allocation2 + $0x68] sm:$0xff] %vm1007, -inf
          %1022 = vst.msk [vmem:[#allocation2 + $0x70] sm:$0xff] %vm1007, -inf
          %1023 = vst.msk [vmem:[#allocation2 + $0x78] sm:$0xff] %vm1007, -inf
          %1024 = vst.msk [vmem:[#allocation2 + $0x80] sm:$0xff] %vm1007, -inf
          %1025 = vst.msk [vmem:[#allocation2 + $0x88] sm:$0xff] %vm1007, -inf
          %1026 = vst.msk [vmem:[#allocation2 + $0x90] sm:$0xff] %vm1007, -inf
          %1027 = vst.msk [vmem:[#allocation2 + $0x98] sm:$0xff] %vm1007, -inf
          %1028 = vst.msk [vmem:[#allocation2 + $0xa0] sm:$0xff] %vm1007, -inf
          %1029 = vst.msk [vmem:[#allocation2 + $0xa8] sm:$0xff] %vm1007, -inf
          %1030 = vst.msk [vmem:[#allocation2 + $0xb0] sm:$0xff] %vm1007, -inf
          %1031 = vst.msk [vmem:[#allocation2 + $0xb8] sm:$0xff] %vm1007, -inf
          %1032 = vst.msk [vmem:[#allocation2 + $0xc0] sm:$0xff] %vm1007, -inf
          %1033 = vst.msk [vmem:[#allocation2 + $0xc8] sm:$0xff] %vm1007, -inf
          %1034 = vst.msk [vmem:[#allocation2 + $0xd0] sm:$0xff] %vm1007, -inf
          %1035 = vst.msk [vmem:[#allocation2 + $0xd8] sm:$0xff] %vm1007, -inf
          %1036 = vst.msk [vmem:[#allocation2 + $0xe0] sm:$0xff] %vm1007, -inf
          %1037 = vst.msk [vmem:[#allocation2 + $0xe8] sm:$0xff] %vm1007, -inf
          %1038 = vst.msk [vmem:[#allocation2 + $0xf0] sm:$0xff] %vm1007, -inf
          %1039 = vst.msk [vmem:[#allocation2 + $0xf8] sm:$0xff] %vm1007, -inf
          %1040 = vst.msk [vmem:[#allocation2 + $0x100] sm:$0xff] %vm1007, -inf
          %1041 = vst.msk [vmem:[#allocation2 + $0x108] sm:$0xff] %vm1007, -inf
          %1042 = vst.msk [vmem:[#allocation2 + $0x110] sm:$0xff] %vm1007, -inf
          %1043 = vst.msk [vmem:[#allocation2 + $0x118] sm:$0xff] %vm1007, -inf
          %1044 = vst.msk [vmem:[#allocation2 + $0x120] sm:$0xff] %vm1007, -inf
          %1045 = vst.msk [vmem:[#allocation2 + $0x128] sm:$0xff] %vm1007, -inf
          %1046 = vst.msk [vmem:[#allocation2 + $0x130] sm:$0xff] %vm1007, -inf
          %1047 = vst.msk [vmem:[#allocation2 + $0x138] sm:$0xff] %vm1007, -inf
          %1048 = vst.msk [vmem:[#allocation2 + $0x140] sm:$0xff] %vm1007, -inf
          %1049 = vst.msk [vmem:[#allocation2 + $0x148] sm:$0xff] %vm1007, -inf
          %1050 = vst.msk [vmem:[#allocation2 + $0x150] sm:$0xff] %vm1007, -inf
          %1051 = vst.msk [vmem:[#allocation2 + $0x158] sm:$0xff] %vm1007, -inf
          %1052 = vst.msk [vmem:[#allocation2 + $0x160] sm:$0xff] %vm1007, -inf
          %1053 = vst.msk [vmem:[#allocation2 + $0x168] sm:$0xff] %vm1007, -inf
          %1054 = vst.msk [vmem:[#allocation2 + $0x170] sm:$0xff] %vm1007, -inf
          %1055 = vst.msk [vmem:[#allocation2 + $0x178] sm:$0xff] %vm1007, -inf
          %1056 = vst.msk [vmem:[#allocation2 + $0x180] sm:$0xff] %vm1007, -inf
          %1057 = vst.msk [vmem:[#allocation2 + $0x188] sm:$0xff] %vm1007, -inf
          %1058 = vst.msk [vmem:[#allocation2 + $0x190] sm:$0xff] %vm1007, -inf
          %1059 = vst.msk [vmem:[#allocation2 + $0x198] sm:$0xff] %vm1007, -inf
          %1060 = vst.msk [vmem:[#allocation2 + $0x1a0] sm:$0xff] %vm1007, -inf
          %1061 = vst.msk [vmem:[#allocation2 + $0x1a8] sm:$0xff] %vm1007, -inf
          %1062 = vst.msk [vmem:[#allocation2 + $0x1b0] sm:$0xff] %vm1007, -inf
          %1063 = vst.msk [vmem:[#allocation2 + $0x1b8] sm:$0xff] %vm1007, -inf
          %1064 = vst.msk [vmem:[#allocation2 + $0x1c0] sm:$0xff] %vm1007, -inf
          %1065 = vst.msk [vmem:[#allocation2 + $0x1c8] sm:$0xff] %vm1007, -inf
          %1066 = vst.msk [vmem:[#allocation2 + $0x1d0] sm:$0xff] %vm1007, -inf
          %1067 = vst.msk [vmem:[#allocation2 + $0x1d8] sm:$0xff] %vm1007, -inf
          %1068 = vst.msk [vmem:[#allocation2 + $0x1e0] sm:$0xff] %vm1007, -inf
          %1069 = vst.msk [vmem:[#allocation2 + $0x1e8] sm:$0xff] %vm1007, -inf
          %1070 = vst.msk [vmem:[#allocation2 + $0x1f0] sm:$0xff] %vm1007, -inf
          %1071 = vst.msk [vmem:[#allocation2 + $0x1f8] sm:$0xff] %vm1007, -inf
          %1072 = vst.msk [vmem:[#allocation2 + $0x200] sm:$0xff] %vm1007, -inf
          %1073 = vst.msk [vmem:[#allocation2 + $0x208] sm:$0xff] %vm1007, -inf
          %1074 = vst.msk [vmem:[#allocation2 + $0x210] sm:$0xff] %vm1007, -inf
          %1075 = vst.msk [vmem:[#allocation2 + $0x218] sm:$0xff] %vm1007, -inf
          %1076 = vst.msk [vmem:[#allocation2 + $0x220] sm:$0xff] %vm1007, -inf
          %1077 = vst.msk [vmem:[#allocation2 + $0x228] sm:$0xff] %vm1007, -inf
          %1078 = vst.msk [vmem:[#allocation2 + $0x230] sm:$0xff] %vm1007, -inf
          %1079 = vst.msk [vmem:[#allocation2 + $0x238] sm:$0xff] %vm1007, -inf
          %1080 = vst.msk [vmem:[#allocation2 + $0x240] sm:$0xff] %vm1007, -inf
          %1081 = vst.msk [vmem:[#allocation2 + $0x248] sm:$0xff] %vm1007, -inf
          %1082 = vst.msk [vmem:[#allocation2 + $0x250] sm:$0xff] %vm1007, -inf
          %1083 = vst.msk [vmem:[#allocation2 + $0x258] sm:$0xff] %vm1007, -inf
          %1084 = vst.msk [vmem:[#allocation2 + $0x260] sm:$0xff] %vm1007, -inf
          %1085 = vst.msk [vmem:[#allocation2 + $0x268] sm:$0xff] %vm1007, -inf
          %1086 = vst.msk [vmem:[#allocation2 + $0x270] sm:$0xff] %vm1007, -inf
          %1087 = vst.msk [vmem:[#allocation2 + $0x278] sm:$0xff] %vm1007, -inf
          %1088 = vst.msk [vmem:[#allocation2 + $0x280] sm:$0xff] %vm1007, -inf
          %1089 = vst.msk [vmem:[#allocation2 + $0x288] sm:$0xff] %vm1007, -inf
          %1090 = vst.msk [vmem:[#allocation2 + $0x290] sm:$0xff] %vm1007, -inf
          %1091 = vst.msk [vmem:[#allocation2 + $0x298] sm:$0xff] %vm1007, -inf
          %1092 = vst.msk [vmem:[#allocation2 + $0x2a0] sm:$0xff] %vm1007, -inf
          %1093 = vst.msk [vmem:[#allocation2 + $0x2a8] sm:$0xff] %vm1007, -inf
          %1094 = vst.msk [vmem:[#allocation2 + $0x2b0] sm:$0xff] %vm1007, -inf
          %1095 = vst.msk [vmem:[#allocation2 + $0x2b8] sm:$0xff] %vm1007, -inf
          %1096 = vst.msk [vmem:[#allocation2 + $0x2c0] sm:$0xff] %vm1007, -inf
          %1097 = vst.msk [vmem:[#allocation2 + $0x2c8] sm:$0xff] %vm1007, -inf
          %1098 = vst.msk [vmem:[#allocation2 + $0x2d0] sm:$0xff] %vm1007, -inf
          %1099 = vst.msk [vmem:[#allocation2 + $0x2d8] sm:$0xff] %vm1007, -inf
          %1100 = vst.msk [vmem:[#allocation2 + $0x2e0] sm:$0xff] %vm1007, -inf
          %1101 = vst.msk [vmem:[#allocation2 + $0x2e8] sm:$0xff] %vm1007, -inf
          %1102 = vst.msk [vmem:[#allocation2 + $0x2f0] sm:$0xff] %vm1007, -inf
          %1103 = vst.msk [vmem:[#allocation2 + $0x2f8] sm:$0xff] %vm1007, -inf
          %1104 = vst.msk [vmem:[#allocation2 + $0x300] sm:$0xff] %vm1007, -inf
          %1105 = vst.msk [vmem:[#allocation2 + $0x308] sm:$0xff] %vm1007, -inf
          %1106 = vst.msk [vmem:[#allocation2 + $0x310] sm:$0xff] %vm1007, -inf
          %1107 = vst.msk [vmem:[#allocation2 + $0x318] sm:$0xff] %vm1007, -inf
          %1108 = vst.msk [vmem:[#allocation2 + $0x320] sm:$0xff] %vm1007, -inf
          %1109 = vst.msk [vmem:[#allocation2 + $0x328] sm:$0xff] %vm1007, -inf
          %1110 = vst.msk [vmem:[#allocation2 + $0x330] sm:$0xff] %vm1007, -inf
          %1111 = vst.msk [vmem:[#allocation2 + $0x338] sm:$0xff] %vm1007, -inf
          %1112 = vst.msk [vmem:[#allocation2 + $0x340] sm:$0xff] %vm1007, -inf
          %1113 = vst.msk [vmem:[#allocation2 + $0x348] sm:$0xff] %vm1007, -inf
          %1114 = vst.msk [vmem:[#allocation2 + $0x350] sm:$0xff] %vm1007, -inf
          %1115 = vst.msk [vmem:[#allocation2 + $0x358] sm:$0xff] %vm1007, -inf
          %1116 = vst.msk [vmem:[#allocation2 + $0x360] sm:$0xff] %vm1007, -inf
          %1117 = vst.msk [vmem:[#allocation2 + $0x368] sm:$0xff] %vm1007, -inf
          %1118 = vst.msk [vmem:[#allocation2 + $0x370] sm:$0xff] %vm1007, -inf
          %1119 = vst.msk [vmem:[#allocation2 + $0x378] sm:$0xff] %vm1007, -inf
          %1120 = vst.msk [vmem:[#allocation2 + $0x380] sm:$0xff] %vm1007, -inf
          %1121 = vst.msk [vmem:[#allocation2 + $0x388] sm:$0xff] %vm1007, -inf
          %1122 = vst.msk [vmem:[#allocation2 + $0x390] sm:$0xff] %vm1007, -inf
          %1123 = vst.msk [vmem:[#allocation2 + $0x398] sm:$0xff] %vm1007, -inf
          %1124 = vst.msk [vmem:[#allocation2 + $0x3a0] sm:$0xff] %vm1007, -inf
          %1125 = vst.msk [vmem:[#allocation2 + $0x3a8] sm:$0xff] %vm1007, -inf
          %1126 = vst.msk [vmem:[#allocation2 + $0x3b0] sm:$0xff] %vm1007, -inf
          %1127 = vst.msk [vmem:[#allocation2 + $0x3b8] sm:$0xff] %vm1007, -inf
          %1128 = vst.msk [vmem:[#allocation2 + $0x3c0] sm:$0xff] %vm1007, -inf
          %1129 = vst.msk [vmem:[#allocation2 + $0x3c8] sm:$0xff] %vm1007, -inf
          %1130 = vst.msk [vmem:[#allocation2 + $0x3d0] sm:$0xff] %vm1007, -inf
          %1131 = vst.msk [vmem:[#allocation2 + $0x3d8] sm:$0xff] %vm1007, -inf
          %1132 = vst.msk [vmem:[#allocation2 + $0x3e0] sm:$0xff] %vm1007, -inf
          %1133 = vst.msk [vmem:[#allocation2 + $0x3e8] sm:$0xff] %vm1007, -inf
          %1134 = vst.msk [vmem:[#allocation2 + $0x3f0] sm:$0xff] %vm1007, -inf
          %1135 = vst.msk [vmem:[#allocation2 + $0x3f8] sm:$0xff] %vm1007, -inf
          %1136 = vst.msk [vmem:[#allocation3] sm:$0xff] %vm1007, 0.0
          %1137 = vst.msk [vmem:[#allocation3 + $0x8] sm:$0xff] %vm1007, 0.0
          %1138 = vst.msk [vmem:[#allocation3 + $0x10] sm:$0xff] %vm1007, 0.0
          %1139 = vst.msk [vmem:[#allocation3 + $0x18] sm:$0xff] %vm1007, 0.0
          %1140 = vst.msk [vmem:[#allocation3 + $0x20] sm:$0xff] %vm1007, 0.0
          %1141 = vst.msk [vmem:[#allocation3 + $0x28] sm:$0xff] %vm1007, 0.0
          %1142 = vst.msk [vmem:[#allocation3 + $0x30] sm:$0xff] %vm1007, 0.0
          %1143 = vst.msk [vmem:[#allocation3 + $0x38] sm:$0xff] %vm1007, 0.0
          %1144 = vst.msk [vmem:[#allocation3 + $0x40] sm:$0xff] %vm1007, 0.0
          %1145 = vst.msk [vmem:[#allocation3 + $0x48] sm:$0xff] %vm1007, 0.0
          %1146 = vst.msk [vmem:[#allocation3 + $0x50] sm:$0xff] %vm1007, 0.0
          %1147 = vst.msk [vmem:[#allocation3 + $0x58] sm:$0xff] %vm1007, 0.0
          %1148 = vst.msk [vmem:[#allocation3 + $0x60] sm:$0xff] %vm1007, 0.0
          %1149 = vst.msk [vmem:[#allocation3 + $0x68] sm:$0xff] %vm1007, 0.0
          %1150 = vst.msk [vmem:[#allocation3 + $0x70] sm:$0xff] %vm1007, 0.0
          %1151 = vst.msk [vmem:[#allocation3 + $0x78] sm:$0xff] %vm1007, 0.0
          %1152 = vst.msk [vmem:[#allocation3 + $0x80] sm:$0xff] %vm1007, 0.0
          %1153 = vst.msk [vmem:[#allocation3 + $0x88] sm:$0xff] %vm1007, 0.0
          %1154 = vst.msk [vmem:[#allocation3 + $0x90] sm:$0xff] %vm1007, 0.0
          %1155 = vst.msk [vmem:[#allocation3 + $0x98] sm:$0xff] %vm1007, 0.0
          %1156 = vst.msk [vmem:[#allocation3 + $0xa0] sm:$0xff] %vm1007, 0.0
          %1157 = vst.msk [vmem:[#allocation3 + $0xa8] sm:$0xff] %vm1007, 0.0
          %1158 = vst.msk [vmem:[#allocation3 + $0xb0] sm:$0xff] %vm1007, 0.0
          %1159 = vst.msk [vmem:[#allocation3 + $0xb8] sm:$0xff] %vm1007, 0.0
          %1160 = vst.msk [vmem:[#allocation3 + $0xc0] sm:$0xff] %vm1007, 0.0
          %1161 = vst.msk [vmem:[#allocation3 + $0xc8] sm:$0xff] %vm1007, 0.0
          %1162 = vst.msk [vmem:[#allocation3 + $0xd0] sm:$0xff] %vm1007, 0.0
          %1163 = vst.msk [vmem:[#allocation3 + $0xd8] sm:$0xff] %vm1007, 0.0
          %1164 = vst.msk [vmem:[#allocation3 + $0xe0] sm:$0xff] %vm1007, 0.0
          %1165 = vst.msk [vmem:[#allocation3 + $0xe8] sm:$0xff] %vm1007, 0.0
          %1166 = vst.msk [vmem:[#allocation3 + $0xf0] sm:$0xff] %vm1007, 0.0
          %1167 = vst.msk [vmem:[#allocation3 + $0xf8] sm:$0xff] %vm1007, 0.0
          %1168 = vst.msk [vmem:[#allocation3 + $0x100] sm:$0xff] %vm1007, 0.0
          %1169 = vst.msk [vmem:[#allocation3 + $0x108] sm:$0xff] %vm1007, 0.0
          %1170 = vst.msk [vmem:[#allocation3 + $0x110] sm:$0xff] %vm1007, 0.0
          %1171 = vst.msk [vmem:[#allocation3 + $0x118] sm:$0xff] %vm1007, 0.0
          %1172 = vst.msk [vmem:[#allocation3 + $0x120] sm:$0xff] %vm1007, 0.0
          %1173 = vst.msk [vmem:[#allocation3 + $0x128] sm:$0xff] %vm1007, 0.0
          %1174 = vst.msk [vmem:[#allocation3 + $0x130] sm:$0xff] %vm1007, 0.0
          %1175 = vst.msk [vmem:[#allocation3 + $0x138] sm:$0xff] %vm1007, 0.0
          %1176 = vst.msk [vmem:[#allocation3 + $0x140] sm:$0xff] %vm1007, 0.0
          %1177 = vst.msk [vmem:[#allocation3 + $0x148] sm:$0xff] %vm1007, 0.0
          %1178 = vst.msk [vmem:[#allocation3 + $0x150] sm:$0xff] %vm1007, 0.0
          %1179 = vst.msk [vmem:[#allocation3 + $0x158] sm:$0xff] %vm1007, 0.0
          %1180 = vst.msk [vmem:[#allocation3 + $0x160] sm:$0xff] %vm1007, 0.0
          %1181 = vst.msk [vmem:[#allocation3 + $0x168] sm:$0xff] %vm1007, 0.0
          %1182 = vst.msk [vmem:[#allocation3 + $0x170] sm:$0xff] %vm1007, 0.0
          %1183 = vst.msk [vmem:[#allocation3 + $0x178] sm:$0xff] %vm1007, 0.0
          %1184 = vst.msk [vmem:[#allocation3 + $0x180] sm:$0xff] %vm1007, 0.0
          %1185 = vst.msk [vmem:[#allocation3 + $0x188] sm:$0xff] %vm1007, 0.0
          %1186 = vst.msk [vmem:[#allocation3 + $0x190] sm:$0xff] %vm1007, 0.0
          %1187 = vst.msk [vmem:[#allocation3 + $0x198] sm:$0xff] %vm1007, 0.0
          %1188 = vst.msk [vmem:[#allocation3 + $0x1a0] sm:$0xff] %vm1007, 0.0
          %1189 = vst.msk [vmem:[#allocation3 + $0x1a8] sm:$0xff] %vm1007, 0.0
          %1190 = vst.msk [vmem:[#allocation3 + $0x1b0] sm:$0xff] %vm1007, 0.0
          %1191 = vst.msk [vmem:[#allocation3 + $0x1b8] sm:$0xff] %vm1007, 0.0
          %1192 = vst.msk [vmem:[#allocation3 + $0x1c0] sm:$0xff] %vm1007, 0.0
          %1193 = vst.msk [vmem:[#allocation3 + $0x1c8] sm:$0xff] %vm1007, 0.0
          %1194 = vst.msk [vmem:[#allocation3 + $0x1d0] sm:$0xff] %vm1007, 0.0
          %1195 = vst.msk [vmem:[#allocation3 + $0x1d8] sm:$0xff] %vm1007, 0.0
          %1196 = vst.msk [vmem:[#allocation3 + $0x1e0] sm:$0xff] %vm1007, 0.0
          %1197 = vst.msk [vmem:[#allocation3 + $0x1e8] sm:$0xff] %vm1007, 0.0
          %1198 = vst.msk [vmem:[#allocation3 + $0x1f0] sm:$0xff] %vm1007, 0.0
          %1199 = vst.msk [vmem:[#allocation3 + $0x1f8] sm:$0xff] %vm1007, 0.0
          %1200 = vst.msk [vmem:[#allocation3 + $0x200] sm:$0xff] %vm1007, 0.0
          %1201 = vst.msk [vmem:[#allocation3 + $0x208] sm:$0xff] %vm1007, 0.0
          %1202 = vst.msk [vmem:[#allocation3 + $0x210] sm:$0xff] %vm1007, 0.0
          %1203 = vst.msk [vmem:[#allocation3 + $0x218] sm:$0xff] %vm1007, 0.0
          %1204 = vst.msk [vmem:[#allocation3 + $0x220] sm:$0xff] %vm1007, 0.0
          %1205 = vst.msk [vmem:[#allocation3 + $0x228] sm:$0xff] %vm1007, 0.0
          %1206 = vst.msk [vmem:[#allocation3 + $0x230] sm:$0xff] %vm1007, 0.0
          %1207 = vst.msk [vmem:[#allocation3 + $0x238] sm:$0xff] %vm1007, 0.0
          %1208 = vst.msk [vmem:[#allocation3 + $0x240] sm:$0xff] %vm1007, 0.0
          %1209 = vst.msk [vmem:[#allocation3 + $0x248] sm:$0xff] %vm1007, 0.0
          %1210 = vst.msk [vmem:[#allocation3 + $0x250] sm:$0xff] %vm1007, 0.0
          %1211 = vst.msk [vmem:[#allocation3 + $0x258] sm:$0xff] %vm1007, 0.0
          %1212 = vst.msk [vmem:[#allocation3 + $0x260] sm:$0xff] %vm1007, 0.0
          %1213 = vst.msk [vmem:[#allocation3 + $0x268] sm:$0xff] %vm1007, 0.0
          %1214 = vst.msk [vmem:[#allocation3 + $0x270] sm:$0xff] %vm1007, 0.0
          %1215 = vst.msk [vmem:[#allocation3 + $0x278] sm:$0xff] %vm1007, 0.0
          %1216 = vst.msk [vmem:[#allocation3 + $0x280] sm:$0xff] %vm1007, 0.0
          %1217 = vst.msk [vmem:[#allocation3 + $0x288] sm:$0xff] %vm1007, 0.0
          %1218 = vst.msk [vmem:[#allocation3 + $0x290] sm:$0xff] %vm1007, 0.0
          %1219 = vst.msk [vmem:[#allocation3 + $0x298] sm:$0xff] %vm1007, 0.0
          %1220 = vst.msk [vmem:[#allocation3 + $0x2a0] sm:$0xff] %vm1007, 0.0
          %1221 = vst.msk [vmem:[#allocation3 + $0x2a8] sm:$0xff] %vm1007, 0.0
          %1222 = vst.msk [vmem:[#allocation3 + $0x2b0] sm:$0xff] %vm1007, 0.0
          %1223 = vst.msk [vmem:[#allocation3 + $0x2b8] sm:$0xff] %vm1007, 0.0
          %1224 = vst.msk [vmem:[#allocation3 + $0x2c0] sm:$0xff] %vm1007, 0.0
          %1225 = vst.msk [vmem:[#allocation3 + $0x2c8] sm:$0xff] %vm1007, 0.0
          %1226 = vst.msk [vmem:[#allocation3 + $0x2d0] sm:$0xff] %vm1007, 0.0
          %1227 = vst.msk [vmem:[#allocation3 + $0x2d8] sm:$0xff] %vm1007, 0.0
          %1228 = vst.msk [vmem:[#allocation3 + $0x2e0] sm:$0xff] %vm1007, 0.0
          %1229 = vst.msk [vmem:[#allocation3 + $0x2e8] sm:$0xff] %vm1007, 0.0
          %1230 = vst.msk [vmem:[#allocation3 + $0x2f0] sm:$0xff] %vm1007, 0.0
          %1231 = vst.msk [vmem:[#allocation3 + $0x2f8] sm:$0xff] %vm1007, 0.0
          %1232 = vst.msk [vmem:[#allocation3 + $0x300] sm:$0xff] %vm1007, 0.0
          %1233 = vst.msk [vmem:[#allocation3 + $0x308] sm:$0xff] %vm1007, 0.0
          %1234 = vst.msk [vmem:[#allocation3 + $0x310] sm:$0xff] %vm1007, 0.0
          %1235 = vst.msk [vmem:[#allocation3 + $0x318] sm:$0xff] %vm1007, 0.0
          %1236 = vst.msk [vmem:[#allocation3 + $0x320] sm:$0xff] %vm1007, 0.0
          %1237 = vst.msk [vmem:[#allocation3 + $0x328] sm:$0xff] %vm1007, 0.0
          %1238 = vst.msk [vmem:[#allocation3 + $0x330] sm:$0xff] %vm1007, 0.0
          %1239 = vst.msk [vmem:[#allocation3 + $0x338] sm:$0xff] %vm1007, 0.0
          %1240 = vst.msk [vmem:[#allocation3 + $0x340] sm:$0xff] %vm1007, 0.0
          %1241 = vst.msk [vmem:[#allocation3 + $0x348] sm:$0xff] %vm1007, 0.0
          %1242 = vst.msk [vmem:[#allocation3 + $0x350] sm:$0xff] %vm1007, 0.0
          %1243 = vst.msk [vmem:[#allocation3 + $0x358] sm:$0xff] %vm1007, 0.0
          %1244 = vst.msk [vmem:[#allocation3 + $0x360] sm:$0xff] %vm1007, 0.0
          %1245 = vst.msk [vmem:[#allocation3 + $0x368] sm:$0xff] %vm1007, 0.0
          %1246 = vst.msk [vmem:[#allocation3 + $0x370] sm:$0xff] %vm1007, 0.0
          %1247 = vst.msk [vmem:[#allocation3 + $0x378] sm:$0xff] %vm1007, 0.0
          %1248 = vst.msk [vmem:[#allocation3 + $0x380] sm:$0xff] %vm1007, 0.0
          %1249 = vst.msk [vmem:[#allocation3 + $0x388] sm:$0xff] %vm1007, 0.0
          %1250 = vst.msk [vmem:[#allocation3 + $0x390] sm:$0xff] %vm1007, 0.0
          %1251 = vst.msk [vmem:[#allocation3 + $0x398] sm:$0xff] %vm1007, 0.0
          %1252 = vst.msk [vmem:[#allocation3 + $0x3a0] sm:$0xff] %vm1007, 0.0
          %1253 = vst.msk [vmem:[#allocation3 + $0x3a8] sm:$0xff] %vm1007, 0.0
          %1254 = vst.msk [vmem:[#allocation3 + $0x3b0] sm:$0xff] %vm1007, 0.0
          %1255 = vst.msk [vmem:[#allocation3 + $0x3b8] sm:$0xff] %vm1007, 0.0
          %1256 = vst.msk [vmem:[#allocation3 + $0x3c0] sm:$0xff] %vm1007, 0.0
          %1257 = vst.msk [vmem:[#allocation3 + $0x3c8] sm:$0xff] %vm1007, 0.0
          %1258 = vst.msk [vmem:[#allocation3 + $0x3d0] sm:$0xff] %vm1007, 0.0
          %1259 = vst.msk [vmem:[#allocation3 + $0x3d8] sm:$0xff] %vm1007, 0.0
          %1260 = vst.msk [vmem:[#allocation3 + $0x3e0] sm:$0xff] %vm1007, 0.0
          %1261 = vst.msk [vmem:[#allocation3 + $0x3e8] sm:$0xff] %vm1007, 0.0
          %1262 = vst.msk [vmem:[#allocation3 + $0x3f0] sm:$0xff] %vm1007, 0.0
          %1263 = vst.msk [vmem:[#allocation3 + $0x3f8] sm:$0xff] %vm1007, 0.0
          %vm1264 = vcmask 261120
          %1265 = vst.msk [vmem:[#allocation4] sm:$0xff] %vm1264, 0.0
          %1266 = vst.msk [vmem:[#allocation4 + $0x8] sm:$0xff] %vm1264, 0.0
          %1267 = vst.msk [vmem:[#allocation4 + $0x10] sm:$0xff] %vm1264, 0.0
          %1268 = vst.msk [vmem:[#allocation4 + $0x18] sm:$0xff] %vm1264, 0.0
          %1269 = vst.msk [vmem:[#allocation4 + $0x20] sm:$0xff] %vm1264, 0.0
          %1270 = vst.msk [vmem:[#allocation4 + $0x28] sm:$0xff] %vm1264, 0.0
          %1271 = vst.msk [vmem:[#allocation4 + $0x30] sm:$0xff] %vm1264, 0.0
          %1272 = vst.msk [vmem:[#allocation4 + $0x38] sm:$0xff] %vm1264, 0.0
          %1273 = vst.msk [vmem:[#allocation4 + $0x40] sm:$0xff] %vm1264, 0.0
          %1274 = vst.msk [vmem:[#allocation4 + $0x48] sm:$0xff] %vm1264, 0.0
          %1275 = vst.msk [vmem:[#allocation4 + $0x50] sm:$0xff] %vm1264, 0.0
          %1276 = vst.msk [vmem:[#allocation4 + $0x58] sm:$0xff] %vm1264, 0.0
          %1277 = vst.msk [vmem:[#allocation4 + $0x60] sm:$0xff] %vm1264, 0.0
          %1278 = vst.msk [vmem:[#allocation4 + $0x68] sm:$0xff] %vm1264, 0.0
          %1279 = vst.msk [vmem:[#allocation4 + $0x70] sm:$0xff] %vm1264, 0.0
          %1280 = vst.msk [vmem:[#allocation4 + $0x78] sm:$0xff] %vm1264, 0.0
          %1281 = vst.msk [vmem:[#allocation4 + $0x80] sm:$0xff] %vm1264, 0.0
          %1282 = vst.msk [vmem:[#allocation4 + $0x88] sm:$0xff] %vm1264, 0.0
          %1283 = vst.msk [vmem:[#allocation4 + $0x90] sm:$0xff] %vm1264, 0.0
          %1284 = vst.msk [vmem:[#allocation4 + $0x98] sm:$0xff] %vm1264, 0.0
          %1285 = vst.msk [vmem:[#allocation4 + $0xa0] sm:$0xff] %vm1264, 0.0
          %1286 = vst.msk [vmem:[#allocation4 + $0xa8] sm:$0xff] %vm1264, 0.0
          %1287 = vst.msk [vmem:[#allocation4 + $0xb0] sm:$0xff] %vm1264, 0.0
          %1288 = vst.msk [vmem:[#allocation4 + $0xb8] sm:$0xff] %vm1264, 0.0
          %1289 = vst.msk [vmem:[#allocation4 + $0xc0] sm:$0xff] %vm1264, 0.0
          %1290 = vst.msk [vmem:[#allocation4 + $0xc8] sm:$0xff] %vm1264, 0.0
          %1291 = vst.msk [vmem:[#allocation4 + $0xd0] sm:$0xff] %vm1264, 0.0
          %1292 = vst.msk [vmem:[#allocation4 + $0xd8] sm:$0xff] %vm1264, 0.0
          %1293 = vst.msk [vmem:[#allocation4 + $0xe0] sm:$0xff] %vm1264, 0.0
          %1294 = vst.msk [vmem:[#allocation4 + $0xe8] sm:$0xff] %vm1264, 0.0
          %1295 = vst.msk [vmem:[#allocation4 + $0xf0] sm:$0xff] %vm1264, 0.0
          %1296 = vst.msk [vmem:[#allocation4 + $0xf8] sm:$0xff] %vm1264, 0.0
          %1297 = vst.msk [vmem:[#allocation4 + $0x100] sm:$0xff] %vm1264, 0.0
          %1298 = vst.msk [vmem:[#allocation4 + $0x108] sm:$0xff] %vm1264, 0.0
          %1299 = vst.msk [vmem:[#allocation4 + $0x110] sm:$0xff] %vm1264, 0.0
          %1300 = vst.msk [vmem:[#allocation4 + $0x118] sm:$0xff] %vm1264, 0.0
          %1301 = vst.msk [vmem:[#allocation4 + $0x120] sm:$0xff] %vm1264, 0.0
          %1302 = vst.msk [vmem:[#allocation4 + $0x128] sm:$0xff] %vm1264, 0.0
          %1303 = vst.msk [vmem:[#allocation4 + $0x130] sm:$0xff] %vm1264, 0.0
          %1304 = vst.msk [vmem:[#allocation4 + $0x138] sm:$0xff] %vm1264, 0.0
          %1305 = vst.msk [vmem:[#allocation4 + $0x140] sm:$0xff] %vm1264, 0.0
          %1306 = vst.msk [vmem:[#allocation4 + $0x148] sm:$0xff] %vm1264, 0.0
          %1307 = vst.msk [vmem:[#allocation4 + $0x150] sm:$0xff] %vm1264, 0.0
          %1308 = vst.msk [vmem:[#allocation4 + $0x158] sm:$0xff] %vm1264, 0.0
          %1309 = vst.msk [vmem:[#allocation4 + $0x160] sm:$0xff] %vm1264, 0.0
          %1310 = vst.msk [vmem:[#allocation4 + $0x168] sm:$0xff] %vm1264, 0.0
          %1311 = vst.msk [vmem:[#allocation4 + $0x170] sm:$0xff] %vm1264, 0.0
          %1312 = vst.msk [vmem:[#allocation4 + $0x178] sm:$0xff] %vm1264, 0.0
          %1313 = vst.msk [vmem:[#allocation4 + $0x180] sm:$0xff] %vm1264, 0.0
          %1314 = vst.msk [vmem:[#allocation4 + $0x188] sm:$0xff] %vm1264, 0.0
          %1315 = vst.msk [vmem:[#allocation4 + $0x190] sm:$0xff] %vm1264, 0.0
          %1316 = vst.msk [vmem:[#allocation4 + $0x198] sm:$0xff] %vm1264, 0.0
          %1317 = vst.msk [vmem:[#allocation4 + $0x1a0] sm:$0xff] %vm1264, 0.0
          %1318 = vst.msk [vmem:[#allocation4 + $0x1a8] sm:$0xff] %vm1264, 0.0
          %1319 = vst.msk [vmem:[#allocation4 + $0x1b0] sm:$0xff] %vm1264, 0.0
          %1320 = vst.msk [vmem:[#allocation4 + $0x1b8] sm:$0xff] %vm1264, 0.0
          %1321 = vst.msk [vmem:[#allocation4 + $0x1c0] sm:$0xff] %vm1264, 0.0
          %1322 = vst.msk [vmem:[#allocation4 + $0x1c8] sm:$0xff] %vm1264, 0.0
          %1323 = vst.msk [vmem:[#allocation4 + $0x1d0] sm:$0xff] %vm1264, 0.0
          %1324 = vst.msk [vmem:[#allocation4 + $0x1d8] sm:$0xff] %vm1264, 0.0
          %1325 = vst.msk [vmem:[#allocation4 + $0x1e0] sm:$0xff] %vm1264, 0.0
          %1326 = vst.msk [vmem:[#allocation4 + $0x1e8] sm:$0xff] %vm1264, 0.0
          %1327 = vst.msk [vmem:[#allocation4 + $0x1f0] sm:$0xff] %vm1264, 0.0
          %1328 = vst.msk [vmem:[#allocation4 + $0x1f8] sm:$0xff] %vm1264, 0.0
          %1329 = vst.msk [vmem:[#allocation4 + $0x200] sm:$0xff] %vm1264, 0.0
          %1330 = vst.msk [vmem:[#allocation4 + $0x208] sm:$0xff] %vm1264, 0.0
          %1331 = vst.msk [vmem:[#allocation4 + $0x210] sm:$0xff] %vm1264, 0.0
          %1332 = vst.msk [vmem:[#allocation4 + $0x218] sm:$0xff] %vm1264, 0.0
          %1333 = vst.msk [vmem:[#allocation4 + $0x220] sm:$0xff] %vm1264, 0.0
          %1334 = vst.msk [vmem:[#allocation4 + $0x228] sm:$0xff] %vm1264, 0.0
          %1335 = vst.msk [vmem:[#allocation4 + $0x230] sm:$0xff] %vm1264, 0.0
          %1336 = vst.msk [vmem:[#allocation4 + $0x238] sm:$0xff] %vm1264, 0.0
          %1337 = vst.msk [vmem:[#allocation4 + $0x240] sm:$0xff] %vm1264, 0.0
          %1338 = vst.msk [vmem:[#allocation4 + $0x248] sm:$0xff] %vm1264, 0.0
          %1339 = vst.msk [vmem:[#allocation4 + $0x250] sm:$0xff] %vm1264, 0.0
          %1340 = vst.msk [vmem:[#allocation4 + $0x258] sm:$0xff] %vm1264, 0.0
          %1341 = vst.msk [vmem:[#allocation4 + $0x260] sm:$0xff] %vm1264, 0.0
          %1342 = vst.msk [vmem:[#allocation4 + $0x268] sm:$0xff] %vm1264, 0.0
          %1343 = vst.msk [vmem:[#allocation4 + $0x270] sm:$0xff] %vm1264, 0.0
          %1344 = vst.msk [vmem:[#allocation4 + $0x278] sm:$0xff] %vm1264, 0.0
          %1345 = vst.msk [vmem:[#allocation4 + $0x280] sm:$0xff] %vm1264, 0.0
          %1346 = vst.msk [vmem:[#allocation4 + $0x288] sm:$0xff] %vm1264, 0.0
          %1347 = vst.msk [vmem:[#allocation4 + $0x290] sm:$0xff] %vm1264, 0.0
          %1348 = vst.msk [vmem:[#allocation4 + $0x298] sm:$0xff] %vm1264, 0.0
          %1349 = vst.msk [vmem:[#allocation4 + $0x2a0] sm:$0xff] %vm1264, 0.0
          %1350 = vst.msk [vmem:[#allocation4 + $0x2a8] sm:$0xff] %vm1264, 0.0
          %1351 = vst.msk [vmem:[#allocation4 + $0x2b0] sm:$0xff] %vm1264, 0.0
          %1352 = vst.msk [vmem:[#allocation4 + $0x2b8] sm:$0xff] %vm1264, 0.0
          %1353 = vst.msk [vmem:[#allocation4 + $0x2c0] sm:$0xff] %vm1264, 0.0
          %1354 = vst.msk [vmem:[#allocation4 + $0x2c8] sm:$0xff] %vm1264, 0.0
          %1355 = vst.msk [vmem:[#allocation4 + $0x2d0] sm:$0xff] %vm1264, 0.0
          %1356 = vst.msk [vmem:[#allocation4 + $0x2d8] sm:$0xff] %vm1264, 0.0
          %1357 = vst.msk [vmem:[#allocation4 + $0x2e0] sm:$0xff] %vm1264, 0.0
          %1358 = vst.msk [vmem:[#allocation4 + $0x2e8] sm:$0xff] %vm1264, 0.0
          %1359 = vst.msk [vmem:[#allocation4 + $0x2f0] sm:$0xff] %vm1264, 0.0
          %1360 = vst.msk [vmem:[#allocation4 + $0x2f8] sm:$0xff] %vm1264, 0.0
          %1361 = vst.msk [vmem:[#allocation4 + $0x300] sm:$0xff] %vm1264, 0.0
          %1362 = vst.msk [vmem:[#allocation4 + $0x308] sm:$0xff] %vm1264, 0.0
          %1363 = vst.msk [vmem:[#allocation4 + $0x310] sm:$0xff] %vm1264, 0.0
          %1364 = vst.msk [vmem:[#allocation4 + $0x318] sm:$0xff] %vm1264, 0.0
          %1365 = vst.msk [vmem:[#allocation4 + $0x320] sm:$0xff] %vm1264, 0.0
          %1366 = vst.msk [vmem:[#allocation4 + $0x328] sm:$0xff] %vm1264, 0.0
          %1367 = vst.msk [vmem:[#allocation4 + $0x330] sm:$0xff] %vm1264, 0.0
          %1368 = vst.msk [vmem:[#allocation4 + $0x338] sm:$0xff] %vm1264, 0.0
          %1369 = vst.msk [vmem:[#allocation4 + $0x340] sm:$0xff] %vm1264, 0.0
          %1370 = vst.msk [vmem:[#allocation4 + $0x348] sm:$0xff] %vm1264, 0.0
          %1371 = vst.msk [vmem:[#allocation4 + $0x350] sm:$0xff] %vm1264, 0.0
          %1372 = vst.msk [vmem:[#allocation4 + $0x358] sm:$0xff] %vm1264, 0.0
          %1373 = vst.msk [vmem:[#allocation4 + $0x360] sm:$0xff] %vm1264, 0.0
          %1374 = vst.msk [vmem:[#allocation4 + $0x368] sm:$0xff] %vm1264, 0.0
          %1375 = vst.msk [vmem:[#allocation4 + $0x370] sm:$0xff] %vm1264, 0.0
          %1376 = vst.msk [vmem:[#allocation4 + $0x378] sm:$0xff] %vm1264, 0.0
          %1377 = vst.msk [vmem:[#allocation4 + $0x380] sm:$0xff] %vm1264, 0.0
          %1378 = vst.msk [vmem:[#allocation4 + $0x388] sm:$0xff] %vm1264, 0.0
          %1379 = vst.msk [vmem:[#allocation4 + $0x390] sm:$0xff] %vm1264, 0.0
          %1380 = vst.msk [vmem:[#allocation4 + $0x398] sm:$0xff] %vm1264, 0.0
          %1381 = vst.msk [vmem:[#allocation4 + $0x3a0] sm:$0xff] %vm1264, 0.0
          %1382 = vst.msk [vmem:[#allocation4 + $0x3a8] sm:$0xff] %vm1264, 0.0
          %1383 = vst.msk [vmem:[#allocation4 + $0x3b0] sm:$0xff] %vm1264, 0.0
          %1384 = vst.msk [vmem:[#allocation4 + $0x3b8] sm:$0xff] %vm1264, 0.0
          %1385 = vst.msk [vmem:[#allocation4 + $0x3c0] sm:$0xff] %vm1264, 0.0
          %1386 = vst.msk [vmem:[#allocation4 + $0x3c8] sm:$0xff] %vm1264, 0.0
          %1387 = vst.msk [vmem:[#allocation4 + $0x3d0] sm:$0xff] %vm1264, 0.0
          %1388 = vst.msk [vmem:[#allocation4 + $0x3d8] sm:$0xff] %vm1264, 0.0
          %1389 = vst.msk [vmem:[#allocation4 + $0x3e0] sm:$0xff] %vm1264, 0.0
          %1390 = vst.msk [vmem:[#allocation4 + $0x3e8] sm:$0xff] %vm1264, 0.0
          %1391 = vst.msk [vmem:[#allocation4 + $0x3f0] sm:$0xff] %vm1264, 0.0
          %1392 = vst.msk [vmem:[#allocation4 + $0x3f8] sm:$0xff] %vm1264, 0.0
        $region159: #{tpu_custom_call.1} parent=142 // pred_fallthru
          _
        %v1393 = vld [vmem:[%s957] sm:$0xf]
        %v1394 = vld [vmem:[%s957 + $0x4] sm:$0xf]
        %v1395 = vld [vmem:[%s957 + $0x8] sm:$0xf]
        %v1396 = vld [vmem:[%s957 + $0xc] sm:$0xf]
        %v1397 = vld [vmem:[%s957 + $0x10] sm:$0xf]
        %v1398 = vld [vmem:[%s957 + $0x14] sm:$0xf]
        %v1399 = vld [vmem:[%s957 + $0x18] sm:$0xf]
        %v1400 = vld [vmem:[%s957 + $0x1c] sm:$0xf]
        %v1401 = vld [vmem:[%s957 + $0x20] sm:$0xf]
        %v1402 = vld [vmem:[%s957 + $0x24] sm:$0xf]
        %v1403 = vld [vmem:[%s957 + $0x28] sm:$0xf]
        %v1404 = vld [vmem:[%s957 + $0x2c] sm:$0xf]
        %v1405 = vld [vmem:[%s957 + $0x30] sm:$0xf]
        %v1406 = vld [vmem:[%s957 + $0x34] sm:$0xf]
        %v1407 = vld [vmem:[%s957 + $0x38] sm:$0xf]
        %v1408 = vld [vmem:[%s957 + $0x3c] sm:$0xf]
        %v1409 = vld [vmem:[%s957 + $0x40] sm:$0xf]
        %v1410 = vld [vmem:[%s957 + $0x44] sm:$0xf]
        %v1411 = vld [vmem:[%s957 + $0x48] sm:$0xf]
        %v1412 = vld [vmem:[%s957 + $0x4c] sm:$0xf]
        %v1413 = vld [vmem:[%s957 + $0x50] sm:$0xf]
        %v1414 = vld [vmem:[%s957 + $0x54] sm:$0xf]
        %v1415 = vld [vmem:[%s957 + $0x58] sm:$0xf]
        %v1416 = vld [vmem:[%s957 + $0x5c] sm:$0xf]
        %v1417 = vld [vmem:[%s957 + $0x60] sm:$0xf]
        %v1418 = vld [vmem:[%s957 + $0x64] sm:$0xf]
        %v1419 = vld [vmem:[%s957 + $0x68] sm:$0xf]
        %v1420 = vld [vmem:[%s957 + $0x6c] sm:$0xf]
        %v1421 = vld [vmem:[%s957 + $0x70] sm:$0xf]
        %v1422 = vld [vmem:[%s957 + $0x74] sm:$0xf]
        %v1423 = vld [vmem:[%s957 + $0x78] sm:$0xf]
        %v1424 = vld [vmem:[%s957 + $0x7c] sm:$0xf]
        %v1425 = vld [vmem:[%s957 + $0x80] sm:$0xf]
        %v1426 = vld [vmem:[%s957 + $0x84] sm:$0xf]
        %v1427 = vld [vmem:[%s957 + $0x88] sm:$0xf]
        %v1428 = vld [vmem:[%s957 + $0x8c] sm:$0xf]
        %v1429 = vld [vmem:[%s957 + $0x90] sm:$0xf]
        %v1430 = vld [vmem:[%s957 + $0x94] sm:$0xf]
        %v1431 = vld [vmem:[%s957 + $0x98] sm:$0xf]
        %v1432 = vld [vmem:[%s957 + $0x9c] sm:$0xf]
        %v1433 = vld [vmem:[%s957 + $0xa0] sm:$0xf]
        %v1434 = vld [vmem:[%s957 + $0xa4] sm:$0xf]
        %v1435 = vld [vmem:[%s957 + $0xa8] sm:$0xf]
        %v1436 = vld [vmem:[%s957 + $0xac] sm:$0xf]
        %v1437 = vld [vmem:[%s957 + $0xb0] sm:$0xf]
        %v1438 = vld [vmem:[%s957 + $0xb4] sm:$0xf]
        %v1439 = vld [vmem:[%s957 + $0xb8] sm:$0xf]
        %v1440 = vld [vmem:[%s957 + $0xbc] sm:$0xf]
        %v1441 = vld [vmem:[%s957 + $0xc0] sm:$0xf]
        %v1442 = vld [vmem:[%s957 + $0xc4] sm:$0xf]
        %v1443 = vld [vmem:[%s957 + $0xc8] sm:$0xf]
        %v1444 = vld [vmem:[%s957 + $0xcc] sm:$0xf]
        %v1445 = vld [vmem:[%s957 + $0xd0] sm:$0xf]
        %v1446 = vld [vmem:[%s957 + $0xd4] sm:$0xf]
        %v1447 = vld [vmem:[%s957 + $0xd8] sm:$0xf]
        %v1448 = vld [vmem:[%s957 + $0xdc] sm:$0xf]
        %v1449 = vld [vmem:[%s957 + $0xe0] sm:$0xf]
        %v1450 = vld [vmem:[%s957 + $0xe4] sm:$0xf]
        %v1451 = vld [vmem:[%s957 + $0xe8] sm:$0xf]
        %v1452 = vld [vmem:[%s957 + $0xec] sm:$0xf]
        %v1453 = vld [vmem:[%s957 + $0xf0] sm:$0xf]
        %v1454 = vld [vmem:[%s957 + $0xf4] sm:$0xf]
        %v1455 = vld [vmem:[%s957 + $0xf8] sm:$0xf]
        %v1456 = vld [vmem:[%s957 + $0xfc] sm:$0xf]
        %v1457 = vld [vmem:[%s957 + $0x100] sm:$0xf]
        %v1458 = vld [vmem:[%s957 + $0x104] sm:$0xf]
        %v1459 = vld [vmem:[%s957 + $0x108] sm:$0xf]
        %v1460 = vld [vmem:[%s957 + $0x10c] sm:$0xf]
        %v1461 = vld [vmem:[%s957 + $0x110] sm:$0xf]
        %v1462 = vld [vmem:[%s957 + $0x114] sm:$0xf]
        %v1463 = vld [vmem:[%s957 + $0x118] sm:$0xf]
        %v1464 = vld [vmem:[%s957 + $0x11c] sm:$0xf]
        %v1465 = vld [vmem:[%s957 + $0x120] sm:$0xf]
        %v1466 = vld [vmem:[%s957 + $0x124] sm:$0xf]
        %v1467 = vld [vmem:[%s957 + $0x128] sm:$0xf]
        %v1468 = vld [vmem:[%s957 + $0x12c] sm:$0xf]
        %v1469 = vld [vmem:[%s957 + $0x130] sm:$0xf]
        %v1470 = vld [vmem:[%s957 + $0x134] sm:$0xf]
        %v1471 = vld [vmem:[%s957 + $0x138] sm:$0xf]
        %v1472 = vld [vmem:[%s957 + $0x13c] sm:$0xf]
        %v1473 = vld [vmem:[%s957 + $0x140] sm:$0xf]
        %v1474 = vld [vmem:[%s957 + $0x144] sm:$0xf]
        %v1475 = vld [vmem:[%s957 + $0x148] sm:$0xf]
        %v1476 = vld [vmem:[%s957 + $0x14c] sm:$0xf]
        %v1477 = vld [vmem:[%s957 + $0x150] sm:$0xf]
        %v1478 = vld [vmem:[%s957 + $0x154] sm:$0xf]
        %v1479 = vld [vmem:[%s957 + $0x158] sm:$0xf]
        %v1480 = vld [vmem:[%s957 + $0x15c] sm:$0xf]
        %v1481 = vld [vmem:[%s957 + $0x160] sm:$0xf]
        %v1482 = vld [vmem:[%s957 + $0x164] sm:$0xf]
        %v1483 = vld [vmem:[%s957 + $0x168] sm:$0xf]
        %v1484 = vld [vmem:[%s957 + $0x16c] sm:$0xf]
        %v1485 = vld [vmem:[%s957 + $0x170] sm:$0xf]
        %v1486 = vld [vmem:[%s957 + $0x174] sm:$0xf]
        %v1487 = vld [vmem:[%s957 + $0x178] sm:$0xf]
        %v1488 = vld [vmem:[%s957 + $0x17c] sm:$0xf]
        %v1489 = vld [vmem:[%s957 + $0x180] sm:$0xf]
        %v1490 = vld [vmem:[%s957 + $0x184] sm:$0xf]
        %v1491 = vld [vmem:[%s957 + $0x188] sm:$0xf]
        %v1492 = vld [vmem:[%s957 + $0x18c] sm:$0xf]
        %v1493 = vld [vmem:[%s957 + $0x190] sm:$0xf]
        %v1494 = vld [vmem:[%s957 + $0x194] sm:$0xf]
        %v1495 = vld [vmem:[%s957 + $0x198] sm:$0xf]
        %v1496 = vld [vmem:[%s957 + $0x19c] sm:$0xf]
        %v1497 = vld [vmem:[%s957 + $0x1a0] sm:$0xf]
        %v1498 = vld [vmem:[%s957 + $0x1a4] sm:$0xf]
        %v1499 = vld [vmem:[%s957 + $0x1a8] sm:$0xf]
        %v1500 = vld [vmem:[%s957 + $0x1ac] sm:$0xf]
        %v1501 = vld [vmem:[%s957 + $0x1b0] sm:$0xf]
        %v1502 = vld [vmem:[%s957 + $0x1b4] sm:$0xf]
        %v1503 = vld [vmem:[%s957 + $0x1b8] sm:$0xf]
        %v1504 = vld [vmem:[%s957 + $0x1bc] sm:$0xf]
        %v1505 = vld [vmem:[%s957 + $0x1c0] sm:$0xf]
        %v1506 = vld [vmem:[%s957 + $0x1c4] sm:$0xf]
        %v1507 = vld [vmem:[%s957 + $0x1c8] sm:$0xf]
        %v1508 = vld [vmem:[%s957 + $0x1cc] sm:$0xf]
        %v1509 = vld [vmem:[%s957 + $0x1d0] sm:$0xf]
        %v1510 = vld [vmem:[%s957 + $0x1d4] sm:$0xf]
        %v1511 = vld [vmem:[%s957 + $0x1d8] sm:$0xf]
        %v1512 = vld [vmem:[%s957 + $0x1dc] sm:$0xf]
        %v1513 = vld [vmem:[%s957 + $0x1e0] sm:$0xf]
        %v1514 = vld [vmem:[%s957 + $0x1e4] sm:$0xf]
        %v1515 = vld [vmem:[%s957 + $0x1e8] sm:$0xf]
        %v1516 = vld [vmem:[%s957 + $0x1ec] sm:$0xf]
        %v1517 = vld [vmem:[%s957 + $0x1f0] sm:$0xf]
        %v1518 = vld [vmem:[%s957 + $0x1f4] sm:$0xf]
        %v1519 = vld [vmem:[%s957 + $0x1f8] sm:$0xf]
        %v1520 = vld [vmem:[%s957 + $0x1fc] sm:$0xf]
        %v1521 = vld [vmem:[%s964] sm:$0xf]
        %v1522 = vld [vmem:[%s964 + $0x4] sm:$0xf]
        %v1523 = vld [vmem:[%s964 + $0x8] sm:$0xf]
        %v1524 = vld [vmem:[%s964 + $0xc] sm:$0xf]
        %v1525 = vld [vmem:[%s964 + $0x10] sm:$0xf]
        %v1526 = vld [vmem:[%s964 + $0x14] sm:$0xf]
        %v1527 = vld [vmem:[%s964 + $0x18] sm:$0xf]
        %v1528 = vld [vmem:[%s964 + $0x1c] sm:$0xf]
        %v1529 = vld [vmem:[%s964 + $0x20] sm:$0xf]
        %v1530 = vld [vmem:[%s964 + $0x24] sm:$0xf]
        %v1531 = vld [vmem:[%s964 + $0x28] sm:$0xf]
        %v1532 = vld [vmem:[%s964 + $0x2c] sm:$0xf]
        %v1533 = vld [vmem:[%s964 + $0x30] sm:$0xf]
        %v1534 = vld [vmem:[%s964 + $0x34] sm:$0xf]
        %v1535 = vld [vmem:[%s964 + $0x38] sm:$0xf]
        %v1536 = vld [vmem:[%s964 + $0x3c] sm:$0xf]
        %v1537 = vld [vmem:[%s971] sm:$0xf]
        %v1538 = vld [vmem:[%s971 + $0x4] sm:$0xf]
        %v1539 = vld [vmem:[%s971 + $0x8] sm:$0xf]
        %v1540 = vld [vmem:[%s971 + $0xc] sm:$0xf]
        %v1541 = vld [vmem:[%s971 + $0x10] sm:$0xf]
        %v1542 = vld [vmem:[%s971 + $0x14] sm:$0xf]
        %v1543 = vld [vmem:[%s971 + $0x18] sm:$0xf]
        %v1544 = vld [vmem:[%s971 + $0x1c] sm:$0xf]
        %v1545 = vld [vmem:[%s971 + $0x20] sm:$0xf]
        %v1546 = vld [vmem:[%s971 + $0x24] sm:$0xf]
        %v1547 = vld [vmem:[%s971 + $0x28] sm:$0xf]
        %v1548 = vld [vmem:[%s971 + $0x2c] sm:$0xf]
        %v1549 = vld [vmem:[%s971 + $0x30] sm:$0xf]
        %v1550 = vld [vmem:[%s971 + $0x34] sm:$0xf]
        %v1551 = vld [vmem:[%s971 + $0x38] sm:$0xf]
        %v1552 = vld [vmem:[%s971 + $0x3c] sm:$0xf]
        %v1585 = vunpack.c.l.b16 %v1393
        %v1586 = vunpack.c.l.b16 %v1394
        %v1587 = vunpack.c.l.b16 %v1395
        %v1588 = vunpack.c.l.b16 %v1396
        %v1589 = vunpack.c.l.b16 %v1397
        %v1590 = vunpack.c.l.b16 %v1398
        %v1591 = vunpack.c.l.b16 %v1399
        %v1592 = vunpack.c.l.b16 %v1400
        %v1593 = vunpack.c.l.b16 %v1401
        %v1594 = vunpack.c.l.b16 %v1402
        %v1595 = vunpack.c.l.b16 %v1403
        %v1596 = vunpack.c.l.b16 %v1404
        %v1597 = vunpack.c.l.b16 %v1405
        %v1598 = vunpack.c.l.b16 %v1406
        %v1599 = vunpack.c.l.b16 %v1407
        %v1600 = vunpack.c.l.b16 %v1408
        %v1601 = vunpack.c.l.b16 %v1409
        %v1602 = vunpack.c.l.b16 %v1410
        %v1603 = vunpack.c.l.b16 %v1411
        %v1604 = vunpack.c.l.b16 %v1412
        %v1605 = vunpack.c.l.b16 %v1413
        %v1606 = vunpack.c.l.b16 %v1414
        %v1607 = vunpack.c.l.b16 %v1415
        %v1608 = vunpack.c.l.b16 %v1416
        %v1609 = vunpack.c.l.b16 %v1417
        %v1610 = vunpack.c.l.b16 %v1418
        %v1611 = vunpack.c.l.b16 %v1419
        %v1612 = vunpack.c.l.b16 %v1420
        %v1613 = vunpack.c.l.b16 %v1421
        %v1614 = vunpack.c.l.b16 %v1422
        %v1615 = vunpack.c.l.b16 %v1423
        %v1616 = vunpack.c.l.b16 %v1424
        %v1617 = vpack.c.b16 %v1586, %v1585
        %v1618 = vpack.c.b16 %v1588, %v1587
        %v1619 = vpack.c.b16 %v1590, %v1589
        %v1620 = vpack.c.b16 %v1592, %v1591
        %v1621 = vpack.c.b16 %v1594, %v1593
        %v1622 = vpack.c.b16 %v1596, %v1595
        %v1623 = vpack.c.b16 %v1598, %v1597
        %v1624 = vpack.c.b16 %v1600, %v1599
        %v1625 = vpack.c.b16 %v1602, %v1601
        %v1626 = vpack.c.b16 %v1604, %v1603
        %v1627 = vpack.c.b16 %v1606, %v1605
        %v1628 = vpack.c.b16 %v1608, %v1607
        %v1629 = vpack.c.b16 %v1610, %v1609
        %v1630 = vpack.c.b16 %v1612, %v1611
        %v1631 = vpack.c.b16 %v1614, %v1613
        %v1632 = vpack.c.b16 %v1616, %v1615
        %v1637 = vunpack.c.l.b16 %v1521
        %v1638 = vunpack.c.l.b16 %v1522
        %v1639 = vunpack.c.l.b16 %v1523
        %v1640 = vunpack.c.l.b16 %v1524
        %v1641 = vpack.c.b16 %v1638, %v1637
        %v1642 = vpack.c.b16 %v1640, %v1639
        %vm1645 = vcmask 261120
        %v1647 = vsel %vm1645, %v1617, 0
        %v1650 = vsel %vm1645, %v1618, 0
        %v1653 = vsel %vm1645, %v1619, 0
        %v1656 = vsel %vm1645, %v1620, 0
        %v1659 = vsel %vm1645, %v1621, 0
        %v1662 = vsel %vm1645, %v1622, 0
        %v1665 = vsel %vm1645, %v1623, 0
        %v1668 = vsel %vm1645, %v1624, 0
        %v1671 = vsel %vm1645, %v1625, 0
        %v1674 = vsel %vm1645, %v1626, 0
        %v1677 = vsel %vm1645, %v1627, 0
        %v1680 = vsel %vm1645, %v1628, 0
        %v1683 = vsel %vm1645, %v1629, 0
        %v1686 = vsel %vm1645, %v1630, 0
        %v1689 = vsel %vm1645, %v1631, 0
        %v1692 = vsel %vm1645, %v1632, 0
        %1694 = vmatpush.bf16.msra.mxu0 0
        %1695 = vmatpush.bf16.msra.mxu0 0
        %1696 = vmatpush.bf16.msra.mxu0 0
        %1697 = vmatpush.bf16.msra.mxu0 0
        %1698 = vmatpush.bf16.msra.mxu0 0
        %1699 = vmatpush.bf16.msra.mxu0 0
        %1700 = vmatpush.bf16.msra.mxu0 %v1642
        %1701 = vmatpush.bf16.msra.mxu0 %v1641
        %1702 = vmatmul.bf16.gmra.mxu0 %v1647
        %v1703 = vpop.f32.mrf.mxu0
        %v1704 = vadd.f32 0.0, %v1703
        %v1705 = vpop.f32.mrf.mxu0
        %v1706 = vadd.f32 0.0, %v1705
        %1707 = vmatmul.bf16.gmra.mxu0 %v1650
        %v1708 = vpop.f32.mrf.mxu0
        %v1709 = vadd.f32 0.0, %v1708
        %v1710 = vpop.f32.mrf.mxu0
        %v1711 = vadd.f32 0.0, %v1710
        %1712 = vmatmul.bf16.gmra.mxu0 %v1653
        %v1713 = vpop.f32.mrf.mxu0
        %v1714 = vadd.f32 0.0, %v1713
        %v1715 = vpop.f32.mrf.mxu0
        %v1716 = vadd.f32 0.0, %v1715
        %1717 = vmatmul.bf16.gmra.mxu0 %v1656
        %v1718 = vpop.f32.mrf.mxu0
        %v1719 = vadd.f32 0.0, %v1718
        %v1720 = vpop.f32.mrf.mxu0
        %v1721 = vadd.f32 0.0, %v1720
        %1722 = vmatmul.bf16.gmra.mxu0 %v1659
        %v1723 = vpop.f32.mrf.mxu0
        %v1724 = vadd.f32 0.0, %v1723
        %v1725 = vpop.f32.mrf.mxu0
        %v1726 = vadd.f32 0.0, %v1725
        %1727 = vmatmul.bf16.gmra.mxu0 %v1662
        %v1728 = vpop.f32.mrf.mxu0
        %v1729 = vadd.f32 0.0, %v1728
        %v1730 = vpop.f32.mrf.mxu0
        %v1731 = vadd.f32 0.0, %v1730
        %1732 = vmatmul.bf16.gmra.mxu0 %v1665
        %v1733 = vpop.f32.mrf.mxu0
        %v1734 = vadd.f32 0.0, %v1733
        %v1735 = vpop.f32.mrf.mxu0
        %v1736 = vadd.f32 0.0, %v1735
        %1737 = vmatmul.bf16.gmra.mxu0 %v1668
        %v1738 = vpop.f32.mrf.mxu0
        %v1739 = vadd.f32 0.0, %v1738
        %v1740 = vpop.f32.mrf.mxu0
        %v1741 = vadd.f32 0.0, %v1740
        %1742 = vmatmul.bf16.gmra.mxu0 %v1671
        %v1743 = vpop.f32.mrf.mxu0
        %v1744 = vadd.f32 0.0, %v1743
        %v1745 = vpop.f32.mrf.mxu0
        %v1746 = vadd.f32 0.0, %v1745
        %1747 = vmatmul.bf16.gmra.mxu0 %v1674
        %v1748 = vpop.f32.mrf.mxu0
        %v1749 = vadd.f32 0.0, %v1748
        %v1750 = vpop.f32.mrf.mxu0
        %v1751 = vadd.f32 0.0, %v1750
        %1752 = vmatmul.bf16.gmra.mxu0 %v1677
        %v1753 = vpop.f32.mrf.mxu0
        %v1754 = vadd.f32 0.0, %v1753
        %v1755 = vpop.f32.mrf.mxu0
        %v1756 = vadd.f32 0.0, %v1755
        %1757 = vmatmul.bf16.gmra.mxu0 %v1680
        %v1758 = vpop.f32.mrf.mxu0
        %v1759 = vadd.f32 0.0, %v1758
        %v1760 = vpop.f32.mrf.mxu0
        %v1761 = vadd.f32 0.0, %v1760
        %1762 = vmatmul.bf16.gmra.mxu0 %v1683
        %v1763 = vpop.f32.mrf.mxu0
        %v1764 = vadd.f32 0.0, %v1763
        %v1765 = vpop.f32.mrf.mxu0
        %v1766 = vadd.f32 0.0, %v1765
        %1767 = vmatmul.bf16.gmra.mxu0 %v1686
        %v1768 = vpop.f32.mrf.mxu0
        %v1769 = vadd.f32 0.0, %v1768
        %v1770 = vpop.f32.mrf.mxu0
        %v1771 = vadd.f32 0.0, %v1770
        %1772 = vmatmul.bf16.gmra.mxu0 %v1689
        %v1773 = vpop.f32.mrf.mxu0
        %v1774 = vadd.f32 0.0, %v1773
        %v1775 = vpop.f32.mrf.mxu0
        %v1776 = vadd.f32 0.0, %v1775
        %1777 = vmatmul.bf16.gmra.mxu0 %v1692
        %v1778 = vpop.f32.mrf.mxu0
        %v1779 = vadd.f32 0.0, %v1778
        %v1780 = vpop.f32.mrf.mxu0
        %v1781 = vadd.f32 0.0, %v1780
        %1782 = vdwg.mxu0
        %v1815 = vunpack.c.l.b16 %v1425
        %v1816 = vunpack.c.l.b16 %v1426
        %v1817 = vunpack.c.l.b16 %v1427
        %v1818 = vunpack.c.l.b16 %v1428
        %v1819 = vunpack.c.l.b16 %v1429
        %v1820 = vunpack.c.l.b16 %v1430
        %v1821 = vunpack.c.l.b16 %v1431
        %v1822 = vunpack.c.l.b16 %v1432
        %v1823 = vunpack.c.l.b16 %v1433
        %v1824 = vunpack.c.l.b16 %v1434
        %v1825 = vunpack.c.l.b16 %v1435
        %v1826 = vunpack.c.l.b16 %v1436
        %v1827 = vunpack.c.l.b16 %v1437
        %v1828 = vunpack.c.l.b16 %v1438
        %v1829 = vunpack.c.l.b16 %v1439
        %v1830 = vunpack.c.l.b16 %v1440
        %v1831 = vunpack.c.l.b16 %v1441
        %v1832 = vunpack.c.l.b16 %v1442
        %v1833 = vunpack.c.l.b16 %v1443
        %v1834 = vunpack.c.l.b16 %v1444
        %v1835 = vunpack.c.l.b16 %v1445
        %v1836 = vunpack.c.l.b16 %v1446
        %v1837 = vunpack.c.l.b16 %v1447
        %v1838 = vunpack.c.l.b16 %v1448
        %v1839 = vunpack.c.l.b16 %v1449
        %v1840 = vunpack.c.l.b16 %v1450
        %v1841 = vunpack.c.l.b16 %v1451
        %v1842 = vunpack.c.l.b16 %v1452
        %v1843 = vunpack.c.l.b16 %v1453
        %v1844 = vunpack.c.l.b16 %v1454
        %v1845 = vunpack.c.l.b16 %v1455
        %v1846 = vunpack.c.l.b16 %v1456
        %v1847 = vpack.c.b16 %v1816, %v1815
        %v1848 = vpack.c.b16 %v1818, %v1817
        %v1849 = vpack.c.b16 %v1820, %v1819
        %v1850 = vpack.c.b16 %v1822, %v1821
        %v1851 = vpack.c.b16 %v1824, %v1823
        %v1852 = vpack.c.b16 %v1826, %v1825
        %v1853 = vpack.c.b16 %v1828, %v1827
        %v1854 = vpack.c.b16 %v1830, %v1829
        %v1855 = vpack.c.b16 %v1832, %v1831
        %v1856 = vpack.c.b16 %v1834, %v1833
        %v1857 = vpack.c.b16 %v1836, %v1835
        %v1858 = vpack.c.b16 %v1838, %v1837
        %v1859 = vpack.c.b16 %v1840, %v1839
        %v1860 = vpack.c.b16 %v1842, %v1841
        %v1861 = vpack.c.b16 %v1844, %v1843
        %v1862 = vpack.c.b16 %v1846, %v1845
        %v1867 = vunpack.c.l.b16 %v1525
        %v1868 = vunpack.c.l.b16 %v1526
        %v1869 = vunpack.c.l.b16 %v1527
        %v1870 = vunpack.c.l.b16 %v1528
        %v1871 = vpack.c.b16 %v1868, %v1867
        %v1872 = vpack.c.b16 %v1870, %v1869
        %v1876 = vsel %vm1645, %v1847, 0
        %v1879 = vsel %vm1645, %v1848, 0
        %v1882 = vsel %vm1645, %v1849, 0
        %v1885 = vsel %vm1645, %v1850, 0
        %v1888 = vsel %vm1645, %v1851, 0
        %v1891 = vsel %vm1645, %v1852, 0
        %v1894 = vsel %vm1645, %v1853, 0
        %v1897 = vsel %vm1645, %v1854, 0
        %v1900 = vsel %vm1645, %v1855, 0
        %v1903 = vsel %vm1645, %v1856, 0
        %v1906 = vsel %vm1645, %v1857, 0
        %v1909 = vsel %vm1645, %v1858, 0
        %v1912 = vsel %vm1645, %v1859, 0
        %v1915 = vsel %vm1645, %v1860, 0
        %v1918 = vsel %vm1645, %v1861, 0
        %v1921 = vsel %vm1645, %v1862, 0
        %1923 = vmatpush.bf16.msra.mxu0 0
        %1924 = vmatpush.bf16.msra.mxu0 0
        %1925 = vmatpush.bf16.msra.mxu0 0
        %1926 = vmatpush.bf16.msra.mxu0 0
        %1927 = vmatpush.bf16.msra.mxu0 0
        %1928 = vmatpush.bf16.msra.mxu0 0
        %1929 = vmatpush.bf16.msra.mxu0 %v1872
        %1930 = vmatpush.bf16.msra.mxu0 %v1871
        %1931 = vmatmul.bf16.gmra.mxu0 %v1876
        %v1932 = vpop.f32.mrf.mxu0
        %v1933 = vadd.f32 0.0, %v1932
        %v1934 = vpop.f32.mrf.mxu0
        %v1935 = vadd.f32 0.0, %v1934
        %1936 = vmatmul.bf16.gmra.mxu0 %v1879
        %v1937 = vpop.f32.mrf.mxu0
        %v1938 = vadd.f32 0.0, %v1937
        %v1939 = vpop.f32.mrf.mxu0
        %v1940 = vadd.f32 0.0, %v1939
        %1941 = vmatmul.bf16.gmra.mxu0 %v1882
        %v1942 = vpop.f32.mrf.mxu0
        %v1943 = vadd.f32 0.0, %v1942
        %v1944 = vpop.f32.mrf.mxu0
        %v1945 = vadd.f32 0.0, %v1944
        %1946 = vmatmul.bf16.gmra.mxu0 %v1885
        %v1947 = vpop.f32.mrf.mxu0
        %v1948 = vadd.f32 0.0, %v1947
        %v1949 = vpop.f32.mrf.mxu0
        %v1950 = vadd.f32 0.0, %v1949
        %1951 = vmatmul.bf16.gmra.mxu0 %v1888
        %v1952 = vpop.f32.mrf.mxu0
        %v1953 = vadd.f32 0.0, %v1952
        %v1954 = vpop.f32.mrf.mxu0
        %v1955 = vadd.f32 0.0, %v1954
        %1956 = vmatmul.bf16.gmra.mxu0 %v1891
        %v1957 = vpop.f32.mrf.mxu0
        %v1958 = vadd.f32 0.0, %v1957
        %v1959 = vpop.f32.mrf.mxu0
        %v1960 = vadd.f32 0.0, %v1959
        %1961 = vmatmul.bf16.gmra.mxu0 %v1894
        %v1962 = vpop.f32.mrf.mxu0
        %v1963 = vadd.f32 0.0, %v1962
        %v1964 = vpop.f32.mrf.mxu0
        %v1965 = vadd.f32 0.0, %v1964
        %1966 = vmatmul.bf16.gmra.mxu0 %v1897
        %v1967 = vpop.f32.mrf.mxu0
        %v1968 = vadd.f32 0.0, %v1967
        %v1969 = vpop.f32.mrf.mxu0
        %v1970 = vadd.f32 0.0, %v1969
        %1971 = vmatmul.bf16.gmra.mxu0 %v1900
        %v1972 = vpop.f32.mrf.mxu0
        %v1973 = vadd.f32 0.0, %v1972
        %v1974 = vpop.f32.mrf.mxu0
        %v1975 = vadd.f32 0.0, %v1974
        %1976 = vmatmul.bf16.gmra.mxu0 %v1903
        %v1977 = vpop.f32.mrf.mxu0
        %v1978 = vadd.f32 0.0, %v1977
        %v1979 = vpop.f32.mrf.mxu0
        %v1980 = vadd.f32 0.0, %v1979
        %1981 = vmatmul.bf16.gmra.mxu0 %v1906
        %v1982 = vpop.f32.mrf.mxu0
        %v1983 = vadd.f32 0.0, %v1982
        %v1984 = vpop.f32.mrf.mxu0
        %v1985 = vadd.f32 0.0, %v1984
        %1986 = vmatmul.bf16.gmra.mxu0 %v1909
        %v1987 = vpop.f32.mrf.mxu0
        %v1988 = vadd.f32 0.0, %v1987
        %v1989 = vpop.f32.mrf.mxu0
        %v1990 = vadd.f32 0.0, %v1989
        %1991 = vmatmul.bf16.gmra.mxu0 %v1912
        %v1992 = vpop.f32.mrf.mxu0
        %v1993 = vadd.f32 0.0, %v1992
        %v1994 = vpop.f32.mrf.mxu0
        %v1995 = vadd.f32 0.0, %v1994
        %1996 = vmatmul.bf16.gmra.mxu0 %v1915
        %v1997 = vpop.f32.mrf.mxu0
        %v1998 = vadd.f32 0.0, %v1997
        %v1999 = vpop.f32.mrf.mxu0
        %v2000 = vadd.f32 0.0, %v1999
        %2001 = vmatmul.bf16.gmra.mxu0 %v1918
        %v2002 = vpop.f32.mrf.mxu0
        %v2003 = vadd.f32 0.0, %v2002
        %v2004 = vpop.f32.mrf.mxu0
        %v2005 = vadd.f32 0.0, %v2004
        %2006 = vmatmul.bf16.gmra.mxu0 %v1921
        %v2007 = vpop.f32.mrf.mxu0
        %v2008 = vadd.f32 0.0, %v2007
        %v2009 = vpop.f32.mrf.mxu0
        %v2010 = vadd.f32 0.0, %v2009
        %2011 = vdwg.mxu0
        %v2044 = vunpack.c.l.b16 %v1457
        %v2045 = vunpack.c.l.b16 %v1458
        %v2046 = vunpack.c.l.b16 %v1459
        %v2047 = vunpack.c.l.b16 %v1460
        %v2048 = vunpack.c.l.b16 %v1461
        %v2049 = vunpack.c.l.b16 %v1462
        %v2050 = vunpack.c.l.b16 %v1463
        %v2051 = vunpack.c.l.b16 %v1464
        %v2052 = vunpack.c.l.b16 %v1465
        %v2053 = vunpack.c.l.b16 %v1466
        %v2054 = vunpack.c.l.b16 %v1467
        %v2055 = vunpack.c.l.b16 %v1468
        %v2056 = vunpack.c.l.b16 %v1469
        %v2057 = vunpack.c.l.b16 %v1470
        %v2058 = vunpack.c.l.b16 %v1471
        %v2059 = vunpack.c.l.b16 %v1472
        %v2060 = vunpack.c.l.b16 %v1473
        %v2061 = vunpack.c.l.b16 %v1474
        %v2062 = vunpack.c.l.b16 %v1475
        %v2063 = vunpack.c.l.b16 %v1476
        %v2064 = vunpack.c.l.b16 %v1477
        %v2065 = vunpack.c.l.b16 %v1478
        %v2066 = vunpack.c.l.b16 %v1479
        %v2067 = vunpack.c.l.b16 %v1480
        %v2068 = vunpack.c.l.b16 %v1481
        %v2069 = vunpack.c.l.b16 %v1482
        %v2070 = vunpack.c.l.b16 %v1483
        %v2071 = vunpack.c.l.b16 %v1484
        %v2072 = vunpack.c.l.b16 %v1485
        %v2073 = vunpack.c.l.b16 %v1486
        %v2074 = vunpack.c.l.b16 %v1487
        %v2075 = vunpack.c.l.b16 %v1488
        %v2076 = vpack.c.b16 %v2045, %v2044
        %v2077 = vpack.c.b16 %v2047, %v2046
        %v2078 = vpack.c.b16 %v2049, %v2048
        %v2079 = vpack.c.b16 %v2051, %v2050
        %v2080 = vpack.c.b16 %v2053, %v2052
        %v2081 = vpack.c.b16 %v2055, %v2054
        %v2082 = vpack.c.b16 %v2057, %v2056
        %v2083 = vpack.c.b16 %v2059, %v2058
        %v2084 = vpack.c.b16 %v2061, %v2060
        %v2085 = vpack.c.b16 %v2063, %v2062
        %v2086 = vpack.c.b16 %v2065, %v2064
        %v2087 = vpack.c.b16 %v2067, %v2066
        %v2088 = vpack.c.b16 %v2069, %v2068
        %v2089 = vpack.c.b16 %v2071, %v2070
        %v2090 = vpack.c.b16 %v2073, %v2072
        %v2091 = vpack.c.b16 %v2075, %v2074
        %v2096 = vunpack.c.l.b16 %v1529
        %v2097 = vunpack.c.l.b16 %v1530
        %v2098 = vunpack.c.l.b16 %v1531
        %v2099 = vunpack.c.l.b16 %v1532
        %v2100 = vpack.c.b16 %v2097, %v2096
        %v2101 = vpack.c.b16 %v2099, %v2098
        %v2105 = vsel %vm1645, %v2076, 0
        %v2108 = vsel %vm1645, %v2077, 0
        %v2111 = vsel %vm1645, %v2078, 0
        %v2114 = vsel %vm1645, %v2079, 0
        %v2117 = vsel %vm1645, %v2080, 0
        %v2120 = vsel %vm1645, %v2081, 0
        %v2123 = vsel %vm1645, %v2082, 0
        %v2126 = vsel %vm1645, %v2083, 0
        %v2129 = vsel %vm1645, %v2084, 0
        %v2132 = vsel %vm1645, %v2085, 0
        %v2135 = vsel %vm1645, %v2086, 0
        %v2138 = vsel %vm1645, %v2087, 0
        %v2141 = vsel %vm1645, %v2088, 0
        %v2144 = vsel %vm1645, %v2089, 0
        %v2147 = vsel %vm1645, %v2090, 0
        %v2150 = vsel %vm1645, %v2091, 0
        %2152 = vmatpush.bf16.msra.mxu0 0
        %2153 = vmatpush.bf16.msra.mxu0 0
        %2154 = vmatpush.bf16.msra.mxu0 0
        %2155 = vmatpush.bf16.msra.mxu0 0
        %2156 = vmatpush.bf16.msra.mxu0 0
        %2157 = vmatpush.bf16.msra.mxu0 0
        %2158 = vmatpush.bf16.msra.mxu0 %v2101
        %2159 = vmatpush.bf16.msra.mxu0 %v2100
        %2160 = vmatmul.bf16.gmra.mxu0 %v2105
        %v2161 = vpop.f32.mrf.mxu0
        %v2162 = vadd.f32 0.0, %v2161
        %v2163 = vpop.f32.mrf.mxu0
        %v2164 = vadd.f32 0.0, %v2163
        %2165 = vmatmul.bf16.gmra.mxu0 %v2108
        %v2166 = vpop.f32.mrf.mxu0
        %v2167 = vadd.f32 0.0, %v2166
        %v2168 = vpop.f32.mrf.mxu0
        %v2169 = vadd.f32 0.0, %v2168
        %2170 = vmatmul.bf16.gmra.mxu0 %v2111
        %v2171 = vpop.f32.mrf.mxu0
        %v2172 = vadd.f32 0.0, %v2171
        %v2173 = vpop.f32.mrf.mxu0
        %v2174 = vadd.f32 0.0, %v2173
        %2175 = vmatmul.bf16.gmra.mxu0 %v2114
        %v2176 = vpop.f32.mrf.mxu0
        %v2177 = vadd.f32 0.0, %v2176
        %v2178 = vpop.f32.mrf.mxu0
        %v2179 = vadd.f32 0.0, %v2178
        %2180 = vmatmul.bf16.gmra.mxu0 %v2117
        %v2181 = vpop.f32.mrf.mxu0
        %v2182 = vadd.f32 0.0, %v2181
        %v2183 = vpop.f32.mrf.mxu0
        %v2184 = vadd.f32 0.0, %v2183
        %2185 = vmatmul.bf16.gmra.mxu0 %v2120
        %v2186 = vpop.f32.mrf.mxu0
        %v2187 = vadd.f32 0.0, %v2186
        %v2188 = vpop.f32.mrf.mxu0
        %v2189 = vadd.f32 0.0, %v2188
        %2190 = vmatmul.bf16.gmra.mxu0 %v2123
        %v2191 = vpop.f32.mrf.mxu0
        %v2192 = vadd.f32 0.0, %v2191
        %v2193 = vpop.f32.mrf.mxu0
        %v2194 = vadd.f32 0.0, %v2193
        %2195 = vmatmul.bf16.gmra.mxu0 %v2126
        %v2196 = vpop.f32.mrf.mxu0
        %v2197 = vadd.f32 0.0, %v2196
        %v2198 = vpop.f32.mrf.mxu0
        %v2199 = vadd.f32 0.0, %v2198
        %2200 = vmatmul.bf16.gmra.mxu0 %v2129
        %v2201 = vpop.f32.mrf.mxu0
        %v2202 = vadd.f32 0.0, %v2201
        %v2203 = vpop.f32.mrf.mxu0
        %v2204 = vadd.f32 0.0, %v2203
        %2205 = vmatmul.bf16.gmra.mxu0 %v2132
        %v2206 = vpop.f32.mrf.mxu0
        %v2207 = vadd.f32 0.0, %v2206
        %v2208 = vpop.f32.mrf.mxu0
        %v2209 = vadd.f32 0.0, %v2208
        %2210 = vmatmul.bf16.gmra.mxu0 %v2135
        %v2211 = vpop.f32.mrf.mxu0
        %v2212 = vadd.f32 0.0, %v2211
        %v2213 = vpop.f32.mrf.mxu0
        %v2214 = vadd.f32 0.0, %v2213
        %2215 = vmatmul.bf16.gmra.mxu0 %v2138
        %v2216 = vpop.f32.mrf.mxu0
        %v2217 = vadd.f32 0.0, %v2216
        %v2218 = vpop.f32.mrf.mxu0
        %v2219 = vadd.f32 0.0, %v2218
        %2220 = vmatmul.bf16.gmra.mxu0 %v2141
        %v2221 = vpop.f32.mrf.mxu0
        %v2222 = vadd.f32 0.0, %v2221
        %v2223 = vpop.f32.mrf.mxu0
        %v2224 = vadd.f32 0.0, %v2223
        %2225 = vmatmul.bf16.gmra.mxu0 %v2144
        %v2226 = vpop.f32.mrf.mxu0
        %v2227 = vadd.f32 0.0, %v2226
        %v2228 = vpop.f32.mrf.mxu0
        %v2229 = vadd.f32 0.0, %v2228
        %2230 = vmatmul.bf16.gmra.mxu0 %v2147
        %v2231 = vpop.f32.mrf.mxu0
        %v2232 = vadd.f32 0.0, %v2231
        %v2233 = vpop.f32.mrf.mxu0
        %v2234 = vadd.f32 0.0, %v2233
        %2235 = vmatmul.bf16.gmra.mxu0 %v2150
        %v2236 = vpop.f32.mrf.mxu0
        %v2237 = vadd.f32 0.0, %v2236
        %v2238 = vpop.f32.mrf.mxu0
        %v2239 = vadd.f32 0.0, %v2238
        %2240 = vdwg.mxu0
        %v2273 = vunpack.c.l.b16 %v1489
        %v2274 = vunpack.c.l.b16 %v1490
        %v2275 = vunpack.c.l.b16 %v1491
        %v2276 = vunpack.c.l.b16 %v1492
        %v2277 = vunpack.c.l.b16 %v1493
        %v2278 = vunpack.c.l.b16 %v1494
        %v2279 = vunpack.c.l.b16 %v1495
        %v2280 = vunpack.c.l.b16 %v1496
        %v2281 = vunpack.c.l.b16 %v1497
        %v2282 = vunpack.c.l.b16 %v1498
        %v2283 = vunpack.c.l.b16 %v1499
        %v2284 = vunpack.c.l.b16 %v1500
        %v2285 = vunpack.c.l.b16 %v1501
        %v2286 = vunpack.c.l.b16 %v1502
        %v2287 = vunpack.c.l.b16 %v1503
        %v2288 = vunpack.c.l.b16 %v1504
        %v2289 = vunpack.c.l.b16 %v1505
        %v2290 = vunpack.c.l.b16 %v1506
        %v2291 = vunpack.c.l.b16 %v1507
        %v2292 = vunpack.c.l.b16 %v1508
        %v2293 = vunpack.c.l.b16 %v1509
        %v2294 = vunpack.c.l.b16 %v1510
        %v2295 = vunpack.c.l.b16 %v1511
        %v2296 = vunpack.c.l.b16 %v1512
        %v2297 = vunpack.c.l.b16 %v1513
        %v2298 = vunpack.c.l.b16 %v1514
        %v2299 = vunpack.c.l.b16 %v1515
        %v2300 = vunpack.c.l.b16 %v1516
        %v2301 = vunpack.c.l.b16 %v1517
        %v2302 = vunpack.c.l.b16 %v1518
        %v2303 = vunpack.c.l.b16 %v1519
        %v2304 = vunpack.c.l.b16 %v1520
        %v2305 = vpack.c.b16 %v2274, %v2273
        %v2306 = vpack.c.b16 %v2276, %v2275
        %v2307 = vpack.c.b16 %v2278, %v2277
        %v2308 = vpack.c.b16 %v2280, %v2279
        %v2309 = vpack.c.b16 %v2282, %v2281
        %v2310 = vpack.c.b16 %v2284, %v2283
        %v2311 = vpack.c.b16 %v2286, %v2285
        %v2312 = vpack.c.b16 %v2288, %v2287
        %v2313 = vpack.c.b16 %v2290, %v2289
        %v2314 = vpack.c.b16 %v2292, %v2291
        %v2315 = vpack.c.b16 %v2294, %v2293
        %v2316 = vpack.c.b16 %v2296, %v2295
        %v2317 = vpack.c.b16 %v2298, %v2297
        %v2318 = vpack.c.b16 %v2300, %v2299
        %v2319 = vpack.c.b16 %v2302, %v2301
        %v2320 = vpack.c.b16 %v2304, %v2303
        %v2325 = vunpack.c.l.b16 %v1533
        %v2326 = vunpack.c.l.b16 %v1534
        %v2327 = vunpack.c.l.b16 %v1535
        %v2328 = vunpack.c.l.b16 %v1536
        %v2329 = vpack.c.b16 %v2326, %v2325
        %v2330 = vpack.c.b16 %v2328, %v2327
        %v2334 = vsel %vm1645, %v2305, 0
        %v2337 = vsel %vm1645, %v2306, 0
        %v2340 = vsel %vm1645, %v2307, 0
        %v2343 = vsel %vm1645, %v2308, 0
        %v2346 = vsel %vm1645, %v2309, 0
        %v2349 = vsel %vm1645, %v2310, 0
        %v2352 = vsel %vm1645, %v2311, 0
        %v2355 = vsel %vm1645, %v2312, 0
        %v2358 = vsel %vm1645, %v2313, 0
        %v2361 = vsel %vm1645, %v2314, 0
        %v2364 = vsel %vm1645, %v2315, 0
        %v2367 = vsel %vm1645, %v2316, 0
        %v2370 = vsel %vm1645, %v2317, 0
        %v2373 = vsel %vm1645, %v2318, 0
        %v2376 = vsel %vm1645, %v2319, 0
        %v2379 = vsel %vm1645, %v2320, 0
        %2381 = vmatpush.bf16.msra.mxu0 0
        %2382 = vmatpush.bf16.msra.mxu0 0
        %2383 = vmatpush.bf16.msra.mxu0 0
        %2384 = vmatpush.bf16.msra.mxu0 0
        %2385 = vmatpush.bf16.msra.mxu0 0
        %2386 = vmatpush.bf16.msra.mxu0 0
        %2387 = vmatpush.bf16.msra.mxu0 %v2330
        %2388 = vmatpush.bf16.msra.mxu0 %v2329
        %2389 = vmatmul.bf16.gmra.mxu0 %v2334
        %v2390 = vpop.f32.mrf.mxu0
        %v2391 = vadd.f32 0.0, %v2390
        %v2392 = vpop.f32.mrf.mxu0
        %v2393 = vadd.f32 0.0, %v2392
        %2394 = vmatmul.bf16.gmra.mxu0 %v2337
        %v2395 = vpop.f32.mrf.mxu0
        %v2396 = vadd.f32 0.0, %v2395
        %v2397 = vpop.f32.mrf.mxu0
        %v2398 = vadd.f32 0.0, %v2397
        %2399 = vmatmul.bf16.gmra.mxu0 %v2340
        %v2400 = vpop.f32.mrf.mxu0
        %v2401 = vadd.f32 0.0, %v2400
        %v2402 = vpop.f32.mrf.mxu0
        %v2403 = vadd.f32 0.0, %v2402
        %2404 = vmatmul.bf16.gmra.mxu0 %v2343
        %v2405 = vpop.f32.mrf.mxu0
        %v2406 = vadd.f32 0.0, %v2405
        %v2407 = vpop.f32.mrf.mxu0
        %v2408 = vadd.f32 0.0, %v2407
        %2409 = vmatmul.bf16.gmra.mxu0 %v2346
        %v2410 = vpop.f32.mrf.mxu0
        %v2411 = vadd.f32 0.0, %v2410
        %v2412 = vpop.f32.mrf.mxu0
        %v2413 = vadd.f32 0.0, %v2412
        %2414 = vmatmul.bf16.gmra.mxu0 %v2349
        %v2415 = vpop.f32.mrf.mxu0
        %v2416 = vadd.f32 0.0, %v2415
        %v2417 = vpop.f32.mrf.mxu0
        %v2418 = vadd.f32 0.0, %v2417
        %2419 = vmatmul.bf16.gmra.mxu0 %v2352
        %v2420 = vpop.f32.mrf.mxu0
        %v2421 = vadd.f32 0.0, %v2420
        %v2422 = vpop.f32.mrf.mxu0
        %v2423 = vadd.f32 0.0, %v2422
        %2424 = vmatmul.bf16.gmra.mxu0 %v2355
        %v2425 = vpop.f32.mrf.mxu0
        %v2426 = vadd.f32 0.0, %v2425
        %v2427 = vpop.f32.mrf.mxu0
        %v2428 = vadd.f32 0.0, %v2427
        %2429 = vmatmul.bf16.gmra.mxu0 %v2358
        %v2430 = vpop.f32.mrf.mxu0
        %v2431 = vadd.f32 0.0, %v2430
        %v2432 = vpop.f32.mrf.mxu0
        %v2433 = vadd.f32 0.0, %v2432
        %2434 = vmatmul.bf16.gmra.mxu0 %v2361
        %v2435 = vpop.f32.mrf.mxu0
        %v2436 = vadd.f32 0.0, %v2435
        %v2437 = vpop.f32.mrf.mxu0
        %v2438 = vadd.f32 0.0, %v2437
        %2439 = vmatmul.bf16.gmra.mxu0 %v2364
        %v2440 = vpop.f32.mrf.mxu0
        %v2441 = vadd.f32 0.0, %v2440
        %v2442 = vpop.f32.mrf.mxu0
        %v2443 = vadd.f32 0.0, %v2442
        %2444 = vmatmul.bf16.gmra.mxu0 %v2367
        %v2445 = vpop.f32.mrf.mxu0
        %v2446 = vadd.f32 0.0, %v2445
        %v2447 = vpop.f32.mrf.mxu0
        %v2448 = vadd.f32 0.0, %v2447
        %2449 = vmatmul.bf16.gmra.mxu0 %v2370
        %v2450 = vpop.f32.mrf.mxu0
        %v2451 = vadd.f32 0.0, %v2450
        %v2452 = vpop.f32.mrf.mxu0
        %v2453 = vadd.f32 0.0, %v2452
        %2454 = vmatmul.bf16.gmra.mxu0 %v2373
        %v2455 = vpop.f32.mrf.mxu0
        %v2456 = vadd.f32 0.0, %v2455
        %v2457 = vpop.f32.mrf.mxu0
        %v2458 = vadd.f32 0.0, %v2457
        %2459 = vmatmul.bf16.gmra.mxu0 %v2376
        %v2460 = vpop.f32.mrf.mxu0
        %v2461 = vadd.f32 0.0, %v2460
        %v2462 = vpop.f32.mrf.mxu0
        %v2463 = vadd.f32 0.0, %v2462
        %2464 = vmatmul.bf16.gmra.mxu0 %v2379
        %v2465 = vpop.f32.mrf.mxu0
        %v2466 = vadd.f32 0.0, %v2465
        %v2467 = vpop.f32.mrf.mxu0
        %v2468 = vadd.f32 0.0, %v2467
        %2469 = vdwg.mxu0
        %v2470 = vld [vmem:[#allocation2] sm:$0xff]
        %v2471 = vld [vmem:[#allocation2 + $0x8] sm:$0xff]
        %v2472 = vld [vmem:[#allocation2 + $0x10] sm:$0xff]
        %v2473 = vld [vmem:[#allocation2 + $0x18] sm:$0xff]
        %v2474 = vld [vmem:[#allocation2 + $0x20] sm:$0xff]
        %v2475 = vld [vmem:[#allocation2 + $0x28] sm:$0xff]
        %v2476 = vld [vmem:[#allocation2 + $0x30] sm:$0xff]
        %v2477 = vld [vmem:[#allocation2 + $0x38] sm:$0xff]
        %v2478 = vld [vmem:[#allocation2 + $0x40] sm:$0xff]
        %v2479 = vld [vmem:[#allocation2 + $0x48] sm:$0xff]
        %v2480 = vld [vmem:[#allocation2 + $0x50] sm:$0xff]
        %v2481 = vld [vmem:[#allocation2 + $0x58] sm:$0xff]
        %v2482 = vld [vmem:[#allocation2 + $0x60] sm:$0xff]
        %v2483 = vld [vmem:[#allocation2 + $0x68] sm:$0xff]
        %v2484 = vld [vmem:[#allocation2 + $0x70] sm:$0xff]
        %v2485 = vld [vmem:[#allocation2 + $0x78] sm:$0xff]
        %v2486 = vld [vmem:[#allocation2 + $0x80] sm:$0xff]
        %v2487 = vld [vmem:[#allocation2 + $0x88] sm:$0xff]
        %v2488 = vld [vmem:[#allocation2 + $0x90] sm:$0xff]
        %v2489 = vld [vmem:[#allocation2 + $0x98] sm:$0xff]
        %v2490 = vld [vmem:[#allocation2 + $0xa0] sm:$0xff]
        %v2491 = vld [vmem:[#allocation2 + $0xa8] sm:$0xff]
        %v2492 = vld [vmem:[#allocation2 + $0xb0] sm:$0xff]
        %v2493 = vld [vmem:[#allocation2 + $0xb8] sm:$0xff]
        %v2494 = vld [vmem:[#allocation2 + $0xc0] sm:$0xff]
        %v2495 = vld [vmem:[#allocation2 + $0xc8] sm:$0xff]
        %v2496 = vld [vmem:[#allocation2 + $0xd0] sm:$0xff]
        %v2497 = vld [vmem:[#allocation2 + $0xd8] sm:$0xff]
        %v2498 = vld [vmem:[#allocation2 + $0xe0] sm:$0xff]
        %v2499 = vld [vmem:[#allocation2 + $0xe8] sm:$0xff]
        %v2500 = vld [vmem:[#allocation2 + $0xf0] sm:$0xff]
        %v2501 = vld [vmem:[#allocation2 + $0xf8] sm:$0xff]
        %v2502 = vld [vmem:[#allocation2 + $0x100] sm:$0xff]
        %v2503 = vld [vmem:[#allocation2 + $0x108] sm:$0xff]
        %v2504 = vld [vmem:[#allocation2 + $0x110] sm:$0xff]
        %v2505 = vld [vmem:[#allocation2 + $0x118] sm:$0xff]
        %v2506 = vld [vmem:[#allocation2 + $0x120] sm:$0xff]
        %v2507 = vld [vmem:[#allocation2 + $0x128] sm:$0xff]
        %v2508 = vld [vmem:[#allocation2 + $0x130] sm:$0xff]
        %v2509 = vld [vmem:[#allocation2 + $0x138] sm:$0xff]
        %v2510 = vld [vmem:[#allocation2 + $0x140] sm:$0xff]
        %v2511 = vld [vmem:[#allocation2 + $0x148] sm:$0xff]
        %v2512 = vld [vmem:[#allocation2 + $0x150] sm:$0xff]
        %v2513 = vld [vmem:[#allocation2 + $0x158] sm:$0xff]
        %v2514 = vld [vmem:[#allocation2 + $0x160] sm:$0xff]
        %v2515 = vld [vmem:[#allocation2 + $0x168] sm:$0xff]
        %v2516 = vld [vmem:[#allocation2 + $0x170] sm:$0xff]
        %v2517 = vld [vmem:[#allocation2 + $0x178] sm:$0xff]
        %v2518 = vld [vmem:[#allocation2 + $0x180] sm:$0xff]
        %v2519 = vld [vmem:[#allocation2 + $0x188] sm:$0xff]
        %v2520 = vld [vmem:[#allocation2 + $0x190] sm:$0xff]
        %v2521 = vld [vmem:[#allocation2 + $0x198] sm:$0xff]
        %v2522 = vld [vmem:[#allocation2 + $0x1a0] sm:$0xff]
        %v2523 = vld [vmem:[#allocation2 + $0x1a8] sm:$0xff]
        %v2524 = vld [vmem:[#allocation2 + $0x1b0] sm:$0xff]
        %v2525 = vld [vmem:[#allocation2 + $0x1b8] sm:$0xff]
        %v2526 = vld [vmem:[#allocation2 + $0x1c0] sm:$0xff]
        %v2527 = vld [vmem:[#allocation2 + $0x1c8] sm:$0xff]
        %v2528 = vld [vmem:[#allocation2 + $0x1d0] sm:$0xff]
        %v2529 = vld [vmem:[#allocation2 + $0x1d8] sm:$0xff]
        %v2530 = vld [vmem:[#allocation2 + $0x1e0] sm:$0xff]
        %v2531 = vld [vmem:[#allocation2 + $0x1e8] sm:$0xff]
        %v2532 = vld [vmem:[#allocation2 + $0x1f0] sm:$0xff]
        %v2533 = vld [vmem:[#allocation2 + $0x1f8] sm:$0xff]
        %v2534 = vld [vmem:[#allocation2 + $0x200] sm:$0xff]
        %v2535 = vld [vmem:[#allocation2 + $0x208] sm:$0xff]
        %v2536 = vld [vmem:[#allocation2 + $0x210] sm:$0xff]
        %v2537 = vld [vmem:[#allocation2 + $0x218] sm:$0xff]
        %v2538 = vld [vmem:[#allocation2 + $0x220] sm:$0xff]
        %v2539 = vld [vmem:[#allocation2 + $0x228] sm:$0xff]
        %v2540 = vld [vmem:[#allocation2 + $0x230] sm:$0xff]
        %v2541 = vld [vmem:[#allocation2 + $0x238] sm:$0xff]
        %v2542 = vld [vmem:[#allocation2 + $0x240] sm:$0xff]
        %v2543 = vld [vmem:[#allocation2 + $0x248] sm:$0xff]
        %v2544 = vld [vmem:[#allocation2 + $0x250] sm:$0xff]
        %v2545 = vld [vmem:[#allocation2 + $0x258] sm:$0xff]
        %v2546 = vld [vmem:[#allocation2 + $0x260] sm:$0xff]
        %v2547 = vld [vmem:[#allocation2 + $0x268] sm:$0xff]
        %v2548 = vld [vmem:[#allocation2 + $0x270] sm:$0xff]
        %v2549 = vld [vmem:[#allocation2 + $0x278] sm:$0xff]
        %v2550 = vld [vmem:[#allocation2 + $0x280] sm:$0xff]
        %v2551 = vld [vmem:[#allocation2 + $0x288] sm:$0xff]
        %v2552 = vld [vmem:[#allocation2 + $0x290] sm:$0xff]
        %v2553 = vld [vmem:[#allocation2 + $0x298] sm:$0xff]
        %v2554 = vld [vmem:[#allocation2 + $0x2a0] sm:$0xff]
        %v2555 = vld [vmem:[#allocation2 + $0x2a8] sm:$0xff]
        %v2556 = vld [vmem:[#allocation2 + $0x2b0] sm:$0xff]
        %v2557 = vld [vmem:[#allocation2 + $0x2b8] sm:$0xff]
        %v2558 = vld [vmem:[#allocation2 + $0x2c0] sm:$0xff]
        %v2559 = vld [vmem:[#allocation2 + $0x2c8] sm:$0xff]
        %v2560 = vld [vmem:[#allocation2 + $0x2d0] sm:$0xff]
        %v2561 = vld [vmem:[#allocation2 + $0x2d8] sm:$0xff]
        %v2562 = vld [vmem:[#allocation2 + $0x2e0] sm:$0xff]
        %v2563 = vld [vmem:[#allocation2 + $0x2e8] sm:$0xff]
        %v2564 = vld [vmem:[#allocation2 + $0x2f0] sm:$0xff]
        %v2565 = vld [vmem:[#allocation2 + $0x2f8] sm:$0xff]
        %v2566 = vld [vmem:[#allocation2 + $0x300] sm:$0xff]
        %v2567 = vld [vmem:[#allocation2 + $0x308] sm:$0xff]
        %v2568 = vld [vmem:[#allocation2 + $0x310] sm:$0xff]
        %v2569 = vld [vmem:[#allocation2 + $0x318] sm:$0xff]
        %v2570 = vld [vmem:[#allocation2 + $0x320] sm:$0xff]
        %v2571 = vld [vmem:[#allocation2 + $0x328] sm:$0xff]
        %v2572 = vld [vmem:[#allocation2 + $0x330] sm:$0xff]
        %v2573 = vld [vmem:[#allocation2 + $0x338] sm:$0xff]
        %v2574 = vld [vmem:[#allocation2 + $0x340] sm:$0xff]
        %v2575 = vld [vmem:[#allocation2 + $0x348] sm:$0xff]
        %v2576 = vld [vmem:[#allocation2 + $0x350] sm:$0xff]
        %v2577 = vld [vmem:[#allocation2 + $0x358] sm:$0xff]
        %v2578 = vld [vmem:[#allocation2 + $0x360] sm:$0xff]
        %v2579 = vld [vmem:[#allocation2 + $0x368] sm:$0xff]
        %v2580 = vld [vmem:[#allocation2 + $0x370] sm:$0xff]
        %v2581 = vld [vmem:[#allocation2 + $0x378] sm:$0xff]
        %v2582 = vld [vmem:[#allocation2 + $0x380] sm:$0xff]
        %v2583 = vld [vmem:[#allocation2 + $0x388] sm:$0xff]
        %v2584 = vld [vmem:[#allocation2 + $0x390] sm:$0xff]
        %v2585 = vld [vmem:[#allocation2 + $0x398] sm:$0xff]
        %v2586 = vld [vmem:[#allocation2 + $0x3a0] sm:$0xff]
        %v2587 = vld [vmem:[#allocation2 + $0x3a8] sm:$0xff]
        %v2588 = vld [vmem:[#allocation2 + $0x3b0] sm:$0xff]
        %v2589 = vld [vmem:[#allocation2 + $0x3b8] sm:$0xff]
        %v2590 = vld [vmem:[#allocation2 + $0x3c0] sm:$0xff]
        %v2591 = vld [vmem:[#allocation2 + $0x3c8] sm:$0xff]
        %v2592 = vld [vmem:[#allocation2 + $0x3d0] sm:$0xff]
        %v2593 = vld [vmem:[#allocation2 + $0x3d8] sm:$0xff]
        %v2594 = vld [vmem:[#allocation2 + $0x3e0] sm:$0xff]
        %v2595 = vld [vmem:[#allocation2 + $0x3e8] sm:$0xff]
        %v2596 = vld [vmem:[#allocation2 + $0x3f0] sm:$0xff]
        %v2597 = vld [vmem:[#allocation2 + $0x3f8] sm:$0xff]
        %2598 = vmax.xlane.f32.xlu0 %v1704
        %v2599 = vpop.xlane.xlu0 %2598
        %2600 = vmax.xlane.f32.xlu0 %v1706
        %v2601 = vpop.xlane.xlu0 %2600
        %2602 = vmax.xlane.f32.xlu0 %v1709
        %v2603 = vpop.xlane.xlu0 %2602
        %2604 = vmax.xlane.f32.xlu0 %v1711
        %v2605 = vpop.xlane.xlu0 %2604
        %2606 = vmax.xlane.f32.xlu0 %v1714
        %v2607 = vpop.xlane.xlu0 %2606
        %2608 = vmax.xlane.f32.xlu0 %v1716
        %v2609 = vpop.xlane.xlu0 %2608
        %2610 = vmax.xlane.f32.xlu0 %v1719
        %v2611 = vpop.xlane.xlu0 %2610
        %2612 = vmax.xlane.f32.xlu0 %v1721
        %v2613 = vpop.xlane.xlu0 %2612
        %2614 = vmax.xlane.f32.xlu0 %v1724
        %v2615 = vpop.xlane.xlu0 %2614
        %2616 = vmax.xlane.f32.xlu0 %v1726
        %v2617 = vpop.xlane.xlu0 %2616
        %2618 = vmax.xlane.f32.xlu0 %v1729
        %v2619 = vpop.xlane.xlu0 %2618
        %2620 = vmax.xlane.f32.xlu0 %v1731
        %v2621 = vpop.xlane.xlu0 %2620
        %2622 = vmax.xlane.f32.xlu0 %v1734
        %v2623 = vpop.xlane.xlu0 %2622
        %2624 = vmax.xlane.f32.xlu0 %v1736
        %v2625 = vpop.xlane.xlu0 %2624
        %2626 = vmax.xlane.f32.xlu0 %v1739
        %v2627 = vpop.xlane.xlu0 %2626
        %2628 = vmax.xlane.f32.xlu0 %v1741
        %v2629 = vpop.xlane.xlu0 %2628
        %2630 = vmax.xlane.f32.xlu0 %v1744
        %v2631 = vpop.xlane.xlu0 %2630
        %2632 = vmax.xlane.f32.xlu0 %v1746
        %v2633 = vpop.xlane.xlu0 %2632
        %2634 = vmax.xlane.f32.xlu0 %v1749
        %v2635 = vpop.xlane.xlu0 %2634
        %2636 = vmax.xlane.f32.xlu0 %v1751
        %v2637 = vpop.xlane.xlu0 %2636
        %2638 = vmax.xlane.f32.xlu0 %v1754
        %v2639 = vpop.xlane.xlu0 %2638
        %2640 = vmax.xlane.f32.xlu0 %v1756
        %v2641 = vpop.xlane.xlu0 %2640
        %2642 = vmax.xlane.f32.xlu0 %v1759
        %v2643 = vpop.xlane.xlu0 %2642
        %2644 = vmax.xlane.f32.xlu0 %v1761
        %v2645 = vpop.xlane.xlu0 %2644
        %2646 = vmax.xlane.f32.xlu0 %v1764
        %v2647 = vpop.xlane.xlu0 %2646
        %2648 = vmax.xlane.f32.xlu0 %v1766
        %v2649 = vpop.xlane.xlu0 %2648
        %2650 = vmax.xlane.f32.xlu0 %v1769
        %v2651 = vpop.xlane.xlu0 %2650
        %2652 = vmax.xlane.f32.xlu0 %v1771
        %v2653 = vpop.xlane.xlu0 %2652
        %2654 = vmax.xlane.f32.xlu0 %v1774
        %v2655 = vpop.xlane.xlu0 %2654
        %2656 = vmax.xlane.f32.xlu0 %v1776
        %v2657 = vpop.xlane.xlu0 %2656
        %2658 = vmax.xlane.f32.xlu0 %v1779
        %v2659 = vpop.xlane.xlu0 %2658
        %2660 = vmax.xlane.f32.xlu0 %v1781
        %v2661 = vpop.xlane.xlu0 %2660
        %2662 = vmax.xlane.f32.xlu0 %v1933
        %v2663 = vpop.xlane.xlu0 %2662
        %2664 = vmax.xlane.f32.xlu0 %v1935
        %v2665 = vpop.xlane.xlu0 %2664
        %2666 = vmax.xlane.f32.xlu0 %v1938
        %v2667 = vpop.xlane.xlu0 %2666
        %2668 = vmax.xlane.f32.xlu0 %v1940
        %v2669 = vpop.xlane.xlu0 %2668
        %2670 = vmax.xlane.f32.xlu0 %v1943
        %v2671 = vpop.xlane.xlu0 %2670
        %2672 = vmax.xlane.f32.xlu0 %v1945
        %v2673 = vpop.xlane.xlu0 %2672
        %2674 = vmax.xlane.f32.xlu0 %v1948
        %v2675 = vpop.xlane.xlu0 %2674
        %2676 = vmax.xlane.f32.xlu0 %v1950
        %v2677 = vpop.xlane.xlu0 %2676
        %2678 = vmax.xlane.f32.xlu0 %v1953
        %v2679 = vpop.xlane.xlu0 %2678
        %2680 = vmax.xlane.f32.xlu0 %v1955
        %v2681 = vpop.xlane.xlu0 %2680
        %2682 = vmax.xlane.f32.xlu0 %v1958
        %v2683 = vpop.xlane.xlu0 %2682
        %2684 = vmax.xlane.f32.xlu0 %v1960
        %v2685 = vpop.xlane.xlu0 %2684
        %2686 = vmax.xlane.f32.xlu0 %v1963
        %v2687 = vpop.xlane.xlu0 %2686
        %2688 = vmax.xlane.f32.xlu0 %v1965
        %v2689 = vpop.xlane.xlu0 %2688
        %2690 = vmax.xlane.f32.xlu0 %v1968
        %v2691 = vpop.xlane.xlu0 %2690
        %2692 = vmax.xlane.f32.xlu0 %v1970
        %v2693 = vpop.xlane.xlu0 %2692
        %2694 = vmax.xlane.f32.xlu0 %v1973
        %v2695 = vpop.xlane.xlu0 %2694
        %2696 = vmax.xlane.f32.xlu0 %v1975
        %v2697 = vpop.xlane.xlu0 %2696
        %2698 = vmax.xlane.f32.xlu0 %v1978
        %v2699 = vpop.xlane.xlu0 %2698
        %2700 = vmax.xlane.f32.xlu0 %v1980
        %v2701 = vpop.xlane.xlu0 %2700
        %2702 = vmax.xlane.f32.xlu0 %v1983
        %v2703 = vpop.xlane.xlu0 %2702
        %2704 = vmax.xlane.f32.xlu0 %v1985
        %v2705 = vpop.xlane.xlu0 %2704
        %2706 = vmax.xlane.f32.xlu0 %v1988
        %v2707 = vpop.xlane.xlu0 %2706
        %2708 = vmax.xlane.f32.xlu0 %v1990
        %v2709 = vpop.xlane.xlu0 %2708
        %2710 = vmax.xlane.f32.xlu0 %v1993
        %v2711 = vpop.xlane.xlu0 %2710
        %2712 = vmax.xlane.f32.xlu0 %v1995
        %v2713 = vpop.xlane.xlu0 %2712
        %2714 = vmax.xlane.f32.xlu0 %v1998
        %v2715 = vpop.xlane.xlu0 %2714
        %2716 = vmax.xlane.f32.xlu0 %v2000
        %v2717 = vpop.xlane.xlu0 %2716
        %2718 = vmax.xlane.f32.xlu0 %v2003
        %v2719 = vpop.xlane.xlu0 %2718
        %2720 = vmax.xlane.f32.xlu0 %v2005
        %v2721 = vpop.xlane.xlu0 %2720
        %2722 = vmax.xlane.f32.xlu0 %v2008
        %v2723 = vpop.xlane.xlu0 %2722
        %2724 = vmax.xlane.f32.xlu0 %v2010
        %v2725 = vpop.xlane.xlu0 %2724
        %2726 = vmax.xlane.f32.xlu0 %v2162
        %v2727 = vpop.xlane.xlu0 %2726
        %2728 = vmax.xlane.f32.xlu0 %v2164
        %v2729 = vpop.xlane.xlu0 %2728
        %2730 = vmax.xlane.f32.xlu0 %v2167
        %v2731 = vpop.xlane.xlu0 %2730
        %2732 = vmax.xlane.f32.xlu0 %v2169
        %v2733 = vpop.xlane.xlu0 %2732
        %2734 = vmax.xlane.f32.xlu0 %v2172
        %v2735 = vpop.xlane.xlu0 %2734
        %2736 = vmax.xlane.f32.xlu0 %v2174
        %v2737 = vpop.xlane.xlu0 %2736
        %2738 = vmax.xlane.f32.xlu0 %v2177
        %v2739 = vpop.xlane.xlu0 %2738
        %2740 = vmax.xlane.f32.xlu0 %v2179
        %v2741 = vpop.xlane.xlu0 %2740
        %2742 = vmax.xlane.f32.xlu0 %v2182
        %v2743 = vpop.xlane.xlu0 %2742
        %2744 = vmax.xlane.f32.xlu0 %v2184
        %v2745 = vpop.xlane.xlu0 %2744
        %2746 = vmax.xlane.f32.xlu0 %v2187
        %v2747 = vpop.xlane.xlu0 %2746
        %2748 = vmax.xlane.f32.xlu0 %v2189
        %v2749 = vpop.xlane.xlu0 %2748
        %2750 = vmax.xlane.f32.xlu0 %v2192
        %v2751 = vpop.xlane.xlu0 %2750
        %2752 = vmax.xlane.f32.xlu0 %v2194
        %v2753 = vpop.xlane.xlu0 %2752
        %2754 = vmax.xlane.f32.xlu0 %v2197
        %v2755 = vpop.xlane.xlu0 %2754
        %2756 = vmax.xlane.f32.xlu0 %v2199
        %v2757 = vpop.xlane.xlu0 %2756
        %2758 = vmax.xlane.f32.xlu0 %v2202
        %v2759 = vpop.xlane.xlu0 %2758
        %2760 = vmax.xlane.f32.xlu0 %v2204
        %v2761 = vpop.xlane.xlu0 %2760
        %2762 = vmax.xlane.f32.xlu0 %v2207
        %v2763 = vpop.xlane.xlu0 %2762
        %2764 = vmax.xlane.f32.xlu0 %v2209
        %v2765 = vpop.xlane.xlu0 %2764
        %2766 = vmax.xlane.f32.xlu0 %v2212
        %v2767 = vpop.xlane.xlu0 %2766
        %2768 = vmax.xlane.f32.xlu0 %v2214
        %v2769 = vpop.xlane.xlu0 %2768
        %2770 = vmax.xlane.f32.xlu0 %v2217
        %v2771 = vpop.xlane.xlu0 %2770
        %2772 = vmax.xlane.f32.xlu0 %v2219
        %v2773 = vpop.xlane.xlu0 %2772
        %2774 = vmax.xlane.f32.xlu0 %v2222
        %v2775 = vpop.xlane.xlu0 %2774
        %2776 = vmax.xlane.f32.xlu0 %v2224
        %v2777 = vpop.xlane.xlu0 %2776
        %2778 = vmax.xlane.f32.xlu0 %v2227
        %v2779 = vpop.xlane.xlu0 %2778
        %2780 = vmax.xlane.f32.xlu0 %v2229
        %v2781 = vpop.xlane.xlu0 %2780
        %2782 = vmax.xlane.f32.xlu0 %v2232
        %v2783 = vpop.xlane.xlu0 %2782
        %2784 = vmax.xlane.f32.xlu0 %v2234
        %v2785 = vpop.xlane.xlu0 %2784
        %2786 = vmax.xlane.f32.xlu0 %v2237
        %v2787 = vpop.xlane.xlu0 %2786
        %2788 = vmax.xlane.f32.xlu0 %v2239
        %v2789 = vpop.xlane.xlu0 %2788
        %2790 = vmax.xlane.f32.xlu0 %v2391
        %v2791 = vpop.xlane.xlu0 %2790
        %2792 = vmax.xlane.f32.xlu0 %v2393
        %v2793 = vpop.xlane.xlu0 %2792
        %2794 = vmax.xlane.f32.xlu0 %v2396
        %v2795 = vpop.xlane.xlu0 %2794
        %2796 = vmax.xlane.f32.xlu0 %v2398
        %v2797 = vpop.xlane.xlu0 %2796
        %2798 = vmax.xlane.f32.xlu0 %v2401
        %v2799 = vpop.xlane.xlu0 %2798
        %2800 = vmax.xlane.f32.xlu0 %v2403
        %v2801 = vpop.xlane.xlu0 %2800
        %2802 = vmax.xlane.f32.xlu0 %v2406
        %v2803 = vpop.xlane.xlu0 %2802
        %2804 = vmax.xlane.f32.xlu0 %v2408
        %v2805 = vpop.xlane.xlu0 %2804
        %2806 = vmax.xlane.f32.xlu0 %v2411
        %v2807 = vpop.xlane.xlu0 %2806
        %2808 = vmax.xlane.f32.xlu0 %v2413
        %v2809 = vpop.xlane.xlu0 %2808
        %2810 = vmax.xlane.f32.xlu0 %v2416
        %v2811 = vpop.xlane.xlu0 %2810
        %2812 = vmax.xlane.f32.xlu0 %v2418
        %v2813 = vpop.xlane.xlu0 %2812
        %2814 = vmax.xlane.f32.xlu0 %v2421
        %v2815 = vpop.xlane.xlu0 %2814
        %2816 = vmax.xlane.f32.xlu0 %v2423
        %v2817 = vpop.xlane.xlu0 %2816
        %2818 = vmax.xlane.f32.xlu0 %v2426
        %v2819 = vpop.xlane.xlu0 %2818
        %2820 = vmax.xlane.f32.xlu0 %v2428
        %v2821 = vpop.xlane.xlu0 %2820
        %2822 = vmax.xlane.f32.xlu0 %v2431
        %v2823 = vpop.xlane.xlu0 %2822
        %2824 = vmax.xlane.f32.xlu0 %v2433
        %v2825 = vpop.xlane.xlu0 %2824
        %2826 = vmax.xlane.f32.xlu0 %v2436
        %v2827 = vpop.xlane.xlu0 %2826
        %2828 = vmax.xlane.f32.xlu0 %v2438
        %v2829 = vpop.xlane.xlu0 %2828
        %2830 = vmax.xlane.f32.xlu0 %v2441
        %v2831 = vpop.xlane.xlu0 %2830
        %2832 = vmax.xlane.f32.xlu0 %v2443
        %v2833 = vpop.xlane.xlu0 %2832
        %2834 = vmax.xlane.f32.xlu0 %v2446
        %v2835 = vpop.xlane.xlu0 %2834
        %2836 = vmax.xlane.f32.xlu0 %v2448
        %v2837 = vpop.xlane.xlu0 %2836
        %2838 = vmax.xlane.f32.xlu0 %v2451
        %v2839 = vpop.xlane.xlu0 %2838
        %2840 = vmax.xlane.f32.xlu0 %v2453
        %v2841 = vpop.xlane.xlu0 %2840
        %2842 = vmax.xlane.f32.xlu0 %v2456
        %v2843 = vpop.xlane.xlu0 %2842
        %2844 = vmax.xlane.f32.xlu0 %v2458
        %v2845 = vpop.xlane.xlu0 %2844
        %2846 = vmax.xlane.f32.xlu0 %v2461
        %v2847 = vpop.xlane.xlu0 %2846
        %2848 = vmax.xlane.f32.xlu0 %v2463
        %v2849 = vpop.xlane.xlu0 %2848
        %2850 = vmax.xlane.f32.xlu0 %v2466
        %v2851 = vpop.xlane.xlu0 %2850
        %2852 = vmax.xlane.f32.xlu0 %v2468
        %v2853 = vpop.xlane.xlu0 %2852
        %v2854 = vmax.f32 %v2470, %v2599
        %v2855 = vmax.f32 %v2471, %v2601
        %v2856 = vmax.f32 %v2472, %v2603
        %v2857 = vmax.f32 %v2473, %v2605
        %v2858 = vmax.f32 %v2474, %v2607
        %v2859 = vmax.f32 %v2475, %v2609
        %v2860 = vmax.f32 %v2476, %v2611
        %v2861 = vmax.f32 %v2477, %v2613
        %v2862 = vmax.f32 %v2478, %v2615
        %v2863 = vmax.f32 %v2479, %v2617
        %v2864 = vmax.f32 %v2480, %v2619
        %v2865 = vmax.f32 %v2481, %v2621
        %v2866 = vmax.f32 %v2482, %v2623
        %v2867 = vmax.f32 %v2483, %v2625
        %v2868 = vmax.f32 %v2484, %v2627
        %v2869 = vmax.f32 %v2485, %v2629
        %v2870 = vmax.f32 %v2486, %v2631
        %v2871 = vmax.f32 %v2487, %v2633
        %v2872 = vmax.f32 %v2488, %v2635
        %v2873 = vmax.f32 %v2489, %v2637
        %v2874 = vmax.f32 %v2490, %v2639
        %v2875 = vmax.f32 %v2491, %v2641
        %v2876 = vmax.f32 %v2492, %v2643
        %v2877 = vmax.f32 %v2493, %v2645
        %v2878 = vmax.f32 %v2494, %v2647
        %v2879 = vmax.f32 %v2495, %v2649
        %v2880 = vmax.f32 %v2496, %v2651
        %v2881 = vmax.f32 %v2497, %v2653
        %v2882 = vmax.f32 %v2498, %v2655
        %v2883 = vmax.f32 %v2499, %v2657
        %v2884 = vmax.f32 %v2500, %v2659
        %v2885 = vmax.f32 %v2501, %v2661
        %v2886 = vmax.f32 %v2502, %v2663
        %v2887 = vmax.f32 %v2503, %v2665
        %v2888 = vmax.f32 %v2504, %v2667
        %v2889 = vmax.f32 %v2505, %v2669
        %v2890 = vmax.f32 %v2506, %v2671
        %v2891 = vmax.f32 %v2507, %v2673
        %v2892 = vmax.f32 %v2508, %v2675
        %v2893 = vmax.f32 %v2509, %v2677
        %v2894 = vmax.f32 %v2510, %v2679
        %v2895 = vmax.f32 %v2511, %v2681
        %v2896 = vmax.f32 %v2512, %v2683
        %v2897 = vmax.f32 %v2513, %v2685
        %v2898 = vmax.f32 %v2514, %v2687
        %v2899 = vmax.f32 %v2515, %v2689
        %v2900 = vmax.f32 %v2516, %v2691
        %v2901 = vmax.f32 %v2517, %v2693
        %v2902 = vmax.f32 %v2518, %v2695
        %v2903 = vmax.f32 %v2519, %v2697
        %v2904 = vmax.f32 %v2520, %v2699
        %v2905 = vmax.f32 %v2521, %v2701
        %v2906 = vmax.f32 %v2522, %v2703
        %v2907 = vmax.f32 %v2523, %v2705
        %v2908 = vmax.f32 %v2524, %v2707
        %v2909 = vmax.f32 %v2525, %v2709
        %v2910 = vmax.f32 %v2526, %v2711
        %v2911 = vmax.f32 %v2527, %v2713
        %v2912 = vmax.f32 %v2528, %v2715
        %v2913 = vmax.f32 %v2529, %v2717
        %v2914 = vmax.f32 %v2530, %v2719
        %v2915 = vmax.f32 %v2531, %v2721
        %v2916 = vmax.f32 %v2532, %v2723
        %v2917 = vmax.f32 %v2533, %v2725
        %v2918 = vmax.f32 %v2534, %v2727
        %v2919 = vmax.f32 %v2535, %v2729
        %v2920 = vmax.f32 %v2536, %v2731
        %v2921 = vmax.f32 %v2537, %v2733
        %v2922 = vmax.f32 %v2538, %v2735
        %v2923 = vmax.f32 %v2539, %v2737
        %v2924 = vmax.f32 %v2540, %v2739
        %v2925 = vmax.f32 %v2541, %v2741
        %v2926 = vmax.f32 %v2542, %v2743
        %v2927 = vmax.f32 %v2543, %v2745
        %v2928 = vmax.f32 %v2544, %v2747
        %v2929 = vmax.f32 %v2545, %v2749
        %v2930 = vmax.f32 %v2546, %v2751
        %v2931 = vmax.f32 %v2547, %v2753
        %v2932 = vmax.f32 %v2548, %v2755
        %v2933 = vmax.f32 %v2549, %v2757
        %v2934 = vmax.f32 %v2550, %v2759
        %v2935 = vmax.f32 %v2551, %v2761
        %v2936 = vmax.f32 %v2552, %v2763
        %v2937 = vmax.f32 %v2553, %v2765
        %v2938 = vmax.f32 %v2554, %v2767
        %v2939 = vmax.f32 %v2555, %v2769
        %v2940 = vmax.f32 %v2556, %v2771
        %v2941 = vmax.f32 %v2557, %v2773
        %v2942 = vmax.f32 %v2558, %v2775
        %v2943 = vmax.f32 %v2559, %v2777
        %v2944 = vmax.f32 %v2560, %v2779
        %v2945 = vmax.f32 %v2561, %v2781
        %v2946 = vmax.f32 %v2562, %v2783
        %v2947 = vmax.f32 %v2563, %v2785
        %v2948 = vmax.f32 %v2564, %v2787
        %v2949 = vmax.f32 %v2565, %v2789
        %v2950 = vmax.f32 %v2566, %v2791
        %v2951 = vmax.f32 %v2567, %v2793
        %v2952 = vmax.f32 %v2568, %v2795
        %v2953 = vmax.f32 %v2569, %v2797
        %v2954 = vmax.f32 %v2570, %v2799
        %v2955 = vmax.f32 %v2571, %v2801
        %v2956 = vmax.f32 %v2572, %v2803
        %v2957 = vmax.f32 %v2573, %v2805
        %v2958 = vmax.f32 %v2574, %v2807
        %v2959 = vmax.f32 %v2575, %v2809
        %v2960 = vmax.f32 %v2576, %v2811
        %v2961 = vmax.f32 %v2577, %v2813
        %v2962 = vmax.f32 %v2578, %v2815
        %v2963 = vmax.f32 %v2579, %v2817
        %v2964 = vmax.f32 %v2580, %v2819
        %v2965 = vmax.f32 %v2581, %v2821
        %v2966 = vmax.f32 %v2582, %v2823
        %v2967 = vmax.f32 %v2583, %v2825
        %v2968 = vmax.f32 %v2584, %v2827
        %v2969 = vmax.f32 %v2585, %v2829
        %v2970 = vmax.f32 %v2586, %v2831
        %v2971 = vmax.f32 %v2587, %v2833
        %v2972 = vmax.f32 %v2588, %v2835
        %v2973 = vmax.f32 %v2589, %v2837
        %v2974 = vmax.f32 %v2590, %v2839
        %v2975 = vmax.f32 %v2591, %v2841
        %v2976 = vmax.f32 %v2592, %v2843
        %v2977 = vmax.f32 %v2593, %v2845
        %v2978 = vmax.f32 %v2594, %v2847
        %v2979 = vmax.f32 %v2595, %v2849
        %v2980 = vmax.f32 %v2596, %v2851
        %v2981 = vmax.f32 %v2597, %v2853
        %v2982 = vsub.f32 %v2470, %v2854
        %v2983 = vsub.f32 %v2471, %v2855
        %v2984 = vsub.f32 %v2472, %v2856
        %v2985 = vsub.f32 %v2473, %v2857
        %v2986 = vsub.f32 %v2474, %v2858
        %v2987 = vsub.f32 %v2475, %v2859
        %v2988 = vsub.f32 %v2476, %v2860
        %v2989 = vsub.f32 %v2477, %v2861
        %v2990 = vsub.f32 %v2478, %v2862
        %v2991 = vsub.f32 %v2479, %v2863
        %v2992 = vsub.f32 %v2480, %v2864
        %v2993 = vsub.f32 %v2481, %v2865
        %v2994 = vsub.f32 %v2482, %v2866
        %v2995 = vsub.f32 %v2483, %v2867
        %v2996 = vsub.f32 %v2484, %v2868
        %v2997 = vsub.f32 %v2485, %v2869
        %v2998 = vsub.f32 %v2486, %v2870
        %v2999 = vsub.f32 %v2487, %v2871
        %v3000 = vsub.f32 %v2488, %v2872
        %v3001 = vsub.f32 %v2489, %v2873
        %v3002 = vsub.f32 %v2490, %v2874
        %v3003 = vsub.f32 %v2491, %v2875
        %v3004 = vsub.f32 %v2492, %v2876
        %v3005 = vsub.f32 %v2493, %v2877
        %v3006 = vsub.f32 %v2494, %v2878
        %v3007 = vsub.f32 %v2495, %v2879
        %v3008 = vsub.f32 %v2496, %v2880
        %v3009 = vsub.f32 %v2497, %v2881
        %v3010 = vsub.f32 %v2498, %v2882
        %v3011 = vsub.f32 %v2499, %v2883
        %v3012 = vsub.f32 %v2500, %v2884
        %v3013 = vsub.f32 %v2501, %v2885
        %v3014 = vsub.f32 %v2502, %v2886
        %v3015 = vsub.f32 %v2503, %v2887
        %v3016 = vsub.f32 %v2504, %v2888
        %v3017 = vsub.f32 %v2505, %v2889
        %v3018 = vsub.f32 %v2506, %v2890
        %v3019 = vsub.f32 %v2507, %v2891
        %v3020 = vsub.f32 %v2508, %v2892
        %v3021 = vsub.f32 %v2509, %v2893
        %v3022 = vsub.f32 %v2510, %v2894
        %v3023 = vsub.f32 %v2511, %v2895
        %v3024 = vsub.f32 %v2512, %v2896
        %v3025 = vsub.f32 %v2513, %v2897
        %v3026 = vsub.f32 %v2514, %v2898
        %v3027 = vsub.f32 %v2515, %v2899
        %v3028 = vsub.f32 %v2516, %v2900
        %v3029 = vsub.f32 %v2517, %v2901
        %v3030 = vsub.f32 %v2518, %v2902
        %v3031 = vsub.f32 %v2519, %v2903
        %v3032 = vsub.f32 %v2520, %v2904
        %v3033 = vsub.f32 %v2521, %v2905
        %v3034 = vsub.f32 %v2522, %v2906
        %v3035 = vsub.f32 %v2523, %v2907
        %v3036 = vsub.f32 %v2524, %v2908
        %v3037 = vsub.f32 %v2525, %v2909
        %v3038 = vsub.f32 %v2526, %v2910
        %v3039 = vsub.f32 %v2527, %v2911
        %v3040 = vsub.f32 %v2528, %v2912
        %v3041 = vsub.f32 %v2529, %v2913
        %v3042 = vsub.f32 %v2530, %v2914
        %v3043 = vsub.f32 %v2531, %v2915
        %v3044 = vsub.f32 %v2532, %v2916
        %v3045 = vsub.f32 %v2533, %v2917
        %v3046 = vsub.f32 %v2534, %v2918
        %v3047 = vsub.f32 %v2535, %v2919
        %v3048 = vsub.f32 %v2536, %v2920
        %v3049 = vsub.f32 %v2537, %v2921
        %v3050 = vsub.f32 %v2538, %v2922
        %v3051 = vsub.f32 %v2539, %v2923
        %v3052 = vsub.f32 %v2540, %v2924
        %v3053 = vsub.f32 %v2541, %v2925
        %v3054 = vsub.f32 %v2542, %v2926
        %v3055 = vsub.f32 %v2543, %v2927
        %v3056 = vsub.f32 %v2544, %v2928
        %v3057 = vsub.f32 %v2545, %v2929
        %v3058 = vsub.f32 %v2546, %v2930
        %v3059 = vsub.f32 %v2547, %v2931
        %v3060 = vsub.f32 %v2548, %v2932
        %v3061 = vsub.f32 %v2549, %v2933
        %v3062 = vsub.f32 %v2550, %v2934
        %v3063 = vsub.f32 %v2551, %v2935
        %v3064 = vsub.f32 %v2552, %v2936
        %v3065 = vsub.f32 %v2553, %v2937
        %v3066 = vsub.f32 %v2554, %v2938
        %v3067 = vsub.f32 %v2555, %v2939
        %v3068 = vsub.f32 %v2556, %v2940
        %v3069 = vsub.f32 %v2557, %v2941
        %v3070 = vsub.f32 %v2558, %v2942
        %v3071 = vsub.f32 %v2559, %v2943
        %v3072 = vsub.f32 %v2560, %v2944
        %v3073 = vsub.f32 %v2561, %v2945
        %v3074 = vsub.f32 %v2562, %v2946
        %v3075 = vsub.f32 %v2563, %v2947
        %v3076 = vsub.f32 %v2564, %v2948
        %v3077 = vsub.f32 %v2565, %v2949
        %v3078 = vsub.f32 %v2566, %v2950
        %v3079 = vsub.f32 %v2567, %v2951
        %v3080 = vsub.f32 %v2568, %v2952
        %v3081 = vsub.f32 %v2569, %v2953
        %v3082 = vsub.f32 %v2570, %v2954
        %v3083 = vsub.f32 %v2571, %v2955
        %v3084 = vsub.f32 %v2572, %v2956
        %v3085 = vsub.f32 %v2573, %v2957
        %v3086 = vsub.f32 %v2574, %v2958
        %v3087 = vsub.f32 %v2575, %v2959
        %v3088 = vsub.f32 %v2576, %v2960
        %v3089 = vsub.f32 %v2577, %v2961
        %v3090 = vsub.f32 %v2578, %v2962
        %v3091 = vsub.f32 %v2579, %v2963
        %v3092 = vsub.f32 %v2580, %v2964
        %v3093 = vsub.f32 %v2581, %v2965
        %v3094 = vsub.f32 %v2582, %v2966
        %v3095 = vsub.f32 %v2583, %v2967
        %v3096 = vsub.f32 %v2584, %v2968
        %v3097 = vsub.f32 %v2585, %v2969
        %v3098 = vsub.f32 %v2586, %v2970
        %v3099 = vsub.f32 %v2587, %v2971
        %v3100 = vsub.f32 %v2588, %v2972
        %v3101 = vsub.f32 %v2589, %v2973
        %v3102 = vsub.f32 %v2590, %v2974
        %v3103 = vsub.f32 %v2591, %v2975
        %v3104 = vsub.f32 %v2592, %v2976
        %v3105 = vsub.f32 %v2593, %v2977
        %v3106 = vsub.f32 %v2594, %v2978
        %v3107 = vsub.f32 %v2595, %v2979
        %v3108 = vsub.f32 %v2596, %v2980
        %v3109 = vsub.f32 %v2597, %v2981
        %v3110 = vmul.f32 %v2982, 1.442695
        %v3111 = vpow.pop %v3110
        %v3112 = vmul.f32 %v2983, 1.442695
        %v3113 = vpow.pop %v3112
        %v3114 = vmul.f32 %v2984, 1.442695
        %v3115 = vpow.pop %v3114
        %v3116 = vmul.f32 %v2985, 1.442695
        %v3117 = vpow.pop %v3116
        %v3118 = vmul.f32 %v2986, 1.442695
        %v3119 = vpow.pop %v3118
        %v3120 = vmul.f32 %v2987, 1.442695
        %v3121 = vpow.pop %v3120
        %v3122 = vmul.f32 %v2988, 1.442695
        %v3123 = vpow.pop %v3122
        %v3124 = vmul.f32 %v2989, 1.442695
        %v3125 = vpow.pop %v3124
        %v3126 = vmul.f32 %v2990, 1.442695
        %v3127 = vpow.pop %v3126
        %v3128 = vmul.f32 %v2991, 1.442695
        %v3129 = vpow.pop %v3128
        %v3130 = vmul.f32 %v2992, 1.442695
        %v3131 = vpow.pop %v3130
        %v3132 = vmul.f32 %v2993, 1.442695
        %v3133 = vpow.pop %v3132
        %v3134 = vmul.f32 %v2994, 1.442695
        %v3135 = vpow.pop %v3134
        %v3136 = vmul.f32 %v2995, 1.442695
        %v3137 = vpow.pop %v3136
        %v3138 = vmul.f32 %v2996, 1.442695
        %v3139 = vpow.pop %v3138
        %v3140 = vmul.f32 %v2997, 1.442695
        %v3141 = vpow.pop %v3140
        %v3142 = vmul.f32 %v2998, 1.442695
        %v3143 = vpow.pop %v3142
        %v3144 = vmul.f32 %v2999, 1.442695
        %v3145 = vpow.pop %v3144
        %v3146 = vmul.f32 %v3000, 1.442695
        %v3147 = vpow.pop %v3146
        %v3148 = vmul.f32 %v3001, 1.442695
        %v3149 = vpow.pop %v3148
        %v3150 = vmul.f32 %v3002, 1.442695
        %v3151 = vpow.pop %v3150
        %v3152 = vmul.f32 %v3003, 1.442695
        %v3153 = vpow.pop %v3152
        %v3154 = vmul.f32 %v3004, 1.442695
        %v3155 = vpow.pop %v3154
        %v3156 = vmul.f32 %v3005, 1.442695
        %v3157 = vpow.pop %v3156
        %v3158 = vmul.f32 %v3006, 1.442695
        %v3159 = vpow.pop %v3158
        %v3160 = vmul.f32 %v3007, 1.442695
        %v3161 = vpow.pop %v3160
        %v3162 = vmul.f32 %v3008, 1.442695
        %v3163 = vpow.pop %v3162
        %v3164 = vmul.f32 %v3009, 1.442695
        %v3165 = vpow.pop %v3164
        %v3166 = vmul.f32 %v3010, 1.442695
        %v3167 = vpow.pop %v3166
        %v3168 = vmul.f32 %v3011, 1.442695
        %v3169 = vpow.pop %v3168
        %v3170 = vmul.f32 %v3012, 1.442695
        %v3171 = vpow.pop %v3170
        %v3172 = vmul.f32 %v3013, 1.442695
        %v3173 = vpow.pop %v3172
        %v3174 = vmul.f32 %v3014, 1.442695
        %v3175 = vpow.pop %v3174
        %v3176 = vmul.f32 %v3015, 1.442695
        %v3177 = vpow.pop %v3176
        %v3178 = vmul.f32 %v3016, 1.442695
        %v3179 = vpow.pop %v3178
        %v3180 = vmul.f32 %v3017, 1.442695
        %v3181 = vpow.pop %v3180
        %v3182 = vmul.f32 %v3018, 1.442695
        %v3183 = vpow.pop %v3182
        %v3184 = vmul.f32 %v3019, 1.442695
        %v3185 = vpow.pop %v3184
        %v3186 = vmul.f32 %v3020, 1.442695
        %v3187 = vpow.pop %v3186
        %v3188 = vmul.f32 %v3021, 1.442695
        %v3189 = vpow.pop %v3188
        %v3190 = vmul.f32 %v3022, 1.442695
        %v3191 = vpow.pop %v3190
        %v3192 = vmul.f32 %v3023, 1.442695
        %v3193 = vpow.pop %v3192
        %v3194 = vmul.f32 %v3024, 1.442695
        %v3195 = vpow.pop %v3194
        %v3196 = vmul.f32 %v3025, 1.442695
        %v3197 = vpow.pop %v3196
        %v3198 = vmul.f32 %v3026, 1.442695
        %v3199 = vpow.pop %v3198
        %v3200 = vmul.f32 %v3027, 1.442695
        %v3201 = vpow.pop %v3200
        %v3202 = vmul.f32 %v3028, 1.442695
        %v3203 = vpow.pop %v3202
        %v3204 = vmul.f32 %v3029, 1.442695
        %v3205 = vpow.pop %v3204
        %v3206 = vmul.f32 %v3030, 1.442695
        %v3207 = vpow.pop %v3206
        %v3208 = vmul.f32 %v3031, 1.442695
        %v3209 = vpow.pop %v3208
        %v3210 = vmul.f32 %v3032, 1.442695
        %v3211 = vpow.pop %v3210
        %v3212 = vmul.f32 %v3033, 1.442695
        %v3213 = vpow.pop %v3212
        %v3214 = vmul.f32 %v3034, 1.442695
        %v3215 = vpow.pop %v3214
        %v3216 = vmul.f32 %v3035, 1.442695
        %v3217 = vpow.pop %v3216
        %v3218 = vmul.f32 %v3036, 1.442695
        %v3219 = vpow.pop %v3218
        %v3220 = vmul.f32 %v3037, 1.442695
        %v3221 = vpow.pop %v3220
        %v3222 = vmul.f32 %v3038, 1.442695
        %v3223 = vpow.pop %v3222
        %v3224 = vmul.f32 %v3039, 1.442695
        %v3225 = vpow.pop %v3224
        %v3226 = vmul.f32 %v3040, 1.442695
        %v3227 = vpow.pop %v3226
        %v3228 = vmul.f32 %v3041, 1.442695
        %v3229 = vpow.pop %v3228
        %v3230 = vmul.f32 %v3042, 1.442695
        %v3231 = vpow.pop %v3230
        %v3232 = vmul.f32 %v3043, 1.442695
        %v3233 = vpow.pop %v3232
        %v3234 = vmul.f32 %v3044, 1.442695
        %v3235 = vpow.pop %v3234
        %v3236 = vmul.f32 %v3045, 1.442695
        %v3237 = vpow.pop %v3236
        %v3238 = vmul.f32 %v3046, 1.442695
        %v3239 = vpow.pop %v3238
        %v3240 = vmul.f32 %v3047, 1.442695
        %v3241 = vpow.pop %v3240
        %v3242 = vmul.f32 %v3048, 1.442695
        %v3243 = vpow.pop %v3242
        %v3244 = vmul.f32 %v3049, 1.442695
        %v3245 = vpow.pop %v3244
        %v3246 = vmul.f32 %v3050, 1.442695
        %v3247 = vpow.pop %v3246
        %v3248 = vmul.f32 %v3051, 1.442695
        %v3249 = vpow.pop %v3248
        %v3250 = vmul.f32 %v3052, 1.442695
        %v3251 = vpow.pop %v3250
        %v3252 = vmul.f32 %v3053, 1.442695
        %v3253 = vpow.pop %v3252
        %v3254 = vmul.f32 %v3054, 1.442695
        %v3255 = vpow.pop %v3254
        %v3256 = vmul.f32 %v3055, 1.442695
        %v3257 = vpow.pop %v3256
        %v3258 = vmul.f32 %v3056, 1.442695
        %v3259 = vpow.pop %v3258
        %v3260 = vmul.f32 %v3057, 1.442695
        %v3261 = vpow.pop %v3260
        %v3262 = vmul.f32 %v3058, 1.442695
        %v3263 = vpow.pop %v3262
        %v3264 = vmul.f32 %v3059, 1.442695
        %v3265 = vpow.pop %v3264
        %v3266 = vmul.f32 %v3060, 1.442695
        %v3267 = vpow.pop %v3266
        %v3268 = vmul.f32 %v3061, 1.442695
        %v3269 = vpow.pop %v3268
        %v3270 = vmul.f32 %v3062, 1.442695
        %v3271 = vpow.pop %v3270
        %v3272 = vmul.f32 %v3063, 1.442695
        %v3273 = vpow.pop %v3272
        %v3274 = vmul.f32 %v3064, 1.442695
        %v3275 = vpow.pop %v3274
        %v3276 = vmul.f32 %v3065, 1.442695
        %v3277 = vpow.pop %v3276
        %v3278 = vmul.f32 %v3066, 1.442695
        %v3279 = vpow.pop %v3278
        %v3280 = vmul.f32 %v3067, 1.442695
        %v3281 = vpow.pop %v3280
        %v3282 = vmul.f32 %v3068, 1.442695
        %v3283 = vpow.pop %v3282
        %v3284 = vmul.f32 %v3069, 1.442695
        %v3285 = vpow.pop %v3284
        %v3286 = vmul.f32 %v3070, 1.442695
        %v3287 = vpow.pop %v3286
        %v3288 = vmul.f32 %v3071, 1.442695
        %v3289 = vpow.pop %v3288
        %v3290 = vmul.f32 %v3072, 1.442695
        %v3291 = vpow.pop %v3290
        %v3292 = vmul.f32 %v3073, 1.442695
        %v3293 = vpow.pop %v3292
        %v3294 = vmul.f32 %v3074, 1.442695
        %v3295 = vpow.pop %v3294
        %v3296 = vmul.f32 %v3075, 1.442695
        %v3297 = vpow.pop %v3296
        %v3298 = vmul.f32 %v3076, 1.442695
        %v3299 = vpow.pop %v3298
        %v3300 = vmul.f32 %v3077, 1.442695
        %v3301 = vpow.pop %v3300
        %v3302 = vmul.f32 %v3078, 1.442695
        %v3303 = vpow.pop %v3302
        %v3304 = vmul.f32 %v3079, 1.442695
        %v3305 = vpow.pop %v3304
        %v3306 = vmul.f32 %v3080, 1.442695
        %v3307 = vpow.pop %v3306
        %v3308 = vmul.f32 %v3081, 1.442695
        %v3309 = vpow.pop %v3308
        %v3310 = vmul.f32 %v3082, 1.442695
        %v3311 = vpow.pop %v3310
        %v3312 = vmul.f32 %v3083, 1.442695
        %v3313 = vpow.pop %v3312
        %v3314 = vmul.f32 %v3084, 1.442695
        %v3315 = vpow.pop %v3314
        %v3316 = vmul.f32 %v3085, 1.442695
        %v3317 = vpow.pop %v3316
        %v3318 = vmul.f32 %v3086, 1.442695
        %v3319 = vpow.pop %v3318
        %v3320 = vmul.f32 %v3087, 1.442695
        %v3321 = vpow.pop %v3320
        %v3322 = vmul.f32 %v3088, 1.442695
        %v3323 = vpow.pop %v3322
        %v3324 = vmul.f32 %v3089, 1.442695
        %v3325 = vpow.pop %v3324
        %v3326 = vmul.f32 %v3090, 1.442695
        %v3327 = vpow.pop %v3326
        %v3328 = vmul.f32 %v3091, 1.442695
        %v3329 = vpow.pop %v3328
        %v3330 = vmul.f32 %v3092, 1.442695
        %v3331 = vpow.pop %v3330
        %v3332 = vmul.f32 %v3093, 1.442695
        %v3333 = vpow.pop %v3332
        %v3334 = vmul.f32 %v3094, 1.442695
        %v3335 = vpow.pop %v3334
        %v3336 = vmul.f32 %v3095, 1.442695
        %v3337 = vpow.pop %v3336
        %v3338 = vmul.f32 %v3096, 1.442695
        %v3339 = vpow.pop %v3338
        %v3340 = vmul.f32 %v3097, 1.442695
        %v3341 = vpow.pop %v3340
        %v3342 = vmul.f32 %v3098, 1.442695
        %v3343 = vpow.pop %v3342
        %v3344 = vmul.f32 %v3099, 1.442695
        %v3345 = vpow.pop %v3344
        %v3346 = vmul.f32 %v3100, 1.442695
        %v3347 = vpow.pop %v3346
        %v3348 = vmul.f32 %v3101, 1.442695
        %v3349 = vpow.pop %v3348
        %v3350 = vmul.f32 %v3102, 1.442695
        %v3351 = vpow.pop %v3350
        %v3352 = vmul.f32 %v3103, 1.442695
        %v3353 = vpow.pop %v3352
        %v3354 = vmul.f32 %v3104, 1.442695
        %v3355 = vpow.pop %v3354
        %v3356 = vmul.f32 %v3105, 1.442695
        %v3357 = vpow.pop %v3356
        %v3358 = vmul.f32 %v3106, 1.442695
        %v3359 = vpow.pop %v3358
        %v3360 = vmul.f32 %v3107, 1.442695
        %v3361 = vpow.pop %v3360
        %v3362 = vmul.f32 %v3108, 1.442695
        %v3363 = vpow.pop %v3362
        %v3364 = vmul.f32 %v3109, 1.442695
        %v3365 = vpow.pop %v3364
        %3367 = vset.pattern.permute.xlu0 0
        %3368 = vperm.xlu0 %3367, %v2854
        %v3369 = vpop.permute.xlu0 %3368
        %3372 = vset.pattern.permute.xlu0 0
        %3373 = vperm.xlu0 %3372, %v2855
        %v3374 = vpop.permute.xlu0 %3373
        %3377 = vset.pattern.permute.xlu0 0
        %3378 = vperm.xlu0 %3377, %v2856
        %v3379 = vpop.permute.xlu0 %3378
        %3382 = vset.pattern.permute.xlu0 0
        %3383 = vperm.xlu0 %3382, %v2857
        %v3384 = vpop.permute.xlu0 %3383
        %3387 = vset.pattern.permute.xlu0 0
        %3388 = vperm.xlu0 %3387, %v2858
        %v3389 = vpop.permute.xlu0 %3388
        %3392 = vset.pattern.permute.xlu0 0
        %3393 = vperm.xlu0 %3392, %v2859
        %v3394 = vpop.permute.xlu0 %3393
        %3397 = vset.pattern.permute.xlu0 0
        %3398 = vperm.xlu0 %3397, %v2860
        %v3399 = vpop.permute.xlu0 %3398
        %3402 = vset.pattern.permute.xlu0 0
        %3403 = vperm.xlu0 %3402, %v2861
        %v3404 = vpop.permute.xlu0 %3403
        %3407 = vset.pattern.permute.xlu0 0
        %3408 = vperm.xlu0 %3407, %v2862
        %v3409 = vpop.permute.xlu0 %3408
        %3412 = vset.pattern.permute.xlu0 0
        %3413 = vperm.xlu0 %3412, %v2863
        %v3414 = vpop.permute.xlu0 %3413
        %3417 = vset.pattern.permute.xlu0 0
        %3418 = vperm.xlu0 %3417, %v2864
        %v3419 = vpop.permute.xlu0 %3418
        %3422 = vset.pattern.permute.xlu0 0
        %3423 = vperm.xlu0 %3422, %v2865
        %v3424 = vpop.permute.xlu0 %3423
        %3427 = vset.pattern.permute.xlu0 0
        %3428 = vperm.xlu0 %3427, %v2866
        %v3429 = vpop.permute.xlu0 %3428
        %3432 = vset.pattern.permute.xlu0 0
        %3433 = vperm.xlu0 %3432, %v2867
        %v3434 = vpop.permute.xlu0 %3433
        %3437 = vset.pattern.permute.xlu0 0
        %3438 = vperm.xlu0 %3437, %v2868
        %v3439 = vpop.permute.xlu0 %3438
        %3442 = vset.pattern.permute.xlu0 0
        %3443 = vperm.xlu0 %3442, %v2869
        %v3444 = vpop.permute.xlu0 %3443
        %3447 = vset.pattern.permute.xlu0 0
        %3448 = vperm.xlu0 %3447, %v2870
        %v3449 = vpop.permute.xlu0 %3448
        %3452 = vset.pattern.permute.xlu0 0
        %3453 = vperm.xlu0 %3452, %v2871
        %v3454 = vpop.permute.xlu0 %3453
        %3457 = vset.pattern.permute.xlu0 0
        %3458 = vperm.xlu0 %3457, %v2872
        %v3459 = vpop.permute.xlu0 %3458
        %3462 = vset.pattern.permute.xlu0 0
        %3463 = vperm.xlu0 %3462, %v2873
        %v3464 = vpop.permute.xlu0 %3463
        %3467 = vset.pattern.permute.xlu0 0
        %3468 = vperm.xlu0 %3467, %v2874
        %v3469 = vpop.permute.xlu0 %3468
        %3472 = vset.pattern.permute.xlu0 0
        %3473 = vperm.xlu0 %3472, %v2875
        %v3474 = vpop.permute.xlu0 %3473
        %3477 = vset.pattern.permute.xlu0 0
        %3478 = vperm.xlu0 %3477, %v2876
        %v3479 = vpop.permute.xlu0 %3478
        %3482 = vset.pattern.permute.xlu0 0
        %3483 = vperm.xlu0 %3482, %v2877
        %v3484 = vpop.permute.xlu0 %3483
        %3487 = vset.pattern.permute.xlu0 0
        %3488 = vperm.xlu0 %3487, %v2878
        %v3489 = vpop.permute.xlu0 %3488
        %3492 = vset.pattern.permute.xlu0 0
        %3493 = vperm.xlu0 %3492, %v2879
        %v3494 = vpop.permute.xlu0 %3493
        %3497 = vset.pattern.permute.xlu0 0
        %3498 = vperm.xlu0 %3497, %v2880
        %v3499 = vpop.permute.xlu0 %3498
        %3502 = vset.pattern.permute.xlu0 0
        %3503 = vperm.xlu0 %3502, %v2881
        %v3504 = vpop.permute.xlu0 %3503
        %3507 = vset.pattern.permute.xlu0 0
        %3508 = vperm.xlu0 %3507, %v2882
        %v3509 = vpop.permute.xlu0 %3508
        %3512 = vset.pattern.permute.xlu0 0
        %3513 = vperm.xlu0 %3512, %v2883
        %v3514 = vpop.permute.xlu0 %3513
        %3517 = vset.pattern.permute.xlu0 0
        %3518 = vperm.xlu0 %3517, %v2884
        %v3519 = vpop.permute.xlu0 %3518
        %3522 = vset.pattern.permute.xlu0 0
        %3523 = vperm.xlu0 %3522, %v2885
        %v3524 = vpop.permute.xlu0 %3523
        %3527 = vset.pattern.permute.xlu0 0
        %3528 = vperm.xlu0 %3527, %v2886
        %v3529 = vpop.permute.xlu0 %3528
        %3532 = vset.pattern.permute.xlu0 0
        %3533 = vperm.xlu0 %3532, %v2887
        %v3534 = vpop.permute.xlu0 %3533
        %3537 = vset.pattern.permute.xlu0 0
        %3538 = vperm.xlu0 %3537, %v2888
        %v3539 = vpop.permute.xlu0 %3538
        %3542 = vset.pattern.permute.xlu0 0
        %3543 = vperm.xlu0 %3542, %v2889
        %v3544 = vpop.permute.xlu0 %3543
        %3547 = vset.pattern.permute.xlu0 0
        %3548 = vperm.xlu0 %3547, %v2890
        %v3549 = vpop.permute.xlu0 %3548
        %3552 = vset.pattern.permute.xlu0 0
        %3553 = vperm.xlu0 %3552, %v2891
        %v3554 = vpop.permute.xlu0 %3553
        %3557 = vset.pattern.permute.xlu0 0
        %3558 = vperm.xlu0 %3557, %v2892
        %v3559 = vpop.permute.xlu0 %3558
        %3562 = vset.pattern.permute.xlu0 0
        %3563 = vperm.xlu0 %3562, %v2893
        %v3564 = vpop.permute.xlu0 %3563
        %3567 = vset.pattern.permute.xlu0 0
        %3568 = vperm.xlu0 %3567, %v2894
        %v3569 = vpop.permute.xlu0 %3568
        %3572 = vset.pattern.permute.xlu0 0
        %3573 = vperm.xlu0 %3572, %v2895
        %v3574 = vpop.permute.xlu0 %3573
        %3577 = vset.pattern.permute.xlu0 0
        %3578 = vperm.xlu0 %3577, %v2896
        %v3579 = vpop.permute.xlu0 %3578
        %3582 = vset.pattern.permute.xlu0 0
        %3583 = vperm.xlu0 %3582, %v2897
        %v3584 = vpop.permute.xlu0 %3583
        %3587 = vset.pattern.permute.xlu0 0
        %3588 = vperm.xlu0 %3587, %v2898
        %v3589 = vpop.permute.xlu0 %3588
        %3592 = vset.pattern.permute.xlu0 0
        %3593 = vperm.xlu0 %3592, %v2899
        %v3594 = vpop.permute.xlu0 %3593
        %3597 = vset.pattern.permute.xlu0 0
        %3598 = vperm.xlu0 %3597, %v2900
        %v3599 = vpop.permute.xlu0 %3598
        %3602 = vset.pattern.permute.xlu0 0
        %3603 = vperm.xlu0 %3602, %v2901
        %v3604 = vpop.permute.xlu0 %3603
        %3607 = vset.pattern.permute.xlu0 0
        %3608 = vperm.xlu0 %3607, %v2902
        %v3609 = vpop.permute.xlu0 %3608
        %3612 = vset.pattern.permute.xlu0 0
        %3613 = vperm.xlu0 %3612, %v2903
        %v3614 = vpop.permute.xlu0 %3613
        %3617 = vset.pattern.permute.xlu0 0
        %3618 = vperm.xlu0 %3617, %v2904
        %v3619 = vpop.permute.xlu0 %3618
        %3622 = vset.pattern.permute.xlu0 0
        %3623 = vperm.xlu0 %3622, %v2905
        %v3624 = vpop.permute.xlu0 %3623
        %3627 = vset.pattern.permute.xlu0 0
        %3628 = vperm.xlu0 %3627, %v2906
        %v3629 = vpop.permute.xlu0 %3628
        %3632 = vset.pattern.permute.xlu0 0
        %3633 = vperm.xlu0 %3632, %v2907
        %v3634 = vpop.permute.xlu0 %3633
        %3637 = vset.pattern.permute.xlu0 0
        %3638 = vperm.xlu0 %3637, %v2908
        %v3639 = vpop.permute.xlu0 %3638
        %3642 = vset.pattern.permute.xlu0 0
        %3643 = vperm.xlu0 %3642, %v2909
        %v3644 = vpop.permute.xlu0 %3643
        %3647 = vset.pattern.permute.xlu0 0
        %3648 = vperm.xlu0 %3647, %v2910
        %v3649 = vpop.permute.xlu0 %3648
        %3652 = vset.pattern.permute.xlu0 0
        %3653 = vperm.xlu0 %3652, %v2911
        %v3654 = vpop.permute.xlu0 %3653
        %3657 = vset.pattern.permute.xlu0 0
        %3658 = vperm.xlu0 %3657, %v2912
        %v3659 = vpop.permute.xlu0 %3658
        %3662 = vset.pattern.permute.xlu0 0
        %3663 = vperm.xlu0 %3662, %v2913
        %v3664 = vpop.permute.xlu0 %3663
        %3667 = vset.pattern.permute.xlu0 0
        %3668 = vperm.xlu0 %3667, %v2914
        %v3669 = vpop.permute.xlu0 %3668
        %3672 = vset.pattern.permute.xlu0 0
        %3673 = vperm.xlu0 %3672, %v2915
        %v3674 = vpop.permute.xlu0 %3673
        %3677 = vset.pattern.permute.xlu0 0
        %3678 = vperm.xlu0 %3677, %v2916
        %v3679 = vpop.permute.xlu0 %3678
        %3682 = vset.pattern.permute.xlu0 0
        %3683 = vperm.xlu0 %3682, %v2917
        %v3684 = vpop.permute.xlu0 %3683
        %3687 = vset.pattern.permute.xlu0 0
        %3688 = vperm.xlu0 %3687, %v2918
        %v3689 = vpop.permute.xlu0 %3688
        %3692 = vset.pattern.permute.xlu0 0
        %3693 = vperm.xlu0 %3692, %v2919
        %v3694 = vpop.permute.xlu0 %3693
        %3697 = vset.pattern.permute.xlu0 0
        %3698 = vperm.xlu0 %3697, %v2920
        %v3699 = vpop.permute.xlu0 %3698
        %3702 = vset.pattern.permute.xlu0 0
        %3703 = vperm.xlu0 %3702, %v2921
        %v3704 = vpop.permute.xlu0 %3703
        %3707 = vset.pattern.permute.xlu0 0
        %3708 = vperm.xlu0 %3707, %v2922
        %v3709 = vpop.permute.xlu0 %3708
        %3712 = vset.pattern.permute.xlu0 0
        %3713 = vperm.xlu0 %3712, %v2923
        %v3714 = vpop.permute.xlu0 %3713
        %3717 = vset.pattern.permute.xlu0 0
        %3718 = vperm.xlu0 %3717, %v2924
        %v3719 = vpop.permute.xlu0 %3718
        %3722 = vset.pattern.permute.xlu0 0
        %3723 = vperm.xlu0 %3722, %v2925
        %v3724 = vpop.permute.xlu0 %3723
        %3727 = vset.pattern.permute.xlu0 0
        %3728 = vperm.xlu0 %3727, %v2926
        %v3729 = vpop.permute.xlu0 %3728
        %3732 = vset.pattern.permute.xlu0 0
        %3733 = vperm.xlu0 %3732, %v2927
        %v3734 = vpop.permute.xlu0 %3733
        %3737 = vset.pattern.permute.xlu0 0
        %3738 = vperm.xlu0 %3737, %v2928
        %v3739 = vpop.permute.xlu0 %3738
        %3742 = vset.pattern.permute.xlu0 0
        %3743 = vperm.xlu0 %3742, %v2929
        %v3744 = vpop.permute.xlu0 %3743
        %3747 = vset.pattern.permute.xlu0 0
        %3748 = vperm.xlu0 %3747, %v2930
        %v3749 = vpop.permute.xlu0 %3748
        %3752 = vset.pattern.permute.xlu0 0
        %3753 = vperm.xlu0 %3752, %v2931
        %v3754 = vpop.permute.xlu0 %3753
        %3757 = vset.pattern.permute.xlu0 0
        %3758 = vperm.xlu0 %3757, %v2932
        %v3759 = vpop.permute.xlu0 %3758
        %3762 = vset.pattern.permute.xlu0 0
        %3763 = vperm.xlu0 %3762, %v2933
        %v3764 = vpop.permute.xlu0 %3763
        %3767 = vset.pattern.permute.xlu0 0
        %3768 = vperm.xlu0 %3767, %v2934
        %v3769 = vpop.permute.xlu0 %3768
        %3772 = vset.pattern.permute.xlu0 0
        %3773 = vperm.xlu0 %3772, %v2935
        %v3774 = vpop.permute.xlu0 %3773
        %3777 = vset.pattern.permute.xlu0 0
        %3778 = vperm.xlu0 %3777, %v2936
        %v3779 = vpop.permute.xlu0 %3778
        %3782 = vset.pattern.permute.xlu0 0
        %3783 = vperm.xlu0 %3782, %v2937
        %v3784 = vpop.permute.xlu0 %3783
        %3787 = vset.pattern.permute.xlu0 0
        %3788 = vperm.xlu0 %3787, %v2938
        %v3789 = vpop.permute.xlu0 %3788
        %3792 = vset.pattern.permute.xlu0 0
        %3793 = vperm.xlu0 %3792, %v2939
        %v3794 = vpop.permute.xlu0 %3793
        %3797 = vset.pattern.permute.xlu0 0
        %3798 = vperm.xlu0 %3797, %v2940
        %v3799 = vpop.permute.xlu0 %3798
        %3802 = vset.pattern.permute.xlu0 0
        %3803 = vperm.xlu0 %3802, %v2941
        %v3804 = vpop.permute.xlu0 %3803
        %3807 = vset.pattern.permute.xlu0 0
        %3808 = vperm.xlu0 %3807, %v2942
        %v3809 = vpop.permute.xlu0 %3808
        %3812 = vset.pattern.permute.xlu0 0
        %3813 = vperm.xlu0 %3812, %v2943
        %v3814 = vpop.permute.xlu0 %3813
        %3817 = vset.pattern.permute.xlu0 0
        %3818 = vperm.xlu0 %3817, %v2944
        %v3819 = vpop.permute.xlu0 %3818
        %3822 = vset.pattern.permute.xlu0 0
        %3823 = vperm.xlu0 %3822, %v2945
        %v3824 = vpop.permute.xlu0 %3823
        %3827 = vset.pattern.permute.xlu0 0
        %3828 = vperm.xlu0 %3827, %v2946
        %v3829 = vpop.permute.xlu0 %3828
        %3832 = vset.pattern.permute.xlu0 0
        %3833 = vperm.xlu0 %3832, %v2947
        %v3834 = vpop.permute.xlu0 %3833
        %3837 = vset.pattern.permute.xlu0 0
        %3838 = vperm.xlu0 %3837, %v2948
        %v3839 = vpop.permute.xlu0 %3838
        %3842 = vset.pattern.permute.xlu0 0
        %3843 = vperm.xlu0 %3842, %v2949
        %v3844 = vpop.permute.xlu0 %3843
        %3847 = vset.pattern.permute.xlu0 0
        %3848 = vperm.xlu0 %3847, %v2950
        %v3849 = vpop.permute.xlu0 %3848
        %3852 = vset.pattern.permute.xlu0 0
        %3853 = vperm.xlu0 %3852, %v2951
        %v3854 = vpop.permute.xlu0 %3853
        %3857 = vset.pattern.permute.xlu0 0
        %3858 = vperm.xlu0 %3857, %v2952
        %v3859 = vpop.permute.xlu0 %3858
        %3862 = vset.pattern.permute.xlu0 0
        %3863 = vperm.xlu0 %3862, %v2953
        %v3864 = vpop.permute.xlu0 %3863
        %3867 = vset.pattern.permute.xlu0 0
        %3868 = vperm.xlu0 %3867, %v2954
        %v3869 = vpop.permute.xlu0 %3868
        %3872 = vset.pattern.permute.xlu0 0
        %3873 = vperm.xlu0 %3872, %v2955
        %v3874 = vpop.permute.xlu0 %3873
        %3877 = vset.pattern.permute.xlu0 0
        %3878 = vperm.xlu0 %3877, %v2956
        %v3879 = vpop.permute.xlu0 %3878
        %3882 = vset.pattern.permute.xlu0 0
        %3883 = vperm.xlu0 %3882, %v2957
        %v3884 = vpop.permute.xlu0 %3883
        %3887 = vset.pattern.permute.xlu0 0
        %3888 = vperm.xlu0 %3887, %v2958
        %v3889 = vpop.permute.xlu0 %3888
        %3892 = vset.pattern.permute.xlu0 0
        %3893 = vperm.xlu0 %3892, %v2959
        %v3894 = vpop.permute.xlu0 %3893
        %3897 = vset.pattern.permute.xlu0 0
        %3898 = vperm.xlu0 %3897, %v2960
        %v3899 = vpop.permute.xlu0 %3898
        %3902 = vset.pattern.permute.xlu0 0
        %3903 = vperm.xlu0 %3902, %v2961
        %v3904 = vpop.permute.xlu0 %3903
        %3907 = vset.pattern.permute.xlu0 0
        %3908 = vperm.xlu0 %3907, %v2962
        %v3909 = vpop.permute.xlu0 %3908
        %3912 = vset.pattern.permute.xlu0 0
        %3913 = vperm.xlu0 %3912, %v2963
        %v3914 = vpop.permute.xlu0 %3913
        %3917 = vset.pattern.permute.xlu0 0
        %3918 = vperm.xlu0 %3917, %v2964
        %v3919 = vpop.permute.xlu0 %3918
        %3922 = vset.pattern.permute.xlu0 0
        %3923 = vperm.xlu0 %3922, %v2965
        %v3924 = vpop.permute.xlu0 %3923
        %3927 = vset.pattern.permute.xlu0 0
        %3928 = vperm.xlu0 %3927, %v2966
        %v3929 = vpop.permute.xlu0 %3928
        %3932 = vset.pattern.permute.xlu0 0
        %3933 = vperm.xlu0 %3932, %v2967
        %v3934 = vpop.permute.xlu0 %3933
        %3937 = vset.pattern.permute.xlu0 0
        %3938 = vperm.xlu0 %3937, %v2968
        %v3939 = vpop.permute.xlu0 %3938
        %3942 = vset.pattern.permute.xlu0 0
        %3943 = vperm.xlu0 %3942, %v2969
        %v3944 = vpop.permute.xlu0 %3943
        %3947 = vset.pattern.permute.xlu0 0
        %3948 = vperm.xlu0 %3947, %v2970
        %v3949 = vpop.permute.xlu0 %3948
        %3952 = vset.pattern.permute.xlu0 0
        %3953 = vperm.xlu0 %3952, %v2971
        %v3954 = vpop.permute.xlu0 %3953
        %3957 = vset.pattern.permute.xlu0 0
        %3958 = vperm.xlu0 %3957, %v2972
        %v3959 = vpop.permute.xlu0 %3958
        %3962 = vset.pattern.permute.xlu0 0
        %3963 = vperm.xlu0 %3962, %v2973
        %v3964 = vpop.permute.xlu0 %3963
        %3967 = vset.pattern.permute.xlu0 0
        %3968 = vperm.xlu0 %3967, %v2974
        %v3969 = vpop.permute.xlu0 %3968
        %3972 = vset.pattern.permute.xlu0 0
        %3973 = vperm.xlu0 %3972, %v2975
        %v3974 = vpop.permute.xlu0 %3973
        %3977 = vset.pattern.permute.xlu0 0
        %3978 = vperm.xlu0 %3977, %v2976
        %v3979 = vpop.permute.xlu0 %3978
        %3982 = vset.pattern.permute.xlu0 0
        %3983 = vperm.xlu0 %3982, %v2977
        %v3984 = vpop.permute.xlu0 %3983
        %3987 = vset.pattern.permute.xlu0 0
        %3988 = vperm.xlu0 %3987, %v2978
        %v3989 = vpop.permute.xlu0 %3988
        %3992 = vset.pattern.permute.xlu0 0
        %3993 = vperm.xlu0 %3992, %v2979
        %v3994 = vpop.permute.xlu0 %3993
        %3997 = vset.pattern.permute.xlu0 0
        %3998 = vperm.xlu0 %3997, %v2980
        %v3999 = vpop.permute.xlu0 %3998
        %4002 = vset.pattern.permute.xlu0 0
        %4003 = vperm.xlu0 %4002, %v2981
        %v4004 = vpop.permute.xlu0 %4003
        %v4006 = vsub.f32 %v1704, %v3369
        %v4007 = vsub.f32 %v1706, %v3374
        %v4008 = vsub.f32 %v1709, %v3379
        %v4009 = vsub.f32 %v1711, %v3384
        %v4010 = vsub.f32 %v1714, %v3389
        %v4011 = vsub.f32 %v1716, %v3394
        %v4012 = vsub.f32 %v1719, %v3399
        %v4013 = vsub.f32 %v1721, %v3404
        %v4014 = vsub.f32 %v1724, %v3409
        %v4015 = vsub.f32 %v1726, %v3414
        %v4016 = vsub.f32 %v1729, %v3419
        %v4017 = vsub.f32 %v1731, %v3424
        %v4018 = vsub.f32 %v1734, %v3429
        %v4019 = vsub.f32 %v1736, %v3434
        %v4020 = vsub.f32 %v1739, %v3439
        %v4021 = vsub.f32 %v1741, %v3444
        %v4022 = vsub.f32 %v1744, %v3449
        %v4023 = vsub.f32 %v1746, %v3454
        %v4024 = vsub.f32 %v1749, %v3459
        %v4025 = vsub.f32 %v1751, %v3464
        %v4026 = vsub.f32 %v1754, %v3469
        %v4027 = vsub.f32 %v1756, %v3474
        %v4028 = vsub.f32 %v1759, %v3479
        %v4029 = vsub.f32 %v1761, %v3484
        %v4030 = vsub.f32 %v1764, %v3489
        %v4031 = vsub.f32 %v1766, %v3494
        %v4032 = vsub.f32 %v1769, %v3499
        %v4033 = vsub.f32 %v1771, %v3504
        %v4034 = vsub.f32 %v1774, %v3509
        %v4035 = vsub.f32 %v1776, %v3514
        %v4036 = vsub.f32 %v1779, %v3519
        %v4037 = vsub.f32 %v1781, %v3524
        %v4038 = vsub.f32 %v1933, %v3529
        %v4039 = vsub.f32 %v1935, %v3534
        %v4040 = vsub.f32 %v1938, %v3539
        %v4041 = vsub.f32 %v1940, %v3544
        %v4042 = vsub.f32 %v1943, %v3549
        %v4043 = vsub.f32 %v1945, %v3554
        %v4044 = vsub.f32 %v1948, %v3559
        %v4045 = vsub.f32 %v1950, %v3564
        %v4046 = vsub.f32 %v1953, %v3569
        %v4047 = vsub.f32 %v1955, %v3574
        %v4048 = vsub.f32 %v1958, %v3579
        %v4049 = vsub.f32 %v1960, %v3584
        %v4050 = vsub.f32 %v1963, %v3589
        %v4051 = vsub.f32 %v1965, %v3594
        %v4052 = vsub.f32 %v1968, %v3599
        %v4053 = vsub.f32 %v1970, %v3604
        %v4054 = vsub.f32 %v1973, %v3609
        %v4055 = vsub.f32 %v1975, %v3614
        %v4056 = vsub.f32 %v1978, %v3619
        %v4057 = vsub.f32 %v1980, %v3624
        %v4058 = vsub.f32 %v1983, %v3629
        %v4059 = vsub.f32 %v1985, %v3634
        %v4060 = vsub.f32 %v1988, %v3639
        %v4061 = vsub.f32 %v1990, %v3644
        %v4062 = vsub.f32 %v1993, %v3649
        %v4063 = vsub.f32 %v1995, %v3654
        %v4064 = vsub.f32 %v1998, %v3659
        %v4065 = vsub.f32 %v2000, %v3664
        %v4066 = vsub.f32 %v2003, %v3669
        %v4067 = vsub.f32 %v2005, %v3674
        %v4068 = vsub.f32 %v2008, %v3679
        %v4069 = vsub.f32 %v2010, %v3684
        %v4070 = vsub.f32 %v2162, %v3689
        %v4071 = vsub.f32 %v2164, %v3694
        %v4072 = vsub.f32 %v2167, %v3699
        %v4073 = vsub.f32 %v2169, %v3704
        %v4074 = vsub.f32 %v2172, %v3709
        %v4075 = vsub.f32 %v2174, %v3714
        %v4076 = vsub.f32 %v2177, %v3719
        %v4077 = vsub.f32 %v2179, %v3724
        %v4078 = vsub.f32 %v2182, %v3729
        %v4079 = vsub.f32 %v2184, %v3734
        %v4080 = vsub.f32 %v2187, %v3739
        %v4081 = vsub.f32 %v2189, %v3744
        %v4082 = vsub.f32 %v2192, %v3749
        %v4083 = vsub.f32 %v2194, %v3754
        %v4084 = vsub.f32 %v2197, %v3759
        %v4085 = vsub.f32 %v2199, %v3764
        %v4086 = vsub.f32 %v2202, %v3769
        %v4087 = vsub.f32 %v2204, %v3774
        %v4088 = vsub.f32 %v2207, %v3779
        %v4089 = vsub.f32 %v2209, %v3784
        %v4090 = vsub.f32 %v2212, %v3789
        %v4091 = vsub.f32 %v2214, %v3794
        %v4092 = vsub.f32 %v2217, %v3799
        %v4093 = vsub.f32 %v2219, %v3804
        %v4094 = vsub.f32 %v2222, %v3809
        %v4095 = vsub.f32 %v2224, %v3814
        %v4096 = vsub.f32 %v2227, %v3819
        %v4097 = vsub.f32 %v2229, %v3824
        %v4098 = vsub.f32 %v2232, %v3829
        %v4099 = vsub.f32 %v2234, %v3834
        %v4100 = vsub.f32 %v2237, %v3839
        %v4101 = vsub.f32 %v2239, %v3844
        %v4102 = vsub.f32 %v2391, %v3849
        %v4103 = vsub.f32 %v2393, %v3854
        %v4104 = vsub.f32 %v2396, %v3859
        %v4105 = vsub.f32 %v2398, %v3864
        %v4106 = vsub.f32 %v2401, %v3869
        %v4107 = vsub.f32 %v2403, %v3874
        %v4108 = vsub.f32 %v2406, %v3879
        %v4109 = vsub.f32 %v2408, %v3884
        %v4110 = vsub.f32 %v2411, %v3889
        %v4111 = vsub.f32 %v2413, %v3894
        %v4112 = vsub.f32 %v2416, %v3899
        %v4113 = vsub.f32 %v2418, %v3904
        %v4114 = vsub.f32 %v2421, %v3909
        %v4115 = vsub.f32 %v2423, %v3914
        %v4116 = vsub.f32 %v2426, %v3919
        %v4117 = vsub.f32 %v2428, %v3924
        %v4118 = vsub.f32 %v2431, %v3929
        %v4119 = vsub.f32 %v2433, %v3934
        %v4120 = vsub.f32 %v2436, %v3939
        %v4121 = vsub.f32 %v2438, %v3944
        %v4122 = vsub.f32 %v2441, %v3949
        %v4123 = vsub.f32 %v2443, %v3954
        %v4124 = vsub.f32 %v2446, %v3959
        %v4125 = vsub.f32 %v2448, %v3964
        %v4126 = vsub.f32 %v2451, %v3969
        %v4127 = vsub.f32 %v2453, %v3974
        %v4128 = vsub.f32 %v2456, %v3979
        %v4129 = vsub.f32 %v2458, %v3984
        %v4130 = vsub.f32 %v2461, %v3989
        %v4131 = vsub.f32 %v2463, %v3994
        %v4132 = vsub.f32 %v2466, %v3999
        %v4133 = vsub.f32 %v2468, %v4004
        %v4134 = vmul.f32 %v4006, 1.442695
        %v4135 = vpow.pop %v4134
        %v4136 = vmul.f32 %v4007, 1.442695
        %v4137 = vpow.pop %v4136
        %v4138 = vmul.f32 %v4008, 1.442695
        %v4139 = vpow.pop %v4138
        %v4140 = vmul.f32 %v4009, 1.442695
        %v4141 = vpow.pop %v4140
        %v4142 = vmul.f32 %v4010, 1.442695
        %v4143 = vpow.pop %v4142
        %v4144 = vmul.f32 %v4011, 1.442695
        %v4145 = vpow.pop %v4144
        %v4146 = vmul.f32 %v4012, 1.442695
        %v4147 = vpow.pop %v4146
        %v4148 = vmul.f32 %v4013, 1.442695
        %v4149 = vpow.pop %v4148
        %v4150 = vmul.f32 %v4014, 1.442695
        %v4151 = vpow.pop %v4150
        %v4152 = vmul.f32 %v4015, 1.442695
        %v4153 = vpow.pop %v4152
        %v4154 = vmul.f32 %v4016, 1.442695
        %v4155 = vpow.pop %v4154
        %v4156 = vmul.f32 %v4017, 1.442695
        %v4157 = vpow.pop %v4156
        %v4158 = vmul.f32 %v4018, 1.442695
        %v4159 = vpow.pop %v4158
        %v4160 = vmul.f32 %v4019, 1.442695
        %v4161 = vpow.pop %v4160
        %v4162 = vmul.f32 %v4020, 1.442695
        %v4163 = vpow.pop %v4162
        %v4164 = vmul.f32 %v4021, 1.442695
        %v4165 = vpow.pop %v4164
        %v4166 = vmul.f32 %v4022, 1.442695
        %v4167 = vpow.pop %v4166
        %v4168 = vmul.f32 %v4023, 1.442695
        %v4169 = vpow.pop %v4168
        %v4170 = vmul.f32 %v4024, 1.442695
        %v4171 = vpow.pop %v4170
        %v4172 = vmul.f32 %v4025, 1.442695
        %v4173 = vpow.pop %v4172
        %v4174 = vmul.f32 %v4026, 1.442695
        %v4175 = vpow.pop %v4174
        %v4176 = vmul.f32 %v4027, 1.442695
        %v4177 = vpow.pop %v4176
        %v4178 = vmul.f32 %v4028, 1.442695
        %v4179 = vpow.pop %v4178
        %v4180 = vmul.f32 %v4029, 1.442695
        %v4181 = vpow.pop %v4180
        %v4182 = vmul.f32 %v4030, 1.442695
        %v4183 = vpow.pop %v4182
        %v4184 = vmul.f32 %v4031, 1.442695
        %v4185 = vpow.pop %v4184
        %v4186 = vmul.f32 %v4032, 1.442695
        %v4187 = vpow.pop %v4186
        %v4188 = vmul.f32 %v4033, 1.442695
        %v4189 = vpow.pop %v4188
        %v4190 = vmul.f32 %v4034, 1.442695
        %v4191 = vpow.pop %v4190
        %v4192 = vmul.f32 %v4035, 1.442695
        %v4193 = vpow.pop %v4192
        %v4194 = vmul.f32 %v4036, 1.442695
        %v4195 = vpow.pop %v4194
        %v4196 = vmul.f32 %v4037, 1.442695
        %v4197 = vpow.pop %v4196
        %v4198 = vmul.f32 %v4038, 1.442695
        %v4199 = vpow.pop %v4198
        %v4200 = vmul.f32 %v4039, 1.442695
        %v4201 = vpow.pop %v4200
        %v4202 = vmul.f32 %v4040, 1.442695
        %v4203 = vpow.pop %v4202
        %v4204 = vmul.f32 %v4041, 1.442695
        %v4205 = vpow.pop %v4204
        %v4206 = vmul.f32 %v4042, 1.442695
        %v4207 = vpow.pop %v4206
        %v4208 = vmul.f32 %v4043, 1.442695
        %v4209 = vpow.pop %v4208
        %v4210 = vmul.f32 %v4044, 1.442695
        %v4211 = vpow.pop %v4210
        %v4212 = vmul.f32 %v4045, 1.442695
        %v4213 = vpow.pop %v4212
        %v4214 = vmul.f32 %v4046, 1.442695
        %v4215 = vpow.pop %v4214
        %v4216 = vmul.f32 %v4047, 1.442695
        %v4217 = vpow.pop %v4216
        %v4218 = vmul.f32 %v4048, 1.442695
        %v4219 = vpow.pop %v4218
        %v4220 = vmul.f32 %v4049, 1.442695
        %v4221 = vpow.pop %v4220
        %v4222 = vmul.f32 %v4050, 1.442695
        %v4223 = vpow.pop %v4222
        %v4224 = vmul.f32 %v4051, 1.442695
        %v4225 = vpow.pop %v4224
        %v4226 = vmul.f32 %v4052, 1.442695
        %v4227 = vpow.pop %v4226
        %v4228 = vmul.f32 %v4053, 1.442695
        %v4229 = vpow.pop %v4228
        %v4230 = vmul.f32 %v4054, 1.442695
        %v4231 = vpow.pop %v4230
        %v4232 = vmul.f32 %v4055, 1.442695
        %v4233 = vpow.pop %v4232
        %v4234 = vmul.f32 %v4056, 1.442695
        %v4235 = vpow.pop %v4234
        %v4236 = vmul.f32 %v4057, 1.442695
        %v4237 = vpow.pop %v4236
        %v4238 = vmul.f32 %v4058, 1.442695
        %v4239 = vpow.pop %v4238
        %v4240 = vmul.f32 %v4059, 1.442695
        %v4241 = vpow.pop %v4240
        %v4242 = vmul.f32 %v4060, 1.442695
        %v4243 = vpow.pop %v4242
        %v4244 = vmul.f32 %v4061, 1.442695
        %v4245 = vpow.pop %v4244
        %v4246 = vmul.f32 %v4062, 1.442695
        %v4247 = vpow.pop %v4246
        %v4248 = vmul.f32 %v4063, 1.442695
        %v4249 = vpow.pop %v4248
        %v4250 = vmul.f32 %v4064, 1.442695
        %v4251 = vpow.pop %v4250
        %v4252 = vmul.f32 %v4065, 1.442695
        %v4253 = vpow.pop %v4252
        %v4254 = vmul.f32 %v4066, 1.442695
        %v4255 = vpow.pop %v4254
        %v4256 = vmul.f32 %v4067, 1.442695
        %v4257 = vpow.pop %v4256
        %v4258 = vmul.f32 %v4068, 1.442695
        %v4259 = vpow.pop %v4258
        %v4260 = vmul.f32 %v4069, 1.442695
        %v4261 = vpow.pop %v4260
        %v4262 = vmul.f32 %v4070, 1.442695
        %v4263 = vpow.pop %v4262
        %v4264 = vmul.f32 %v4071, 1.442695
        %v4265 = vpow.pop %v4264
        %v4266 = vmul.f32 %v4072, 1.442695
        %v4267 = vpow.pop %v4266
        %v4268 = vmul.f32 %v4073, 1.442695
        %v4269 = vpow.pop %v4268
        %v4270 = vmul.f32 %v4074, 1.442695
        %v4271 = vpow.pop %v4270
        %v4272 = vmul.f32 %v4075, 1.442695
        %v4273 = vpow.pop %v4272
        %v4274 = vmul.f32 %v4076, 1.442695
        %v4275 = vpow.pop %v4274
        %v4276 = vmul.f32 %v4077, 1.442695
        %v4277 = vpow.pop %v4276
        %v4278 = vmul.f32 %v4078, 1.442695
        %v4279 = vpow.pop %v4278
        %v4280 = vmul.f32 %v4079, 1.442695
        %v4281 = vpow.pop %v4280
        %v4282 = vmul.f32 %v4080, 1.442695
        %v4283 = vpow.pop %v4282
        %v4284 = vmul.f32 %v4081, 1.442695
        %v4285 = vpow.pop %v4284
        %v4286 = vmul.f32 %v4082, 1.442695
        %v4287 = vpow.pop %v4286
        %v4288 = vmul.f32 %v4083, 1.442695
        %v4289 = vpow.pop %v4288
        %v4290 = vmul.f32 %v4084, 1.442695
        %v4291 = vpow.pop %v4290
        %v4292 = vmul.f32 %v4085, 1.442695
        %v4293 = vpow.pop %v4292
        %v4294 = vmul.f32 %v4086, 1.442695
        %v4295 = vpow.pop %v4294
        %v4296 = vmul.f32 %v4087, 1.442695
        %v4297 = vpow.pop %v4296
        %v4298 = vmul.f32 %v4088, 1.442695
        %v4299 = vpow.pop %v4298
        %v4300 = vmul.f32 %v4089, 1.442695
        %v4301 = vpow.pop %v4300
        %v4302 = vmul.f32 %v4090, 1.442695
        %v4303 = vpow.pop %v4302
        %v4304 = vmul.f32 %v4091, 1.442695
        %v4305 = vpow.pop %v4304
        %v4306 = vmul.f32 %v4092, 1.442695
        %v4307 = vpow.pop %v4306
        %v4308 = vmul.f32 %v4093, 1.442695
        %v4309 = vpow.pop %v4308
        %v4310 = vmul.f32 %v4094, 1.442695
        %v4311 = vpow.pop %v4310
        %v4312 = vmul.f32 %v4095, 1.442695
        %v4313 = vpow.pop %v4312
        %v4314 = vmul.f32 %v4096, 1.442695
        %v4315 = vpow.pop %v4314
        %v4316 = vmul.f32 %v4097, 1.442695
        %v4317 = vpow.pop %v4316
        %v4318 = vmul.f32 %v4098, 1.442695
        %v4319 = vpow.pop %v4318
        %v4320 = vmul.f32 %v4099, 1.442695
        %v4321 = vpow.pop %v4320
        %v4322 = vmul.f32 %v4100, 1.442695
        %v4323 = vpow.pop %v4322
        %v4324 = vmul.f32 %v4101, 1.442695
        %v4325 = vpow.pop %v4324
        %v4326 = vmul.f32 %v4102, 1.442695
        %v4327 = vpow.pop %v4326
        %v4328 = vmul.f32 %v4103, 1.442695
        %v4329 = vpow.pop %v4328
        %v4330 = vmul.f32 %v4104, 1.442695
        %v4331 = vpow.pop %v4330
        %v4332 = vmul.f32 %v4105, 1.442695
        %v4333 = vpow.pop %v4332
        %v4334 = vmul.f32 %v4106, 1.442695
        %v4335 = vpow.pop %v4334
        %v4336 = vmul.f32 %v4107, 1.442695
        %v4337 = vpow.pop %v4336
        %v4338 = vmul.f32 %v4108, 1.442695
        %v4339 = vpow.pop %v4338
        %v4340 = vmul.f32 %v4109, 1.442695
        %v4341 = vpow.pop %v4340
        %v4342 = vmul.f32 %v4110, 1.442695
        %v4343 = vpow.pop %v4342
        %v4344 = vmul.f32 %v4111, 1.442695
        %v4345 = vpow.pop %v4344
        %v4346 = vmul.f32 %v4112, 1.442695
        %v4347 = vpow.pop %v4346
        %v4348 = vmul.f32 %v4113, 1.442695
        %v4349 = vpow.pop %v4348
        %v4350 = vmul.f32 %v4114, 1.442695
        %v4351 = vpow.pop %v4350
        %v4352 = vmul.f32 %v4115, 1.442695
        %v4353 = vpow.pop %v4352
        %v4354 = vmul.f32 %v4116, 1.442695
        %v4355 = vpow.pop %v4354
        %v4356 = vmul.f32 %v4117, 1.442695
        %v4357 = vpow.pop %v4356
        %v4358 = vmul.f32 %v4118, 1.442695
        %v4359 = vpow.pop %v4358
        %v4360 = vmul.f32 %v4119, 1.442695
        %v4361 = vpow.pop %v4360
        %v4362 = vmul.f32 %v4120, 1.442695
        %v4363 = vpow.pop %v4362
        %v4364 = vmul.f32 %v4121, 1.442695
        %v4365 = vpow.pop %v4364
        %v4366 = vmul.f32 %v4122, 1.442695
        %v4367 = vpow.pop %v4366
        %v4368 = vmul.f32 %v4123, 1.442695
        %v4369 = vpow.pop %v4368
        %v4370 = vmul.f32 %v4124, 1.442695
        %v4371 = vpow.pop %v4370
        %v4372 = vmul.f32 %v4125, 1.442695
        %v4373 = vpow.pop %v4372
        %v4374 = vmul.f32 %v4126, 1.442695
        %v4375 = vpow.pop %v4374
        %v4376 = vmul.f32 %v4127, 1.442695
        %v4377 = vpow.pop %v4376
        %v4378 = vmul.f32 %v4128, 1.442695
        %v4379 = vpow.pop %v4378
        %v4380 = vmul.f32 %v4129, 1.442695
        %v4381 = vpow.pop %v4380
        %v4382 = vmul.f32 %v4130, 1.442695
        %v4383 = vpow.pop %v4382
        %v4384 = vmul.f32 %v4131, 1.442695
        %v4385 = vpow.pop %v4384
        %v4386 = vmul.f32 %v4132, 1.442695
        %v4387 = vpow.pop %v4386
        %v4388 = vmul.f32 %v4133, 1.442695
        %v4389 = vpow.pop %v4388
        %v4390 = vld [vmem:[#allocation3] sm:$0xff]
        %v4391 = vld [vmem:[#allocation3 + $0x8] sm:$0xff]
        %v4392 = vld [vmem:[#allocation3 + $0x10] sm:$0xff]
        %v4393 = vld [vmem:[#allocation3 + $0x18] sm:$0xff]
        %v4394 = vld [vmem:[#allocation3 + $0x20] sm:$0xff]
        %v4395 = vld [vmem:[#allocation3 + $0x28] sm:$0xff]
        %v4396 = vld [vmem:[#allocation3 + $0x30] sm:$0xff]
        %v4397 = vld [vmem:[#allocation3 + $0x38] sm:$0xff]
        %v4398 = vld [vmem:[#allocation3 + $0x40] sm:$0xff]
        %v4399 = vld [vmem:[#allocation3 + $0x48] sm:$0xff]
        %v4400 = vld [vmem:[#allocation3 + $0x50] sm:$0xff]
        %v4401 = vld [vmem:[#allocation3 + $0x58] sm:$0xff]
        %v4402 = vld [vmem:[#allocation3 + $0x60] sm:$0xff]
        %v4403 = vld [vmem:[#allocation3 + $0x68] sm:$0xff]
        %v4404 = vld [vmem:[#allocation3 + $0x70] sm:$0xff]
        %v4405 = vld [vmem:[#allocation3 + $0x78] sm:$0xff]
        %v4406 = vld [vmem:[#allocation3 + $0x80] sm:$0xff]
        %v4407 = vld [vmem:[#allocation3 + $0x88] sm:$0xff]
        %v4408 = vld [vmem:[#allocation3 + $0x90] sm:$0xff]
        %v4409 = vld [vmem:[#allocation3 + $0x98] sm:$0xff]
        %v4410 = vld [vmem:[#allocation3 + $0xa0] sm:$0xff]
        %v4411 = vld [vmem:[#allocation3 + $0xa8] sm:$0xff]
        %v4412 = vld [vmem:[#allocation3 + $0xb0] sm:$0xff]
        %v4413 = vld [vmem:[#allocation3 + $0xb8] sm:$0xff]
        %v4414 = vld [vmem:[#allocation3 + $0xc0] sm:$0xff]
        %v4415 = vld [vmem:[#allocation3 + $0xc8] sm:$0xff]
        %v4416 = vld [vmem:[#allocation3 + $0xd0] sm:$0xff]
        %v4417 = vld [vmem:[#allocation3 + $0xd8] sm:$0xff]
        %v4418 = vld [vmem:[#allocation3 + $0xe0] sm:$0xff]
        %v4419 = vld [vmem:[#allocation3 + $0xe8] sm:$0xff]
        %v4420 = vld [vmem:[#allocation3 + $0xf0] sm:$0xff]
        %v4421 = vld [vmem:[#allocation3 + $0xf8] sm:$0xff]
        %v4422 = vld [vmem:[#allocation3 + $0x100] sm:$0xff]
        %v4423 = vld [vmem:[#allocation3 + $0x108] sm:$0xff]
        %v4424 = vld [vmem:[#allocation3 + $0x110] sm:$0xff]
        %v4425 = vld [vmem:[#allocation3 + $0x118] sm:$0xff]
        %v4426 = vld [vmem:[#allocation3 + $0x120] sm:$0xff]
        %v4427 = vld [vmem:[#allocation3 + $0x128] sm:$0xff]
        %v4428 = vld [vmem:[#allocation3 + $0x130] sm:$0xff]
        %v4429 = vld [vmem:[#allocation3 + $0x138] sm:$0xff]
        %v4430 = vld [vmem:[#allocation3 + $0x140] sm:$0xff]
        %v4431 = vld [vmem:[#allocation3 + $0x148] sm:$0xff]
        %v4432 = vld [vmem:[#allocation3 + $0x150] sm:$0xff]
        %v4433 = vld [vmem:[#allocation3 + $0x158] sm:$0xff]
        %v4434 = vld [vmem:[#allocation3 + $0x160] sm:$0xff]
        %v4435 = vld [vmem:[#allocation3 + $0x168] sm:$0xff]
        %v4436 = vld [vmem:[#allocation3 + $0x170] sm:$0xff]
        %v4437 = vld [vmem:[#allocation3 + $0x178] sm:$0xff]
        %v4438 = vld [vmem:[#allocation3 + $0x180] sm:$0xff]
        %v4439 = vld [vmem:[#allocation3 + $0x188] sm:$0xff]
        %v4440 = vld [vmem:[#allocation3 + $0x190] sm:$0xff]
        %v4441 = vld [vmem:[#allocation3 + $0x198] sm:$0xff]
        %v4442 = vld [vmem:[#allocation3 + $0x1a0] sm:$0xff]
        %v4443 = vld [vmem:[#allocation3 + $0x1a8] sm:$0xff]
        %v4444 = vld [vmem:[#allocation3 + $0x1b0] sm:$0xff]
        %v4445 = vld [vmem:[#allocation3 + $0x1b8] sm:$0xff]
        %v4446 = vld [vmem:[#allocation3 + $0x1c0] sm:$0xff]
        %v4447 = vld [vmem:[#allocation3 + $0x1c8] sm:$0xff]
        %v4448 = vld [vmem:[#allocation3 + $0x1d0] sm:$0xff]
        %v4449 = vld [vmem:[#allocation3 + $0x1d8] sm:$0xff]
        %v4450 = vld [vmem:[#allocation3 + $0x1e0] sm:$0xff]
        %v4451 = vld [vmem:[#allocation3 + $0x1e8] sm:$0xff]
        %v4452 = vld [vmem:[#allocation3 + $0x1f0] sm:$0xff]
        %v4453 = vld [vmem:[#allocation3 + $0x1f8] sm:$0xff]
        %v4454 = vld [vmem:[#allocation3 + $0x200] sm:$0xff]
        %v4455 = vld [vmem:[#allocation3 + $0x208] sm:$0xff]
        %v4456 = vld [vmem:[#allocation3 + $0x210] sm:$0xff]
        %v4457 = vld [vmem:[#allocation3 + $0x218] sm:$0xff]
        %v4458 = vld [vmem:[#allocation3 + $0x220] sm:$0xff]
        %v4459 = vld [vmem:[#allocation3 + $0x228] sm:$0xff]
        %v4460 = vld [vmem:[#allocation3 + $0x230] sm:$0xff]
        %v4461 = vld [vmem:[#allocation3 + $0x238] sm:$0xff]
        %v4462 = vld [vmem:[#allocation3 + $0x240] sm:$0xff]
        %v4463 = vld [vmem:[#allocation3 + $0x248] sm:$0xff]
        %v4464 = vld [vmem:[#allocation3 + $0x250] sm:$0xff]
        %v4465 = vld [vmem:[#allocation3 + $0x258] sm:$0xff]
        %v4466 = vld [vmem:[#allocation3 + $0x260] sm:$0xff]
        %v4467 = vld [vmem:[#allocation3 + $0x268] sm:$0xff]
        %v4468 = vld [vmem:[#allocation3 + $0x270] sm:$0xff]
        %v4469 = vld [vmem:[#allocation3 + $0x278] sm:$0xff]
        %v4470 = vld [vmem:[#allocation3 + $0x280] sm:$0xff]
        %v4471 = vld [vmem:[#allocation3 + $0x288] sm:$0xff]
        %v4472 = vld [vmem:[#allocation3 + $0x290] sm:$0xff]
        %v4473 = vld [vmem:[#allocation3 + $0x298] sm:$0xff]
        %v4474 = vld [vmem:[#allocation3 + $0x2a0] sm:$0xff]
        %v4475 = vld [vmem:[#allocation3 + $0x2a8] sm:$0xff]
        %v4476 = vld [vmem:[#allocation3 + $0x2b0] sm:$0xff]
        %v4477 = vld [vmem:[#allocation3 + $0x2b8] sm:$0xff]
        %v4478 = vld [vmem:[#allocation3 + $0x2c0] sm:$0xff]
        %v4479 = vld [vmem:[#allocation3 + $0x2c8] sm:$0xff]
        %v4480 = vld [vmem:[#allocation3 + $0x2d0] sm:$0xff]
        %v4481 = vld [vmem:[#allocation3 + $0x2d8] sm:$0xff]
        %v4482 = vld [vmem:[#allocation3 + $0x2e0] sm:$0xff]
        %v4483 = vld [vmem:[#allocation3 + $0x2e8] sm:$0xff]
        %v4484 = vld [vmem:[#allocation3 + $0x2f0] sm:$0xff]
        %v4485 = vld [vmem:[#allocation3 + $0x2f8] sm:$0xff]
        %v4486 = vld [vmem:[#allocation3 + $0x300] sm:$0xff]
        %v4487 = vld [vmem:[#allocation3 + $0x308] sm:$0xff]
        %v4488 = vld [vmem:[#allocation3 + $0x310] sm:$0xff]
        %v4489 = vld [vmem:[#allocation3 + $0x318] sm:$0xff]
        %v4490 = vld [vmem:[#allocation3 + $0x320] sm:$0xff]
        %v4491 = vld [vmem:[#allocation3 + $0x328] sm:$0xff]
        %v4492 = vld [vmem:[#allocation3 + $0x330] sm:$0xff]
        %v4493 = vld [vmem:[#allocation3 + $0x338] sm:$0xff]
        %v4494 = vld [vmem:[#allocation3 + $0x340] sm:$0xff]
        %v4495 = vld [vmem:[#allocation3 + $0x348] sm:$0xff]
        %v4496 = vld [vmem:[#allocation3 + $0x350] sm:$0xff]
        %v4497 = vld [vmem:[#allocation3 + $0x358] sm:$0xff]
        %v4498 = vld [vmem:[#allocation3 + $0x360] sm:$0xff]
        %v4499 = vld [vmem:[#allocation3 + $0x368] sm:$0xff]
        %v4500 = vld [vmem:[#allocation3 + $0x370] sm:$0xff]
        %v4501 = vld [vmem:[#allocation3 + $0x378] sm:$0xff]
        %v4502 = vld [vmem:[#allocation3 + $0x380] sm:$0xff]
        %v4503 = vld [vmem:[#allocation3 + $0x388] sm:$0xff]
        %v4504 = vld [vmem:[#allocation3 + $0x390] sm:$0xff]
        %v4505 = vld [vmem:[#allocation3 + $0x398] sm:$0xff]
        %v4506 = vld [vmem:[#allocation3 + $0x3a0] sm:$0xff]
        %v4507 = vld [vmem:[#allocation3 + $0x3a8] sm:$0xff]
        %v4508 = vld [vmem:[#allocation3 + $0x3b0] sm:$0xff]
        %v4509 = vld [vmem:[#allocation3 + $0x3b8] sm:$0xff]
        %v4510 = vld [vmem:[#allocation3 + $0x3c0] sm:$0xff]
        %v4511 = vld [vmem:[#allocation3 + $0x3c8] sm:$0xff]
        %v4512 = vld [vmem:[#allocation3 + $0x3d0] sm:$0xff]
        %v4513 = vld [vmem:[#allocation3 + $0x3d8] sm:$0xff]
        %v4514 = vld [vmem:[#allocation3 + $0x3e0] sm:$0xff]
        %v4515 = vld [vmem:[#allocation3 + $0x3e8] sm:$0xff]
        %v4516 = vld [vmem:[#allocation3 + $0x3f0] sm:$0xff]
        %v4517 = vld [vmem:[#allocation3 + $0x3f8] sm:$0xff]
        %v4518 = vmul.f32 %v3111, %v4390
        %v4519 = vmul.f32 %v3113, %v4391
        %v4520 = vmul.f32 %v3115, %v4392
        %v4521 = vmul.f32 %v3117, %v4393
        %v4522 = vmul.f32 %v3119, %v4394
        %v4523 = vmul.f32 %v3121, %v4395
        %v4524 = vmul.f32 %v3123, %v4396
        %v4525 = vmul.f32 %v3125, %v4397
        %v4526 = vmul.f32 %v3127, %v4398
        %v4527 = vmul.f32 %v3129, %v4399
        %v4528 = vmul.f32 %v3131, %v4400
        %v4529 = vmul.f32 %v3133, %v4401
        %v4530 = vmul.f32 %v3135, %v4402
        %v4531 = vmul.f32 %v3137, %v4403
        %v4532 = vmul.f32 %v3139, %v4404
        %v4533 = vmul.f32 %v3141, %v4405
        %v4534 = vmul.f32 %v3143, %v4406
        %v4535 = vmul.f32 %v3145, %v4407
        %v4536 = vmul.f32 %v3147, %v4408
        %v4537 = vmul.f32 %v3149, %v4409
        %v4538 = vmul.f32 %v3151, %v4410
        %v4539 = vmul.f32 %v3153, %v4411
        %v4540 = vmul.f32 %v3155, %v4412
        %v4541 = vmul.f32 %v3157, %v4413
        %v4542 = vmul.f32 %v3159, %v4414
        %v4543 = vmul.f32 %v3161, %v4415
        %v4544 = vmul.f32 %v3163, %v4416
        %v4545 = vmul.f32 %v3165, %v4417
        %v4546 = vmul.f32 %v3167, %v4418
        %v4547 = vmul.f32 %v3169, %v4419
        %v4548 = vmul.f32 %v3171, %v4420
        %v4549 = vmul.f32 %v3173, %v4421
        %v4550 = vmul.f32 %v3175, %v4422
        %v4551 = vmul.f32 %v3177, %v4423
        %v4552 = vmul.f32 %v3179, %v4424
        %v4553 = vmul.f32 %v3181, %v4425
        %v4554 = vmul.f32 %v3183, %v4426
        %v4555 = vmul.f32 %v3185, %v4427
        %v4556 = vmul.f32 %v3187, %v4428
        %v4557 = vmul.f32 %v3189, %v4429
        %v4558 = vmul.f32 %v3191, %v4430
        %v4559 = vmul.f32 %v3193, %v4431
        %v4560 = vmul.f32 %v3195, %v4432
        %v4561 = vmul.f32 %v3197, %v4433
        %v4562 = vmul.f32 %v3199, %v4434
        %v4563 = vmul.f32 %v3201, %v4435
        %v4564 = vmul.f32 %v3203, %v4436
        %v4565 = vmul.f32 %v3205, %v4437
        %v4566 = vmul.f32 %v3207, %v4438
        %v4567 = vmul.f32 %v3209, %v4439
        %v4568 = vmul.f32 %v3211, %v4440
        %v4569 = vmul.f32 %v3213, %v4441
        %v4570 = vmul.f32 %v3215, %v4442
        %v4571 = vmul.f32 %v3217, %v4443
        %v4572 = vmul.f32 %v3219, %v4444
        %v4573 = vmul.f32 %v3221, %v4445
        %v4574 = vmul.f32 %v3223, %v4446
        %v4575 = vmul.f32 %v3225, %v4447
        %v4576 = vmul.f32 %v3227, %v4448
        %v4577 = vmul.f32 %v3229, %v4449
        %v4578 = vmul.f32 %v3231, %v4450
        %v4579 = vmul.f32 %v3233, %v4451
        %v4580 = vmul.f32 %v3235, %v4452
        %v4581 = vmul.f32 %v3237, %v4453
        %v4582 = vmul.f32 %v3239, %v4454
        %v4583 = vmul.f32 %v3241, %v4455
        %v4584 = vmul.f32 %v3243, %v4456
        %v4585 = vmul.f32 %v3245, %v4457
        %v4586 = vmul.f32 %v3247, %v4458
        %v4587 = vmul.f32 %v3249, %v4459
        %v4588 = vmul.f32 %v3251, %v4460
        %v4589 = vmul.f32 %v3253, %v4461
        %v4590 = vmul.f32 %v3255, %v4462
        %v4591 = vmul.f32 %v3257, %v4463
        %v4592 = vmul.f32 %v3259, %v4464
        %v4593 = vmul.f32 %v3261, %v4465
        %v4594 = vmul.f32 %v3263, %v4466
        %v4595 = vmul.f32 %v3265, %v4467
        %v4596 = vmul.f32 %v3267, %v4468
        %v4597 = vmul.f32 %v3269, %v4469
        %v4598 = vmul.f32 %v3271, %v4470
        %v4599 = vmul.f32 %v3273, %v4471
        %v4600 = vmul.f32 %v3275, %v4472
        %v4601 = vmul.f32 %v3277, %v4473
        %v4602 = vmul.f32 %v3279, %v4474
        %v4603 = vmul.f32 %v3281, %v4475
        %v4604 = vmul.f32 %v3283, %v4476
        %v4605 = vmul.f32 %v3285, %v4477
        %v4606 = vmul.f32 %v3287, %v4478
        %v4607 = vmul.f32 %v3289, %v4479
        %v4608 = vmul.f32 %v3291, %v4480
        %v4609 = vmul.f32 %v3293, %v4481
        %v4610 = vmul.f32 %v3295, %v4482
        %v4611 = vmul.f32 %v3297, %v4483
        %v4612 = vmul.f32 %v3299, %v4484
        %v4613 = vmul.f32 %v3301, %v4485
        %v4614 = vmul.f32 %v3303, %v4486
        %v4615 = vmul.f32 %v3305, %v4487
        %v4616 = vmul.f32 %v3307, %v4488
        %v4617 = vmul.f32 %v3309, %v4489
        %v4618 = vmul.f32 %v3311, %v4490
        %v4619 = vmul.f32 %v3313, %v4491
        %v4620 = vmul.f32 %v3315, %v4492
        %v4621 = vmul.f32 %v3317, %v4493
        %v4622 = vmul.f32 %v3319, %v4494
        %v4623 = vmul.f32 %v3321, %v4495
        %v4624 = vmul.f32 %v3323, %v4496
        %v4625 = vmul.f32 %v3325, %v4497
        %v4626 = vmul.f32 %v3327, %v4498
        %v4627 = vmul.f32 %v3329, %v4499
        %v4628 = vmul.f32 %v3331, %v4500
        %v4629 = vmul.f32 %v3333, %v4501
        %v4630 = vmul.f32 %v3335, %v4502
        %v4631 = vmul.f32 %v3337, %v4503
        %v4632 = vmul.f32 %v3339, %v4504
        %v4633 = vmul.f32 %v3341, %v4505
        %v4634 = vmul.f32 %v3343, %v4506
        %v4635 = vmul.f32 %v3345, %v4507
        %v4636 = vmul.f32 %v3347, %v4508
        %v4637 = vmul.f32 %v3349, %v4509
        %v4638 = vmul.f32 %v3351, %v4510
        %v4639 = vmul.f32 %v3353, %v4511
        %v4640 = vmul.f32 %v3355, %v4512
        %v4641 = vmul.f32 %v3357, %v4513
        %v4642 = vmul.f32 %v3359, %v4514
        %v4643 = vmul.f32 %v3361, %v4515
        %v4644 = vmul.f32 %v3363, %v4516
        %v4645 = vmul.f32 %v3365, %v4517
        %4646 = vadd.xlane.f32.xlu0 %v4135
        %v4647 = vpop.xlane.xlu0 %4646
        %4648 = vadd.xlane.f32.xlu0 %v4137
        %v4649 = vpop.xlane.xlu0 %4648
        %4650 = vadd.xlane.f32.xlu0 %v4139
        %v4651 = vpop.xlane.xlu0 %4650
        %4652 = vadd.xlane.f32.xlu0 %v4141
        %v4653 = vpop.xlane.xlu0 %4652
        %4654 = vadd.xlane.f32.xlu0 %v4143
        %v4655 = vpop.xlane.xlu0 %4654
        %4656 = vadd.xlane.f32.xlu0 %v4145
        %v4657 = vpop.xlane.xlu0 %4656
        %4658 = vadd.xlane.f32.xlu0 %v4147
        %v4659 = vpop.xlane.xlu0 %4658
        %4660 = vadd.xlane.f32.xlu0 %v4149
        %v4661 = vpop.xlane.xlu0 %4660
        %4662 = vadd.xlane.f32.xlu0 %v4151
        %v4663 = vpop.xlane.xlu0 %4662
        %4664 = vadd.xlane.f32.xlu0 %v4153
        %v4665 = vpop.xlane.xlu0 %4664
        %4666 = vadd.xlane.f32.xlu0 %v4155
        %v4667 = vpop.xlane.xlu0 %4666
        %4668 = vadd.xlane.f32.xlu0 %v4157
        %v4669 = vpop.xlane.xlu0 %4668
        %4670 = vadd.xlane.f32.xlu0 %v4159
        %v4671 = vpop.xlane.xlu0 %4670
        %4672 = vadd.xlane.f32.xlu0 %v4161
        %v4673 = vpop.xlane.xlu0 %4672
        %4674 = vadd.xlane.f32.xlu0 %v4163
        %v4675 = vpop.xlane.xlu0 %4674
        %4676 = vadd.xlane.f32.xlu0 %v4165
        %v4677 = vpop.xlane.xlu0 %4676
        %4678 = vadd.xlane.f32.xlu0 %v4167
        %v4679 = vpop.xlane.xlu0 %4678
        %4680 = vadd.xlane.f32.xlu0 %v4169
        %v4681 = vpop.xlane.xlu0 %4680
        %4682 = vadd.xlane.f32.xlu0 %v4171
        %v4683 = vpop.xlane.xlu0 %4682
        %4684 = vadd.xlane.f32.xlu0 %v4173
        %v4685 = vpop.xlane.xlu0 %4684
        %4686 = vadd.xlane.f32.xlu0 %v4175
        %v4687 = vpop.xlane.xlu0 %4686
        %4688 = vadd.xlane.f32.xlu0 %v4177
        %v4689 = vpop.xlane.xlu0 %4688
        %4690 = vadd.xlane.f32.xlu0 %v4179
        %v4691 = vpop.xlane.xlu0 %4690
        %4692 = vadd.xlane.f32.xlu0 %v4181
        %v4693 = vpop.xlane.xlu0 %4692
        %4694 = vadd.xlane.f32.xlu0 %v4183
        %v4695 = vpop.xlane.xlu0 %4694
        %4696 = vadd.xlane.f32.xlu0 %v4185
        %v4697 = vpop.xlane.xlu0 %4696
        %4698 = vadd.xlane.f32.xlu0 %v4187
        %v4699 = vpop.xlane.xlu0 %4698
        %4700 = vadd.xlane.f32.xlu0 %v4189
        %v4701 = vpop.xlane.xlu0 %4700
        %4702 = vadd.xlane.f32.xlu0 %v4191
        %v4703 = vpop.xlane.xlu0 %4702
        %4704 = vadd.xlane.f32.xlu0 %v4193
        %v4705 = vpop.xlane.xlu0 %4704
        %4706 = vadd.xlane.f32.xlu0 %v4195
        %v4707 = vpop.xlane.xlu0 %4706
        %4708 = vadd.xlane.f32.xlu0 %v4197
        %v4709 = vpop.xlane.xlu0 %4708
        %4710 = vadd.xlane.f32.xlu0 %v4199
        %v4711 = vpop.xlane.xlu0 %4710
        %4712 = vadd.xlane.f32.xlu0 %v4201
        %v4713 = vpop.xlane.xlu0 %4712
        %4714 = vadd.xlane.f32.xlu0 %v4203
        %v4715 = vpop.xlane.xlu0 %4714
        %4716 = vadd.xlane.f32.xlu0 %v4205
        %v4717 = vpop.xlane.xlu0 %4716
        %4718 = vadd.xlane.f32.xlu0 %v4207
        %v4719 = vpop.xlane.xlu0 %4718
        %4720 = vadd.xlane.f32.xlu0 %v4209
        %v4721 = vpop.xlane.xlu0 %4720
        %4722 = vadd.xlane.f32.xlu0 %v4211
        %v4723 = vpop.xlane.xlu0 %4722
        %4724 = vadd.xlane.f32.xlu0 %v4213
        %v4725 = vpop.xlane.xlu0 %4724
        %4726 = vadd.xlane.f32.xlu0 %v4215
        %v4727 = vpop.xlane.xlu0 %4726
        %4728 = vadd.xlane.f32.xlu0 %v4217
        %v4729 = vpop.xlane.xlu0 %4728
        %4730 = vadd.xlane.f32.xlu0 %v4219
        %v4731 = vpop.xlane.xlu0 %4730
        %4732 = vadd.xlane.f32.xlu0 %v4221
        %v4733 = vpop.xlane.xlu0 %4732
        %4734 = vadd.xlane.f32.xlu0 %v4223
        %v4735 = vpop.xlane.xlu0 %4734
        %4736 = vadd.xlane.f32.xlu0 %v4225
        %v4737 = vpop.xlane.xlu0 %4736
        %4738 = vadd.xlane.f32.xlu0 %v4227
        %v4739 = vpop.xlane.xlu0 %4738
        %4740 = vadd.xlane.f32.xlu0 %v4229
        %v4741 = vpop.xlane.xlu0 %4740
        %4742 = vadd.xlane.f32.xlu0 %v4231
        %v4743 = vpop.xlane.xlu0 %4742
        %4744 = vadd.xlane.f32.xlu0 %v4233
        %v4745 = vpop.xlane.xlu0 %4744
        %4746 = vadd.xlane.f32.xlu0 %v4235
        %v4747 = vpop.xlane.xlu0 %4746
        %4748 = vadd.xlane.f32.xlu0 %v4237
        %v4749 = vpop.xlane.xlu0 %4748
        %4750 = vadd.xlane.f32.xlu0 %v4239
        %v4751 = vpop.xlane.xlu0 %4750
        %4752 = vadd.xlane.f32.xlu0 %v4241
        %v4753 = vpop.xlane.xlu0 %4752
        %4754 = vadd.xlane.f32.xlu0 %v4243
        %v4755 = vpop.xlane.xlu0 %4754
        %4756 = vadd.xlane.f32.xlu0 %v4245
        %v4757 = vpop.xlane.xlu0 %4756
        %4758 = vadd.xlane.f32.xlu0 %v4247
        %v4759 = vpop.xlane.xlu0 %4758
        %4760 = vadd.xlane.f32.xlu0 %v4249
        %v4761 = vpop.xlane.xlu0 %4760
        %4762 = vadd.xlane.f32.xlu0 %v4251
        %v4763 = vpop.xlane.xlu0 %4762
        %4764 = vadd.xlane.f32.xlu0 %v4253
        %v4765 = vpop.xlane.xlu0 %4764
        %4766 = vadd.xlane.f32.xlu0 %v4255
        %v4767 = vpop.xlane.xlu0 %4766
        %4768 = vadd.xlane.f32.xlu0 %v4257
        %v4769 = vpop.xlane.xlu0 %4768
        %4770 = vadd.xlane.f32.xlu0 %v4259
        %v4771 = vpop.xlane.xlu0 %4770
        %4772 = vadd.xlane.f32.xlu0 %v4261
        %v4773 = vpop.xlane.xlu0 %4772
        %4774 = vadd.xlane.f32.xlu0 %v4263
        %v4775 = vpop.xlane.xlu0 %4774
        %4776 = vadd.xlane.f32.xlu0 %v4265
        %v4777 = vpop.xlane.xlu0 %4776
        %4778 = vadd.xlane.f32.xlu0 %v4267
        %v4779 = vpop.xlane.xlu0 %4778
        %4780 = vadd.xlane.f32.xlu0 %v4269
        %v4781 = vpop.xlane.xlu0 %4780
        %4782 = vadd.xlane.f32.xlu0 %v4271
        %v4783 = vpop.xlane.xlu0 %4782
        %4784 = vadd.xlane.f32.xlu0 %v4273
        %v4785 = vpop.xlane.xlu0 %4784
        %4786 = vadd.xlane.f32.xlu0 %v4275
        %v4787 = vpop.xlane.xlu0 %4786
        %4788 = vadd.xlane.f32.xlu0 %v4277
        %v4789 = vpop.xlane.xlu0 %4788
        %4790 = vadd.xlane.f32.xlu0 %v4279
        %v4791 = vpop.xlane.xlu0 %4790
        %4792 = vadd.xlane.f32.xlu0 %v4281
        %v4793 = vpop.xlane.xlu0 %4792
        %4794 = vadd.xlane.f32.xlu0 %v4283
        %v4795 = vpop.xlane.xlu0 %4794
        %4796 = vadd.xlane.f32.xlu0 %v4285
        %v4797 = vpop.xlane.xlu0 %4796
        %4798 = vadd.xlane.f32.xlu0 %v4287
        %v4799 = vpop.xlane.xlu0 %4798
        %4800 = vadd.xlane.f32.xlu0 %v4289
        %v4801 = vpop.xlane.xlu0 %4800
        %4802 = vadd.xlane.f32.xlu0 %v4291
        %v4803 = vpop.xlane.xlu0 %4802
        %4804 = vadd.xlane.f32.xlu0 %v4293
        %v4805 = vpop.xlane.xlu0 %4804
        %4806 = vadd.xlane.f32.xlu0 %v4295
        %v4807 = vpop.xlane.xlu0 %4806
        %4808 = vadd.xlane.f32.xlu0 %v4297
        %v4809 = vpop.xlane.xlu0 %4808
        %4810 = vadd.xlane.f32.xlu0 %v4299
        %v4811 = vpop.xlane.xlu0 %4810
        %4812 = vadd.xlane.f32.xlu0 %v4301
        %v4813 = vpop.xlane.xlu0 %4812
        %4814 = vadd.xlane.f32.xlu0 %v4303
        %v4815 = vpop.xlane.xlu0 %4814
        %4816 = vadd.xlane.f32.xlu0 %v4305
        %v4817 = vpop.xlane.xlu0 %4816
        %4818 = vadd.xlane.f32.xlu0 %v4307
        %v4819 = vpop.xlane.xlu0 %4818
        %4820 = vadd.xlane.f32.xlu0 %v4309
        %v4821 = vpop.xlane.xlu0 %4820
        %4822 = vadd.xlane.f32.xlu0 %v4311
        %v4823 = vpop.xlane.xlu0 %4822
        %4824 = vadd.xlane.f32.xlu0 %v4313
        %v4825 = vpop.xlane.xlu0 %4824
        %4826 = vadd.xlane.f32.xlu0 %v4315
        %v4827 = vpop.xlane.xlu0 %4826
        %4828 = vadd.xlane.f32.xlu0 %v4317
        %v4829 = vpop.xlane.xlu0 %4828
        %4830 = vadd.xlane.f32.xlu0 %v4319
        %v4831 = vpop.xlane.xlu0 %4830
        %4832 = vadd.xlane.f32.xlu0 %v4321
        %v4833 = vpop.xlane.xlu0 %4832
        %4834 = vadd.xlane.f32.xlu0 %v4323
        %v4835 = vpop.xlane.xlu0 %4834
        %4836 = vadd.xlane.f32.xlu0 %v4325
        %v4837 = vpop.xlane.xlu0 %4836
        %4838 = vadd.xlane.f32.xlu0 %v4327
        %v4839 = vpop.xlane.xlu0 %4838
        %4840 = vadd.xlane.f32.xlu0 %v4329
        %v4841 = vpop.xlane.xlu0 %4840
        %4842 = vadd.xlane.f32.xlu0 %v4331
        %v4843 = vpop.xlane.xlu0 %4842
        %4844 = vadd.xlane.f32.xlu0 %v4333
        %v4845 = vpop.xlane.xlu0 %4844
        %4846 = vadd.xlane.f32.xlu0 %v4335
        %v4847 = vpop.xlane.xlu0 %4846
        %4848 = vadd.xlane.f32.xlu0 %v4337
        %v4849 = vpop.xlane.xlu0 %4848
        %4850 = vadd.xlane.f32.xlu0 %v4339
        %v4851 = vpop.xlane.xlu0 %4850
        %4852 = vadd.xlane.f32.xlu0 %v4341
        %v4853 = vpop.xlane.xlu0 %4852
        %4854 = vadd.xlane.f32.xlu0 %v4343
        %v4855 = vpop.xlane.xlu0 %4854
        %4856 = vadd.xlane.f32.xlu0 %v4345
        %v4857 = vpop.xlane.xlu0 %4856
        %4858 = vadd.xlane.f32.xlu0 %v4347
        %v4859 = vpop.xlane.xlu0 %4858
        %4860 = vadd.xlane.f32.xlu0 %v4349
        %v4861 = vpop.xlane.xlu0 %4860
        %4862 = vadd.xlane.f32.xlu0 %v4351
        %v4863 = vpop.xlane.xlu0 %4862
        %4864 = vadd.xlane.f32.xlu0 %v4353
        %v4865 = vpop.xlane.xlu0 %4864
        %4866 = vadd.xlane.f32.xlu0 %v4355
        %v4867 = vpop.xlane.xlu0 %4866
        %4868 = vadd.xlane.f32.xlu0 %v4357
        %v4869 = vpop.xlane.xlu0 %4868
        %4870 = vadd.xlane.f32.xlu0 %v4359
        %v4871 = vpop.xlane.xlu0 %4870
        %4872 = vadd.xlane.f32.xlu0 %v4361
        %v4873 = vpop.xlane.xlu0 %4872
        %4874 = vadd.xlane.f32.xlu0 %v4363
        %v4875 = vpop.xlane.xlu0 %4874
        %4876 = vadd.xlane.f32.xlu0 %v4365
        %v4877 = vpop.xlane.xlu0 %4876
        %4878 = vadd.xlane.f32.xlu0 %v4367
        %v4879 = vpop.xlane.xlu0 %4878
        %4880 = vadd.xlane.f32.xlu0 %v4369
        %v4881 = vpop.xlane.xlu0 %4880
        %4882 = vadd.xlane.f32.xlu0 %v4371
        %v4883 = vpop.xlane.xlu0 %4882
        %4884 = vadd.xlane.f32.xlu0 %v4373
        %v4885 = vpop.xlane.xlu0 %4884
        %4886 = vadd.xlane.f32.xlu0 %v4375
        %v4887 = vpop.xlane.xlu0 %4886
        %4888 = vadd.xlane.f32.xlu0 %v4377
        %v4889 = vpop.xlane.xlu0 %4888
        %4890 = vadd.xlane.f32.xlu0 %v4379
        %v4891 = vpop.xlane.xlu0 %4890
        %4892 = vadd.xlane.f32.xlu0 %v4381
        %v4893 = vpop.xlane.xlu0 %4892
        %4894 = vadd.xlane.f32.xlu0 %v4383
        %v4895 = vpop.xlane.xlu0 %4894
        %4896 = vadd.xlane.f32.xlu0 %v4385
        %v4897 = vpop.xlane.xlu0 %4896
        %4898 = vadd.xlane.f32.xlu0 %v4387
        %v4899 = vpop.xlane.xlu0 %4898
        %4900 = vadd.xlane.f32.xlu0 %v4389
        %v4901 = vpop.xlane.xlu0 %4900
        %v4902 = vadd.f32 %v4518, %v4647
        %v4903 = vadd.f32 %v4519, %v4649
        %v4904 = vadd.f32 %v4520, %v4651
        %v4905 = vadd.f32 %v4521, %v4653
        %v4906 = vadd.f32 %v4522, %v4655
        %v4907 = vadd.f32 %v4523, %v4657
        %v4908 = vadd.f32 %v4524, %v4659
        %v4909 = vadd.f32 %v4525, %v4661
        %v4910 = vadd.f32 %v4526, %v4663
        %v4911 = vadd.f32 %v4527, %v4665
        %v4912 = vadd.f32 %v4528, %v4667
        %v4913 = vadd.f32 %v4529, %v4669
        %v4914 = vadd.f32 %v4530, %v4671
        %v4915 = vadd.f32 %v4531, %v4673
        %v4916 = vadd.f32 %v4532, %v4675
        %v4917 = vadd.f32 %v4533, %v4677
        %v4918 = vadd.f32 %v4534, %v4679
        %v4919 = vadd.f32 %v4535, %v4681
        %v4920 = vadd.f32 %v4536, %v4683
        %v4921 = vadd.f32 %v4537, %v4685
        %v4922 = vadd.f32 %v4538, %v4687
        %v4923 = vadd.f32 %v4539, %v4689
        %v4924 = vadd.f32 %v4540, %v4691
        %v4925 = vadd.f32 %v4541, %v4693
        %v4926 = vadd.f32 %v4542, %v4695
        %v4927 = vadd.f32 %v4543, %v4697
        %v4928 = vadd.f32 %v4544, %v4699
        %v4929 = vadd.f32 %v4545, %v4701
        %v4930 = vadd.f32 %v4546, %v4703
        %v4931 = vadd.f32 %v4547, %v4705
        %v4932 = vadd.f32 %v4548, %v4707
        %v4933 = vadd.f32 %v4549, %v4709
        %v4934 = vadd.f32 %v4550, %v4711
        %v4935 = vadd.f32 %v4551, %v4713
        %v4936 = vadd.f32 %v4552, %v4715
        %v4937 = vadd.f32 %v4553, %v4717
        %v4938 = vadd.f32 %v4554, %v4719
        %v4939 = vadd.f32 %v4555, %v4721
        %v4940 = vadd.f32 %v4556, %v4723
        %v4941 = vadd.f32 %v4557, %v4725
        %v4942 = vadd.f32 %v4558, %v4727
        %v4943 = vadd.f32 %v4559, %v4729
        %v4944 = vadd.f32 %v4560, %v4731
        %v4945 = vadd.f32 %v4561, %v4733
        %v4946 = vadd.f32 %v4562, %v4735
        %v4947 = vadd.f32 %v4563, %v4737
        %v4948 = vadd.f32 %v4564, %v4739
        %v4949 = vadd.f32 %v4565, %v4741
        %v4950 = vadd.f32 %v4566, %v4743
        %v4951 = vadd.f32 %v4567, %v4745
        %v4952 = vadd.f32 %v4568, %v4747
        %v4953 = vadd.f32 %v4569, %v4749
        %v4954 = vadd.f32 %v4570, %v4751
        %v4955 = vadd.f32 %v4571, %v4753
        %v4956 = vadd.f32 %v4572, %v4755
        %v4957 = vadd.f32 %v4573, %v4757
        %v4958 = vadd.f32 %v4574, %v4759
        %v4959 = vadd.f32 %v4575, %v4761
        %v4960 = vadd.f32 %v4576, %v4763
        %v4961 = vadd.f32 %v4577, %v4765
        %v4962 = vadd.f32 %v4578, %v4767
        %v4963 = vadd.f32 %v4579, %v4769
        %v4964 = vadd.f32 %v4580, %v4771
        %v4965 = vadd.f32 %v4581, %v4773
        %v4966 = vadd.f32 %v4582, %v4775
        %v4967 = vadd.f32 %v4583, %v4777
        %v4968 = vadd.f32 %v4584, %v4779
        %v4969 = vadd.f32 %v4585, %v4781
        %v4970 = vadd.f32 %v4586, %v4783
        %v4971 = vadd.f32 %v4587, %v4785
        %v4972 = vadd.f32 %v4588, %v4787
        %v4973 = vadd.f32 %v4589, %v4789
        %v4974 = vadd.f32 %v4590, %v4791
        %v4975 = vadd.f32 %v4591, %v4793
        %v4976 = vadd.f32 %v4592, %v4795
        %v4977 = vadd.f32 %v4593, %v4797
        %v4978 = vadd.f32 %v4594, %v4799
        %v4979 = vadd.f32 %v4595, %v4801
        %v4980 = vadd.f32 %v4596, %v4803
        %v4981 = vadd.f32 %v4597, %v4805
        %v4982 = vadd.f32 %v4598, %v4807
        %v4983 = vadd.f32 %v4599, %v4809
        %v4984 = vadd.f32 %v4600, %v4811
        %v4985 = vadd.f32 %v4601, %v4813
        %v4986 = vadd.f32 %v4602, %v4815
        %v4987 = vadd.f32 %v4603, %v4817
        %v4988 = vadd.f32 %v4604, %v4819
        %v4989 = vadd.f32 %v4605, %v4821
        %v4990 = vadd.f32 %v4606, %v4823
        %v4991 = vadd.f32 %v4607, %v4825
        %v4992 = vadd.f32 %v4608, %v4827
        %v4993 = vadd.f32 %v4609, %v4829
        %v4994 = vadd.f32 %v4610, %v4831
        %v4995 = vadd.f32 %v4611, %v4833
        %v4996 = vadd.f32 %v4612, %v4835
        %v4997 = vadd.f32 %v4613, %v4837
        %v4998 = vadd.f32 %v4614, %v4839
        %v4999 = vadd.f32 %v4615, %v4841
        %v5000 = vadd.f32 %v4616, %v4843
        %v5001 = vadd.f32 %v4617, %v4845
        %v5002 = vadd.f32 %v4618, %v4847
        %v5003 = vadd.f32 %v4619, %v4849
        %v5004 = vadd.f32 %v4620, %v4851
        %v5005 = vadd.f32 %v4621, %v4853
        %v5006 = vadd.f32 %v4622, %v4855
        %v5007 = vadd.f32 %v4623, %v4857
        %v5008 = vadd.f32 %v4624, %v4859
        %v5009 = vadd.f32 %v4625, %v4861
        %v5010 = vadd.f32 %v4626, %v4863
        %v5011 = vadd.f32 %v4627, %v4865
        %v5012 = vadd.f32 %v4628, %v4867
        %v5013 = vadd.f32 %v4629, %v4869
        %v5014 = vadd.f32 %v4630, %v4871
        %v5015 = vadd.f32 %v4631, %v4873
        %v5016 = vadd.f32 %v4632, %v4875
        %v5017 = vadd.f32 %v4633, %v4877
        %v5018 = vadd.f32 %v4634, %v4879
        %v5019 = vadd.f32 %v4635, %v4881
        %v5020 = vadd.f32 %v4636, %v4883
        %v5021 = vadd.f32 %v4637, %v4885
        %v5022 = vadd.f32 %v4638, %v4887
        %v5023 = vadd.f32 %v4639, %v4889
        %v5024 = vadd.f32 %v4640, %v4891
        %v5025 = vadd.f32 %v4641, %v4893
        %v5026 = vadd.f32 %v4642, %v4895
        %v5027 = vadd.f32 %v4643, %v4897
        %v5028 = vadd.f32 %v4644, %v4899
        %v5029 = vadd.f32 %v4645, %v4901
        %vm5030 = vcmask 7168
        %5031 = vst.msk [vmem:[#allocation3] sm:$0xff] %vm5030, %v4902
        %5032 = vst.msk [vmem:[#allocation3 + $0x8] sm:$0xff] %vm5030, %v4903
        %5033 = vst.msk [vmem:[#allocation3 + $0x10] sm:$0xff] %vm5030, %v4904
        %5034 = vst.msk [vmem:[#allocation3 + $0x18] sm:$0xff] %vm5030, %v4905
        %5035 = vst.msk [vmem:[#allocation3 + $0x20] sm:$0xff] %vm5030, %v4906
        %5036 = vst.msk [vmem:[#allocation3 + $0x28] sm:$0xff] %vm5030, %v4907
        %5037 = vst.msk [vmem:[#allocation3 + $0x30] sm:$0xff] %vm5030, %v4908
        %5038 = vst.msk [vmem:[#allocation3 + $0x38] sm:$0xff] %vm5030, %v4909
        %5039 = vst.msk [vmem:[#allocation3 + $0x40] sm:$0xff] %vm5030, %v4910
        %5040 = vst.msk [vmem:[#allocation3 + $0x48] sm:$0xff] %vm5030, %v4911
        %5041 = vst.msk [vmem:[#allocation3 + $0x50] sm:$0xff] %vm5030, %v4912
        %5042 = vst.msk [vmem:[#allocation3 + $0x58] sm:$0xff] %vm5030, %v4913
        %5043 = vst.msk [vmem:[#allocation3 + $0x60] sm:$0xff] %vm5030, %v4914
        %5044 = vst.msk [vmem:[#allocation3 + $0x68] sm:$0xff] %vm5030, %v4915
        %5045 = vst.msk [vmem:[#allocation3 + $0x70] sm:$0xff] %vm5030, %v4916
        %5046 = vst.msk [vmem:[#allocation3 + $0x78] sm:$0xff] %vm5030, %v4917
        %5047 = vst.msk [vmem:[#allocation3 + $0x80] sm:$0xff] %vm5030, %v4918
        %5048 = vst.msk [vmem:[#allocation3 + $0x88] sm:$0xff] %vm5030, %v4919
        %5049 = vst.msk [vmem:[#allocation3 + $0x90] sm:$0xff] %vm5030, %v4920
        %5050 = vst.msk [vmem:[#allocation3 + $0x98] sm:$0xff] %vm5030, %v4921
        %5051 = vst.msk [vmem:[#allocation3 + $0xa0] sm:$0xff] %vm5030, %v4922
        %5052 = vst.msk [vmem:[#allocation3 + $0xa8] sm:$0xff] %vm5030, %v4923
        %5053 = vst.msk [vmem:[#allocation3 + $0xb0] sm:$0xff] %vm5030, %v4924
        %5054 = vst.msk [vmem:[#allocation3 + $0xb8] sm:$0xff] %vm5030, %v4925
        %5055 = vst.msk [vmem:[#allocation3 + $0xc0] sm:$0xff] %vm5030, %v4926
        %5056 = vst.msk [vmem:[#allocation3 + $0xc8] sm:$0xff] %vm5030, %v4927
        %5057 = vst.msk [vmem:[#allocation3 + $0xd0] sm:$0xff] %vm5030, %v4928
        %5058 = vst.msk [vmem:[#allocation3 + $0xd8] sm:$0xff] %vm5030, %v4929
        %5059 = vst.msk [vmem:[#allocation3 + $0xe0] sm:$0xff] %vm5030, %v4930
        %5060 = vst.msk [vmem:[#allocation3 + $0xe8] sm:$0xff] %vm5030, %v4931
        %5061 = vst.msk [vmem:[#allocation3 + $0xf0] sm:$0xff] %vm5030, %v4932
        %5062 = vst.msk [vmem:[#allocation3 + $0xf8] sm:$0xff] %vm5030, %v4933
        %5063 = vst.msk [vmem:[#allocation3 + $0x100] sm:$0xff] %vm5030, %v4934
        %5064 = vst.msk [vmem:[#allocation3 + $0x108] sm:$0xff] %vm5030, %v4935
        %5065 = vst.msk [vmem:[#allocation3 + $0x110] sm:$0xff] %vm5030, %v4936
        %5066 = vst.msk [vmem:[#allocation3 + $0x118] sm:$0xff] %vm5030, %v4937
        %5067 = vst.msk [vmem:[#allocation3 + $0x120] sm:$0xff] %vm5030, %v4938
        %5068 = vst.msk [vmem:[#allocation3 + $0x128] sm:$0xff] %vm5030, %v4939
        %5069 = vst.msk [vmem:[#allocation3 + $0x130] sm:$0xff] %vm5030, %v4940
        %5070 = vst.msk [vmem:[#allocation3 + $0x138] sm:$0xff] %vm5030, %v4941
        %5071 = vst.msk [vmem:[#allocation3 + $0x140] sm:$0xff] %vm5030, %v4942
        %5072 = vst.msk [vmem:[#allocation3 + $0x148] sm:$0xff] %vm5030, %v4943
        %5073 = vst.msk [vmem:[#allocation3 + $0x150] sm:$0xff] %vm5030, %v4944
        %5074 = vst.msk [vmem:[#allocation3 + $0x158] sm:$0xff] %vm5030, %v4945
        %5075 = vst.msk [vmem:[#allocation3 + $0x160] sm:$0xff] %vm5030, %v4946
        %5076 = vst.msk [vmem:[#allocation3 + $0x168] sm:$0xff] %vm5030, %v4947
        %5077 = vst.msk [vmem:[#allocation3 + $0x170] sm:$0xff] %vm5030, %v4948
        %5078 = vst.msk [vmem:[#allocation3 + $0x178] sm:$0xff] %vm5030, %v4949
        %5079 = vst.msk [vmem:[#allocation3 + $0x180] sm:$0xff] %vm5030, %v4950
        %5080 = vst.msk [vmem:[#allocation3 + $0x188] sm:$0xff] %vm5030, %v4951
        %5081 = vst.msk [vmem:[#allocation3 + $0x190] sm:$0xff] %vm5030, %v4952
        %5082 = vst.msk [vmem:[#allocation3 + $0x198] sm:$0xff] %vm5030, %v4953
        %5083 = vst.msk [vmem:[#allocation3 + $0x1a0] sm:$0xff] %vm5030, %v4954
        %5084 = vst.msk [vmem:[#allocation3 + $0x1a8] sm:$0xff] %vm5030, %v4955
        %5085 = vst.msk [vmem:[#allocation3 + $0x1b0] sm:$0xff] %vm5030, %v4956
        %5086 = vst.msk [vmem:[#allocation3 + $0x1b8] sm:$0xff] %vm5030, %v4957
        %5087 = vst.msk [vmem:[#allocation3 + $0x1c0] sm:$0xff] %vm5030, %v4958
        %5088 = vst.msk [vmem:[#allocation3 + $0x1c8] sm:$0xff] %vm5030, %v4959
        %5089 = vst.msk [vmem:[#allocation3 + $0x1d0] sm:$0xff] %vm5030, %v4960
        %5090 = vst.msk [vmem:[#allocation3 + $0x1d8] sm:$0xff] %vm5030, %v4961
        %5091 = vst.msk [vmem:[#allocation3 + $0x1e0] sm:$0xff] %vm5030, %v4962
        %5092 = vst.msk [vmem:[#allocation3 + $0x1e8] sm:$0xff] %vm5030, %v4963
        %5093 = vst.msk [vmem:[#allocation3 + $0x1f0] sm:$0xff] %vm5030, %v4964
        %5094 = vst.msk [vmem:[#allocation3 + $0x1f8] sm:$0xff] %vm5030, %v4965
        %5095 = vst.msk [vmem:[#allocation3 + $0x200] sm:$0xff] %vm5030, %v4966
        %5096 = vst.msk [vmem:[#allocation3 + $0x208] sm:$0xff] %vm5030, %v4967
        %5097 = vst.msk [vmem:[#allocation3 + $0x210] sm:$0xff] %vm5030, %v4968
        %5098 = vst.msk [vmem:[#allocation3 + $0x218] sm:$0xff] %vm5030, %v4969
        %5099 = vst.msk [vmem:[#allocation3 + $0x220] sm:$0xff] %vm5030, %v4970
        %5100 = vst.msk [vmem:[#allocation3 + $0x228] sm:$0xff] %vm5030, %v4971
        %5101 = vst.msk [vmem:[#allocation3 + $0x230] sm:$0xff] %vm5030, %v4972
        %5102 = vst.msk [vmem:[#allocation3 + $0x238] sm:$0xff] %vm5030, %v4973
        %5103 = vst.msk [vmem:[#allocation3 + $0x240] sm:$0xff] %vm5030, %v4974
        %5104 = vst.msk [vmem:[#allocation3 + $0x248] sm:$0xff] %vm5030, %v4975
        %5105 = vst.msk [vmem:[#allocation3 + $0x250] sm:$0xff] %vm5030, %v4976
        %5106 = vst.msk [vmem:[#allocation3 + $0x258] sm:$0xff] %vm5030, %v4977
        %5107 = vst.msk [vmem:[#allocation3 + $0x260] sm:$0xff] %vm5030, %v4978
        %5108 = vst.msk [vmem:[#allocation3 + $0x268] sm:$0xff] %vm5030, %v4979
        %5109 = vst.msk [vmem:[#allocation3 + $0x270] sm:$0xff] %vm5030, %v4980
        %5110 = vst.msk [vmem:[#allocation3 + $0x278] sm:$0xff] %vm5030, %v4981
        %5111 = vst.msk [vmem:[#allocation3 + $0x280] sm:$0xff] %vm5030, %v4982
        %5112 = vst.msk [vmem:[#allocation3 + $0x288] sm:$0xff] %vm5030, %v4983
        %5113 = vst.msk [vmem:[#allocation3 + $0x290] sm:$0xff] %vm5030, %v4984
        %5114 = vst.msk [vmem:[#allocation3 + $0x298] sm:$0xff] %vm5030, %v4985
        %5115 = vst.msk [vmem:[#allocation3 + $0x2a0] sm:$0xff] %vm5030, %v4986
        %5116 = vst.msk [vmem:[#allocation3 + $0x2a8] sm:$0xff] %vm5030, %v4987
        %5117 = vst.msk [vmem:[#allocation3 + $0x2b0] sm:$0xff] %vm5030, %v4988
        %5118 = vst.msk [vmem:[#allocation3 + $0x2b8] sm:$0xff] %vm5030, %v4989
        %5119 = vst.msk [vmem:[#allocation3 + $0x2c0] sm:$0xff] %vm5030, %v4990
        %5120 = vst.msk [vmem:[#allocation3 + $0x2c8] sm:$0xff] %vm5030, %v4991
        %5121 = vst.msk [vmem:[#allocation3 + $0x2d0] sm:$0xff] %vm5030, %v4992
        %5122 = vst.msk [vmem:[#allocation3 + $0x2d8] sm:$0xff] %vm5030, %v4993
        %5123 = vst.msk [vmem:[#allocation3 + $0x2e0] sm:$0xff] %vm5030, %v4994
        %5124 = vst.msk [vmem:[#allocation3 + $0x2e8] sm:$0xff] %vm5030, %v4995
        %5125 = vst.msk [vmem:[#allocation3 + $0x2f0] sm:$0xff] %vm5030, %v4996
        %5126 = vst.msk [vmem:[#allocation3 + $0x2f8] sm:$0xff] %vm5030, %v4997
        %5127 = vst.msk [vmem:[#allocation3 + $0x300] sm:$0xff] %vm5030, %v4998
        %5128 = vst.msk [vmem:[#allocation3 + $0x308] sm:$0xff] %vm5030, %v4999
        %5129 = vst.msk [vmem:[#allocation3 + $0x310] sm:$0xff] %vm5030, %v5000
        %5130 = vst.msk [vmem:[#allocation3 + $0x318] sm:$0xff] %vm5030, %v5001
        %5131 = vst.msk [vmem:[#allocation3 + $0x320] sm:$0xff] %vm5030, %v5002
        %5132 = vst.msk [vmem:[#allocation3 + $0x328] sm:$0xff] %vm5030, %v5003
        %5133 = vst.msk [vmem:[#allocation3 + $0x330] sm:$0xff] %vm5030, %v5004
        %5134 = vst.msk [vmem:[#allocation3 + $0x338] sm:$0xff] %vm5030, %v5005
        %5135 = vst.msk [vmem:[#allocation3 + $0x340] sm:$0xff] %vm5030, %v5006
        %5136 = vst.msk [vmem:[#allocation3 + $0x348] sm:$0xff] %vm5030, %v5007
        %5137 = vst.msk [vmem:[#allocation3 + $0x350] sm:$0xff] %vm5030, %v5008
        %5138 = vst.msk [vmem:[#allocation3 + $0x358] sm:$0xff] %vm5030, %v5009
        %5139 = vst.msk [vmem:[#allocation3 + $0x360] sm:$0xff] %vm5030, %v5010
        %5140 = vst.msk [vmem:[#allocation3 + $0x368] sm:$0xff] %vm5030, %v5011
        %5141 = vst.msk [vmem:[#allocation3 + $0x370] sm:$0xff] %vm5030, %v5012
        %5142 = vst.msk [vmem:[#allocation3 + $0x378] sm:$0xff] %vm5030, %v5013
        %5143 = vst.msk [vmem:[#allocation3 + $0x380] sm:$0xff] %vm5030, %v5014
        %5144 = vst.msk [vmem:[#allocation3 + $0x388] sm:$0xff] %vm5030, %v5015
        %5145 = vst.msk [vmem:[#allocation3 + $0x390] sm:$0xff] %vm5030, %v5016
        %5146 = vst.msk [vmem:[#allocation3 + $0x398] sm:$0xff] %vm5030, %v5017
        %5147 = vst.msk [vmem:[#allocation3 + $0x3a0] sm:$0xff] %vm5030, %v5018
        %5148 = vst.msk [vmem:[#allocation3 + $0x3a8] sm:$0xff] %vm5030, %v5019
        %5149 = vst.msk [vmem:[#allocation3 + $0x3b0] sm:$0xff] %vm5030, %v5020
        %5150 = vst.msk [vmem:[#allocation3 + $0x3b8] sm:$0xff] %vm5030, %v5021
        %5151 = vst.msk [vmem:[#allocation3 + $0x3c0] sm:$0xff] %vm5030, %v5022
        %5152 = vst.msk [vmem:[#allocation3 + $0x3c8] sm:$0xff] %vm5030, %v5023
        %5153 = vst.msk [vmem:[#allocation3 + $0x3d0] sm:$0xff] %vm5030, %v5024
        %5154 = vst.msk [vmem:[#allocation3 + $0x3d8] sm:$0xff] %vm5030, %v5025
        %5155 = vst.msk [vmem:[#allocation3 + $0x3e0] sm:$0xff] %vm5030, %v5026
        %5156 = vst.msk [vmem:[#allocation3 + $0x3e8] sm:$0xff] %vm5030, %v5027
        %5157 = vst.msk [vmem:[#allocation3 + $0x3f0] sm:$0xff] %vm5030, %v5028
        %5158 = vst.msk [vmem:[#allocation3 + $0x3f8] sm:$0xff] %vm5030, %v5029
        %v5159 = vpack.c.bf16 %v4135, %v4135
        %v5160 = vpack.c.bf16 %v4137, %v4137
        %v5161 = vpack.c.bf16 %v4139, %v4139
        %v5162 = vpack.c.bf16 %v4141, %v4141
        %v5163 = vpack.c.bf16 %v4143, %v4143
        %v5164 = vpack.c.bf16 %v4145, %v4145
        %v5165 = vpack.c.bf16 %v4147, %v4147
        %v5166 = vpack.c.bf16 %v4149, %v4149
        %v5167 = vpack.c.bf16 %v4151, %v4151
        %v5168 = vpack.c.bf16 %v4153, %v4153
        %v5169 = vpack.c.bf16 %v4155, %v4155
        %v5170 = vpack.c.bf16 %v4157, %v4157
        %v5171 = vpack.c.bf16 %v4159, %v4159
        %v5172 = vpack.c.bf16 %v4161, %v4161
        %v5173 = vpack.c.bf16 %v4163, %v4163
        %v5174 = vpack.c.bf16 %v4165, %v4165
        %v5175 = vpack.c.bf16 %v4167, %v4167
        %v5176 = vpack.c.bf16 %v4169, %v4169
        %v5177 = vpack.c.bf16 %v4171, %v4171
        %v5178 = vpack.c.bf16 %v4173, %v4173
        %v5179 = vpack.c.bf16 %v4175, %v4175
        %v5180 = vpack.c.bf16 %v4177, %v4177
        %v5181 = vpack.c.bf16 %v4179, %v4179
        %v5182 = vpack.c.bf16 %v4181, %v4181
        %v5183 = vpack.c.bf16 %v4183, %v4183
        %v5184 = vpack.c.bf16 %v4185, %v4185
        %v5185 = vpack.c.bf16 %v4187, %v4187
        %v5186 = vpack.c.bf16 %v4189, %v4189
        %v5187 = vpack.c.bf16 %v4191, %v4191
        %v5188 = vpack.c.bf16 %v4193, %v4193
        %v5189 = vpack.c.bf16 %v4195, %v4195
        %v5190 = vpack.c.bf16 %v4197, %v4197
        %v5191 = vpack.c.bf16 %v4199, %v4199
        %v5192 = vpack.c.bf16 %v4201, %v4201
        %v5193 = vpack.c.bf16 %v4203, %v4203
        %v5194 = vpack.c.bf16 %v4205, %v4205
        %v5195 = vpack.c.bf16 %v4207, %v4207
        %v5196 = vpack.c.bf16 %v4209, %v4209
        %v5197 = vpack.c.bf16 %v4211, %v4211
        %v5198 = vpack.c.bf16 %v4213, %v4213
        %v5199 = vpack.c.bf16 %v4215, %v4215
        %v5200 = vpack.c.bf16 %v4217, %v4217
        %v5201 = vpack.c.bf16 %v4219, %v4219
        %v5202 = vpack.c.bf16 %v4221, %v4221
        %v5203 = vpack.c.bf16 %v4223, %v4223
        %v5204 = vpack.c.bf16 %v4225, %v4225
        %v5205 = vpack.c.bf16 %v4227, %v4227
        %v5206 = vpack.c.bf16 %v4229, %v4229
        %v5207 = vpack.c.bf16 %v4231, %v4231
        %v5208 = vpack.c.bf16 %v4233, %v4233
        %v5209 = vpack.c.bf16 %v4235, %v4235
        %v5210 = vpack.c.bf16 %v4237, %v4237
        %v5211 = vpack.c.bf16 %v4239, %v4239
        %v5212 = vpack.c.bf16 %v4241, %v4241
        %v5213 = vpack.c.bf16 %v4243, %v4243
        %v5214 = vpack.c.bf16 %v4245, %v4245
        %v5215 = vpack.c.bf16 %v4247, %v4247
        %v5216 = vpack.c.bf16 %v4249, %v4249
        %v5217 = vpack.c.bf16 %v4251, %v4251
        %v5218 = vpack.c.bf16 %v4253, %v4253
        %v5219 = vpack.c.bf16 %v4255, %v4255
        %v5220 = vpack.c.bf16 %v4257, %v4257
        %v5221 = vpack.c.bf16 %v4259, %v4259
        %v5222 = vpack.c.bf16 %v4261, %v4261
        %v5223 = vpack.c.bf16 %v4263, %v4263
        %v5224 = vpack.c.bf16 %v4265, %v4265
        %v5225 = vpack.c.bf16 %v4267, %v4267
        %v5226 = vpack.c.bf16 %v4269, %v4269
        %v5227 = vpack.c.bf16 %v4271, %v4271
        %v5228 = vpack.c.bf16 %v4273, %v4273
        %v5229 = vpack.c.bf16 %v4275, %v4275
        %v5230 = vpack.c.bf16 %v4277, %v4277
        %v5231 = vpack.c.bf16 %v4279, %v4279
        %v5232 = vpack.c.bf16 %v4281, %v4281
        %v5233 = vpack.c.bf16 %v4283, %v4283
        %v5234 = vpack.c.bf16 %v4285, %v4285
        %v5235 = vpack.c.bf16 %v4287, %v4287
        %v5236 = vpack.c.bf16 %v4289, %v4289
        %v5237 = vpack.c.bf16 %v4291, %v4291
        %v5238 = vpack.c.bf16 %v4293, %v4293
        %v5239 = vpack.c.bf16 %v4295, %v4295
        %v5240 = vpack.c.bf16 %v4297, %v4297
        %v5241 = vpack.c.bf16 %v4299, %v4299
        %v5242 = vpack.c.bf16 %v4301, %v4301
        %v5243 = vpack.c.bf16 %v4303, %v4303
        %v5244 = vpack.c.bf16 %v4305, %v4305
        %v5245 = vpack.c.bf16 %v4307, %v4307
        %v5246 = vpack.c.bf16 %v4309, %v4309
        %v5247 = vpack.c.bf16 %v4311, %v4311
        %v5248 = vpack.c.bf16 %v4313, %v4313
        %v5249 = vpack.c.bf16 %v4315, %v4315
        %v5250 = vpack.c.bf16 %v4317, %v4317
        %v5251 = vpack.c.bf16 %v4319, %v4319
        %v5252 = vpack.c.bf16 %v4321, %v4321
        %v5253 = vpack.c.bf16 %v4323, %v4323
        %v5254 = vpack.c.bf16 %v4325, %v4325
        %v5255 = vpack.c.bf16 %v4327, %v4327
        %v5256 = vpack.c.bf16 %v4329, %v4329
        %v5257 = vpack.c.bf16 %v4331, %v4331
        %v5258 = vpack.c.bf16 %v4333, %v4333
        %v5259 = vpack.c.bf16 %v4335, %v4335
        %v5260 = vpack.c.bf16 %v4337, %v4337
        %v5261 = vpack.c.bf16 %v4339, %v4339
        %v5262 = vpack.c.bf16 %v4341, %v4341
        %v5263 = vpack.c.bf16 %v4343, %v4343
        %v5264 = vpack.c.bf16 %v4345, %v4345
        %v5265 = vpack.c.bf16 %v4347, %v4347
        %v5266 = vpack.c.bf16 %v4349, %v4349
        %v5267 = vpack.c.bf16 %v4351, %v4351
        %v5268 = vpack.c.bf16 %v4353, %v4353
        %v5269 = vpack.c.bf16 %v4355, %v4355
        %v5270 = vpack.c.bf16 %v4357, %v4357
        %v5271 = vpack.c.bf16 %v4359, %v4359
        %v5272 = vpack.c.bf16 %v4361, %v4361
        %v5273 = vpack.c.bf16 %v4363, %v4363
        %v5274 = vpack.c.bf16 %v4365, %v4365
        %v5275 = vpack.c.bf16 %v4367, %v4367
        %v5276 = vpack.c.bf16 %v4369, %v4369
        %v5277 = vpack.c.bf16 %v4371, %v4371
        %v5278 = vpack.c.bf16 %v4373, %v4373
        %v5279 = vpack.c.bf16 %v4375, %v4375
        %v5280 = vpack.c.bf16 %v4377, %v4377
        %v5281 = vpack.c.bf16 %v4379, %v4379
        %v5282 = vpack.c.bf16 %v4381, %v4381
        %v5283 = vpack.c.bf16 %v4383, %v4383
        %v5284 = vpack.c.bf16 %v4385, %v4385
        %v5285 = vpack.c.bf16 %v4387, %v4387
        %v5286 = vpack.c.bf16 %v4389, %v4389
        %v5319 = vunpack.c.l.b16 %v5159
        %v5320 = vunpack.c.l.b16 %v5160
        %v5321 = vunpack.c.l.b16 %v5161
        %v5322 = vunpack.c.l.b16 %v5162
        %v5323 = vunpack.c.l.b16 %v5163
        %v5324 = vunpack.c.l.b16 %v5164
        %v5325 = vunpack.c.l.b16 %v5165
        %v5326 = vunpack.c.l.b16 %v5166
        %v5327 = vunpack.c.l.b16 %v5167
        %v5328 = vunpack.c.l.b16 %v5168
        %v5329 = vunpack.c.l.b16 %v5169
        %v5330 = vunpack.c.l.b16 %v5170
        %v5331 = vunpack.c.l.b16 %v5171
        %v5332 = vunpack.c.l.b16 %v5172
        %v5333 = vunpack.c.l.b16 %v5173
        %v5334 = vunpack.c.l.b16 %v5174
        %v5335 = vunpack.c.l.b16 %v5175
        %v5336 = vunpack.c.l.b16 %v5176
        %v5337 = vunpack.c.l.b16 %v5177
        %v5338 = vunpack.c.l.b16 %v5178
        %v5339 = vunpack.c.l.b16 %v5179
        %v5340 = vunpack.c.l.b16 %v5180
        %v5341 = vunpack.c.l.b16 %v5181
        %v5342 = vunpack.c.l.b16 %v5182
        %v5343 = vunpack.c.l.b16 %v5183
        %v5344 = vunpack.c.l.b16 %v5184
        %v5345 = vunpack.c.l.b16 %v5185
        %v5346 = vunpack.c.l.b16 %v5186
        %v5347 = vunpack.c.l.b16 %v5187
        %v5348 = vunpack.c.l.b16 %v5188
        %v5349 = vunpack.c.l.b16 %v5189
        %v5350 = vunpack.c.l.b16 %v5190
        %v5351 = vpack.c.b16 %v5320, %v5319
        %v5352 = vpack.c.b16 %v5322, %v5321
        %v5353 = vpack.c.b16 %v5324, %v5323
        %v5354 = vpack.c.b16 %v5326, %v5325
        %v5355 = vpack.c.b16 %v5328, %v5327
        %v5356 = vpack.c.b16 %v5330, %v5329
        %v5357 = vpack.c.b16 %v5332, %v5331
        %v5358 = vpack.c.b16 %v5334, %v5333
        %v5359 = vpack.c.b16 %v5336, %v5335
        %v5360 = vpack.c.b16 %v5338, %v5337
        %v5361 = vpack.c.b16 %v5340, %v5339
        %v5362 = vpack.c.b16 %v5342, %v5341
        %v5363 = vpack.c.b16 %v5344, %v5343
        %v5364 = vpack.c.b16 %v5346, %v5345
        %v5365 = vpack.c.b16 %v5348, %v5347
        %v5366 = vpack.c.b16 %v5350, %v5349
        %v5387 = vunpack.c.l.b16 %v1537
        %v5388 = vunpack.c.l.b16 %v1538
        %v5389 = vunpack.c.l.b16 %v1539
        %v5390 = vunpack.c.l.b16 %v1540
        %v5391 = vpack.c.b16 %v5388, %v5387
        %v5392 = vpack.c.b16 %v5390, %v5389
        %5395 = vmatpush.bf16.xpose.msra.mxu0 0
        %5396 = vmatpush.bf16.xpose.msra.mxu0 0
        %5397 = vmatpush.bf16.xpose.msra.mxu0 0
        %5398 = vmatpush.bf16.xpose.msra.mxu0 0
        %5399 = vmatpush.bf16.xpose.msra.mxu0 0
        %5400 = vmatpush.bf16.xpose.msra.mxu0 0
        %5401 = vmatpush.bf16.xpose.msra.mxu0 %v5392
        %5402 = vmatpush.bf16.xpose.msra.mxu0 %v5391
        %5403 = vmatmul.bf16.gmra.mxu0 %v5351
        %v5404 = vpop.f32.mrf.mxu0
        %v5405 = vadd.f32 0.0, %v5404
        %v5406 = vpop.f32.mrf.mxu0
        %v5407 = vadd.f32 0.0, %v5406
        %5408 = vmatmul.bf16.gmra.mxu0 %v5352
        %v5409 = vpop.f32.mrf.mxu0
        %v5410 = vadd.f32 0.0, %v5409
        %v5411 = vpop.f32.mrf.mxu0
        %v5412 = vadd.f32 0.0, %v5411
        %5413 = vmatmul.bf16.gmra.mxu0 %v5353
        %v5414 = vpop.f32.mrf.mxu0
        %v5415 = vadd.f32 0.0, %v5414
        %v5416 = vpop.f32.mrf.mxu0
        %v5417 = vadd.f32 0.0, %v5416
        %5418 = vmatmul.bf16.gmra.mxu0 %v5354
        %v5419 = vpop.f32.mrf.mxu0
        %v5420 = vadd.f32 0.0, %v5419
        %v5421 = vpop.f32.mrf.mxu0
        %v5422 = vadd.f32 0.0, %v5421
        %5423 = vmatmul.bf16.gmra.mxu0 %v5355
        %v5424 = vpop.f32.mrf.mxu0
        %v5425 = vadd.f32 0.0, %v5424
        %v5426 = vpop.f32.mrf.mxu0
        %v5427 = vadd.f32 0.0, %v5426
        %5428 = vmatmul.bf16.gmra.mxu0 %v5356
        %v5429 = vpop.f32.mrf.mxu0
        %v5430 = vadd.f32 0.0, %v5429
        %v5431 = vpop.f32.mrf.mxu0
        %v5432 = vadd.f32 0.0, %v5431
        %5433 = vmatmul.bf16.gmra.mxu0 %v5357
        %v5434 = vpop.f32.mrf.mxu0
        %v5435 = vadd.f32 0.0, %v5434
        %v5436 = vpop.f32.mrf.mxu0
        %v5437 = vadd.f32 0.0, %v5436
        %5438 = vmatmul.bf16.gmra.mxu0 %v5358
        %v5439 = vpop.f32.mrf.mxu0
        %v5440 = vadd.f32 0.0, %v5439
        %v5441 = vpop.f32.mrf.mxu0
        %v5442 = vadd.f32 0.0, %v5441
        %5443 = vmatmul.bf16.gmra.mxu0 %v5359
        %v5444 = vpop.f32.mrf.mxu0
        %v5445 = vadd.f32 0.0, %v5444
        %v5446 = vpop.f32.mrf.mxu0
        %v5447 = vadd.f32 0.0, %v5446
        %5448 = vmatmul.bf16.gmra.mxu0 %v5360
        %v5449 = vpop.f32.mrf.mxu0
        %v5450 = vadd.f32 0.0, %v5449
        %v5451 = vpop.f32.mrf.mxu0
        %v5452 = vadd.f32 0.0, %v5451
        %5453 = vmatmul.bf16.gmra.mxu0 %v5361
        %v5454 = vpop.f32.mrf.mxu0
        %v5455 = vadd.f32 0.0, %v5454
        %v5456 = vpop.f32.mrf.mxu0
        %v5457 = vadd.f32 0.0, %v5456
        %5458 = vmatmul.bf16.gmra.mxu0 %v5362
        %v5459 = vpop.f32.mrf.mxu0
        %v5460 = vadd.f32 0.0, %v5459
        %v5461 = vpop.f32.mrf.mxu0
        %v5462 = vadd.f32 0.0, %v5461
        %5463 = vmatmul.bf16.gmra.mxu0 %v5363
        %v5464 = vpop.f32.mrf.mxu0
        %v5465 = vadd.f32 0.0, %v5464
        %v5466 = vpop.f32.mrf.mxu0
        %v5467 = vadd.f32 0.0, %v5466
        %5468 = vmatmul.bf16.gmra.mxu0 %v5364
        %v5469 = vpop.f32.mrf.mxu0
        %v5470 = vadd.f32 0.0, %v5469
        %v5471 = vpop.f32.mrf.mxu0
        %v5472 = vadd.f32 0.0, %v5471
        %5473 = vmatmul.bf16.gmra.mxu0 %v5365
        %v5474 = vpop.f32.mrf.mxu0
        %v5475 = vadd.f32 0.0, %v5474
        %v5476 = vpop.f32.mrf.mxu0
        %v5477 = vadd.f32 0.0, %v5476
        %5478 = vmatmul.bf16.gmra.mxu0 %v5366
        %v5479 = vpop.f32.mrf.mxu0
        %v5480 = vadd.f32 0.0, %v5479
        %v5481 = vpop.f32.mrf.mxu0
        %v5482 = vadd.f32 0.0, %v5481
        %5483 = vdwg.mxu0
        %v5516 = vunpack.c.l.b16 %v5191
        %v5517 = vunpack.c.l.b16 %v5192
        %v5518 = vunpack.c.l.b16 %v5193
        %v5519 = vunpack.c.l.b16 %v5194
        %v5520 = vunpack.c.l.b16 %v5195
        %v5521 = vunpack.c.l.b16 %v5196
        %v5522 = vunpack.c.l.b16 %v5197
        %v5523 = vunpack.c.l.b16 %v5198
        %v5524 = vunpack.c.l.b16 %v5199
        %v5525 = vunpack.c.l.b16 %v5200
        %v5526 = vunpack.c.l.b16 %v5201
        %v5527 = vunpack.c.l.b16 %v5202
        %v5528 = vunpack.c.l.b16 %v5203
        %v5529 = vunpack.c.l.b16 %v5204
        %v5530 = vunpack.c.l.b16 %v5205
        %v5531 = vunpack.c.l.b16 %v5206
        %v5532 = vunpack.c.l.b16 %v5207
        %v5533 = vunpack.c.l.b16 %v5208
        %v5534 = vunpack.c.l.b16 %v5209
        %v5535 = vunpack.c.l.b16 %v5210
        %v5536 = vunpack.c.l.b16 %v5211
        %v5537 = vunpack.c.l.b16 %v5212
        %v5538 = vunpack.c.l.b16 %v5213
        %v5539 = vunpack.c.l.b16 %v5214
        %v5540 = vunpack.c.l.b16 %v5215
        %v5541 = vunpack.c.l.b16 %v5216
        %v5542 = vunpack.c.l.b16 %v5217
        %v5543 = vunpack.c.l.b16 %v5218
        %v5544 = vunpack.c.l.b16 %v5219
        %v5545 = vunpack.c.l.b16 %v5220
        %v5546 = vunpack.c.l.b16 %v5221
        %v5547 = vunpack.c.l.b16 %v5222
        %v5548 = vpack.c.b16 %v5517, %v5516
        %v5549 = vpack.c.b16 %v5519, %v5518
        %v5550 = vpack.c.b16 %v5521, %v5520
        %v5551 = vpack.c.b16 %v5523, %v5522
        %v5552 = vpack.c.b16 %v5525, %v5524
        %v5553 = vpack.c.b16 %v5527, %v5526
        %v5554 = vpack.c.b16 %v5529, %v5528
        %v5555 = vpack.c.b16 %v5531, %v5530
        %v5556 = vpack.c.b16 %v5533, %v5532
        %v5557 = vpack.c.b16 %v5535, %v5534
        %v5558 = vpack.c.b16 %v5537, %v5536
        %v5559 = vpack.c.b16 %v5539, %v5538
        %v5560 = vpack.c.b16 %v5541, %v5540
        %v5561 = vpack.c.b16 %v5543, %v5542
        %v5562 = vpack.c.b16 %v5545, %v5544
        %v5563 = vpack.c.b16 %v5547, %v5546
        %v5584 = vunpack.c.l.b16 %v1541
        %v5585 = vunpack.c.l.b16 %v1542
        %v5586 = vunpack.c.l.b16 %v1543
        %v5587 = vunpack.c.l.b16 %v1544
        %v5588 = vpack.c.b16 %v5585, %v5584
        %v5589 = vpack.c.b16 %v5587, %v5586
        %5592 = vmatpush.bf16.xpose.msra.mxu0 0
        %5593 = vmatpush.bf16.xpose.msra.mxu0 0
        %5594 = vmatpush.bf16.xpose.msra.mxu0 0
        %5595 = vmatpush.bf16.xpose.msra.mxu0 0
        %5596 = vmatpush.bf16.xpose.msra.mxu0 0
        %5597 = vmatpush.bf16.xpose.msra.mxu0 0
        %5598 = vmatpush.bf16.xpose.msra.mxu0 %v5589
        %5599 = vmatpush.bf16.xpose.msra.mxu0 %v5588
        %5600 = vmatmul.bf16.gmra.mxu0 %v5548
        %v5601 = vpop.f32.mrf.mxu0
        %v5602 = vadd.f32 0.0, %v5601
        %v5603 = vpop.f32.mrf.mxu0
        %v5604 = vadd.f32 0.0, %v5603
        %5605 = vmatmul.bf16.gmra.mxu0 %v5549
        %v5606 = vpop.f32.mrf.mxu0
        %v5607 = vadd.f32 0.0, %v5606
        %v5608 = vpop.f32.mrf.mxu0
        %v5609 = vadd.f32 0.0, %v5608
        %5610 = vmatmul.bf16.gmra.mxu0 %v5550
        %v5611 = vpop.f32.mrf.mxu0
        %v5612 = vadd.f32 0.0, %v5611
        %v5613 = vpop.f32.mrf.mxu0
        %v5614 = vadd.f32 0.0, %v5613
        %5615 = vmatmul.bf16.gmra.mxu0 %v5551
        %v5616 = vpop.f32.mrf.mxu0
        %v5617 = vadd.f32 0.0, %v5616
        %v5618 = vpop.f32.mrf.mxu0
        %v5619 = vadd.f32 0.0, %v5618
        %5620 = vmatmul.bf16.gmra.mxu0 %v5552
        %v5621 = vpop.f32.mrf.mxu0
        %v5622 = vadd.f32 0.0, %v5621
        %v5623 = vpop.f32.mrf.mxu0
        %v5624 = vadd.f32 0.0, %v5623
        %5625 = vmatmul.bf16.gmra.mxu0 %v5553
        %v5626 = vpop.f32.mrf.mxu0
        %v5627 = vadd.f32 0.0, %v5626
        %v5628 = vpop.f32.mrf.mxu0
        %v5629 = vadd.f32 0.0, %v5628
        %5630 = vmatmul.bf16.gmra.mxu0 %v5554
        %v5631 = vpop.f32.mrf.mxu0
        %v5632 = vadd.f32 0.0, %v5631
        %v5633 = vpop.f32.mrf.mxu0
        %v5634 = vadd.f32 0.0, %v5633
        %5635 = vmatmul.bf16.gmra.mxu0 %v5555
        %v5636 = vpop.f32.mrf.mxu0
        %v5637 = vadd.f32 0.0, %v5636
        %v5638 = vpop.f32.mrf.mxu0
        %v5639 = vadd.f32 0.0, %v5638
        %5640 = vmatmul.bf16.gmra.mxu0 %v5556
        %v5641 = vpop.f32.mrf.mxu0
        %v5642 = vadd.f32 0.0, %v5641
        %v5643 = vpop.f32.mrf.mxu0
        %v5644 = vadd.f32 0.0, %v5643
        %5645 = vmatmul.bf16.gmra.mxu0 %v5557
        %v5646 = vpop.f32.mrf.mxu0
        %v5647 = vadd.f32 0.0, %v5646
        %v5648 = vpop.f32.mrf.mxu0
        %v5649 = vadd.f32 0.0, %v5648
        %5650 = vmatmul.bf16.gmra.mxu0 %v5558
        %v5651 = vpop.f32.mrf.mxu0
        %v5652 = vadd.f32 0.0, %v5651
        %v5653 = vpop.f32.mrf.mxu0
        %v5654 = vadd.f32 0.0, %v5653
        %5655 = vmatmul.bf16.gmra.mxu0 %v5559
        %v5656 = vpop.f32.mrf.mxu0
        %v5657 = vadd.f32 0.0, %v5656
        %v5658 = vpop.f32.mrf.mxu0
        %v5659 = vadd.f32 0.0, %v5658
        %5660 = vmatmul.bf16.gmra.mxu0 %v5560
        %v5661 = vpop.f32.mrf.mxu0
        %v5662 = vadd.f32 0.0, %v5661
        %v5663 = vpop.f32.mrf.mxu0
        %v5664 = vadd.f32 0.0, %v5663
        %5665 = vmatmul.bf16.gmra.mxu0 %v5561
        %v5666 = vpop.f32.mrf.mxu0
        %v5667 = vadd.f32 0.0, %v5666
        %v5668 = vpop.f32.mrf.mxu0
        %v5669 = vadd.f32 0.0, %v5668
        %5670 = vmatmul.bf16.gmra.mxu0 %v5562
        %v5671 = vpop.f32.mrf.mxu0
        %v5672 = vadd.f32 0.0, %v5671
        %v5673 = vpop.f32.mrf.mxu0
        %v5674 = vadd.f32 0.0, %v5673
        %5675 = vmatmul.bf16.gmra.mxu0 %v5563
        %v5676 = vpop.f32.mrf.mxu0
        %v5677 = vadd.f32 0.0, %v5676
        %v5678 = vpop.f32.mrf.mxu0
        %v5679 = vadd.f32 0.0, %v5678
        %5680 = vdwg.mxu0
        %v5713 = vunpack.c.l.b16 %v5223
        %v5714 = vunpack.c.l.b16 %v5224
        %v5715 = vunpack.c.l.b16 %v5225
        %v5716 = vunpack.c.l.b16 %v5226
        %v5717 = vunpack.c.l.b16 %v5227
        %v5718 = vunpack.c.l.b16 %v5228
        %v5719 = vunpack.c.l.b16 %v5229
        %v5720 = vunpack.c.l.b16 %v5230
        %v5721 = vunpack.c.l.b16 %v5231
        %v5722 = vunpack.c.l.b16 %v5232
        %v5723 = vunpack.c.l.b16 %v5233
        %v5724 = vunpack.c.l.b16 %v5234
        %v5725 = vunpack.c.l.b16 %v5235
        %v5726 = vunpack.c.l.b16 %v5236
        %v5727 = vunpack.c.l.b16 %v5237
        %v5728 = vunpack.c.l.b16 %v5238
        %v5729 = vunpack.c.l.b16 %v5239
        %v5730 = vunpack.c.l.b16 %v5240
        %v5731 = vunpack.c.l.b16 %v5241
        %v5732 = vunpack.c.l.b16 %v5242
        %v5733 = vunpack.c.l.b16 %v5243
        %v5734 = vunpack.c.l.b16 %v5244
        %v5735 = vunpack.c.l.b16 %v5245
        %v5736 = vunpack.c.l.b16 %v5246
        %v5737 = vunpack.c.l.b16 %v5247
        %v5738 = vunpack.c.l.b16 %v5248
        %v5739 = vunpack.c.l.b16 %v5249
        %v5740 = vunpack.c.l.b16 %v5250
        %v5741 = vunpack.c.l.b16 %v5251
        %v5742 = vunpack.c.l.b16 %v5252
        %v5743 = vunpack.c.l.b16 %v5253
        %v5744 = vunpack.c.l.b16 %v5254
        %v5745 = vpack.c.b16 %v5714, %v5713
        %v5746 = vpack.c.b16 %v5716, %v5715
        %v5747 = vpack.c.b16 %v5718, %v5717
        %v5748 = vpack.c.b16 %v5720, %v5719
        %v5749 = vpack.c.b16 %v5722, %v5721
        %v5750 = vpack.c.b16 %v5724, %v5723
        %v5751 = vpack.c.b16 %v5726, %v5725
        %v5752 = vpack.c.b16 %v5728, %v5727
        %v5753 = vpack.c.b16 %v5730, %v5729
        %v5754 = vpack.c.b16 %v5732, %v5731
        %v5755 = vpack.c.b16 %v5734, %v5733
        %v5756 = vpack.c.b16 %v5736, %v5735
        %v5757 = vpack.c.b16 %v5738, %v5737
        %v5758 = vpack.c.b16 %v5740, %v5739
        %v5759 = vpack.c.b16 %v5742, %v5741
        %v5760 = vpack.c.b16 %v5744, %v5743
        %v5781 = vunpack.c.l.b16 %v1545
        %v5782 = vunpack.c.l.b16 %v1546
        %v5783 = vunpack.c.l.b16 %v1547
        %v5784 = vunpack.c.l.b16 %v1548
        %v5785 = vpack.c.b16 %v5782, %v5781
        %v5786 = vpack.c.b16 %v5784, %v5783
        %5789 = vmatpush.bf16.xpose.msra.mxu0 0
        %5790 = vmatpush.bf16.xpose.msra.mxu0 0
        %5791 = vmatpush.bf16.xpose.msra.mxu0 0
        %5792 = vmatpush.bf16.xpose.msra.mxu0 0
        %5793 = vmatpush.bf16.xpose.msra.mxu0 0
        %5794 = vmatpush.bf16.xpose.msra.mxu0 0
        %5795 = vmatpush.bf16.xpose.msra.mxu0 %v5786
        %5796 = vmatpush.bf16.xpose.msra.mxu0 %v5785
        %5797 = vmatmul.bf16.gmra.mxu0 %v5745
        %v5798 = vpop.f32.mrf.mxu0
        %v5799 = vadd.f32 0.0, %v5798
        %v5800 = vpop.f32.mrf.mxu0
        %v5801 = vadd.f32 0.0, %v5800
        %5802 = vmatmul.bf16.gmra.mxu0 %v5746
        %v5803 = vpop.f32.mrf.mxu0
        %v5804 = vadd.f32 0.0, %v5803
        %v5805 = vpop.f32.mrf.mxu0
        %v5806 = vadd.f32 0.0, %v5805
        %5807 = vmatmul.bf16.gmra.mxu0 %v5747
        %v5808 = vpop.f32.mrf.mxu0
        %v5809 = vadd.f32 0.0, %v5808
        %v5810 = vpop.f32.mrf.mxu0
        %v5811 = vadd.f32 0.0, %v5810
        %5812 = vmatmul.bf16.gmra.mxu0 %v5748
        %v5813 = vpop.f32.mrf.mxu0
        %v5814 = vadd.f32 0.0, %v5813
        %v5815 = vpop.f32.mrf.mxu0
        %v5816 = vadd.f32 0.0, %v5815
        %5817 = vmatmul.bf16.gmra.mxu0 %v5749
        %v5818 = vpop.f32.mrf.mxu0
        %v5819 = vadd.f32 0.0, %v5818
        %v5820 = vpop.f32.mrf.mxu0
        %v5821 = vadd.f32 0.0, %v5820
        %5822 = vmatmul.bf16.gmra.mxu0 %v5750
        %v5823 = vpop.f32.mrf.mxu0
        %v5824 = vadd.f32 0.0, %v5823
        %v5825 = vpop.f32.mrf.mxu0
        %v5826 = vadd.f32 0.0, %v5825
        %5827 = vmatmul.bf16.gmra.mxu0 %v5751
        %v5828 = vpop.f32.mrf.mxu0
        %v5829 = vadd.f32 0.0, %v5828
        %v5830 = vpop.f32.mrf.mxu0
        %v5831 = vadd.f32 0.0, %v5830
        %5832 = vmatmul.bf16.gmra.mxu0 %v5752
        %v5833 = vpop.f32.mrf.mxu0
        %v5834 = vadd.f32 0.0, %v5833
        %v5835 = vpop.f32.mrf.mxu0
        %v5836 = vadd.f32 0.0, %v5835
        %5837 = vmatmul.bf16.gmra.mxu0 %v5753
        %v5838 = vpop.f32.mrf.mxu0
        %v5839 = vadd.f32 0.0, %v5838
        %v5840 = vpop.f32.mrf.mxu0
        %v5841 = vadd.f32 0.0, %v5840
        %5842 = vmatmul.bf16.gmra.mxu0 %v5754
        %v5843 = vpop.f32.mrf.mxu0
        %v5844 = vadd.f32 0.0, %v5843
        %v5845 = vpop.f32.mrf.mxu0
        %v5846 = vadd.f32 0.0, %v5845
        %5847 = vmatmul.bf16.gmra.mxu0 %v5755
        %v5848 = vpop.f32.mrf.mxu0
        %v5849 = vadd.f32 0.0, %v5848
        %v5850 = vpop.f32.mrf.mxu0
        %v5851 = vadd.f32 0.0, %v5850
        %5852 = vmatmul.bf16.gmra.mxu0 %v5756
        %v5853 = vpop.f32.mrf.mxu0
        %v5854 = vadd.f32 0.0, %v5853
        %v5855 = vpop.f32.mrf.mxu0
        %v5856 = vadd.f32 0.0, %v5855
        %5857 = vmatmul.bf16.gmra.mxu0 %v5757
        %v5858 = vpop.f32.mrf.mxu0
        %v5859 = vadd.f32 0.0, %v5858
        %v5860 = vpop.f32.mrf.mxu0
        %v5861 = vadd.f32 0.0, %v5860
        %5862 = vmatmul.bf16.gmra.mxu0 %v5758
        %v5863 = vpop.f32.mrf.mxu0
        %v5864 = vadd.f32 0.0, %v5863
        %v5865 = vpop.f32.mrf.mxu0
        %v5866 = vadd.f32 0.0, %v5865
        %5867 = vmatmul.bf16.gmra.mxu0 %v5759
        %v5868 = vpop.f32.mrf.mxu0
        %v5869 = vadd.f32 0.0, %v5868
        %v5870 = vpop.f32.mrf.mxu0
        %v5871 = vadd.f32 0.0, %v5870
        %5872 = vmatmul.bf16.gmra.mxu0 %v5760
        %v5873 = vpop.f32.mrf.mxu0
        %v5874 = vadd.f32 0.0, %v5873
        %v5875 = vpop.f32.mrf.mxu0
        %v5876 = vadd.f32 0.0, %v5875
        %5877 = vdwg.mxu0
        %v5910 = vunpack.c.l.b16 %v5255
        %v5911 = vunpack.c.l.b16 %v5256
        %v5912 = vunpack.c.l.b16 %v5257
        %v5913 = vunpack.c.l.b16 %v5258
        %v5914 = vunpack.c.l.b16 %v5259
        %v5915 = vunpack.c.l.b16 %v5260
        %v5916 = vunpack.c.l.b16 %v5261
        %v5917 = vunpack.c.l.b16 %v5262
        %v5918 = vunpack.c.l.b16 %v5263
        %v5919 = vunpack.c.l.b16 %v5264
        %v5920 = vunpack.c.l.b16 %v5265
        %v5921 = vunpack.c.l.b16 %v5266
        %v5922 = vunpack.c.l.b16 %v5267
        %v5923 = vunpack.c.l.b16 %v5268
        %v5924 = vunpack.c.l.b16 %v5269
        %v5925 = vunpack.c.l.b16 %v5270
        %v5926 = vunpack.c.l.b16 %v5271
        %v5927 = vunpack.c.l.b16 %v5272
        %v5928 = vunpack.c.l.b16 %v5273
        %v5929 = vunpack.c.l.b16 %v5274
        %v5930 = vunpack.c.l.b16 %v5275
        %v5931 = vunpack.c.l.b16 %v5276
        %v5932 = vunpack.c.l.b16 %v5277
        %v5933 = vunpack.c.l.b16 %v5278
        %v5934 = vunpack.c.l.b16 %v5279
        %v5935 = vunpack.c.l.b16 %v5280
        %v5936 = vunpack.c.l.b16 %v5281
        %v5937 = vunpack.c.l.b16 %v5282
        %v5938 = vunpack.c.l.b16 %v5283
        %v5939 = vunpack.c.l.b16 %v5284
        %v5940 = vunpack.c.l.b16 %v5285
        %v5941 = vunpack.c.l.b16 %v5286
        %v5942 = vpack.c.b16 %v5911, %v5910
        %v5943 = vpack.c.b16 %v5913, %v5912
        %v5944 = vpack.c.b16 %v5915, %v5914
        %v5945 = vpack.c.b16 %v5917, %v5916
        %v5946 = vpack.c.b16 %v5919, %v5918
        %v5947 = vpack.c.b16 %v5921, %v5920
        %v5948 = vpack.c.b16 %v5923, %v5922
        %v5949 = vpack.c.b16 %v5925, %v5924
        %v5950 = vpack.c.b16 %v5927, %v5926
        %v5951 = vpack.c.b16 %v5929, %v5928
        %v5952 = vpack.c.b16 %v5931, %v5930
        %v5953 = vpack.c.b16 %v5933, %v5932
        %v5954 = vpack.c.b16 %v5935, %v5934
        %v5955 = vpack.c.b16 %v5937, %v5936
        %v5956 = vpack.c.b16 %v5939, %v5938
        %v5957 = vpack.c.b16 %v5941, %v5940
        %v5978 = vunpack.c.l.b16 %v1549
        %v5979 = vunpack.c.l.b16 %v1550
        %v5980 = vunpack.c.l.b16 %v1551
        %v5981 = vunpack.c.l.b16 %v1552
        %v5982 = vpack.c.b16 %v5979, %v5978
        %v5983 = vpack.c.b16 %v5981, %v5980
        %5986 = vmatpush.bf16.xpose.msra.mxu0 0
        %5987 = vmatpush.bf16.xpose.msra.mxu0 0
        %5988 = vmatpush.bf16.xpose.msra.mxu0 0
        %5989 = vmatpush.bf16.xpose.msra.mxu0 0
        %5990 = vmatpush.bf16.xpose.msra.mxu0 0
        %5991 = vmatpush.bf16.xpose.msra.mxu0 0
        %5992 = vmatpush.bf16.xpose.msra.mxu0 %v5983
        %5993 = vmatpush.bf16.xpose.msra.mxu0 %v5982
        %5994 = vmatmul.bf16.gmra.mxu0 %v5942
        %v5995 = vpop.f32.mrf.mxu0
        %v5996 = vadd.f32 0.0, %v5995
        %v5997 = vpop.f32.mrf.mxu0
        %v5998 = vadd.f32 0.0, %v5997
        %5999 = vmatmul.bf16.gmra.mxu0 %v5943
        %v6000 = vpop.f32.mrf.mxu0
        %v6001 = vadd.f32 0.0, %v6000
        %v6002 = vpop.f32.mrf.mxu0
        %v6003 = vadd.f32 0.0, %v6002
        %6004 = vmatmul.bf16.gmra.mxu0 %v5944
        %v6005 = vpop.f32.mrf.mxu0
        %v6006 = vadd.f32 0.0, %v6005
        %v6007 = vpop.f32.mrf.mxu0
        %v6008 = vadd.f32 0.0, %v6007
        %6009 = vmatmul.bf16.gmra.mxu0 %v5945
        %v6010 = vpop.f32.mrf.mxu0
        %v6011 = vadd.f32 0.0, %v6010
        %v6012 = vpop.f32.mrf.mxu0
        %v6013 = vadd.f32 0.0, %v6012
        %6014 = vmatmul.bf16.gmra.mxu0 %v5946
        %v6015 = vpop.f32.mrf.mxu0
        %v6016 = vadd.f32 0.0, %v6015
        %v6017 = vpop.f32.mrf.mxu0
        %v6018 = vadd.f32 0.0, %v6017
        %6019 = vmatmul.bf16.gmra.mxu0 %v5947
        %v6020 = vpop.f32.mrf.mxu0
        %v6021 = vadd.f32 0.0, %v6020
        %v6022 = vpop.f32.mrf.mxu0
        %v6023 = vadd.f32 0.0, %v6022
        %6024 = vmatmul.bf16.gmra.mxu0 %v5948
        %v6025 = vpop.f32.mrf.mxu0
        %v6026 = vadd.f32 0.0, %v6025
        %v6027 = vpop.f32.mrf.mxu0
        %v6028 = vadd.f32 0.0, %v6027
        %6029 = vmatmul.bf16.gmra.mxu0 %v5949
        %v6030 = vpop.f32.mrf.mxu0
        %v6031 = vadd.f32 0.0, %v6030
        %v6032 = vpop.f32.mrf.mxu0
        %v6033 = vadd.f32 0.0, %v6032
        %6034 = vmatmul.bf16.gmra.mxu0 %v5950
        %v6035 = vpop.f32.mrf.mxu0
        %v6036 = vadd.f32 0.0, %v6035
        %v6037 = vpop.f32.mrf.mxu0
        %v6038 = vadd.f32 0.0, %v6037
        %6039 = vmatmul.bf16.gmra.mxu0 %v5951
        %v6040 = vpop.f32.mrf.mxu0
        %v6041 = vadd.f32 0.0, %v6040
        %v6042 = vpop.f32.mrf.mxu0
        %v6043 = vadd.f32 0.0, %v6042
        %6044 = vmatmul.bf16.gmra.mxu0 %v5952
        %v6045 = vpop.f32.mrf.mxu0
        %v6046 = vadd.f32 0.0, %v6045
        %v6047 = vpop.f32.mrf.mxu0
        %v6048 = vadd.f32 0.0, %v6047
        %6049 = vmatmul.bf16.gmra.mxu0 %v5953
        %v6050 = vpop.f32.mrf.mxu0
        %v6051 = vadd.f32 0.0, %v6050
        %v6052 = vpop.f32.mrf.mxu0
        %v6053 = vadd.f32 0.0, %v6052
        %6054 = vmatmul.bf16.gmra.mxu0 %v5954
        %v6055 = vpop.f32.mrf.mxu0
        %v6056 = vadd.f32 0.0, %v6055
        %v6057 = vpop.f32.mrf.mxu0
        %v6058 = vadd.f32 0.0, %v6057
        %6059 = vmatmul.bf16.gmra.mxu0 %v5955
        %v6060 = vpop.f32.mrf.mxu0
        %v6061 = vadd.f32 0.0, %v6060
        %v6062 = vpop.f32.mrf.mxu0
        %v6063 = vadd.f32 0.0, %v6062
        %6064 = vmatmul.bf16.gmra.mxu0 %v5956
        %v6065 = vpop.f32.mrf.mxu0
        %v6066 = vadd.f32 0.0, %v6065
        %v6067 = vpop.f32.mrf.mxu0
        %v6068 = vadd.f32 0.0, %v6067
        %6069 = vmatmul.bf16.gmra.mxu0 %v5957
        %v6070 = vpop.f32.mrf.mxu0
        %v6071 = vadd.f32 0.0, %v6070
        %v6072 = vpop.f32.mrf.mxu0
        %v6073 = vadd.f32 0.0, %v6072
        %6074 = vdwg.mxu0
        %v6075 = vld [vmem:[#allocation4] sm:$0xff]
        %v6076 = vld [vmem:[#allocation4 + $0x8] sm:$0xff]
        %v6077 = vld [vmem:[#allocation4 + $0x10] sm:$0xff]
        %v6078 = vld [vmem:[#allocation4 + $0x18] sm:$0xff]
        %v6079 = vld [vmem:[#allocation4 + $0x20] sm:$0xff]
        %v6080 = vld [vmem:[#allocation4 + $0x28] sm:$0xff]
        %v6081 = vld [vmem:[#allocation4 + $0x30] sm:$0xff]
        %v6082 = vld [vmem:[#allocation4 + $0x38] sm:$0xff]
        %v6083 = vld [vmem:[#allocation4 + $0x40] sm:$0xff]
        %v6084 = vld [vmem:[#allocation4 + $0x48] sm:$0xff]
        %v6085 = vld [vmem:[#allocation4 + $0x50] sm:$0xff]
        %v6086 = vld [vmem:[#allocation4 + $0x58] sm:$0xff]
        %v6087 = vld [vmem:[#allocation4 + $0x60] sm:$0xff]
        %v6088 = vld [vmem:[#allocation4 + $0x68] sm:$0xff]
        %v6089 = vld [vmem:[#allocation4 + $0x70] sm:$0xff]
        %v6090 = vld [vmem:[#allocation4 + $0x78] sm:$0xff]
        %v6091 = vld [vmem:[#allocation4 + $0x80] sm:$0xff]
        %v6092 = vld [vmem:[#allocation4 + $0x88] sm:$0xff]
        %v6093 = vld [vmem:[#allocation4 + $0x90] sm:$0xff]
        %v6094 = vld [vmem:[#allocation4 + $0x98] sm:$0xff]
        %v6095 = vld [vmem:[#allocation4 + $0xa0] sm:$0xff]
        %v6096 = vld [vmem:[#allocation4 + $0xa8] sm:$0xff]
        %v6097 = vld [vmem:[#allocation4 + $0xb0] sm:$0xff]
        %v6098 = vld [vmem:[#allocation4 + $0xb8] sm:$0xff]
        %v6099 = vld [vmem:[#allocation4 + $0xc0] sm:$0xff]
        %v6100 = vld [vmem:[#allocation4 + $0xc8] sm:$0xff]
        %v6101 = vld [vmem:[#allocation4 + $0xd0] sm:$0xff]
        %v6102 = vld [vmem:[#allocation4 + $0xd8] sm:$0xff]
        %v6103 = vld [vmem:[#allocation4 + $0xe0] sm:$0xff]
        %v6104 = vld [vmem:[#allocation4 + $0xe8] sm:$0xff]
        %v6105 = vld [vmem:[#allocation4 + $0xf0] sm:$0xff]
        %v6106 = vld [vmem:[#allocation4 + $0xf8] sm:$0xff]
        %v6107 = vld [vmem:[#allocation4 + $0x100] sm:$0xff]
        %v6108 = vld [vmem:[#allocation4 + $0x108] sm:$0xff]
        %v6109 = vld [vmem:[#allocation4 + $0x110] sm:$0xff]
        %v6110 = vld [vmem:[#allocation4 + $0x118] sm:$0xff]
        %v6111 = vld [vmem:[#allocation4 + $0x120] sm:$0xff]
        %v6112 = vld [vmem:[#allocation4 + $0x128] sm:$0xff]
        %v6113 = vld [vmem:[#allocation4 + $0x130] sm:$0xff]
        %v6114 = vld [vmem:[#allocation4 + $0x138] sm:$0xff]
        %v6115 = vld [vmem:[#allocation4 + $0x140] sm:$0xff]
        %v6116 = vld [vmem:[#allocation4 + $0x148] sm:$0xff]
        %v6117 = vld [vmem:[#allocation4 + $0x150] sm:$0xff]
        %v6118 = vld [vmem:[#allocation4 + $0x158] sm:$0xff]
        %v6119 = vld [vmem:[#allocation4 + $0x160] sm:$0xff]
        %v6120 = vld [vmem:[#allocation4 + $0x168] sm:$0xff]
        %v6121 = vld [vmem:[#allocation4 + $0x170] sm:$0xff]
        %v6122 = vld [vmem:[#allocation4 + $0x178] sm:$0xff]
        %v6123 = vld [vmem:[#allocation4 + $0x180] sm:$0xff]
        %v6124 = vld [vmem:[#allocation4 + $0x188] sm:$0xff]
        %v6125 = vld [vmem:[#allocation4 + $0x190] sm:$0xff]
        %v6126 = vld [vmem:[#allocation4 + $0x198] sm:$0xff]
        %v6127 = vld [vmem:[#allocation4 + $0x1a0] sm:$0xff]
        %v6128 = vld [vmem:[#allocation4 + $0x1a8] sm:$0xff]
        %v6129 = vld [vmem:[#allocation4 + $0x1b0] sm:$0xff]
        %v6130 = vld [vmem:[#allocation4 + $0x1b8] sm:$0xff]
        %v6131 = vld [vmem:[#allocation4 + $0x1c0] sm:$0xff]
        %v6132 = vld [vmem:[#allocation4 + $0x1c8] sm:$0xff]
        %v6133 = vld [vmem:[#allocation4 + $0x1d0] sm:$0xff]
        %v6134 = vld [vmem:[#allocation4 + $0x1d8] sm:$0xff]
        %v6135 = vld [vmem:[#allocation4 + $0x1e0] sm:$0xff]
        %v6136 = vld [vmem:[#allocation4 + $0x1e8] sm:$0xff]
        %v6137 = vld [vmem:[#allocation4 + $0x1f0] sm:$0xff]
        %v6138 = vld [vmem:[#allocation4 + $0x1f8] sm:$0xff]
        %v6139 = vld [vmem:[#allocation4 + $0x200] sm:$0xff]
        %v6140 = vld [vmem:[#allocation4 + $0x208] sm:$0xff]
        %v6141 = vld [vmem:[#allocation4 + $0x210] sm:$0xff]
        %v6142 = vld [vmem:[#allocation4 + $0x218] sm:$0xff]
        %v6143 = vld [vmem:[#allocation4 + $0x220] sm:$0xff]
        %v6144 = vld [vmem:[#allocation4 + $0x228] sm:$0xff]
        %v6145 = vld [vmem:[#allocation4 + $0x230] sm:$0xff]
        %v6146 = vld [vmem:[#allocation4 + $0x238] sm:$0xff]
        %v6147 = vld [vmem:[#allocation4 + $0x240] sm:$0xff]
        %v6148 = vld [vmem:[#allocation4 + $0x248] sm:$0xff]
        %v6149 = vld [vmem:[#allocation4 + $0x250] sm:$0xff]
        %v6150 = vld [vmem:[#allocation4 + $0x258] sm:$0xff]
        %v6151 = vld [vmem:[#allocation4 + $0x260] sm:$0xff]
        %v6152 = vld [vmem:[#allocation4 + $0x268] sm:$0xff]
        %v6153 = vld [vmem:[#allocation4 + $0x270] sm:$0xff]
        %v6154 = vld [vmem:[#allocation4 + $0x278] sm:$0xff]
        %v6155 = vld [vmem:[#allocation4 + $0x280] sm:$0xff]
        %v6156 = vld [vmem:[#allocation4 + $0x288] sm:$0xff]
        %v6157 = vld [vmem:[#allocation4 + $0x290] sm:$0xff]
        %v6158 = vld [vmem:[#allocation4 + $0x298] sm:$0xff]
        %v6159 = vld [vmem:[#allocation4 + $0x2a0] sm:$0xff]
        %v6160 = vld [vmem:[#allocation4 + $0x2a8] sm:$0xff]
        %v6161 = vld [vmem:[#allocation4 + $0x2b0] sm:$0xff]
        %v6162 = vld [vmem:[#allocation4 + $0x2b8] sm:$0xff]
        %v6163 = vld [vmem:[#allocation4 + $0x2c0] sm:$0xff]
        %v6164 = vld [vmem:[#allocation4 + $0x2c8] sm:$0xff]
        %v6165 = vld [vmem:[#allocation4 + $0x2d0] sm:$0xff]
        %v6166 = vld [vmem:[#allocation4 + $0x2d8] sm:$0xff]
        %v6167 = vld [vmem:[#allocation4 + $0x2e0] sm:$0xff]
        %v6168 = vld [vmem:[#allocation4 + $0x2e8] sm:$0xff]
        %v6169 = vld [vmem:[#allocation4 + $0x2f0] sm:$0xff]
        %v6170 = vld [vmem:[#allocation4 + $0x2f8] sm:$0xff]
        %v6171 = vld [vmem:[#allocation4 + $0x300] sm:$0xff]
        %v6172 = vld [vmem:[#allocation4 + $0x308] sm:$0xff]
        %v6173 = vld [vmem:[#allocation4 + $0x310] sm:$0xff]
        %v6174 = vld [vmem:[#allocation4 + $0x318] sm:$0xff]
        %v6175 = vld [vmem:[#allocation4 + $0x320] sm:$0xff]
        %v6176 = vld [vmem:[#allocation4 + $0x328] sm:$0xff]
        %v6177 = vld [vmem:[#allocation4 + $0x330] sm:$0xff]
        %v6178 = vld [vmem:[#allocation4 + $0x338] sm:$0xff]
        %v6179 = vld [vmem:[#allocation4 + $0x340] sm:$0xff]
        %v6180 = vld [vmem:[#allocation4 + $0x348] sm:$0xff]
        %v6181 = vld [vmem:[#allocation4 + $0x350] sm:$0xff]
        %v6182 = vld [vmem:[#allocation4 + $0x358] sm:$0xff]
        %v6183 = vld [vmem:[#allocation4 + $0x360] sm:$0xff]
        %v6184 = vld [vmem:[#allocation4 + $0x368] sm:$0xff]
        %v6185 = vld [vmem:[#allocation4 + $0x370] sm:$0xff]
        %v6186 = vld [vmem:[#allocation4 + $0x378] sm:$0xff]
        %v6187 = vld [vmem:[#allocation4 + $0x380] sm:$0xff]
        %v6188 = vld [vmem:[#allocation4 + $0x388] sm:$0xff]
        %v6189 = vld [vmem:[#allocation4 + $0x390] sm:$0xff]
        %v6190 = vld [vmem:[#allocation4 + $0x398] sm:$0xff]
        %v6191 = vld [vmem:[#allocation4 + $0x3a0] sm:$0xff]
        %v6192 = vld [vmem:[#allocation4 + $0x3a8] sm:$0xff]
        %v6193 = vld [vmem:[#allocation4 + $0x3b0] sm:$0xff]
        %v6194 = vld [vmem:[#allocation4 + $0x3b8] sm:$0xff]
        %v6195 = vld [vmem:[#allocation4 + $0x3c0] sm:$0xff]
        %v6196 = vld [vmem:[#allocation4 + $0x3c8] sm:$0xff]
        %v6197 = vld [vmem:[#allocation4 + $0x3d0] sm:$0xff]
        %v6198 = vld [vmem:[#allocation4 + $0x3d8] sm:$0xff]
        %v6199 = vld [vmem:[#allocation4 + $0x3e0] sm:$0xff]
        %v6200 = vld [vmem:[#allocation4 + $0x3e8] sm:$0xff]
        %v6201 = vld [vmem:[#allocation4 + $0x3f0] sm:$0xff]
        %v6202 = vld [vmem:[#allocation4 + $0x3f8] sm:$0xff]
        %6204 = vset.pattern.permute.xlu0 0
        %6205 = vperm.xlu0 %6204, %v3111
        %v6206 = vpop.permute.xlu0 %6205
        %6209 = vset.pattern.permute.xlu0 0
        %6210 = vperm.xlu0 %6209, %v3113
        %v6211 = vpop.permute.xlu0 %6210
        %6214 = vset.pattern.permute.xlu0 0
        %6215 = vperm.xlu0 %6214, %v3115
        %v6216 = vpop.permute.xlu0 %6215
        %6219 = vset.pattern.permute.xlu0 0
        %6220 = vperm.xlu0 %6219, %v3117
        %v6221 = vpop.permute.xlu0 %6220
        %6224 = vset.pattern.permute.xlu0 0
        %6225 = vperm.xlu0 %6224, %v3119
        %v6226 = vpop.permute.xlu0 %6225
        %6229 = vset.pattern.permute.xlu0 0
        %6230 = vperm.xlu0 %6229, %v3121
        %v6231 = vpop.permute.xlu0 %6230
        %6234 = vset.pattern.permute.xlu0 0
        %6235 = vperm.xlu0 %6234, %v3123
        %v6236 = vpop.permute.xlu0 %6235
        %6239 = vset.pattern.permute.xlu0 0
        %6240 = vperm.xlu0 %6239, %v3125
        %v6241 = vpop.permute.xlu0 %6240
        %6244 = vset.pattern.permute.xlu0 0
        %6245 = vperm.xlu0 %6244, %v3127
        %v6246 = vpop.permute.xlu0 %6245
        %6249 = vset.pattern.permute.xlu0 0
        %6250 = vperm.xlu0 %6249, %v3129
        %v6251 = vpop.permute.xlu0 %6250
        %6254 = vset.pattern.permute.xlu0 0
        %6255 = vperm.xlu0 %6254, %v3131
        %v6256 = vpop.permute.xlu0 %6255
        %6259 = vset.pattern.permute.xlu0 0
        %6260 = vperm.xlu0 %6259, %v3133
        %v6261 = vpop.permute.xlu0 %6260
        %6264 = vset.pattern.permute.xlu0 0
        %6265 = vperm.xlu0 %6264, %v3135
        %v6266 = vpop.permute.xlu0 %6265
        %6269 = vset.pattern.permute.xlu0 0
        %6270 = vperm.xlu0 %6269, %v3137
        %v6271 = vpop.permute.xlu0 %6270
        %6274 = vset.pattern.permute.xlu0 0
        %6275 = vperm.xlu0 %6274, %v3139
        %v6276 = vpop.permute.xlu0 %6275
        %6279 = vset.pattern.permute.xlu0 0
        %6280 = vperm.xlu0 %6279, %v3141
        %v6281 = vpop.permute.xlu0 %6280
        %6284 = vset.pattern.permute.xlu0 0
        %6285 = vperm.xlu0 %6284, %v3143
        %v6286 = vpop.permute.xlu0 %6285
        %6289 = vset.pattern.permute.xlu0 0
        %6290 = vperm.xlu0 %6289, %v3145
        %v6291 = vpop.permute.xlu0 %6290
        %6294 = vset.pattern.permute.xlu0 0
        %6295 = vperm.xlu0 %6294, %v3147
        %v6296 = vpop.permute.xlu0 %6295
        %6299 = vset.pattern.permute.xlu0 0
        %6300 = vperm.xlu0 %6299, %v3149
        %v6301 = vpop.permute.xlu0 %6300
        %6304 = vset.pattern.permute.xlu0 0
        %6305 = vperm.xlu0 %6304, %v3151
        %v6306 = vpop.permute.xlu0 %6305
        %6309 = vset.pattern.permute.xlu0 0
        %6310 = vperm.xlu0 %6309, %v3153
        %v6311 = vpop.permute.xlu0 %6310
        %6314 = vset.pattern.permute.xlu0 0
        %6315 = vperm.xlu0 %6314, %v3155
        %v6316 = vpop.permute.xlu0 %6315
        %6319 = vset.pattern.permute.xlu0 0
        %6320 = vperm.xlu0 %6319, %v3157
        %v6321 = vpop.permute.xlu0 %6320
        %6324 = vset.pattern.permute.xlu0 0
        %6325 = vperm.xlu0 %6324, %v3159
        %v6326 = vpop.permute.xlu0 %6325
        %6329 = vset.pattern.permute.xlu0 0
        %6330 = vperm.xlu0 %6329, %v3161
        %v6331 = vpop.permute.xlu0 %6330
        %6334 = vset.pattern.permute.xlu0 0
        %6335 = vperm.xlu0 %6334, %v3163
        %v6336 = vpop.permute.xlu0 %6335
        %6339 = vset.pattern.permute.xlu0 0
        %6340 = vperm.xlu0 %6339, %v3165
        %v6341 = vpop.permute.xlu0 %6340
        %6344 = vset.pattern.permute.xlu0 0
        %6345 = vperm.xlu0 %6344, %v3167
        %v6346 = vpop.permute.xlu0 %6345
        %6349 = vset.pattern.permute.xlu0 0
        %6350 = vperm.xlu0 %6349, %v3169
        %v6351 = vpop.permute.xlu0 %6350
        %6354 = vset.pattern.permute.xlu0 0
        %6355 = vperm.xlu0 %6354, %v3171
        %v6356 = vpop.permute.xlu0 %6355
        %6359 = vset.pattern.permute.xlu0 0
        %6360 = vperm.xlu0 %6359, %v3173
        %v6361 = vpop.permute.xlu0 %6360
        %6364 = vset.pattern.permute.xlu0 0
        %6365 = vperm.xlu0 %6364, %v3175
        %v6366 = vpop.permute.xlu0 %6365
        %6369 = vset.pattern.permute.xlu0 0
        %6370 = vperm.xlu0 %6369, %v3177
        %v6371 = vpop.permute.xlu0 %6370
        %6374 = vset.pattern.permute.xlu0 0
        %6375 = vperm.xlu0 %6374, %v3179
        %v6376 = vpop.permute.xlu0 %6375
        %6379 = vset.pattern.permute.xlu0 0
        %6380 = vperm.xlu0 %6379, %v3181
        %v6381 = vpop.permute.xlu0 %6380
        %6384 = vset.pattern.permute.xlu0 0
        %6385 = vperm.xlu0 %6384, %v3183
        %v6386 = vpop.permute.xlu0 %6385
        %6389 = vset.pattern.permute.xlu0 0
        %6390 = vperm.xlu0 %6389, %v3185
        %v6391 = vpop.permute.xlu0 %6390
        %6394 = vset.pattern.permute.xlu0 0
        %6395 = vperm.xlu0 %6394, %v3187
        %v6396 = vpop.permute.xlu0 %6395
        %6399 = vset.pattern.permute.xlu0 0
        %6400 = vperm.xlu0 %6399, %v3189
        %v6401 = vpop.permute.xlu0 %6400
        %6404 = vset.pattern.permute.xlu0 0
        %6405 = vperm.xlu0 %6404, %v3191
        %v6406 = vpop.permute.xlu0 %6405
        %6409 = vset.pattern.permute.xlu0 0
        %6410 = vperm.xlu0 %6409, %v3193
        %v6411 = vpop.permute.xlu0 %6410
        %6414 = vset.pattern.permute.xlu0 0
        %6415 = vperm.xlu0 %6414, %v3195
        %v6416 = vpop.permute.xlu0 %6415
        %6419 = vset.pattern.permute.xlu0 0
        %6420 = vperm.xlu0 %6419, %v3197
        %v6421 = vpop.permute.xlu0 %6420
        %6424 = vset.pattern.permute.xlu0 0
        %6425 = vperm.xlu0 %6424, %v3199
        %v6426 = vpop.permute.xlu0 %6425
        %6429 = vset.pattern.permute.xlu0 0
        %6430 = vperm.xlu0 %6429, %v3201
        %v6431 = vpop.permute.xlu0 %6430
        %6434 = vset.pattern.permute.xlu0 0
        %6435 = vperm.xlu0 %6434, %v3203
        %v6436 = vpop.permute.xlu0 %6435
        %6439 = vset.pattern.permute.xlu0 0
        %6440 = vperm.xlu0 %6439, %v3205
        %v6441 = vpop.permute.xlu0 %6440
        %6444 = vset.pattern.permute.xlu0 0
        %6445 = vperm.xlu0 %6444, %v3207
        %v6446 = vpop.permute.xlu0 %6445
        %6449 = vset.pattern.permute.xlu0 0
        %6450 = vperm.xlu0 %6449, %v3209
        %v6451 = vpop.permute.xlu0 %6450
        %6454 = vset.pattern.permute.xlu0 0
        %6455 = vperm.xlu0 %6454, %v3211
        %v6456 = vpop.permute.xlu0 %6455
        %6459 = vset.pattern.permute.xlu0 0
        %6460 = vperm.xlu0 %6459, %v3213
        %v6461 = vpop.permute.xlu0 %6460
        %6464 = vset.pattern.permute.xlu0 0
        %6465 = vperm.xlu0 %6464, %v3215
        %v6466 = vpop.permute.xlu0 %6465
        %6469 = vset.pattern.permute.xlu0 0
        %6470 = vperm.xlu0 %6469, %v3217
        %v6471 = vpop.permute.xlu0 %6470
        %6474 = vset.pattern.permute.xlu0 0
        %6475 = vperm.xlu0 %6474, %v3219
        %v6476 = vpop.permute.xlu0 %6475
        %6479 = vset.pattern.permute.xlu0 0
        %6480 = vperm.xlu0 %6479, %v3221
        %v6481 = vpop.permute.xlu0 %6480
        %6484 = vset.pattern.permute.xlu0 0
        %6485 = vperm.xlu0 %6484, %v3223
        %v6486 = vpop.permute.xlu0 %6485
        %6489 = vset.pattern.permute.xlu0 0
        %6490 = vperm.xlu0 %6489, %v3225
        %v6491 = vpop.permute.xlu0 %6490
        %6494 = vset.pattern.permute.xlu0 0
        %6495 = vperm.xlu0 %6494, %v3227
        %v6496 = vpop.permute.xlu0 %6495
        %6499 = vset.pattern.permute.xlu0 0
        %6500 = vperm.xlu0 %6499, %v3229
        %v6501 = vpop.permute.xlu0 %6500
        %6504 = vset.pattern.permute.xlu0 0
        %6505 = vperm.xlu0 %6504, %v3231
        %v6506 = vpop.permute.xlu0 %6505
        %6509 = vset.pattern.permute.xlu0 0
        %6510 = vperm.xlu0 %6509, %v3233
        %v6511 = vpop.permute.xlu0 %6510
        %6514 = vset.pattern.permute.xlu0 0
        %6515 = vperm.xlu0 %6514, %v3235
        %v6516 = vpop.permute.xlu0 %6515
        %6519 = vset.pattern.permute.xlu0 0
        %6520 = vperm.xlu0 %6519, %v3237
        %v6521 = vpop.permute.xlu0 %6520
        %6524 = vset.pattern.permute.xlu0 0
        %6525 = vperm.xlu0 %6524, %v3239
        %v6526 = vpop.permute.xlu0 %6525
        %6529 = vset.pattern.permute.xlu0 0
        %6530 = vperm.xlu0 %6529, %v3241
        %v6531 = vpop.permute.xlu0 %6530
        %6534 = vset.pattern.permute.xlu0 0
        %6535 = vperm.xlu0 %6534, %v3243
        %v6536 = vpop.permute.xlu0 %6535
        %6539 = vset.pattern.permute.xlu0 0
        %6540 = vperm.xlu0 %6539, %v3245
        %v6541 = vpop.permute.xlu0 %6540
        %6544 = vset.pattern.permute.xlu0 0
        %6545 = vperm.xlu0 %6544, %v3247
        %v6546 = vpop.permute.xlu0 %6545
        %6549 = vset.pattern.permute.xlu0 0
        %6550 = vperm.xlu0 %6549, %v3249
        %v6551 = vpop.permute.xlu0 %6550
        %6554 = vset.pattern.permute.xlu0 0
        %6555 = vperm.xlu0 %6554, %v3251
        %v6556 = vpop.permute.xlu0 %6555
        %6559 = vset.pattern.permute.xlu0 0
        %6560 = vperm.xlu0 %6559, %v3253
        %v6561 = vpop.permute.xlu0 %6560
        %6564 = vset.pattern.permute.xlu0 0
        %6565 = vperm.xlu0 %6564, %v3255
        %v6566 = vpop.permute.xlu0 %6565
        %6569 = vset.pattern.permute.xlu0 0
        %6570 = vperm.xlu0 %6569, %v3257
        %v6571 = vpop.permute.xlu0 %6570
        %6574 = vset.pattern.permute.xlu0 0
        %6575 = vperm.xlu0 %6574, %v3259
        %v6576 = vpop.permute.xlu0 %6575
        %6579 = vset.pattern.permute.xlu0 0
        %6580 = vperm.xlu0 %6579, %v3261
        %v6581 = vpop.permute.xlu0 %6580
        %6584 = vset.pattern.permute.xlu0 0
        %6585 = vperm.xlu0 %6584, %v3263
        %v6586 = vpop.permute.xlu0 %6585
        %6589 = vset.pattern.permute.xlu0 0
        %6590 = vperm.xlu0 %6589, %v3265
        %v6591 = vpop.permute.xlu0 %6590
        %6594 = vset.pattern.permute.xlu0 0
        %6595 = vperm.xlu0 %6594, %v3267
        %v6596 = vpop.permute.xlu0 %6595
        %6599 = vset.pattern.permute.xlu0 0
        %6600 = vperm.xlu0 %6599, %v3269
        %v6601 = vpop.permute.xlu0 %6600
        %6604 = vset.pattern.permute.xlu0 0
        %6605 = vperm.xlu0 %6604, %v3271
        %v6606 = vpop.permute.xlu0 %6605
        %6609 = vset.pattern.permute.xlu0 0
        %6610 = vperm.xlu0 %6609, %v3273
        %v6611 = vpop.permute.xlu0 %6610
        %6614 = vset.pattern.permute.xlu0 0
        %6615 = vperm.xlu0 %6614, %v3275
        %v6616 = vpop.permute.xlu0 %6615
        %6619 = vset.pattern.permute.xlu0 0
        %6620 = vperm.xlu0 %6619, %v3277
        %v6621 = vpop.permute.xlu0 %6620
        %6624 = vset.pattern.permute.xlu0 0
        %6625 = vperm.xlu0 %6624, %v3279
        %v6626 = vpop.permute.xlu0 %6625
        %6629 = vset.pattern.permute.xlu0 0
        %6630 = vperm.xlu0 %6629, %v3281
        %v6631 = vpop.permute.xlu0 %6630
        %6634 = vset.pattern.permute.xlu0 0
        %6635 = vperm.xlu0 %6634, %v3283
        %v6636 = vpop.permute.xlu0 %6635
        %6639 = vset.pattern.permute.xlu0 0
        %6640 = vperm.xlu0 %6639, %v3285
        %v6641 = vpop.permute.xlu0 %6640
        %6644 = vset.pattern.permute.xlu0 0
        %6645 = vperm.xlu0 %6644, %v3287
        %v6646 = vpop.permute.xlu0 %6645
        %6649 = vset.pattern.permute.xlu0 0
        %6650 = vperm.xlu0 %6649, %v3289
        %v6651 = vpop.permute.xlu0 %6650
        %6654 = vset.pattern.permute.xlu0 0
        %6655 = vperm.xlu0 %6654, %v3291
        %v6656 = vpop.permute.xlu0 %6655
        %6659 = vset.pattern.permute.xlu0 0
        %6660 = vperm.xlu0 %6659, %v3293
        %v6661 = vpop.permute.xlu0 %6660
        %6664 = vset.pattern.permute.xlu0 0
        %6665 = vperm.xlu0 %6664, %v3295
        %v6666 = vpop.permute.xlu0 %6665
        %6669 = vset.pattern.permute.xlu0 0
        %6670 = vperm.xlu0 %6669, %v3297
        %v6671 = vpop.permute.xlu0 %6670
        %6674 = vset.pattern.permute.xlu0 0
        %6675 = vperm.xlu0 %6674, %v3299
        %v6676 = vpop.permute.xlu0 %6675
        %6679 = vset.pattern.permute.xlu0 0
        %6680 = vperm.xlu0 %6679, %v3301
        %v6681 = vpop.permute.xlu0 %6680
        %6684 = vset.pattern.permute.xlu0 0
        %6685 = vperm.xlu0 %6684, %v3303
        %v6686 = vpop.permute.xlu0 %6685
        %6689 = vset.pattern.permute.xlu0 0
        %6690 = vperm.xlu0 %6689, %v3305
        %v6691 = vpop.permute.xlu0 %6690
        %6694 = vset.pattern.permute.xlu0 0
        %6695 = vperm.xlu0 %6694, %v3307
        %v6696 = vpop.permute.xlu0 %6695
        %6699 = vset.pattern.permute.xlu0 0
        %6700 = vperm.xlu0 %6699, %v3309
        %v6701 = vpop.permute.xlu0 %6700
        %6704 = vset.pattern.permute.xlu0 0
        %6705 = vperm.xlu0 %6704, %v3311
        %v6706 = vpop.permute.xlu0 %6705
        %6709 = vset.pattern.permute.xlu0 0
        %6710 = vperm.xlu0 %6709, %v3313
        %v6711 = vpop.permute.xlu0 %6710
        %6714 = vset.pattern.permute.xlu0 0
        %6715 = vperm.xlu0 %6714, %v3315
        %v6716 = vpop.permute.xlu0 %6715
        %6719 = vset.pattern.permute.xlu0 0
        %6720 = vperm.xlu0 %6719, %v3317
        %v6721 = vpop.permute.xlu0 %6720
        %6724 = vset.pattern.permute.xlu0 0
        %6725 = vperm.xlu0 %6724, %v3319
        %v6726 = vpop.permute.xlu0 %6725
        %6729 = vset.pattern.permute.xlu0 0
        %6730 = vperm.xlu0 %6729, %v3321
        %v6731 = vpop.permute.xlu0 %6730
        %6734 = vset.pattern.permute.xlu0 0
        %6735 = vperm.xlu0 %6734, %v3323
        %v6736 = vpop.permute.xlu0 %6735
        %6739 = vset.pattern.permute.xlu0 0
        %6740 = vperm.xlu0 %6739, %v3325
        %v6741 = vpop.permute.xlu0 %6740
        %6744 = vset.pattern.permute.xlu0 0
        %6745 = vperm.xlu0 %6744, %v3327
        %v6746 = vpop.permute.xlu0 %6745
        %6749 = vset.pattern.permute.xlu0 0
        %6750 = vperm.xlu0 %6749, %v3329
        %v6751 = vpop.permute.xlu0 %6750
        %6754 = vset.pattern.permute.xlu0 0
        %6755 = vperm.xlu0 %6754, %v3331
        %v6756 = vpop.permute.xlu0 %6755
        %6759 = vset.pattern.permute.xlu0 0
        %6760 = vperm.xlu0 %6759, %v3333
        %v6761 = vpop.permute.xlu0 %6760
        %6764 = vset.pattern.permute.xlu0 0
        %6765 = vperm.xlu0 %6764, %v3335
        %v6766 = vpop.permute.xlu0 %6765
        %6769 = vset.pattern.permute.xlu0 0
        %6770 = vperm.xlu0 %6769, %v3337
        %v6771 = vpop.permute.xlu0 %6770
        %6774 = vset.pattern.permute.xlu0 0
        %6775 = vperm.xlu0 %6774, %v3339
        %v6776 = vpop.permute.xlu0 %6775
        %6779 = vset.pattern.permute.xlu0 0
        %6780 = vperm.xlu0 %6779, %v3341
        %v6781 = vpop.permute.xlu0 %6780
        %6784 = vset.pattern.permute.xlu0 0
        %6785 = vperm.xlu0 %6784, %v3343
        %v6786 = vpop.permute.xlu0 %6785
        %6789 = vset.pattern.permute.xlu0 0
        %6790 = vperm.xlu0 %6789, %v3345
        %v6791 = vpop.permute.xlu0 %6790
        %6794 = vset.pattern.permute.xlu0 0
        %6795 = vperm.xlu0 %6794, %v3347
        %v6796 = vpop.permute.xlu0 %6795
        %6799 = vset.pattern.permute.xlu0 0
        %6800 = vperm.xlu0 %6799, %v3349
        %v6801 = vpop.permute.xlu0 %6800
        %6804 = vset.pattern.permute.xlu0 0
        %6805 = vperm.xlu0 %6804, %v3351
        %v6806 = vpop.permute.xlu0 %6805
        %6809 = vset.pattern.permute.xlu0 0
        %6810 = vperm.xlu0 %6809, %v3353
        %v6811 = vpop.permute.xlu0 %6810
        %6814 = vset.pattern.permute.xlu0 0
        %6815 = vperm.xlu0 %6814, %v3355
        %v6816 = vpop.permute.xlu0 %6815
        %6819 = vset.pattern.permute.xlu0 0
        %6820 = vperm.xlu0 %6819, %v3357
        %v6821 = vpop.permute.xlu0 %6820
        %6824 = vset.pattern.permute.xlu0 0
        %6825 = vperm.xlu0 %6824, %v3359
        %v6826 = vpop.permute.xlu0 %6825
        %6829 = vset.pattern.permute.xlu0 0
        %6830 = vperm.xlu0 %6829, %v3361
        %v6831 = vpop.permute.xlu0 %6830
        %6834 = vset.pattern.permute.xlu0 0
        %6835 = vperm.xlu0 %6834, %v3363
        %v6836 = vpop.permute.xlu0 %6835
        %6839 = vset.pattern.permute.xlu0 0
        %6840 = vperm.xlu0 %6839, %v3365
        %v6841 = vpop.permute.xlu0 %6840
        %v6843 = vmul.f32 %v6206, %v6075
        %v6844 = vmul.f32 %v6211, %v6076
        %v6845 = vmul.f32 %v6216, %v6077
        %v6846 = vmul.f32 %v6221, %v6078
        %v6847 = vmul.f32 %v6226, %v6079
        %v6848 = vmul.f32 %v6231, %v6080
        %v6849 = vmul.f32 %v6236, %v6081
        %v6850 = vmul.f32 %v6241, %v6082
        %v6851 = vmul.f32 %v6246, %v6083
        %v6852 = vmul.f32 %v6251, %v6084
        %v6853 = vmul.f32 %v6256, %v6085
        %v6854 = vmul.f32 %v6261, %v6086
        %v6855 = vmul.f32 %v6266, %v6087
        %v6856 = vmul.f32 %v6271, %v6088
        %v6857 = vmul.f32 %v6276, %v6089
        %v6858 = vmul.f32 %v6281, %v6090
        %v6859 = vmul.f32 %v6286, %v6091
        %v6860 = vmul.f32 %v6291, %v6092
        %v6861 = vmul.f32 %v6296, %v6093
        %v6862 = vmul.f32 %v6301, %v6094
        %v6863 = vmul.f32 %v6306, %v6095
        %v6864 = vmul.f32 %v6311, %v6096
        %v6865 = vmul.f32 %v6316, %v6097
        %v6866 = vmul.f32 %v6321, %v6098
        %v6867 = vmul.f32 %v6326, %v6099
        %v6868 = vmul.f32 %v6331, %v6100
        %v6869 = vmul.f32 %v6336, %v6101
        %v6870 = vmul.f32 %v6341, %v6102
        %v6871 = vmul.f32 %v6346, %v6103
        %v6872 = vmul.f32 %v6351, %v6104
        %v6873 = vmul.f32 %v6356, %v6105
        %v6874 = vmul.f32 %v6361, %v6106
        %v6875 = vmul.f32 %v6366, %v6107
        %v6876 = vmul.f32 %v6371, %v6108
        %v6877 = vmul.f32 %v6376, %v6109
        %v6878 = vmul.f32 %v6381, %v6110
        %v6879 = vmul.f32 %v6386, %v6111
        %v6880 = vmul.f32 %v6391, %v6112
        %v6881 = vmul.f32 %v6396, %v6113
        %v6882 = vmul.f32 %v6401, %v6114
        %v6883 = vmul.f32 %v6406, %v6115
        %v6884 = vmul.f32 %v6411, %v6116
        %v6885 = vmul.f32 %v6416, %v6117
        %v6886 = vmul.f32 %v6421, %v6118
        %v6887 = vmul.f32 %v6426, %v6119
        %v6888 = vmul.f32 %v6431, %v6120
        %v6889 = vmul.f32 %v6436, %v6121
        %v6890 = vmul.f32 %v6441, %v6122
        %v6891 = vmul.f32 %v6446, %v6123
        %v6892 = vmul.f32 %v6451, %v6124
        %v6893 = vmul.f32 %v6456, %v6125
        %v6894 = vmul.f32 %v6461, %v6126
        %v6895 = vmul.f32 %v6466, %v6127
        %v6896 = vmul.f32 %v6471, %v6128
        %v6897 = vmul.f32 %v6476, %v6129
        %v6898 = vmul.f32 %v6481, %v6130
        %v6899 = vmul.f32 %v6486, %v6131
        %v6900 = vmul.f32 %v6491, %v6132
        %v6901 = vmul.f32 %v6496, %v6133
        %v6902 = vmul.f32 %v6501, %v6134
        %v6903 = vmul.f32 %v6506, %v6135
        %v6904 = vmul.f32 %v6511, %v6136
        %v6905 = vmul.f32 %v6516, %v6137
        %v6906 = vmul.f32 %v6521, %v6138
        %v6907 = vmul.f32 %v6526, %v6139
        %v6908 = vmul.f32 %v6531, %v6140
        %v6909 = vmul.f32 %v6536, %v6141
        %v6910 = vmul.f32 %v6541, %v6142
        %v6911 = vmul.f32 %v6546, %v6143
        %v6912 = vmul.f32 %v6551, %v6144
        %v6913 = vmul.f32 %v6556, %v6145
        %v6914 = vmul.f32 %v6561, %v6146
        %v6915 = vmul.f32 %v6566, %v6147
        %v6916 = vmul.f32 %v6571, %v6148
        %v6917 = vmul.f32 %v6576, %v6149
        %v6918 = vmul.f32 %v6581, %v6150
        %v6919 = vmul.f32 %v6586, %v6151
        %v6920 = vmul.f32 %v6591, %v6152
        %v6921 = vmul.f32 %v6596, %v6153
        %v6922 = vmul.f32 %v6601, %v6154
        %v6923 = vmul.f32 %v6606, %v6155
        %v6924 = vmul.f32 %v6611, %v6156
        %v6925 = vmul.f32 %v6616, %v6157
        %v6926 = vmul.f32 %v6621, %v6158
        %v6927 = vmul.f32 %v6626, %v6159
        %v6928 = vmul.f32 %v6631, %v6160
        %v6929 = vmul.f32 %v6636, %v6161
        %v6930 = vmul.f32 %v6641, %v6162
        %v6931 = vmul.f32 %v6646, %v6163
        %v6932 = vmul.f32 %v6651, %v6164
        %v6933 = vmul.f32 %v6656, %v6165
        %v6934 = vmul.f32 %v6661, %v6166
        %v6935 = vmul.f32 %v6666, %v6167
        %v6936 = vmul.f32 %v6671, %v6168
        %v6937 = vmul.f32 %v6676, %v6169
        %v6938 = vmul.f32 %v6681, %v6170
        %v6939 = vmul.f32 %v6686, %v6171
        %v6940 = vmul.f32 %v6691, %v6172
        %v6941 = vmul.f32 %v6696, %v6173
        %v6942 = vmul.f32 %v6701, %v6174
        %v6943 = vmul.f32 %v6706, %v6175
        %v6944 = vmul.f32 %v6711, %v6176
        %v6945 = vmul.f32 %v6716, %v6177
        %v6946 = vmul.f32 %v6721, %v6178
        %v6947 = vmul.f32 %v6726, %v6179
        %v6948 = vmul.f32 %v6731, %v6180
        %v6949 = vmul.f32 %v6736, %v6181
        %v6950 = vmul.f32 %v6741, %v6182
        %v6951 = vmul.f32 %v6746, %v6183
        %v6952 = vmul.f32 %v6751, %v6184
        %v6953 = vmul.f32 %v6756, %v6185
        %v6954 = vmul.f32 %v6761, %v6186
        %v6955 = vmul.f32 %v6766, %v6187
        %v6956 = vmul.f32 %v6771, %v6188
        %v6957 = vmul.f32 %v6776, %v6189
        %v6958 = vmul.f32 %v6781, %v6190
        %v6959 = vmul.f32 %v6786, %v6191
        %v6960 = vmul.f32 %v6791, %v6192
        %v6961 = vmul.f32 %v6796, %v6193
        %v6962 = vmul.f32 %v6801, %v6194
        %v6963 = vmul.f32 %v6806, %v6195
        %v6964 = vmul.f32 %v6811, %v6196
        %v6965 = vmul.f32 %v6816, %v6197
        %v6966 = vmul.f32 %v6821, %v6198
        %v6967 = vmul.f32 %v6826, %v6199
        %v6968 = vmul.f32 %v6831, %v6200
        %v6969 = vmul.f32 %v6836, %v6201
        %v6970 = vmul.f32 %v6841, %v6202
        %v6971 = vadd.f32 %v6843, %v5405
        %v6972 = vadd.f32 %v6844, %v5407
        %v6973 = vadd.f32 %v6845, %v5410
        %v6974 = vadd.f32 %v6846, %v5412
        %v6975 = vadd.f32 %v6847, %v5415
        %v6976 = vadd.f32 %v6848, %v5417
        %v6977 = vadd.f32 %v6849, %v5420
        %v6978 = vadd.f32 %v6850, %v5422
        %v6979 = vadd.f32 %v6851, %v5425
        %v6980 = vadd.f32 %v6852, %v5427
        %v6981 = vadd.f32 %v6853, %v5430
        %v6982 = vadd.f32 %v6854, %v5432
        %v6983 = vadd.f32 %v6855, %v5435
        %v6984 = vadd.f32 %v6856, %v5437
        %v6985 = vadd.f32 %v6857, %v5440
        %v6986 = vadd.f32 %v6858, %v5442
        %v6987 = vadd.f32 %v6859, %v5445
        %v6988 = vadd.f32 %v6860, %v5447
        %v6989 = vadd.f32 %v6861, %v5450
        %v6990 = vadd.f32 %v6862, %v5452
        %v6991 = vadd.f32 %v6863, %v5455
        %v6992 = vadd.f32 %v6864, %v5457
        %v6993 = vadd.f32 %v6865, %v5460
        %v6994 = vadd.f32 %v6866, %v5462
        %v6995 = vadd.f32 %v6867, %v5465
        %v6996 = vadd.f32 %v6868, %v5467
        %v6997 = vadd.f32 %v6869, %v5470
        %v6998 = vadd.f32 %v6870, %v5472
        %v6999 = vadd.f32 %v6871, %v5475
        %v7000 = vadd.f32 %v6872, %v5477
        %v7001 = vadd.f32 %v6873, %v5480
        %v7002 = vadd.f32 %v6874, %v5482
        %v7003 = vadd.f32 %v6875, %v5602
        %v7004 = vadd.f32 %v6876, %v5604
        %v7005 = vadd.f32 %v6877, %v5607
        %v7006 = vadd.f32 %v6878, %v5609
        %v7007 = vadd.f32 %v6879, %v5612
        %v7008 = vadd.f32 %v6880, %v5614
        %v7009 = vadd.f32 %v6881, %v5617
        %v7010 = vadd.f32 %v6882, %v5619
        %v7011 = vadd.f32 %v6883, %v5622
        %v7012 = vadd.f32 %v6884, %v5624
        %v7013 = vadd.f32 %v6885, %v5627
        %v7014 = vadd.f32 %v6886, %v5629
        %v7015 = vadd.f32 %v6887, %v5632
        %v7016 = vadd.f32 %v6888, %v5634
        %v7017 = vadd.f32 %v6889, %v5637
        %v7018 = vadd.f32 %v6890, %v5639
        %v7019 = vadd.f32 %v6891, %v5642
        %v7020 = vadd.f32 %v6892, %v5644
        %v7021 = vadd.f32 %v6893, %v5647
        %v7022 = vadd.f32 %v6894, %v5649
        %v7023 = vadd.f32 %v6895, %v5652
        %v7024 = vadd.f32 %v6896, %v5654
        %v7025 = vadd.f32 %v6897, %v5657
        %v7026 = vadd.f32 %v6898, %v5659
        %v7027 = vadd.f32 %v6899, %v5662
        %v7028 = vadd.f32 %v6900, %v5664
        %v7029 = vadd.f32 %v6901, %v5667
        %v7030 = vadd.f32 %v6902, %v5669
        %v7031 = vadd.f32 %v6903, %v5672
        %v7032 = vadd.f32 %v6904, %v5674
        %v7033 = vadd.f32 %v6905, %v5677
        %v7034 = vadd.f32 %v6906, %v5679
        %v7035 = vadd.f32 %v6907, %v5799
        %v7036 = vadd.f32 %v6908, %v5801
        %v7037 = vadd.f32 %v6909, %v5804
        %v7038 = vadd.f32 %v6910, %v5806
        %v7039 = vadd.f32 %v6911, %v5809
        %v7040 = vadd.f32 %v6912, %v5811
        %v7041 = vadd.f32 %v6913, %v5814
        %v7042 = vadd.f32 %v6914, %v5816
        %v7043 = vadd.f32 %v6915, %v5819
        %v7044 = vadd.f32 %v6916, %v5821
        %v7045 = vadd.f32 %v6917, %v5824
        %v7046 = vadd.f32 %v6918, %v5826
        %v7047 = vadd.f32 %v6919, %v5829
        %v7048 = vadd.f32 %v6920, %v5831
        %v7049 = vadd.f32 %v6921, %v5834
        %v7050 = vadd.f32 %v6922, %v5836
        %v7051 = vadd.f32 %v6923, %v5839
        %v7052 = vadd.f32 %v6924, %v5841
        %v7053 = vadd.f32 %v6925, %v5844
        %v7054 = vadd.f32 %v6926, %v5846
        %v7055 = vadd.f32 %v6927, %v5849
        %v7056 = vadd.f32 %v6928, %v5851
        %v7057 = vadd.f32 %v6929, %v5854
        %v7058 = vadd.f32 %v6930, %v5856
        %v7059 = vadd.f32 %v6931, %v5859
        %v7060 = vadd.f32 %v6932, %v5861
        %v7061 = vadd.f32 %v6933, %v5864
        %v7062 = vadd.f32 %v6934, %v5866
        %v7063 = vadd.f32 %v6935, %v5869
        %v7064 = vadd.f32 %v6936, %v5871
        %v7065 = vadd.f32 %v6937, %v5874
        %v7066 = vadd.f32 %v6938, %v5876
        %v7067 = vadd.f32 %v6939, %v5996
        %v7068 = vadd.f32 %v6940, %v5998
        %v7069 = vadd.f32 %v6941, %v6001
        %v7070 = vadd.f32 %v6942, %v6003
        %v7071 = vadd.f32 %v6943, %v6006
        %v7072 = vadd.f32 %v6944, %v6008
        %v7073 = vadd.f32 %v6945, %v6011
        %v7074 = vadd.f32 %v6946, %v6013
        %v7075 = vadd.f32 %v6947, %v6016
        %v7076 = vadd.f32 %v6948, %v6018
        %v7077 = vadd.f32 %v6949, %v6021
        %v7078 = vadd.f32 %v6950, %v6023
        %v7079 = vadd.f32 %v6951, %v6026
        %v7080 = vadd.f32 %v6952, %v6028
        %v7081 = vadd.f32 %v6953, %v6031
        %v7082 = vadd.f32 %v6954, %v6033
        %v7083 = vadd.f32 %v6955, %v6036
        %v7084 = vadd.f32 %v6956, %v6038
        %v7085 = vadd.f32 %v6957, %v6041
        %v7086 = vadd.f32 %v6958, %v6043
        %v7087 = vadd.f32 %v6959, %v6046
        %v7088 = vadd.f32 %v6960, %v6048
        %v7089 = vadd.f32 %v6961, %v6051
        %v7090 = vadd.f32 %v6962, %v6053
        %v7091 = vadd.f32 %v6963, %v6056
        %v7092 = vadd.f32 %v6964, %v6058
        %v7093 = vadd.f32 %v6965, %v6061
        %v7094 = vadd.f32 %v6966, %v6063
        %v7095 = vadd.f32 %v6967, %v6066
        %v7096 = vadd.f32 %v6968, %v6068
        %v7097 = vadd.f32 %v6969, %v6071
        %v7098 = vadd.f32 %v6970, %v6073
        %7099 = vst.msk [vmem:[#allocation4] sm:$0xff] %vm1645, %v6971
        %7100 = vst.msk [vmem:[#allocation4 + $0x8] sm:$0xff] %vm1645, %v6972
        %7101 = vst.msk [vmem:[#allocation4 + $0x10] sm:$0xff] %vm1645, %v6973
        %7102 = vst.msk [vmem:[#allocation4 + $0x18] sm:$0xff] %vm1645, %v6974
        %7103 = vst.msk [vmem:[#allocation4 + $0x20] sm:$0xff] %vm1645, %v6975
        %7104 = vst.msk [vmem:[#allocation4 + $0x28] sm:$0xff] %vm1645, %v6976
        %7105 = vst.msk [vmem:[#allocation4 + $0x30] sm:$0xff] %vm1645, %v6977
        %7106 = vst.msk [vmem:[#allocation4 + $0x38] sm:$0xff] %vm1645, %v6978
        %7107 = vst.msk [vmem:[#allocation4 + $0x40] sm:$0xff] %vm1645, %v6979
        %7108 = vst.msk [vmem:[#allocation4 + $0x48] sm:$0xff] %vm1645, %v6980
        %7109 = vst.msk [vmem:[#allocation4 + $0x50] sm:$0xff] %vm1645, %v6981
        %7110 = vst.msk [vmem:[#allocation4 + $0x58] sm:$0xff] %vm1645, %v6982
        %7111 = vst.msk [vmem:[#allocation4 + $0x60] sm:$0xff] %vm1645, %v6983
        %7112 = vst.msk [vmem:[#allocation4 + $0x68] sm:$0xff] %vm1645, %v6984
        %7113 = vst.msk [vmem:[#allocation4 + $0x70] sm:$0xff] %vm1645, %v6985
        %7114 = vst.msk [vmem:[#allocation4 + $0x78] sm:$0xff] %vm1645, %v6986
        %7115 = vst.msk [vmem:[#allocation4 + $0x80] sm:$0xff] %vm1645, %v6987
        %7116 = vst.msk [vmem:[#allocation4 + $0x88] sm:$0xff] %vm1645, %v6988
        %7117 = vst.msk [vmem:[#allocation4 + $0x90] sm:$0xff] %vm1645, %v6989
        %7118 = vst.msk [vmem:[#allocation4 + $0x98] sm:$0xff] %vm1645, %v6990
        %7119 = vst.msk [vmem:[#allocation4 + $0xa0] sm:$0xff] %vm1645, %v6991
        %7120 = vst.msk [vmem:[#allocation4 + $0xa8] sm:$0xff] %vm1645, %v6992
        %7121 = vst.msk [vmem:[#allocation4 + $0xb0] sm:$0xff] %vm1645, %v6993
        %7122 = vst.msk [vmem:[#allocation4 + $0xb8] sm:$0xff] %vm1645, %v6994
        %7123 = vst.msk [vmem:[#allocation4 + $0xc0] sm:$0xff] %vm1645, %v6995
        %7124 = vst.msk [vmem:[#allocation4 + $0xc8] sm:$0xff] %vm1645, %v6996
        %7125 = vst.msk [vmem:[#allocation4 + $0xd0] sm:$0xff] %vm1645, %v6997
        %7126 = vst.msk [vmem:[#allocation4 + $0xd8] sm:$0xff] %vm1645, %v6998
        %7127 = vst.msk [vmem:[#allocation4 + $0xe0] sm:$0xff] %vm1645, %v6999
        %7128 = vst.msk [vmem:[#allocation4 + $0xe8] sm:$0xff] %vm1645, %v7000
        %7129 = vst.msk [vmem:[#allocation4 + $0xf0] sm:$0xff] %vm1645, %v7001
        %7130 = vst.msk [vmem:[#allocation4 + $0xf8] sm:$0xff] %vm1645, %v7002
        %7131 = vst.msk [vmem:[#allocation4 + $0x100] sm:$0xff] %vm1645, %v7003
        %7132 = vst.msk [vmem:[#allocation4 + $0x108] sm:$0xff] %vm1645, %v7004
        %7133 = vst.msk [vmem:[#allocation4 + $0x110] sm:$0xff] %vm1645, %v7005
        %7134 = vst.msk [vmem:[#allocation4 + $0x118] sm:$0xff] %vm1645, %v7006
        %7135 = vst.msk [vmem:[#allocation4 + $0x120] sm:$0xff] %vm1645, %v7007
        %7136 = vst.msk [vmem:[#allocation4 + $0x128] sm:$0xff] %vm1645, %v7008
        %7137 = vst.msk [vmem:[#allocation4 + $0x130] sm:$0xff] %vm1645, %v7009
        %7138 = vst.msk [vmem:[#allocation4 + $0x138] sm:$0xff] %vm1645, %v7010
        %7139 = vst.msk [vmem:[#allocation4 + $0x140] sm:$0xff] %vm1645, %v7011
        %7140 = vst.msk [vmem:[#allocation4 + $0x148] sm:$0xff] %vm1645, %v7012
        %7141 = vst.msk [vmem:[#allocation4 + $0x150] sm:$0xff] %vm1645, %v7013
        %7142 = vst.msk [vmem:[#allocation4 + $0x158] sm:$0xff] %vm1645, %v7014
        %7143 = vst.msk [vmem:[#allocation4 + $0x160] sm:$0xff] %vm1645, %v7015
        %7144 = vst.msk [vmem:[#allocation4 + $0x168] sm:$0xff] %vm1645, %v7016
        %7145 = vst.msk [vmem:[#allocation4 + $0x170] sm:$0xff] %vm1645, %v7017
        %7146 = vst.msk [vmem:[#allocation4 + $0x178] sm:$0xff] %vm1645, %v7018
        %7147 = vst.msk [vmem:[#allocation4 + $0x180] sm:$0xff] %vm1645, %v7019
        %7148 = vst.msk [vmem:[#allocation4 + $0x188] sm:$0xff] %vm1645, %v7020
        %7149 = vst.msk [vmem:[#allocation4 + $0x190] sm:$0xff] %vm1645, %v7021
        %7150 = vst.msk [vmem:[#allocation4 + $0x198] sm:$0xff] %vm1645, %v7022
        %7151 = vst.msk [vmem:[#allocation4 + $0x1a0] sm:$0xff] %vm1645, %v7023
        %7152 = vst.msk [vmem:[#allocation4 + $0x1a8] sm:$0xff] %vm1645, %v7024
        %7153 = vst.msk [vmem:[#allocation4 + $0x1b0] sm:$0xff] %vm1645, %v7025
        %7154 = vst.msk [vmem:[#allocation4 + $0x1b8] sm:$0xff] %vm1645, %v7026
        %7155 = vst.msk [vmem:[#allocation4 + $0x1c0] sm:$0xff] %vm1645, %v7027
        %7156 = vst.msk [vmem:[#allocation4 + $0x1c8] sm:$0xff] %vm1645, %v7028
        %7157 = vst.msk [vmem:[#allocation4 + $0x1d0] sm:$0xff] %vm1645, %v7029
        %7158 = vst.msk [vmem:[#allocation4 + $0x1d8] sm:$0xff] %vm1645, %v7030
        %7159 = vst.msk [vmem:[#allocation4 + $0x1e0] sm:$0xff] %vm1645, %v7031
        %7160 = vst.msk [vmem:[#allocation4 + $0x1e8] sm:$0xff] %vm1645, %v7032
        %7161 = vst.msk [vmem:[#allocation4 + $0x1f0] sm:$0xff] %vm1645, %v7033
        %7162 = vst.msk [vmem:[#allocation4 + $0x1f8] sm:$0xff] %vm1645, %v7034
        %7163 = vst.msk [vmem:[#allocation4 + $0x200] sm:$0xff] %vm1645, %v7035
        %7164 = vst.msk [vmem:[#allocation4 + $0x208] sm:$0xff] %vm1645, %v7036
        %7165 = vst.msk [vmem:[#allocation4 + $0x210] sm:$0xff] %vm1645, %v7037
        %7166 = vst.msk [vmem:[#allocation4 + $0x218] sm:$0xff] %vm1645, %v7038
        %7167 = vst.msk [vmem:[#allocation4 + $0x220] sm:$0xff] %vm1645, %v7039
        %7168 = vst.msk [vmem:[#allocation4 + $0x228] sm:$0xff] %vm1645, %v7040
        %7169 = vst.msk [vmem:[#allocation4 + $0x230] sm:$0xff] %vm1645, %v7041
        %7170 = vst.msk [vmem:[#allocation4 + $0x238] sm:$0xff] %vm1645, %v7042
        %7171 = vst.msk [vmem:[#allocation4 + $0x240] sm:$0xff] %vm1645, %v7043
        %7172 = vst.msk [vmem:[#allocation4 + $0x248] sm:$0xff] %vm1645, %v7044
        %7173 = vst.msk [vmem:[#allocation4 + $0x250] sm:$0xff] %vm1645, %v7045
        %7174 = vst.msk [vmem:[#allocation4 + $0x258] sm:$0xff] %vm1645, %v7046
        %7175 = vst.msk [vmem:[#allocation4 + $0x260] sm:$0xff] %vm1645, %v7047
        %7176 = vst.msk [vmem:[#allocation4 + $0x268] sm:$0xff] %vm1645, %v7048
        %7177 = vst.msk [vmem:[#allocation4 + $0x270] sm:$0xff] %vm1645, %v7049
        %7178 = vst.msk [vmem:[#allocation4 + $0x278] sm:$0xff] %vm1645, %v7050
        %7179 = vst.msk [vmem:[#allocation4 + $0x280] sm:$0xff] %vm1645, %v7051
        %7180 = vst.msk [vmem:[#allocation4 + $0x288] sm:$0xff] %vm1645, %v7052
        %7181 = vst.msk [vmem:[#allocation4 + $0x290] sm:$0xff] %vm1645, %v7053
        %7182 = vst.msk [vmem:[#allocation4 + $0x298] sm:$0xff] %vm1645, %v7054
        %7183 = vst.msk [vmem:[#allocation4 + $0x2a0] sm:$0xff] %vm1645, %v7055
        %7184 = vst.msk [vmem:[#allocation4 + $0x2a8] sm:$0xff] %vm1645, %v7056
        %7185 = vst.msk [vmem:[#allocation4 + $0x2b0] sm:$0xff] %vm1645, %v7057
        %7186 = vst.msk [vmem:[#allocation4 + $0x2b8] sm:$0xff] %vm1645, %v7058
        %7187 = vst.msk [vmem:[#allocation4 + $0x2c0] sm:$0xff] %vm1645, %v7059
        %7188 = vst.msk [vmem:[#allocation4 + $0x2c8] sm:$0xff] %vm1645, %v7060
        %7189 = vst.msk [vmem:[#allocation4 + $0x2d0] sm:$0xff] %vm1645, %v7061
        %7190 = vst.msk [vmem:[#allocation4 + $0x2d8] sm:$0xff] %vm1645, %v7062
        %7191 = vst.msk [vmem:[#allocation4 + $0x2e0] sm:$0xff] %vm1645, %v7063
        %7192 = vst.msk [vmem:[#allocation4 + $0x2e8] sm:$0xff] %vm1645, %v7064
        %7193 = vst.msk [vmem:[#allocation4 + $0x2f0] sm:$0xff] %vm1645, %v7065
        %7194 = vst.msk [vmem:[#allocation4 + $0x2f8] sm:$0xff] %vm1645, %v7066
        %7195 = vst.msk [vmem:[#allocation4 + $0x300] sm:$0xff] %vm1645, %v7067
        %7196 = vst.msk [vmem:[#allocation4 + $0x308] sm:$0xff] %vm1645, %v7068
        %7197 = vst.msk [vmem:[#allocation4 + $0x310] sm:$0xff] %vm1645, %v7069
        %7198 = vst.msk [vmem:[#allocation4 + $0x318] sm:$0xff] %vm1645, %v7070
        %7199 = vst.msk [vmem:[#allocation4 + $0x320] sm:$0xff] %vm1645, %v7071
        %7200 = vst.msk [vmem:[#allocation4 + $0x328] sm:$0xff] %vm1645, %v7072
        %7201 = vst.msk [vmem:[#allocation4 + $0x330] sm:$0xff] %vm1645, %v7073
        %7202 = vst.msk [vmem:[#allocation4 + $0x338] sm:$0xff] %vm1645, %v7074
        %7203 = vst.msk [vmem:[#allocation4 + $0x340] sm:$0xff] %vm1645, %v7075
        %7204 = vst.msk [vmem:[#allocation4 + $0x348] sm:$0xff] %vm1645, %v7076
        %7205 = vst.msk [vmem:[#allocation4 + $0x350] sm:$0xff] %vm1645, %v7077
        %7206 = vst.msk [vmem:[#allocation4 + $0x358] sm:$0xff] %vm1645, %v7078
        %7207 = vst.msk [vmem:[#allocation4 + $0x360] sm:$0xff] %vm1645, %v7079
        %7208 = vst.msk [vmem:[#allocation4 + $0x368] sm:$0xff] %vm1645, %v7080
        %7209 = vst.msk [vmem:[#allocation4 + $0x370] sm:$0xff] %vm1645, %v7081
        %7210 = vst.msk [vmem:[#allocation4 + $0x378] sm:$0xff] %vm1645, %v7082
        %7211 = vst.msk [vmem:[#allocation4 + $0x380] sm:$0xff] %vm1645, %v7083
        %7212 = vst.msk [vmem:[#allocation4 + $0x388] sm:$0xff] %vm1645, %v7084
        %7213 = vst.msk [vmem:[#allocation4 + $0x390] sm:$0xff] %vm1645, %v7085
        %7214 = vst.msk [vmem:[#allocation4 + $0x398] sm:$0xff] %vm1645, %v7086
        %7215 = vst.msk [vmem:[#allocation4 + $0x3a0] sm:$0xff] %vm1645, %v7087
        %7216 = vst.msk [vmem:[#allocation4 + $0x3a8] sm:$0xff] %vm1645, %v7088
        %7217 = vst.msk [vmem:[#allocation4 + $0x3b0] sm:$0xff] %vm1645, %v7089
        %7218 = vst.msk [vmem:[#allocation4 + $0x3b8] sm:$0xff] %vm1645, %v7090
        %7219 = vst.msk [vmem:[#allocation4 + $0x3c0] sm:$0xff] %vm1645, %v7091
        %7220 = vst.msk [vmem:[#allocation4 + $0x3c8] sm:$0xff] %vm1645, %v7092
        %7221 = vst.msk [vmem:[#allocation4 + $0x3d0] sm:$0xff] %vm1645, %v7093
        %7222 = vst.msk [vmem:[#allocation4 + $0x3d8] sm:$0xff] %vm1645, %v7094
        %7223 = vst.msk [vmem:[#allocation4 + $0x3e0] sm:$0xff] %vm1645, %v7095
        %7224 = vst.msk [vmem:[#allocation4 + $0x3e8] sm:$0xff] %vm1645, %v7096
        %7225 = vst.msk [vmem:[#allocation4 + $0x3f0] sm:$0xff] %vm1645, %v7097
        %7226 = vst.msk [vmem:[#allocation4 + $0x3f8] sm:$0xff] %vm1645, %v7098
        %7227 = vst.msk [vmem:[#allocation2] sm:$0xff] %vm5030, %v2854
        %7228 = vst.msk [vmem:[#allocation2 + $0x8] sm:$0xff] %vm5030, %v2855
        %7229 = vst.msk [vmem:[#allocation2 + $0x10] sm:$0xff] %vm5030, %v2856
        %7230 = vst.msk [vmem:[#allocation2 + $0x18] sm:$0xff] %vm5030, %v2857
        %7231 = vst.msk [vmem:[#allocation2 + $0x20] sm:$0xff] %vm5030, %v2858
        %7232 = vst.msk [vmem:[#allocation2 + $0x28] sm:$0xff] %vm5030, %v2859
        %7233 = vst.msk [vmem:[#allocation2 + $0x30] sm:$0xff] %vm5030, %v2860
        %7234 = vst.msk [vmem:[#allocation2 + $0x38] sm:$0xff] %vm5030, %v2861
        %7235 = vst.msk [vmem:[#allocation2 + $0x40] sm:$0xff] %vm5030, %v2862
        %7236 = vst.msk [vmem:[#allocation2 + $0x48] sm:$0xff] %vm5030, %v2863
        %7237 = vst.msk [vmem:[#allocation2 + $0x50] sm:$0xff] %vm5030, %v2864
        %7238 = vst.msk [vmem:[#allocation2 + $0x58] sm:$0xff] %vm5030, %v2865
        %7239 = vst.msk [vmem:[#allocation2 + $0x60] sm:$0xff] %vm5030, %v2866
        %7240 = vst.msk [vmem:[#allocation2 + $0x68] sm:$0xff] %vm5030, %v2867
        %7241 = vst.msk [vmem:[#allocation2 + $0x70] sm:$0xff] %vm5030, %v2868
        %7242 = vst.msk [vmem:[#allocation2 + $0x78] sm:$0xff] %vm5030, %v2869
        %7243 = vst.msk [vmem:[#allocation2 + $0x80] sm:$0xff] %vm5030, %v2870
        %7244 = vst.msk [vmem:[#allocation2 + $0x88] sm:$0xff] %vm5030, %v2871
        %7245 = vst.msk [vmem:[#allocation2 + $0x90] sm:$0xff] %vm5030, %v2872
        %7246 = vst.msk [vmem:[#allocation2 + $0x98] sm:$0xff] %vm5030, %v2873
        %7247 = vst.msk [vmem:[#allocation2 + $0xa0] sm:$0xff] %vm5030, %v2874
        %7248 = vst.msk [vmem:[#allocation2 + $0xa8] sm:$0xff] %vm5030, %v2875
        %7249 = vst.msk [vmem:[#allocation2 + $0xb0] sm:$0xff] %vm5030, %v2876
        %7250 = vst.msk [vmem:[#allocation2 + $0xb8] sm:$0xff] %vm5030, %v2877
        %7251 = vst.msk [vmem:[#allocation2 + $0xc0] sm:$0xff] %vm5030, %v2878
        %7252 = vst.msk [vmem:[#allocation2 + $0xc8] sm:$0xff] %vm5030, %v2879
        %7253 = vst.msk [vmem:[#allocation2 + $0xd0] sm:$0xff] %vm5030, %v2880
        %7254 = vst.msk [vmem:[#allocation2 + $0xd8] sm:$0xff] %vm5030, %v2881
        %7255 = vst.msk [vmem:[#allocation2 + $0xe0] sm:$0xff] %vm5030, %v2882
        %7256 = vst.msk [vmem:[#allocation2 + $0xe8] sm:$0xff] %vm5030, %v2883
        %7257 = vst.msk [vmem:[#allocation2 + $0xf0] sm:$0xff] %vm5030, %v2884
        %7258 = vst.msk [vmem:[#allocation2 + $0xf8] sm:$0xff] %vm5030, %v2885
        %7259 = vst.msk [vmem:[#allocation2 + $0x100] sm:$0xff] %vm5030, %v2886
        %7260 = vst.msk [vmem:[#allocation2 + $0x108] sm:$0xff] %vm5030, %v2887
        %7261 = vst.msk [vmem:[#allocation2 + $0x110] sm:$0xff] %vm5030, %v2888
        %7262 = vst.msk [vmem:[#allocation2 + $0x118] sm:$0xff] %vm5030, %v2889
        %7263 = vst.msk [vmem:[#allocation2 + $0x120] sm:$0xff] %vm5030, %v2890
        %7264 = vst.msk [vmem:[#allocation2 + $0x128] sm:$0xff] %vm5030, %v2891
        %7265 = vst.msk [vmem:[#allocation2 + $0x130] sm:$0xff] %vm5030, %v2892
        %7266 = vst.msk [vmem:[#allocation2 + $0x138] sm:$0xff] %vm5030, %v2893
        %7267 = vst.msk [vmem:[#allocation2 + $0x140] sm:$0xff] %vm5030, %v2894
        %7268 = vst.msk [vmem:[#allocation2 + $0x148] sm:$0xff] %vm5030, %v2895
        %7269 = vst.msk [vmem:[#allocation2 + $0x150] sm:$0xff] %vm5030, %v2896
        %7270 = vst.msk [vmem:[#allocation2 + $0x158] sm:$0xff] %vm5030, %v2897
        %7271 = vst.msk [vmem:[#allocation2 + $0x160] sm:$0xff] %vm5030, %v2898
        %7272 = vst.msk [vmem:[#allocation2 + $0x168] sm:$0xff] %vm5030, %v2899
        %7273 = vst.msk [vmem:[#allocation2 + $0x170] sm:$0xff] %vm5030, %v2900
        %7274 = vst.msk [vmem:[#allocation2 + $0x178] sm:$0xff] %vm5030, %v2901
        %7275 = vst.msk [vmem:[#allocation2 + $0x180] sm:$0xff] %vm5030, %v2902
        %7276 = vst.msk [vmem:[#allocation2 + $0x188] sm:$0xff] %vm5030, %v2903
        %7277 = vst.msk [vmem:[#allocation2 + $0x190] sm:$0xff] %vm5030, %v2904
        %7278 = vst.msk [vmem:[#allocation2 + $0x198] sm:$0xff] %vm5030, %v2905
        %7279 = vst.msk [vmem:[#allocation2 + $0x1a0] sm:$0xff] %vm5030, %v2906
        %7280 = vst.msk [vmem:[#allocation2 + $0x1a8] sm:$0xff] %vm5030, %v2907
        %7281 = vst.msk [vmem:[#allocation2 + $0x1b0] sm:$0xff] %vm5030, %v2908
        %7282 = vst.msk [vmem:[#allocation2 + $0x1b8] sm:$0xff] %vm5030, %v2909
        %7283 = vst.msk [vmem:[#allocation2 + $0x1c0] sm:$0xff] %vm5030, %v2910
        %7284 = vst.msk [vmem:[#allocation2 + $0x1c8] sm:$0xff] %vm5030, %v2911
        %7285 = vst.msk [vmem:[#allocation2 + $0x1d0] sm:$0xff] %vm5030, %v2912
        %7286 = vst.msk [vmem:[#allocation2 + $0x1d8] sm:$0xff] %vm5030, %v2913
        %7287 = vst.msk [vmem:[#allocation2 + $0x1e0] sm:$0xff] %vm5030, %v2914
        %7288 = vst.msk [vmem:[#allocation2 + $0x1e8] sm:$0xff] %vm5030, %v2915
        %7289 = vst.msk [vmem:[#allocation2 + $0x1f0] sm:$0xff] %vm5030, %v2916
        %7290 = vst.msk [vmem:[#allocation2 + $0x1f8] sm:$0xff] %vm5030, %v2917
        %7291 = vst.msk [vmem:[#allocation2 + $0x200] sm:$0xff] %vm5030, %v2918
        %7292 = vst.msk [vmem:[#allocation2 + $0x208] sm:$0xff] %vm5030, %v2919
        %7293 = vst.msk [vmem:[#allocation2 + $0x210] sm:$0xff] %vm5030, %v2920
        %7294 = vst.msk [vmem:[#allocation2 + $0x218] sm:$0xff] %vm5030, %v2921
        %7295 = vst.msk [vmem:[#allocation2 + $0x220] sm:$0xff] %vm5030, %v2922
        %7296 = vst.msk [vmem:[#allocation2 + $0x228] sm:$0xff] %vm5030, %v2923
        %7297 = vst.msk [vmem:[#allocation2 + $0x230] sm:$0xff] %vm5030, %v2924
        %7298 = vst.msk [vmem:[#allocation2 + $0x238] sm:$0xff] %vm5030, %v2925
        %7299 = vst.msk [vmem:[#allocation2 + $0x240] sm:$0xff] %vm5030, %v2926
        %7300 = vst.msk [vmem:[#allocation2 + $0x248] sm:$0xff] %vm5030, %v2927
        %7301 = vst.msk [vmem:[#allocation2 + $0x250] sm:$0xff] %vm5030, %v2928
        %7302 = vst.msk [vmem:[#allocation2 + $0x258] sm:$0xff] %vm5030, %v2929
        %7303 = vst.msk [vmem:[#allocation2 + $0x260] sm:$0xff] %vm5030, %v2930
        %7304 = vst.msk [vmem:[#allocation2 + $0x268] sm:$0xff] %vm5030, %v2931
        %7305 = vst.msk [vmem:[#allocation2 + $0x270] sm:$0xff] %vm5030, %v2932
        %7306 = vst.msk [vmem:[#allocation2 + $0x278] sm:$0xff] %vm5030, %v2933
        %7307 = vst.msk [vmem:[#allocation2 + $0x280] sm:$0xff] %vm5030, %v2934
        %7308 = vst.msk [vmem:[#allocation2 + $0x288] sm:$0xff] %vm5030, %v2935
        %7309 = vst.msk [vmem:[#allocation2 + $0x290] sm:$0xff] %vm5030, %v2936
        %7310 = vst.msk [vmem:[#allocation2 + $0x298] sm:$0xff] %vm5030, %v2937
        %7311 = vst.msk [vmem:[#allocation2 + $0x2a0] sm:$0xff] %vm5030, %v2938
        %7312 = vst.msk [vmem:[#allocation2 + $0x2a8] sm:$0xff] %vm5030, %v2939
        %7313 = vst.msk [vmem:[#allocation2 + $0x2b0] sm:$0xff] %vm5030, %v2940
        %7314 = vst.msk [vmem:[#allocation2 + $0x2b8] sm:$0xff] %vm5030, %v2941
        %7315 = vst.msk [vmem:[#allocation2 + $0x2c0] sm:$0xff] %vm5030, %v2942
        %7316 = vst.msk [vmem:[#allocation2 + $0x2c8] sm:$0xff] %vm5030, %v2943
        %7317 = vst.msk [vmem:[#allocation2 + $0x2d0] sm:$0xff] %vm5030, %v2944
        %7318 = vst.msk [vmem:[#allocation2 + $0x2d8] sm:$0xff] %vm5030, %v2945
        %7319 = vst.msk [vmem:[#allocation2 + $0x2e0] sm:$0xff] %vm5030, %v2946
        %7320 = vst.msk [vmem:[#allocation2 + $0x2e8] sm:$0xff] %vm5030, %v2947
        %7321 = vst.msk [vmem:[#allocation2 + $0x2f0] sm:$0xff] %vm5030, %v2948
        %7322 = vst.msk [vmem:[#allocation2 + $0x2f8] sm:$0xff] %vm5030, %v2949
        %7323 = vst.msk [vmem:[#allocation2 + $0x300] sm:$0xff] %vm5030, %v2950
        %7324 = vst.msk [vmem:[#allocation2 + $0x308] sm:$0xff] %vm5030, %v2951
        %7325 = vst.msk [vmem:[#allocation2 + $0x310] sm:$0xff] %vm5030, %v2952
        %7326 = vst.msk [vmem:[#allocation2 + $0x318] sm:$0xff] %vm5030, %v2953
        %7327 = vst.msk [vmem:[#allocation2 + $0x320] sm:$0xff] %vm5030, %v2954
        %7328 = vst.msk [vmem:[#allocation2 + $0x328] sm:$0xff] %vm5030, %v2955
        %7329 = vst.msk [vmem:[#allocation2 + $0x330] sm:$0xff] %vm5030, %v2956
        %7330 = vst.msk [vmem:[#allocation2 + $0x338] sm:$0xff] %vm5030, %v2957
        %7331 = vst.msk [vmem:[#allocation2 + $0x340] sm:$0xff] %vm5030, %v2958
        %7332 = vst.msk [vmem:[#allocation2 + $0x348] sm:$0xff] %vm5030, %v2959
        %7333 = vst.msk [vmem:[#allocation2 + $0x350] sm:$0xff] %vm5030, %v2960
        %7334 = vst.msk [vmem:[#allocation2 + $0x358] sm:$0xff] %vm5030, %v2961
        %7335 = vst.msk [vmem:[#allocation2 + $0x360] sm:$0xff] %vm5030, %v2962
        %7336 = vst.msk [vmem:[#allocation2 + $0x368] sm:$0xff] %vm5030, %v2963
        %7337 = vst.msk [vmem:[#allocation2 + $0x370] sm:$0xff] %vm5030, %v2964
        %7338 = vst.msk [vmem:[#allocation2 + $0x378] sm:$0xff] %vm5030, %v2965
        %7339 = vst.msk [vmem:[#allocation2 + $0x380] sm:$0xff] %vm5030, %v2966
        %7340 = vst.msk [vmem:[#allocation2 + $0x388] sm:$0xff] %vm5030, %v2967
        %7341 = vst.msk [vmem:[#allocation2 + $0x390] sm:$0xff] %vm5030, %v2968
        %7342 = vst.msk [vmem:[#allocation2 + $0x398] sm:$0xff] %vm5030, %v2969
        %7343 = vst.msk [vmem:[#allocation2 + $0x3a0] sm:$0xff] %vm5030, %v2970
        %7344 = vst.msk [vmem:[#allocation2 + $0x3a8] sm:$0xff] %vm5030, %v2971
        %7345 = vst.msk [vmem:[#allocation2 + $0x3b0] sm:$0xff] %vm5030, %v2972
        %7346 = vst.msk [vmem:[#allocation2 + $0x3b8] sm:$0xff] %vm5030, %v2973
        %7347 = vst.msk [vmem:[#allocation2 + $0x3c0] sm:$0xff] %vm5030, %v2974
        %7348 = vst.msk [vmem:[#allocation2 + $0x3c8] sm:$0xff] %vm5030, %v2975
        %7349 = vst.msk [vmem:[#allocation2 + $0x3d0] sm:$0xff] %vm5030, %v2976
        %7350 = vst.msk [vmem:[#allocation2 + $0x3d8] sm:$0xff] %vm5030, %v2977
        %7351 = vst.msk [vmem:[#allocation2 + $0x3e0] sm:$0xff] %vm5030, %v2978
        %7352 = vst.msk [vmem:[#allocation2 + $0x3e8] sm:$0xff] %vm5030, %v2979
        %7353 = vst.msk [vmem:[#allocation2 + $0x3f0] sm:$0xff] %vm5030, %v2980
        %7354 = vst.msk [vmem:[#allocation2 + $0x3f8] sm:$0xff] %vm5030, %v2981
        %p7355 = scmp.eq.s32.totalorder %s24, 3
        // Predicated region
        $region160: #{tpu_custom_call.1} parent=142 // pred_check
          %p7356 = pneg %p7355
        $region161: #{tpu_custom_call.1} parent=142 // pred_check_branch
          %7358 = sbr.rel (%p7356) target = $region163
        $region162: #{tpu_custom_call.1} parent=142 // pred_region
          %v7359 = vld [vmem:[#allocation4] sm:$0xff]
          %v7360 = vld [vmem:[#allocation4 + $0x8] sm:$0xff]
          %v7361 = vld [vmem:[#allocation4 + $0x10] sm:$0xff]
          %v7362 = vld [vmem:[#allocation4 + $0x18] sm:$0xff]
          %v7363 = vld [vmem:[#allocation4 + $0x20] sm:$0xff]
          %v7364 = vld [vmem:[#allocation4 + $0x28] sm:$0xff]
          %v7365 = vld [vmem:[#allocation4 + $0x30] sm:$0xff]
          %v7366 = vld [vmem:[#allocation4 + $0x38] sm:$0xff]
          %v7367 = vld [vmem:[#allocation4 + $0x40] sm:$0xff]
          %v7368 = vld [vmem:[#allocation4 + $0x48] sm:$0xff]
          %v7369 = vld [vmem:[#allocation4 + $0x50] sm:$0xff]
          %v7370 = vld [vmem:[#allocation4 + $0x58] sm:$0xff]
          %v7371 = vld [vmem:[#allocation4 + $0x60] sm:$0xff]
          %v7372 = vld [vmem:[#allocation4 + $0x68] sm:$0xff]
          %v7373 = vld [vmem:[#allocation4 + $0x70] sm:$0xff]
          %v7374 = vld [vmem:[#allocation4 + $0x78] sm:$0xff]
          %v7375 = vld [vmem:[#allocation4 + $0x80] sm:$0xff]
          %v7376 = vld [vmem:[#allocation4 + $0x88] sm:$0xff]
          %v7377 = vld [vmem:[#allocation4 + $0x90] sm:$0xff]
          %v7378 = vld [vmem:[#allocation4 + $0x98] sm:$0xff]
          %v7379 = vld [vmem:[#allocation4 + $0xa0] sm:$0xff]
          %v7380 = vld [vmem:[#allocation4 + $0xa8] sm:$0xff]
          %v7381 = vld [vmem:[#allocation4 + $0xb0] sm:$0xff]
          %v7382 = vld [vmem:[#allocation4 + $0xb8] sm:$0xff]
          %v7383 = vld [vmem:[#allocation4 + $0xc0] sm:$0xff]
          %v7384 = vld [vmem:[#allocation4 + $0xc8] sm:$0xff]
          %v7385 = vld [vmem:[#allocation4 + $0xd0] sm:$0xff]
          %v7386 = vld [vmem:[#allocation4 + $0xd8] sm:$0xff]
          %v7387 = vld [vmem:[#allocation4 + $0xe0] sm:$0xff]
          %v7388 = vld [vmem:[#allocation4 + $0xe8] sm:$0xff]
          %v7389 = vld [vmem:[#allocation4 + $0xf0] sm:$0xff]
          %v7390 = vld [vmem:[#allocation4 + $0xf8] sm:$0xff]
          %v7391 = vld [vmem:[#allocation4 + $0x100] sm:$0xff]
          %v7392 = vld [vmem:[#allocation4 + $0x108] sm:$0xff]
          %v7393 = vld [vmem:[#allocation4 + $0x110] sm:$0xff]
          %v7394 = vld [vmem:[#allocation4 + $0x118] sm:$0xff]
          %v7395 = vld [vmem:[#allocation4 + $0x120] sm:$0xff]
          %v7396 = vld [vmem:[#allocation4 + $0x128] sm:$0xff]
          %v7397 = vld [vmem:[#allocation4 + $0x130] sm:$0xff]
          %v7398 = vld [vmem:[#allocation4 + $0x138] sm:$0xff]
          %v7399 = vld [vmem:[#allocation4 + $0x140] sm:$0xff]
          %v7400 = vld [vmem:[#allocation4 + $0x148] sm:$0xff]
          %v7401 = vld [vmem:[#allocation4 + $0x150] sm:$0xff]
          %v7402 = vld [vmem:[#allocation4 + $0x158] sm:$0xff]
          %v7403 = vld [vmem:[#allocation4 + $0x160] sm:$0xff]
          %v7404 = vld [vmem:[#allocation4 + $0x168] sm:$0xff]
          %v7405 = vld [vmem:[#allocation4 + $0x170] sm:$0xff]
          %v7406 = vld [vmem:[#allocation4 + $0x178] sm:$0xff]
          %v7407 = vld [vmem:[#allocation4 + $0x180] sm:$0xff]
          %v7408 = vld [vmem:[#allocation4 + $0x188] sm:$0xff]
          %v7409 = vld [vmem:[#allocation4 + $0x190] sm:$0xff]
          %v7410 = vld [vmem:[#allocation4 + $0x198] sm:$0xff]
          %v7411 = vld [vmem:[#allocation4 + $0x1a0] sm:$0xff]
          %v7412 = vld [vmem:[#allocation4 + $0x1a8] sm:$0xff]
          %v7413 = vld [vmem:[#allocation4 + $0x1b0] sm:$0xff]
          %v7414 = vld [vmem:[#allocation4 + $0x1b8] sm:$0xff]
          %v7415 = vld [vmem:[#allocation4 + $0x1c0] sm:$0xff]
          %v7416 = vld [vmem:[#allocation4 + $0x1c8] sm:$0xff]
          %v7417 = vld [vmem:[#allocation4 + $0x1d0] sm:$0xff]
          %v7418 = vld [vmem:[#allocation4 + $0x1d8] sm:$0xff]
          %v7419 = vld [vmem:[#allocation4 + $0x1e0] sm:$0xff]
          %v7420 = vld [vmem:[#allocation4 + $0x1e8] sm:$0xff]
          %v7421 = vld [vmem:[#allocation4 + $0x1f0] sm:$0xff]
          %v7422 = vld [vmem:[#allocation4 + $0x1f8] sm:$0xff]
          %v7423 = vld [vmem:[#allocation4 + $0x200] sm:$0xff]
          %v7424 = vld [vmem:[#allocation4 + $0x208] sm:$0xff]
          %v7425 = vld [vmem:[#allocation4 + $0x210] sm:$0xff]
          %v7426 = vld [vmem:[#allocation4 + $0x218] sm:$0xff]
          %v7427 = vld [vmem:[#allocation4 + $0x220] sm:$0xff]
          %v7428 = vld [vmem:[#allocation4 + $0x228] sm:$0xff]
          %v7429 = vld [vmem:[#allocation4 + $0x230] sm:$0xff]
          %v7430 = vld [vmem:[#allocation4 + $0x238] sm:$0xff]
          %v7431 = vld [vmem:[#allocation4 + $0x240] sm:$0xff]
          %v7432 = vld [vmem:[#allocation4 + $0x248] sm:$0xff]
          %v7433 = vld [vmem:[#allocation4 + $0x250] sm:$0xff]
          %v7434 = vld [vmem:[#allocation4 + $0x258] sm:$0xff]
          %v7435 = vld [vmem:[#allocation4 + $0x260] sm:$0xff]
          %v7436 = vld [vmem:[#allocation4 + $0x268] sm:$0xff]
          %v7437 = vld [vmem:[#allocation4 + $0x270] sm:$0xff]
          %v7438 = vld [vmem:[#allocation4 + $0x278] sm:$0xff]
          %v7439 = vld [vmem:[#allocation4 + $0x280] sm:$0xff]
          %v7440 = vld [vmem:[#allocation4 + $0x288] sm:$0xff]
          %v7441 = vld [vmem:[#allocation4 + $0x290] sm:$0xff]
          %v7442 = vld [vmem:[#allocation4 + $0x298] sm:$0xff]
          %v7443 = vld [vmem:[#allocation4 + $0x2a0] sm:$0xff]
          %v7444 = vld [vmem:[#allocation4 + $0x2a8] sm:$0xff]
          %v7445 = vld [vmem:[#allocation4 + $0x2b0] sm:$0xff]
          %v7446 = vld [vmem:[#allocation4 + $0x2b8] sm:$0xff]
          %v7447 = vld [vmem:[#allocation4 + $0x2c0] sm:$0xff]
          %v7448 = vld [vmem:[#allocation4 + $0x2c8] sm:$0xff]
          %v7449 = vld [vmem:[#allocation4 + $0x2d0] sm:$0xff]
          %v7450 = vld [vmem:[#allocation4 + $0x2d8] sm:$0xff]
          %v7451 = vld [vmem:[#allocation4 + $0x2e0] sm:$0xff]
          %v7452 = vld [vmem:[#allocation4 + $0x2e8] sm:$0xff]
          %v7453 = vld [vmem:[#allocation4 + $0x2f0] sm:$0xff]
          %v7454 = vld [vmem:[#allocation4 + $0x2f8] sm:$0xff]
          %v7455 = vld [vmem:[#allocation4 + $0x300] sm:$0xff]
          %v7456 = vld [vmem:[#allocation4 + $0x308] sm:$0xff]
          %v7457 = vld [vmem:[#allocation4 + $0x310] sm:$0xff]
          %v7458 = vld [vmem:[#allocation4 + $0x318] sm:$0xff]
          %v7459 = vld [vmem:[#allocation4 + $0x320] sm:$0xff]
          %v7460 = vld [vmem:[#allocation4 + $0x328] sm:$0xff]
          %v7461 = vld [vmem:[#allocation4 + $0x330] sm:$0xff]
          %v7462 = vld [vmem:[#allocation4 + $0x338] sm:$0xff]
          %v7463 = vld [vmem:[#allocation4 + $0x340] sm:$0xff]
          %v7464 = vld [vmem:[#allocation4 + $0x348] sm:$0xff]
          %v7465 = vld [vmem:[#allocation4 + $0x350] sm:$0xff]
          %v7466 = vld [vmem:[#allocation4 + $0x358] sm:$0xff]
          %v7467 = vld [vmem:[#allocation4 + $0x360] sm:$0xff]
          %v7468 = vld [vmem:[#allocation4 + $0x368] sm:$0xff]
          %v7469 = vld [vmem:[#allocation4 + $0x370] sm:$0xff]
          %v7470 = vld [vmem:[#allocation4 + $0x378] sm:$0xff]
          %v7471 = vld [vmem:[#allocation4 + $0x380] sm:$0xff]
          %v7472 = vld [vmem:[#allocation4 + $0x388] sm:$0xff]
          %v7473 = vld [vmem:[#allocation4 + $0x390] sm:$0xff]
          %v7474 = vld [vmem:[#allocation4 + $0x398] sm:$0xff]
          %v7475 = vld [vmem:[#allocation4 + $0x3a0] sm:$0xff]
          %v7476 = vld [vmem:[#allocation4 + $0x3a8] sm:$0xff]
          %v7477 = vld [vmem:[#allocation4 + $0x3b0] sm:$0xff]
          %v7478 = vld [vmem:[#allocation4 + $0x3b8] sm:$0xff]
          %v7479 = vld [vmem:[#allocation4 + $0x3c0] sm:$0xff]
          %v7480 = vld [vmem:[#allocation4 + $0x3c8] sm:$0xff]
          %v7481 = vld [vmem:[#allocation4 + $0x3d0] sm:$0xff]
          %v7482 = vld [vmem:[#allocation4 + $0x3d8] sm:$0xff]
          %v7483 = vld [vmem:[#allocation4 + $0x3e0] sm:$0xff]
          %v7484 = vld [vmem:[#allocation4 + $0x3e8] sm:$0xff]
          %v7485 = vld [vmem:[#allocation4 + $0x3f0] sm:$0xff]
          %v7486 = vld [vmem:[#allocation4 + $0x3f8] sm:$0xff]
          %v7487 = vld [vmem:[#allocation3] sm:$0xff]
          %v7488 = vld [vmem:[#allocation3 + $0x8] sm:$0xff]
          %v7489 = vld [vmem:[#allocation3 + $0x10] sm:$0xff]
          %v7490 = vld [vmem:[#allocation3 + $0x18] sm:$0xff]
          %v7491 = vld [vmem:[#allocation3 + $0x20] sm:$0xff]
          %v7492 = vld [vmem:[#allocation3 + $0x28] sm:$0xff]
          %v7493 = vld [vmem:[#allocation3 + $0x30] sm:$0xff]
          %v7494 = vld [vmem:[#allocation3 + $0x38] sm:$0xff]
          %v7495 = vld [vmem:[#allocation3 + $0x40] sm:$0xff]
          %v7496 = vld [vmem:[#allocation3 + $0x48] sm:$0xff]
          %v7497 = vld [vmem:[#allocation3 + $0x50] sm:$0xff]
          %v7498 = vld [vmem:[#allocation3 + $0x58] sm:$0xff]
          %v7499 = vld [vmem:[#allocation3 + $0x60] sm:$0xff]
          %v7500 = vld [vmem:[#allocation3 + $0x68] sm:$0xff]
          %v7501 = vld [vmem:[#allocation3 + $0x70] sm:$0xff]
          %v7502 = vld [vmem:[#allocation3 + $0x78] sm:$0xff]
          %v7503 = vld [vmem:[#allocation3 + $0x80] sm:$0xff]
          %v7504 = vld [vmem:[#allocation3 + $0x88] sm:$0xff]
          %v7505 = vld [vmem:[#allocation3 + $0x90] sm:$0xff]
          %v7506 = vld [vmem:[#allocation3 + $0x98] sm:$0xff]
          %v7507 = vld [vmem:[#allocation3 + $0xa0] sm:$0xff]
          %v7508 = vld [vmem:[#allocation3 + $0xa8] sm:$0xff]
          %v7509 = vld [vmem:[#allocation3 + $0xb0] sm:$0xff]
          %v7510 = vld [vmem:[#allocation3 + $0xb8] sm:$0xff]
          %v7511 = vld [vmem:[#allocation3 + $0xc0] sm:$0xff]
          %v7512 = vld [vmem:[#allocation3 + $0xc8] sm:$0xff]
          %v7513 = vld [vmem:[#allocation3 + $0xd0] sm:$0xff]
          %v7514 = vld [vmem:[#allocation3 + $0xd8] sm:$0xff]
          %v7515 = vld [vmem:[#allocation3 + $0xe0] sm:$0xff]
          %v7516 = vld [vmem:[#allocation3 + $0xe8] sm:$0xff]
          %v7517 = vld [vmem:[#allocation3 + $0xf0] sm:$0xff]
          %v7518 = vld [vmem:[#allocation3 + $0xf8] sm:$0xff]
          %v7519 = vld [vmem:[#allocation3 + $0x100] sm:$0xff]
          %v7520 = vld [vmem:[#allocation3 + $0x108] sm:$0xff]
          %v7521 = vld [vmem:[#allocation3 + $0x110] sm:$0xff]
          %v7522 = vld [vmem:[#allocation3 + $0x118] sm:$0xff]
          %v7523 = vld [vmem:[#allocation3 + $0x120] sm:$0xff]
          %v7524 = vld [vmem:[#allocation3 + $0x128] sm:$0xff]
          %v7525 = vld [vmem:[#allocation3 + $0x130] sm:$0xff]
          %v7526 = vld [vmem:[#allocation3 + $0x138] sm:$0xff]
          %v7527 = vld [vmem:[#allocation3 + $0x140] sm:$0xff]
          %v7528 = vld [vmem:[#allocation3 + $0x148] sm:$0xff]
          %v7529 = vld [vmem:[#allocation3 + $0x150] sm:$0xff]
          %v7530 = vld [vmem:[#allocation3 + $0x158] sm:$0xff]
          %v7531 = vld [vmem:[#allocation3 + $0x160] sm:$0xff]
          %v7532 = vld [vmem:[#allocation3 + $0x168] sm:$0xff]
          %v7533 = vld [vmem:[#allocation3 + $0x170] sm:$0xff]
          %v7534 = vld [vmem:[#allocation3 + $0x178] sm:$0xff]
          %v7535 = vld [vmem:[#allocation3 + $0x180] sm:$0xff]
          %v7536 = vld [vmem:[#allocation3 + $0x188] sm:$0xff]
          %v7537 = vld [vmem:[#allocation3 + $0x190] sm:$0xff]
          %v7538 = vld [vmem:[#allocation3 + $0x198] sm:$0xff]
          %v7539 = vld [vmem:[#allocation3 + $0x1a0] sm:$0xff]
          %v7540 = vld [vmem:[#allocation3 + $0x1a8] sm:$0xff]
          %v7541 = vld [vmem:[#allocation3 + $0x1b0] sm:$0xff]
          %v7542 = vld [vmem:[#allocation3 + $0x1b8] sm:$0xff]
          %v7543 = vld [vmem:[#allocation3 + $0x1c0] sm:$0xff]
          %v7544 = vld [vmem:[#allocation3 + $0x1c8] sm:$0xff]
          %v7545 = vld [vmem:[#allocation3 + $0x1d0] sm:$0xff]
          %v7546 = vld [vmem:[#allocation3 + $0x1d8] sm:$0xff]
          %v7547 = vld [vmem:[#allocation3 + $0x1e0] sm:$0xff]
          %v7548 = vld [vmem:[#allocation3 + $0x1e8] sm:$0xff]
          %v7549 = vld [vmem:[#allocation3 + $0x1f0] sm:$0xff]
          %v7550 = vld [vmem:[#allocation3 + $0x1f8] sm:$0xff]
          %v7551 = vld [vmem:[#allocation3 + $0x200] sm:$0xff]
          %v7552 = vld [vmem:[#allocation3 + $0x208] sm:$0xff]
          %v7553 = vld [vmem:[#allocation3 + $0x210] sm:$0xff]
          %v7554 = vld [vmem:[#allocation3 + $0x218] sm:$0xff]
          %v7555 = vld [vmem:[#allocation3 + $0x220] sm:$0xff]
          %v7556 = vld [vmem:[#allocation3 + $0x228] sm:$0xff]
          %v7557 = vld [vmem:[#allocation3 + $0x230] sm:$0xff]
          %v7558 = vld [vmem:[#allocation3 + $0x238] sm:$0xff]
          %v7559 = vld [vmem:[#allocation3 + $0x240] sm:$0xff]
          %v7560 = vld [vmem:[#allocation3 + $0x248] sm:$0xff]
          %v7561 = vld [vmem:[#allocation3 + $0x250] sm:$0xff]
          %v7562 = vld [vmem:[#allocation3 + $0x258] sm:$0xff]
          %v7563 = vld [vmem:[#allocation3 + $0x260] sm:$0xff]
          %v7564 = vld [vmem:[#allocation3 + $0x268] sm:$0xff]
          %v7565 = vld [vmem:[#allocation3 + $0x270] sm:$0xff]
          %v7566 = vld [vmem:[#allocation3 + $0x278] sm:$0xff]
          %v7567 = vld [vmem:[#allocation3 + $0x280] sm:$0xff]
          %v7568 = vld [vmem:[#allocation3 + $0x288] sm:$0xff]
          %v7569 = vld [vmem:[#allocation3 + $0x290] sm:$0xff]
          %v7570 = vld [vmem:[#allocation3 + $0x298] sm:$0xff]
          %v7571 = vld [vmem:[#allocation3 + $0x2a0] sm:$0xff]
          %v7572 = vld [vmem:[#allocation3 + $0x2a8] sm:$0xff]
          %v7573 = vld [vmem:[#allocation3 + $0x2b0] sm:$0xff]
          %v7574 = vld [vmem:[#allocation3 + $0x2b8] sm:$0xff]
          %v7575 = vld [vmem:[#allocation3 + $0x2c0] sm:$0xff]
          %v7576 = vld [vmem:[#allocation3 + $0x2c8] sm:$0xff]
          %v7577 = vld [vmem:[#allocation3 + $0x2d0] sm:$0xff]
          %v7578 = vld [vmem:[#allocation3 + $0x2d8] sm:$0xff]
          %v7579 = vld [vmem:[#allocation3 + $0x2e0] sm:$0xff]
          %v7580 = vld [vmem:[#allocation3 + $0x2e8] sm:$0xff]
          %v7581 = vld [vmem:[#allocation3 + $0x2f0] sm:$0xff]
          %v7582 = vld [vmem:[#allocation3 + $0x2f8] sm:$0xff]
          %v7583 = vld [vmem:[#allocation3 + $0x300] sm:$0xff]
          %v7584 = vld [vmem:[#allocation3 + $0x308] sm:$0xff]
          %v7585 = vld [vmem:[#allocation3 + $0x310] sm:$0xff]
          %v7586 = vld [vmem:[#allocation3 + $0x318] sm:$0xff]
          %v7587 = vld [vmem:[#allocation3 + $0x320] sm:$0xff]
          %v7588 = vld [vmem:[#allocation3 + $0x328] sm:$0xff]
          %v7589 = vld [vmem:[#allocation3 + $0x330] sm:$0xff]
          %v7590 = vld [vmem:[#allocation3 + $0x338] sm:$0xff]
          %v7591 = vld [vmem:[#allocation3 + $0x340] sm:$0xff]
          %v7592 = vld [vmem:[#allocation3 + $0x348] sm:$0xff]
          %v7593 = vld [vmem:[#allocation3 + $0x350] sm:$0xff]
          %v7594 = vld [vmem:[#allocation3 + $0x358] sm:$0xff]
          %v7595 = vld [vmem:[#allocation3 + $0x360] sm:$0xff]
          %v7596 = vld [vmem:[#allocation3 + $0x368] sm:$0xff]
          %v7597 = vld [vmem:[#allocation3 + $0x370] sm:$0xff]
          %v7598 = vld [vmem:[#allocation3 + $0x378] sm:$0xff]
          %v7599 = vld [vmem:[#allocation3 + $0x380] sm:$0xff]
          %v7600 = vld [vmem:[#allocation3 + $0x388] sm:$0xff]
          %v7601 = vld [vmem:[#allocation3 + $0x390] sm:$0xff]
          %v7602 = vld [vmem:[#allocation3 + $0x398] sm:$0xff]
          %v7603 = vld [vmem:[#allocation3 + $0x3a0] sm:$0xff]
          %v7604 = vld [vmem:[#allocation3 + $0x3a8] sm:$0xff]
          %v7605 = vld [vmem:[#allocation3 + $0x3b0] sm:$0xff]
          %v7606 = vld [vmem:[#allocation3 + $0x3b8] sm:$0xff]
          %v7607 = vld [vmem:[#allocation3 + $0x3c0] sm:$0xff]
          %v7608 = vld [vmem:[#allocation3 + $0x3c8] sm:$0xff]
          %v7609 = vld [vmem:[#allocation3 + $0x3d0] sm:$0xff]
          %v7610 = vld [vmem:[#allocation3 + $0x3d8] sm:$0xff]
          %v7611 = vld [vmem:[#allocation3 + $0x3e0] sm:$0xff]
          %v7612 = vld [vmem:[#allocation3 + $0x3e8] sm:$0xff]
          %v7613 = vld [vmem:[#allocation3 + $0x3f0] sm:$0xff]
          %v7614 = vld [vmem:[#allocation3 + $0x3f8] sm:$0xff]
          %v7615 = vrcp.pop %v7487
          %v7616 = vrcp.pop %v7488
          %v7617 = vrcp.pop %v7489
          %v7618 = vrcp.pop %v7490
          %v7619 = vrcp.pop %v7491
          %v7620 = vrcp.pop %v7492
          %v7621 = vrcp.pop %v7493
          %v7622 = vrcp.pop %v7494
          %v7623 = vrcp.pop %v7495
          %v7624 = vrcp.pop %v7496
          %v7625 = vrcp.pop %v7497
          %v7626 = vrcp.pop %v7498
          %v7627 = vrcp.pop %v7499
          %v7628 = vrcp.pop %v7500
          %v7629 = vrcp.pop %v7501
          %v7630 = vrcp.pop %v7502
          %v7631 = vrcp.pop %v7503
          %v7632 = vrcp.pop %v7504
          %v7633 = vrcp.pop %v7505
          %v7634 = vrcp.pop %v7506
          %v7635 = vrcp.pop %v7507
          %v7636 = vrcp.pop %v7508
          %v7637 = vrcp.pop %v7509
          %v7638 = vrcp.pop %v7510
          %v7639 = vrcp.pop %v7511
          %v7640 = vrcp.pop %v7512
          %v7641 = vrcp.pop %v7513
          %v7642 = vrcp.pop %v7514
          %v7643 = vrcp.pop %v7515
          %v7644 = vrcp.pop %v7516
          %v7645 = vrcp.pop %v7517
          %v7646 = vrcp.pop %v7518
          %v7647 = vrcp.pop %v7519
          %v7648 = vrcp.pop %v7520
          %v7649 = vrcp.pop %v7521
          %v7650 = vrcp.pop %v7522
          %v7651 = vrcp.pop %v7523
          %v7652 = vrcp.pop %v7524
          %v7653 = vrcp.pop %v7525
          %v7654 = vrcp.pop %v7526
          %v7655 = vrcp.pop %v7527
          %v7656 = vrcp.pop %v7528
          %v7657 = vrcp.pop %v7529
          %v7658 = vrcp.pop %v7530
          %v7659 = vrcp.pop %v7531
          %v7660 = vrcp.pop %v7532
          %v7661 = vrcp.pop %v7533
          %v7662 = vrcp.pop %v7534
          %v7663 = vrcp.pop %v7535
          %v7664 = vrcp.pop %v7536
          %v7665 = vrcp.pop %v7537
          %v7666 = vrcp.pop %v7538
          %v7667 = vrcp.pop %v7539
          %v7668 = vrcp.pop %v7540
          %v7669 = vrcp.pop %v7541
          %v7670 = vrcp.pop %v7542
          %v7671 = vrcp.pop %v7543
          %v7672 = vrcp.pop %v7544
          %v7673 = vrcp.pop %v7545
          %v7674 = vrcp.pop %v7546
          %v7675 = vrcp.pop %v7547
          %v7676 = vrcp.pop %v7548
          %v7677 = vrcp.pop %v7549
          %v7678 = vrcp.pop %v7550
          %v7679 = vrcp.pop %v7551
          %v7680 = vrcp.pop %v7552
          %v7681 = vrcp.pop %v7553
          %v7682 = vrcp.pop %v7554
          %v7683 = vrcp.pop %v7555
          %v7684 = vrcp.pop %v7556
          %v7685 = vrcp.pop %v7557
          %v7686 = vrcp.pop %v7558
          %v7687 = vrcp.pop %v7559
          %v7688 = vrcp.pop %v7560
          %v7689 = vrcp.pop %v7561
          %v7690 = vrcp.pop %v7562
          %v7691 = vrcp.pop %v7563
          %v7692 = vrcp.pop %v7564
          %v7693 = vrcp.pop %v7565
          %v7694 = vrcp.pop %v7566
          %v7695 = vrcp.pop %v7567
          %v7696 = vrcp.pop %v7568
          %v7697 = vrcp.pop %v7569
          %v7698 = vrcp.pop %v7570
          %v7699 = vrcp.pop %v7571
          %v7700 = vrcp.pop %v7572
          %v7701 = vrcp.pop %v7573
          %v7702 = vrcp.pop %v7574
          %v7703 = vrcp.pop %v7575
          %v7704 = vrcp.pop %v7576
          %v7705 = vrcp.pop %v7577
          %v7706 = vrcp.pop %v7578
          %v7707 = vrcp.pop %v7579
          %v7708 = vrcp.pop %v7580
          %v7709 = vrcp.pop %v7581
          %v7710 = vrcp.pop %v7582
          %v7711 = vrcp.pop %v7583
          %v7712 = vrcp.pop %v7584
          %v7713 = vrcp.pop %v7585
          %v7714 = vrcp.pop %v7586
          %v7715 = vrcp.pop %v7587
          %v7716 = vrcp.pop %v7588
          %v7717 = vrcp.pop %v7589
          %v7718 = vrcp.pop %v7590
          %v7719 = vrcp.pop %v7591
          %v7720 = vrcp.pop %v7592
          %v7721 = vrcp.pop %v7593
          %v7722 = vrcp.pop %v7594
          %v7723 = vrcp.pop %v7595
          %v7724 = vrcp.pop %v7596
          %v7725 = vrcp.pop %v7597
          %v7726 = vrcp.pop %v7598
          %v7727 = vrcp.pop %v7599
          %v7728 = vrcp.pop %v7600
          %v7729 = vrcp.pop %v7601
          %v7730 = vrcp.pop %v7602
          %v7731 = vrcp.pop %v7603
          %v7732 = vrcp.pop %v7604
          %v7733 = vrcp.pop %v7605
          %v7734 = vrcp.pop %v7606
          %v7735 = vrcp.pop %v7607
          %v7736 = vrcp.pop %v7608
          %v7737 = vrcp.pop %v7609
          %v7738 = vrcp.pop %v7610
          %v7739 = vrcp.pop %v7611
          %v7740 = vrcp.pop %v7612
          %v7741 = vrcp.pop %v7613
          %v7742 = vrcp.pop %v7614
          %7744 = vset.pattern.permute.xlu0 0
          %7745 = vperm.xlu0 %7744, %v7615
          %v7746 = vpop.permute.xlu0 %7745
          %7749 = vset.pattern.permute.xlu0 0
          %7750 = vperm.xlu0 %7749, %v7616
          %v7751 = vpop.permute.xlu0 %7750
          %7754 = vset.pattern.permute.xlu0 0
          %7755 = vperm.xlu0 %7754, %v7617
          %v7756 = vpop.permute.xlu0 %7755
          %7759 = vset.pattern.permute.xlu0 0
          %7760 = vperm.xlu0 %7759, %v7618
          %v7761 = vpop.permute.xlu0 %7760
          %7764 = vset.pattern.permute.xlu0 0
          %7765 = vperm.xlu0 %7764, %v7619
          %v7766 = vpop.permute.xlu0 %7765
          %7769 = vset.pattern.permute.xlu0 0
          %7770 = vperm.xlu0 %7769, %v7620
          %v7771 = vpop.permute.xlu0 %7770
          %7774 = vset.pattern.permute.xlu0 0
          %7775 = vperm.xlu0 %7774, %v7621
          %v7776 = vpop.permute.xlu0 %7775
          %7779 = vset.pattern.permute.xlu0 0
          %7780 = vperm.xlu0 %7779, %v7622
          %v7781 = vpop.permute.xlu0 %7780
          %7784 = vset.pattern.permute.xlu0 0
          %7785 = vperm.xlu0 %7784, %v7623
          %v7786 = vpop.permute.xlu0 %7785
          %7789 = vset.pattern.permute.xlu0 0
          %7790 = vperm.xlu0 %7789, %v7624
          %v7791 = vpop.permute.xlu0 %7790
          %7794 = vset.pattern.permute.xlu0 0
          %7795 = vperm.xlu0 %7794, %v7625
          %v7796 = vpop.permute.xlu0 %7795
          %7799 = vset.pattern.permute.xlu0 0
          %7800 = vperm.xlu0 %7799, %v7626
          %v7801 = vpop.permute.xlu0 %7800
          %7804 = vset.pattern.permute.xlu0 0
          %7805 = vperm.xlu0 %7804, %v7627
          %v7806 = vpop.permute.xlu0 %7805
          %7809 = vset.pattern.permute.xlu0 0
          %7810 = vperm.xlu0 %7809, %v7628
          %v7811 = vpop.permute.xlu0 %7810
          %7814 = vset.pattern.permute.xlu0 0
          %7815 = vperm.xlu0 %7814, %v7629
          %v7816 = vpop.permute.xlu0 %7815
          %7819 = vset.pattern.permute.xlu0 0
          %7820 = vperm.xlu0 %7819, %v7630
          %v7821 = vpop.permute.xlu0 %7820
          %7824 = vset.pattern.permute.xlu0 0
          %7825 = vperm.xlu0 %7824, %v7631
          %v7826 = vpop.permute.xlu0 %7825
          %7829 = vset.pattern.permute.xlu0 0
          %7830 = vperm.xlu0 %7829, %v7632
          %v7831 = vpop.permute.xlu0 %7830
          %7834 = vset.pattern.permute.xlu0 0
          %7835 = vperm.xlu0 %7834, %v7633
          %v7836 = vpop.permute.xlu0 %7835
          %7839 = vset.pattern.permute.xlu0 0
          %7840 = vperm.xlu0 %7839, %v7634
          %v7841 = vpop.permute.xlu0 %7840
          %7844 = vset.pattern.permute.xlu0 0
          %7845 = vperm.xlu0 %7844, %v7635
          %v7846 = vpop.permute.xlu0 %7845
          %7849 = vset.pattern.permute.xlu0 0
          %7850 = vperm.xlu0 %7849, %v7636
          %v7851 = vpop.permute.xlu0 %7850
          %7854 = vset.pattern.permute.xlu0 0
          %7855 = vperm.xlu0 %7854, %v7637
          %v7856 = vpop.permute.xlu0 %7855
          %7859 = vset.pattern.permute.xlu0 0
          %7860 = vperm.xlu0 %7859, %v7638
          %v7861 = vpop.permute.xlu0 %7860
          %7864 = vset.pattern.permute.xlu0 0
          %7865 = vperm.xlu0 %7864, %v7639
          %v7866 = vpop.permute.xlu0 %7865
          %7869 = vset.pattern.permute.xlu0 0
          %7870 = vperm.xlu0 %7869, %v7640
          %v7871 = vpop.permute.xlu0 %7870
          %7874 = vset.pattern.permute.xlu0 0
          %7875 = vperm.xlu0 %7874, %v7641
          %v7876 = vpop.permute.xlu0 %7875
          %7879 = vset.pattern.permute.xlu0 0
          %7880 = vperm.xlu0 %7879, %v7642
          %v7881 = vpop.permute.xlu0 %7880
          %7884 = vset.pattern.permute.xlu0 0
          %7885 = vperm.xlu0 %7884, %v7643
          %v7886 = vpop.permute.xlu0 %7885
          %7889 = vset.pattern.permute.xlu0 0
          %7890 = vperm.xlu0 %7889, %v7644
          %v7891 = vpop.permute.xlu0 %7890
          %7894 = vset.pattern.permute.xlu0 0
          %7895 = vperm.xlu0 %7894, %v7645
          %v7896 = vpop.permute.xlu0 %7895
          %7899 = vset.pattern.permute.xlu0 0
          %7900 = vperm.xlu0 %7899, %v7646
          %v7901 = vpop.permute.xlu0 %7900
          %7904 = vset.pattern.permute.xlu0 0
          %7905 = vperm.xlu0 %7904, %v7647
          %v7906 = vpop.permute.xlu0 %7905
          %7909 = vset.pattern.permute.xlu0 0
          %7910 = vperm.xlu0 %7909, %v7648
          %v7911 = vpop.permute.xlu0 %7910
          %7914 = vset.pattern.permute.xlu0 0
          %7915 = vperm.xlu0 %7914, %v7649
          %v7916 = vpop.permute.xlu0 %7915
          %7919 = vset.pattern.permute.xlu0 0
          %7920 = vperm.xlu0 %7919, %v7650
          %v7921 = vpop.permute.xlu0 %7920
          %7924 = vset.pattern.permute.xlu0 0
          %7925 = vperm.xlu0 %7924, %v7651
          %v7926 = vpop.permute.xlu0 %7925
          %7929 = vset.pattern.permute.xlu0 0
          %7930 = vperm.xlu0 %7929, %v7652
          %v7931 = vpop.permute.xlu0 %7930
          %7934 = vset.pattern.permute.xlu0 0
          %7935 = vperm.xlu0 %7934, %v7653
          %v7936 = vpop.permute.xlu0 %7935
          %7939 = vset.pattern.permute.xlu0 0
          %7940 = vperm.xlu0 %7939, %v7654
          %v7941 = vpop.permute.xlu0 %7940
          %7944 = vset.pattern.permute.xlu0 0
          %7945 = vperm.xlu0 %7944, %v7655
          %v7946 = vpop.permute.xlu0 %7945
          %7949 = vset.pattern.permute.xlu0 0
          %7950 = vperm.xlu0 %7949, %v7656
          %v7951 = vpop.permute.xlu0 %7950
          %7954 = vset.pattern.permute.xlu0 0
          %7955 = vperm.xlu0 %7954, %v7657
          %v7956 = vpop.permute.xlu0 %7955
          %7959 = vset.pattern.permute.xlu0 0
          %7960 = vperm.xlu0 %7959, %v7658
          %v7961 = vpop.permute.xlu0 %7960
          %7964 = vset.pattern.permute.xlu0 0
          %7965 = vperm.xlu0 %7964, %v7659
          %v7966 = vpop.permute.xlu0 %7965
          %7969 = vset.pattern.permute.xlu0 0
          %7970 = vperm.xlu0 %7969, %v7660
          %v7971 = vpop.permute.xlu0 %7970
          %7974 = vset.pattern.permute.xlu0 0
          %7975 = vperm.xlu0 %7974, %v7661
          %v7976 = vpop.permute.xlu0 %7975
          %7979 = vset.pattern.permute.xlu0 0
          %7980 = vperm.xlu0 %7979, %v7662
          %v7981 = vpop.permute.xlu0 %7980
          %7984 = vset.pattern.permute.xlu0 0
          %7985 = vperm.xlu0 %7984, %v7663
          %v7986 = vpop.permute.xlu0 %7985
          %7989 = vset.pattern.permute.xlu0 0
          %7990 = vperm.xlu0 %7989, %v7664
          %v7991 = vpop.permute.xlu0 %7990
          %7994 = vset.pattern.permute.xlu0 0
          %7995 = vperm.xlu0 %7994, %v7665
          %v7996 = vpop.permute.xlu0 %7995
          %7999 = vset.pattern.permute.xlu0 0
          %8000 = vperm.xlu0 %7999, %v7666
          %v8001 = vpop.permute.xlu0 %8000
          %8004 = vset.pattern.permute.xlu0 0
          %8005 = vperm.xlu0 %8004, %v7667
          %v8006 = vpop.permute.xlu0 %8005
          %8009 = vset.pattern.permute.xlu0 0
          %8010 = vperm.xlu0 %8009, %v7668
          %v8011 = vpop.permute.xlu0 %8010
          %8014 = vset.pattern.permute.xlu0 0
          %8015 = vperm.xlu0 %8014, %v7669
          %v8016 = vpop.permute.xlu0 %8015
          %8019 = vset.pattern.permute.xlu0 0
          %8020 = vperm.xlu0 %8019, %v7670
          %v8021 = vpop.permute.xlu0 %8020
          %8024 = vset.pattern.permute.xlu0 0
          %8025 = vperm.xlu0 %8024, %v7671
          %v8026 = vpop.permute.xlu0 %8025
          %8029 = vset.pattern.permute.xlu0 0
          %8030 = vperm.xlu0 %8029, %v7672
          %v8031 = vpop.permute.xlu0 %8030
          %8034 = vset.pattern.permute.xlu0 0
          %8035 = vperm.xlu0 %8034, %v7673
          %v8036 = vpop.permute.xlu0 %8035
          %8039 = vset.pattern.permute.xlu0 0
          %8040 = vperm.xlu0 %8039, %v7674
          %v8041 = vpop.permute.xlu0 %8040
          %8044 = vset.pattern.permute.xlu0 0
          %8045 = vperm.xlu0 %8044, %v7675
          %v8046 = vpop.permute.xlu0 %8045
          %8049 = vset.pattern.permute.xlu0 0
          %8050 = vperm.xlu0 %8049, %v7676
          %v8051 = vpop.permute.xlu0 %8050
          %8054 = vset.pattern.permute.xlu0 0
          %8055 = vperm.xlu0 %8054, %v7677
          %v8056 = vpop.permute.xlu0 %8055
          %8059 = vset.pattern.permute.xlu0 0
          %8060 = vperm.xlu0 %8059, %v7678
          %v8061 = vpop.permute.xlu0 %8060
          %8064 = vset.pattern.permute.xlu0 0
          %8065 = vperm.xlu0 %8064, %v7679
          %v8066 = vpop.permute.xlu0 %8065
          %8069 = vset.pattern.permute.xlu0 0
          %8070 = vperm.xlu0 %8069, %v7680
          %v8071 = vpop.permute.xlu0 %8070
          %8074 = vset.pattern.permute.xlu0 0
          %8075 = vperm.xlu0 %8074, %v7681
          %v8076 = vpop.permute.xlu0 %8075
          %8079 = vset.pattern.permute.xlu0 0
          %8080 = vperm.xlu0 %8079, %v7682
          %v8081 = vpop.permute.xlu0 %8080
          %8084 = vset.pattern.permute.xlu0 0
          %8085 = vperm.xlu0 %8084, %v7683
          %v8086 = vpop.permute.xlu0 %8085
          %8089 = vset.pattern.permute.xlu0 0
          %8090 = vperm.xlu0 %8089, %v7684
          %v8091 = vpop.permute.xlu0 %8090
          %8094 = vset.pattern.permute.xlu0 0
          %8095 = vperm.xlu0 %8094, %v7685
          %v8096 = vpop.permute.xlu0 %8095
          %8099 = vset.pattern.permute.xlu0 0
          %8100 = vperm.xlu0 %8099, %v7686
          %v8101 = vpop.permute.xlu0 %8100
          %8104 = vset.pattern.permute.xlu0 0
          %8105 = vperm.xlu0 %8104, %v7687
          %v8106 = vpop.permute.xlu0 %8105
          %8109 = vset.pattern.permute.xlu0 0
          %8110 = vperm.xlu0 %8109, %v7688
          %v8111 = vpop.permute.xlu0 %8110
          %8114 = vset.pattern.permute.xlu0 0
          %8115 = vperm.xlu0 %8114, %v7689
          %v8116 = vpop.permute.xlu0 %8115
          %8119 = vset.pattern.permute.xlu0 0
          %8120 = vperm.xlu0 %8119, %v7690
          %v8121 = vpop.permute.xlu0 %8120
          %8124 = vset.pattern.permute.xlu0 0
          %8125 = vperm.xlu0 %8124, %v7691
          %v8126 = vpop.permute.xlu0 %8125
          %8129 = vset.pattern.permute.xlu0 0
          %8130 = vperm.xlu0 %8129, %v7692
          %v8131 = vpop.permute.xlu0 %8130
          %8134 = vset.pattern.permute.xlu0 0
          %8135 = vperm.xlu0 %8134, %v7693
          %v8136 = vpop.permute.xlu0 %8135
          %8139 = vset.pattern.permute.xlu0 0
          %8140 = vperm.xlu0 %8139, %v7694
          %v8141 = vpop.permute.xlu0 %8140
          %8144 = vset.pattern.permute.xlu0 0
          %8145 = vperm.xlu0 %8144, %v7695
          %v8146 = vpop.permute.xlu0 %8145
          %8149 = vset.pattern.permute.xlu0 0
          %8150 = vperm.xlu0 %8149, %v7696
          %v8151 = vpop.permute.xlu0 %8150
          %8154 = vset.pattern.permute.xlu0 0
          %8155 = vperm.xlu0 %8154, %v7697
          %v8156 = vpop.permute.xlu0 %8155
          %8159 = vset.pattern.permute.xlu0 0
          %8160 = vperm.xlu0 %8159, %v7698
          %v8161 = vpop.permute.xlu0 %8160
          %8164 = vset.pattern.permute.xlu0 0
          %8165 = vperm.xlu0 %8164, %v7699
          %v8166 = vpop.permute.xlu0 %8165
          %8169 = vset.pattern.permute.xlu0 0
          %8170 = vperm.xlu0 %8169, %v7700
          %v8171 = vpop.permute.xlu0 %8170
          %8174 = vset.pattern.permute.xlu0 0
          %8175 = vperm.xlu0 %8174, %v7701
          %v8176 = vpop.permute.xlu0 %8175
          %8179 = vset.pattern.permute.xlu0 0
          %8180 = vperm.xlu0 %8179, %v7702
          %v8181 = vpop.permute.xlu0 %8180
          %8184 = vset.pattern.permute.xlu0 0
          %8185 = vperm.xlu0 %8184, %v7703
          %v8186 = vpop.permute.xlu0 %8185
          %8189 = vset.pattern.permute.xlu0 0
          %8190 = vperm.xlu0 %8189, %v7704
          %v8191 = vpop.permute.xlu0 %8190
          %8194 = vset.pattern.permute.xlu0 0
          %8195 = vperm.xlu0 %8194, %v7705
          %v8196 = vpop.permute.xlu0 %8195
          %8199 = vset.pattern.permute.xlu0 0
          %8200 = vperm.xlu0 %8199, %v7706
          %v8201 = vpop.permute.xlu0 %8200
          %8204 = vset.pattern.permute.xlu0 0
          %8205 = vperm.xlu0 %8204, %v7707
          %v8206 = vpop.permute.xlu0 %8205
          %8209 = vset.pattern.permute.xlu0 0
          %8210 = vperm.xlu0 %8209, %v7708
          %v8211 = vpop.permute.xlu0 %8210
          %8214 = vset.pattern.permute.xlu0 0
          %8215 = vperm.xlu0 %8214, %v7709
          %v8216 = vpop.permute.xlu0 %8215
          %8219 = vset.pattern.permute.xlu0 0
          %8220 = vperm.xlu0 %8219, %v7710
          %v8221 = vpop.permute.xlu0 %8220
          %8224 = vset.pattern.permute.xlu0 0
          %8225 = vperm.xlu0 %8224, %v7711
          %v8226 = vpop.permute.xlu0 %8225
          %8229 = vset.pattern.permute.xlu0 0
          %8230 = vperm.xlu0 %8229, %v7712
          %v8231 = vpop.permute.xlu0 %8230
          %8234 = vset.pattern.permute.xlu0 0
          %8235 = vperm.xlu0 %8234, %v7713
          %v8236 = vpop.permute.xlu0 %8235
          %8239 = vset.pattern.permute.xlu0 0
          %8240 = vperm.xlu0 %8239, %v7714
          %v8241 = vpop.permute.xlu0 %8240
          %8244 = vset.pattern.permute.xlu0 0
          %8245 = vperm.xlu0 %8244, %v7715
          %v8246 = vpop.permute.xlu0 %8245
          %8249 = vset.pattern.permute.xlu0 0
          %8250 = vperm.xlu0 %8249, %v7716
          %v8251 = vpop.permute.xlu0 %8250
          %8254 = vset.pattern.permute.xlu0 0
          %8255 = vperm.xlu0 %8254, %v7717
          %v8256 = vpop.permute.xlu0 %8255
          %8259 = vset.pattern.permute.xlu0 0
          %8260 = vperm.xlu0 %8259, %v7718
          %v8261 = vpop.permute.xlu0 %8260
          %8264 = vset.pattern.permute.xlu0 0
          %8265 = vperm.xlu0 %8264, %v7719
          %v8266 = vpop.permute.xlu0 %8265
          %8269 = vset.pattern.permute.xlu0 0
          %8270 = vperm.xlu0 %8269, %v7720
          %v8271 = vpop.permute.xlu0 %8270
          %8274 = vset.pattern.permute.xlu0 0
          %8275 = vperm.xlu0 %8274, %v7721
          %v8276 = vpop.permute.xlu0 %8275
          %8279 = vset.pattern.permute.xlu0 0
          %8280 = vperm.xlu0 %8279, %v7722
          %v8281 = vpop.permute.xlu0 %8280
          %8284 = vset.pattern.permute.xlu0 0
          %8285 = vperm.xlu0 %8284, %v7723
          %v8286 = vpop.permute.xlu0 %8285
          %8289 = vset.pattern.permute.xlu0 0
          %8290 = vperm.xlu0 %8289, %v7724
          %v8291 = vpop.permute.xlu0 %8290
          %8294 = vset.pattern.permute.xlu0 0
          %8295 = vperm.xlu0 %8294, %v7725
          %v8296 = vpop.permute.xlu0 %8295
          %8299 = vset.pattern.permute.xlu0 0
          %8300 = vperm.xlu0 %8299, %v7726
          %v8301 = vpop.permute.xlu0 %8300
          %8304 = vset.pattern.permute.xlu0 0
          %8305 = vperm.xlu0 %8304, %v7727
          %v8306 = vpop.permute.xlu0 %8305
          %8309 = vset.pattern.permute.xlu0 0
          %8310 = vperm.xlu0 %8309, %v7728
          %v8311 = vpop.permute.xlu0 %8310
          %8314 = vset.pattern.permute.xlu0 0
          %8315 = vperm.xlu0 %8314, %v7729
          %v8316 = vpop.permute.xlu0 %8315
          %8319 = vset.pattern.permute.xlu0 0
          %8320 = vperm.xlu0 %8319, %v7730
          %v8321 = vpop.permute.xlu0 %8320
          %8324 = vset.pattern.permute.xlu0 0
          %8325 = vperm.xlu0 %8324, %v7731
          %v8326 = vpop.permute.xlu0 %8325
          %8329 = vset.pattern.permute.xlu0 0
          %8330 = vperm.xlu0 %8329, %v7732
          %v8331 = vpop.permute.xlu0 %8330
          %8334 = vset.pattern.permute.xlu0 0
          %8335 = vperm.xlu0 %8334, %v7733
          %v8336 = vpop.permute.xlu0 %8335
          %8339 = vset.pattern.permute.xlu0 0
          %8340 = vperm.xlu0 %8339, %v7734
          %v8341 = vpop.permute.xlu0 %8340
          %8344 = vset.pattern.permute.xlu0 0
          %8345 = vperm.xlu0 %8344, %v7735
          %v8346 = vpop.permute.xlu0 %8345
          %8349 = vset.pattern.permute.xlu0 0
          %8350 = vperm.xlu0 %8349, %v7736
          %v8351 = vpop.permute.xlu0 %8350
          %8354 = vset.pattern.permute.xlu0 0
          %8355 = vperm.xlu0 %8354, %v7737
          %v8356 = vpop.permute.xlu0 %8355
          %8359 = vset.pattern.permute.xlu0 0
          %8360 = vperm.xlu0 %8359, %v7738
          %v8361 = vpop.permute.xlu0 %8360
          %8364 = vset.pattern.permute.xlu0 0
          %8365 = vperm.xlu0 %8364, %v7739
          %v8366 = vpop.permute.xlu0 %8365
          %8369 = vset.pattern.permute.xlu0 0
          %8370 = vperm.xlu0 %8369, %v7740
          %v8371 = vpop.permute.xlu0 %8370
          %8374 = vset.pattern.permute.xlu0 0
          %8375 = vperm.xlu0 %8374, %v7741
          %v8376 = vpop.permute.xlu0 %8375
          %8379 = vset.pattern.permute.xlu0 0
          %8380 = vperm.xlu0 %8379, %v7742
          %v8381 = vpop.permute.xlu0 %8380
          %v8383 = vmul.f32 %v7359, %v7746
          %v8384 = vmul.f32 %v7360, %v7751
          %v8385 = vmul.f32 %v7361, %v7756
          %v8386 = vmul.f32 %v7362, %v7761
          %v8387 = vmul.f32 %v7363, %v7766
          %v8388 = vmul.f32 %v7364, %v7771
          %v8389 = vmul.f32 %v7365, %v7776
          %v8390 = vmul.f32 %v7366, %v7781
          %v8391 = vmul.f32 %v7367, %v7786
          %v8392 = vmul.f32 %v7368, %v7791
          %v8393 = vmul.f32 %v7369, %v7796
          %v8394 = vmul.f32 %v7370, %v7801
          %v8395 = vmul.f32 %v7371, %v7806
          %v8396 = vmul.f32 %v7372, %v7811
          %v8397 = vmul.f32 %v7373, %v7816
          %v8398 = vmul.f32 %v7374, %v7821
          %v8399 = vmul.f32 %v7375, %v7826
          %v8400 = vmul.f32 %v7376, %v7831
          %v8401 = vmul.f32 %v7377, %v7836
          %v8402 = vmul.f32 %v7378, %v7841
          %v8403 = vmul.f32 %v7379, %v7846
          %v8404 = vmul.f32 %v7380, %v7851
          %v8405 = vmul.f32 %v7381, %v7856
          %v8406 = vmul.f32 %v7382, %v7861
          %v8407 = vmul.f32 %v7383, %v7866
          %v8408 = vmul.f32 %v7384, %v7871
          %v8409 = vmul.f32 %v7385, %v7876
          %v8410 = vmul.f32 %v7386, %v7881
          %v8411 = vmul.f32 %v7387, %v7886
          %v8412 = vmul.f32 %v7388, %v7891
          %v8413 = vmul.f32 %v7389, %v7896
          %v8414 = vmul.f32 %v7390, %v7901
          %v8415 = vmul.f32 %v7391, %v7906
          %v8416 = vmul.f32 %v7392, %v7911
          %v8417 = vmul.f32 %v7393, %v7916
          %v8418 = vmul.f32 %v7394, %v7921
          %v8419 = vmul.f32 %v7395, %v7926
          %v8420 = vmul.f32 %v7396, %v7931
          %v8421 = vmul.f32 %v7397, %v7936
          %v8422 = vmul.f32 %v7398, %v7941
          %v8423 = vmul.f32 %v7399, %v7946
          %v8424 = vmul.f32 %v7400, %v7951
          %v8425 = vmul.f32 %v7401, %v7956
          %v8426 = vmul.f32 %v7402, %v7961
          %v8427 = vmul.f32 %v7403, %v7966
          %v8428 = vmul.f32 %v7404, %v7971
          %v8429 = vmul.f32 %v7405, %v7976
          %v8430 = vmul.f32 %v7406, %v7981
          %v8431 = vmul.f32 %v7407, %v7986
          %v8432 = vmul.f32 %v7408, %v7991
          %v8433 = vmul.f32 %v7409, %v7996
          %v8434 = vmul.f32 %v7410, %v8001
          %v8435 = vmul.f32 %v7411, %v8006
          %v8436 = vmul.f32 %v7412, %v8011
          %v8437 = vmul.f32 %v7413, %v8016
          %v8438 = vmul.f32 %v7414, %v8021
          %v8439 = vmul.f32 %v7415, %v8026
          %v8440 = vmul.f32 %v7416, %v8031
          %v8441 = vmul.f32 %v7417, %v8036
          %v8442 = vmul.f32 %v7418, %v8041
          %v8443 = vmul.f32 %v7419, %v8046
          %v8444 = vmul.f32 %v7420, %v8051
          %v8445 = vmul.f32 %v7421, %v8056
          %v8446 = vmul.f32 %v7422, %v8061
          %v8447 = vmul.f32 %v7423, %v8066
          %v8448 = vmul.f32 %v7424, %v8071
          %v8449 = vmul.f32 %v7425, %v8076
          %v8450 = vmul.f32 %v7426, %v8081
          %v8451 = vmul.f32 %v7427, %v8086
          %v8452 = vmul.f32 %v7428, %v8091
          %v8453 = vmul.f32 %v7429, %v8096
          %v8454 = vmul.f32 %v7430, %v8101
          %v8455 = vmul.f32 %v7431, %v8106
          %v8456 = vmul.f32 %v7432, %v8111
          %v8457 = vmul.f32 %v7433, %v8116
          %v8458 = vmul.f32 %v7434, %v8121
          %v8459 = vmul.f32 %v7435, %v8126
          %v8460 = vmul.f32 %v7436, %v8131
          %v8461 = vmul.f32 %v7437, %v8136
          %v8462 = vmul.f32 %v7438, %v8141
          %v8463 = vmul.f32 %v7439, %v8146
          %v8464 = vmul.f32 %v7440, %v8151
          %v8465 = vmul.f32 %v7441, %v8156
          %v8466 = vmul.f32 %v7442, %v8161
          %v8467 = vmul.f32 %v7443, %v8166
          %v8468 = vmul.f32 %v7444, %v8171
          %v8469 = vmul.f32 %v7445, %v8176
          %v8470 = vmul.f32 %v7446, %v8181
          %v8471 = vmul.f32 %v7447, %v8186
          %v8472 = vmul.f32 %v7448, %v8191
          %v8473 = vmul.f32 %v7449, %v8196
          %v8474 = vmul.f32 %v7450, %v8201
          %v8475 = vmul.f32 %v7451, %v8206
          %v8476 = vmul.f32 %v7452, %v8211
          %v8477 = vmul.f32 %v7453, %v8216
          %v8478 = vmul.f32 %v7454, %v8221
          %v8479 = vmul.f32 %v7455, %v8226
          %v8480 = vmul.f32 %v7456, %v8231
          %v8481 = vmul.f32 %v7457, %v8236
          %v8482 = vmul.f32 %v7458, %v8241
          %v8483 = vmul.f32 %v7459, %v8246
          %v8484 = vmul.f32 %v7460, %v8251
          %v8485 = vmul.f32 %v7461, %v8256
          %v8486 = vmul.f32 %v7462, %v8261
          %v8487 = vmul.f32 %v7463, %v8266
          %v8488 = vmul.f32 %v7464, %v8271
          %v8489 = vmul.f32 %v7465, %v8276
          %v8490 = vmul.f32 %v7466, %v8281
          %v8491 = vmul.f32 %v7467, %v8286
          %v8492 = vmul.f32 %v7468, %v8291
          %v8493 = vmul.f32 %v7469, %v8296
          %v8494 = vmul.f32 %v7470, %v8301
          %v8495 = vmul.f32 %v7471, %v8306
          %v8496 = vmul.f32 %v7472, %v8311
          %v8497 = vmul.f32 %v7473, %v8316
          %v8498 = vmul.f32 %v7474, %v8321
          %v8499 = vmul.f32 %v7475, %v8326
          %v8500 = vmul.f32 %v7476, %v8331
          %v8501 = vmul.f32 %v7477, %v8336
          %v8502 = vmul.f32 %v7478, %v8341
          %v8503 = vmul.f32 %v7479, %v8346
          %v8504 = vmul.f32 %v7480, %v8351
          %v8505 = vmul.f32 %v7481, %v8356
          %v8506 = vmul.f32 %v7482, %v8361
          %v8507 = vmul.f32 %v7483, %v8366
          %v8508 = vmul.f32 %v7484, %v8371
          %v8509 = vmul.f32 %v7485, %v8376
          %v8510 = vmul.f32 %v7486, %v8381
          %8543 = vrot.lane.b32.xlu0 %v8415, 32
          %v8544 = vpop.permute.xlu0 %8543
          %8545 = vrot.lane.b32.xlu0 %v8416, 32
          %v8546 = vpop.permute.xlu0 %8545
          %8547 = vrot.lane.b32.xlu0 %v8417, 32
          %v8548 = vpop.permute.xlu0 %8547
          %8549 = vrot.lane.b32.xlu0 %v8418, 32
          %v8550 = vpop.permute.xlu0 %8549
          %8551 = vrot.lane.b32.xlu0 %v8419, 32
          %v8552 = vpop.permute.xlu0 %8551
          %8553 = vrot.lane.b32.xlu0 %v8420, 32
          %v8554 = vpop.permute.xlu0 %8553
          %8555 = vrot.lane.b32.xlu0 %v8421, 32
          %v8556 = vpop.permute.xlu0 %8555
          %8557 = vrot.lane.b32.xlu0 %v8422, 32
          %v8558 = vpop.permute.xlu0 %8557
          %8559 = vrot.lane.b32.xlu0 %v8423, 32
          %v8560 = vpop.permute.xlu0 %8559
          %8561 = vrot.lane.b32.xlu0 %v8424, 32
          %v8562 = vpop.permute.xlu0 %8561
          %8563 = vrot.lane.b32.xlu0 %v8425, 32
          %v8564 = vpop.permute.xlu0 %8563
          %8565 = vrot.lane.b32.xlu0 %v8426, 32
          %v8566 = vpop.permute.xlu0 %8565
          %8567 = vrot.lane.b32.xlu0 %v8427, 32
          %v8568 = vpop.permute.xlu0 %8567
          %8569 = vrot.lane.b32.xlu0 %v8428, 32
          %v8570 = vpop.permute.xlu0 %8569
          %8571 = vrot.lane.b32.xlu0 %v8429, 32
          %v8572 = vpop.permute.xlu0 %8571
          %8573 = vrot.lane.b32.xlu0 %v8430, 32
          %v8574 = vpop.permute.xlu0 %8573
          %8575 = vrot.lane.b32.xlu0 %v8431, 32
          %v8576 = vpop.permute.xlu0 %8575
          %8577 = vrot.lane.b32.xlu0 %v8432, 32
          %v8578 = vpop.permute.xlu0 %8577
          %8579 = vrot.lane.b32.xlu0 %v8433, 32
          %v8580 = vpop.permute.xlu0 %8579
          %8581 = vrot.lane.b32.xlu0 %v8434, 32
          %v8582 = vpop.permute.xlu0 %8581
          %8583 = vrot.lane.b32.xlu0 %v8435, 32
          %v8584 = vpop.permute.xlu0 %8583
          %8585 = vrot.lane.b32.xlu0 %v8436, 32
          %v8586 = vpop.permute.xlu0 %8585
          %8587 = vrot.lane.b32.xlu0 %v8437, 32
          %v8588 = vpop.permute.xlu0 %8587
          %8589 = vrot.lane.b32.xlu0 %v8438, 32
          %v8590 = vpop.permute.xlu0 %8589
          %8591 = vrot.lane.b32.xlu0 %v8439, 32
          %v8592 = vpop.permute.xlu0 %8591
          %8593 = vrot.lane.b32.xlu0 %v8440, 32
          %v8594 = vpop.permute.xlu0 %8593
          %8595 = vrot.lane.b32.xlu0 %v8441, 32
          %v8596 = vpop.permute.xlu0 %8595
          %8597 = vrot.lane.b32.xlu0 %v8442, 32
          %v8598 = vpop.permute.xlu0 %8597
          %8599 = vrot.lane.b32.xlu0 %v8443, 32
          %v8600 = vpop.permute.xlu0 %8599
          %8601 = vrot.lane.b32.xlu0 %v8444, 32
          %v8602 = vpop.permute.xlu0 %8601
          %8603 = vrot.lane.b32.xlu0 %v8445, 32
          %v8604 = vpop.permute.xlu0 %8603
          %8605 = vrot.lane.b32.xlu0 %v8446, 32
          %v8606 = vpop.permute.xlu0 %8605
          %8671 = vrot.lane.b32.xlu0 %v8447, 64
          %v8672 = vpop.permute.xlu0 %8671
          %8673 = vrot.lane.b32.xlu0 %v8448, 64
          %v8674 = vpop.permute.xlu0 %8673
          %8675 = vrot.lane.b32.xlu0 %v8449, 64
          %v8676 = vpop.permute.xlu0 %8675
          %8677 = vrot.lane.b32.xlu0 %v8450, 64
          %v8678 = vpop.permute.xlu0 %8677
          %8679 = vrot.lane.b32.xlu0 %v8451, 64
          %v8680 = vpop.permute.xlu0 %8679
          %8681 = vrot.lane.b32.xlu0 %v8452, 64
          %v8682 = vpop.permute.xlu0 %8681
          %8683 = vrot.lane.b32.xlu0 %v8453, 64
          %v8684 = vpop.permute.xlu0 %8683
          %8685 = vrot.lane.b32.xlu0 %v8454, 64
          %v8686 = vpop.permute.xlu0 %8685
          %8687 = vrot.lane.b32.xlu0 %v8455, 64
          %v8688 = vpop.permute.xlu0 %8687
          %8689 = vrot.lane.b32.xlu0 %v8456, 64
          %v8690 = vpop.permute.xlu0 %8689
          %8691 = vrot.lane.b32.xlu0 %v8457, 64
          %v8692 = vpop.permute.xlu0 %8691
          %8693 = vrot.lane.b32.xlu0 %v8458, 64
          %v8694 = vpop.permute.xlu0 %8693
          %8695 = vrot.lane.b32.xlu0 %v8459, 64
          %v8696 = vpop.permute.xlu0 %8695
          %8697 = vrot.lane.b32.xlu0 %v8460, 64
          %v8698 = vpop.permute.xlu0 %8697
          %8699 = vrot.lane.b32.xlu0 %v8461, 64
          %v8700 = vpop.permute.xlu0 %8699
          %8701 = vrot.lane.b32.xlu0 %v8462, 64
          %v8702 = vpop.permute.xlu0 %8701
          %8703 = vrot.lane.b32.xlu0 %v8463, 64
          %v8704 = vpop.permute.xlu0 %8703
          %8705 = vrot.lane.b32.xlu0 %v8464, 64
          %v8706 = vpop.permute.xlu0 %8705
          %8707 = vrot.lane.b32.xlu0 %v8465, 64
          %v8708 = vpop.permute.xlu0 %8707
          %8709 = vrot.lane.b32.xlu0 %v8466, 64
          %v8710 = vpop.permute.xlu0 %8709
          %8711 = vrot.lane.b32.xlu0 %v8467, 64
          %v8712 = vpop.permute.xlu0 %8711
          %8713 = vrot.lane.b32.xlu0 %v8468, 64
          %v8714 = vpop.permute.xlu0 %8713
          %8715 = vrot.lane.b32.xlu0 %v8469, 64
          %v8716 = vpop.permute.xlu0 %8715
          %8717 = vrot.lane.b32.xlu0 %v8470, 64
          %v8718 = vpop.permute.xlu0 %8717
          %8719 = vrot.lane.b32.xlu0 %v8471, 64
          %v8720 = vpop.permute.xlu0 %8719
          %8721 = vrot.lane.b32.xlu0 %v8472, 64
          %v8722 = vpop.permute.xlu0 %8721
          %8723 = vrot.lane.b32.xlu0 %v8473, 64
          %v8724 = vpop.permute.xlu0 %8723
          %8725 = vrot.lane.b32.xlu0 %v8474, 64
          %v8726 = vpop.permute.xlu0 %8725
          %8727 = vrot.lane.b32.xlu0 %v8475, 64
          %v8728 = vpop.permute.xlu0 %8727
          %8729 = vrot.lane.b32.xlu0 %v8476, 64
          %v8730 = vpop.permute.xlu0 %8729
          %8731 = vrot.lane.b32.xlu0 %v8477, 64
          %v8732 = vpop.permute.xlu0 %8731
          %8733 = vrot.lane.b32.xlu0 %v8478, 64
          %v8734 = vpop.permute.xlu0 %8733
          %8799 = vrot.lane.b32.xlu0 %v8479, 96
          %v8800 = vpop.permute.xlu0 %8799
          %8801 = vrot.lane.b32.xlu0 %v8480, 96
          %v8802 = vpop.permute.xlu0 %8801
          %8803 = vrot.lane.b32.xlu0 %v8481, 96
          %v8804 = vpop.permute.xlu0 %8803
          %8805 = vrot.lane.b32.xlu0 %v8482, 96
          %v8806 = vpop.permute.xlu0 %8805
          %8807 = vrot.lane.b32.xlu0 %v8483, 96
          %v8808 = vpop.permute.xlu0 %8807
          %8809 = vrot.lane.b32.xlu0 %v8484, 96
          %v8810 = vpop.permute.xlu0 %8809
          %8811 = vrot.lane.b32.xlu0 %v8485, 96
          %v8812 = vpop.permute.xlu0 %8811
          %8813 = vrot.lane.b32.xlu0 %v8486, 96
          %v8814 = vpop.permute.xlu0 %8813
          %8815 = vrot.lane.b32.xlu0 %v8487, 96
          %v8816 = vpop.permute.xlu0 %8815
          %8817 = vrot.lane.b32.xlu0 %v8488, 96
          %v8818 = vpop.permute.xlu0 %8817
          %8819 = vrot.lane.b32.xlu0 %v8489, 96
          %v8820 = vpop.permute.xlu0 %8819
          %8821 = vrot.lane.b32.xlu0 %v8490, 96
          %v8822 = vpop.permute.xlu0 %8821
          %8823 = vrot.lane.b32.xlu0 %v8491, 96
          %v8824 = vpop.permute.xlu0 %8823
          %8825 = vrot.lane.b32.xlu0 %v8492, 96
          %v8826 = vpop.permute.xlu0 %8825
          %8827 = vrot.lane.b32.xlu0 %v8493, 96
          %v8828 = vpop.permute.xlu0 %8827
          %8829 = vrot.lane.b32.xlu0 %v8494, 96
          %v8830 = vpop.permute.xlu0 %8829
          %8831 = vrot.lane.b32.xlu0 %v8495, 96
          %v8832 = vpop.permute.xlu0 %8831
          %8833 = vrot.lane.b32.xlu0 %v8496, 96
          %v8834 = vpop.permute.xlu0 %8833
          %8835 = vrot.lane.b32.xlu0 %v8497, 96
          %v8836 = vpop.permute.xlu0 %8835
          %8837 = vrot.lane.b32.xlu0 %v8498, 96
          %v8838 = vpop.permute.xlu0 %8837
          %8839 = vrot.lane.b32.xlu0 %v8499, 96
          %v8840 = vpop.permute.xlu0 %8839
          %8841 = vrot.lane.b32.xlu0 %v8500, 96
          %v8842 = vpop.permute.xlu0 %8841
          %8843 = vrot.lane.b32.xlu0 %v8501, 96
          %v8844 = vpop.permute.xlu0 %8843
          %8845 = vrot.lane.b32.xlu0 %v8502, 96
          %v8846 = vpop.permute.xlu0 %8845
          %8847 = vrot.lane.b32.xlu0 %v8503, 96
          %v8848 = vpop.permute.xlu0 %8847
          %8849 = vrot.lane.b32.xlu0 %v8504, 96
          %v8850 = vpop.permute.xlu0 %8849
          %8851 = vrot.lane.b32.xlu0 %v8505, 96
          %v8852 = vpop.permute.xlu0 %8851
          %8853 = vrot.lane.b32.xlu0 %v8506, 96
          %v8854 = vpop.permute.xlu0 %8853
          %8855 = vrot.lane.b32.xlu0 %v8507, 96
          %v8856 = vpop.permute.xlu0 %8855
          %8857 = vrot.lane.b32.xlu0 %v8508, 96
          %v8858 = vpop.permute.xlu0 %8857
          %8859 = vrot.lane.b32.xlu0 %v8509, 96
          %v8860 = vpop.permute.xlu0 %8859
          %8861 = vrot.lane.b32.xlu0 %v8510, 96
          %v8862 = vpop.permute.xlu0 %8861
          %v8895 = vsel %vm1645, %v8383, %v8544
          %v8896 = vsel %vm1645, %v8384, %v8546
          %v8897 = vsel %vm1645, %v8385, %v8548
          %v8898 = vsel %vm1645, %v8386, %v8550
          %v8899 = vsel %vm1645, %v8387, %v8552
          %v8900 = vsel %vm1645, %v8388, %v8554
          %v8901 = vsel %vm1645, %v8389, %v8556
          %v8902 = vsel %vm1645, %v8390, %v8558
          %v8903 = vsel %vm1645, %v8391, %v8560
          %v8904 = vsel %vm1645, %v8392, %v8562
          %v8905 = vsel %vm1645, %v8393, %v8564
          %v8906 = vsel %vm1645, %v8394, %v8566
          %v8907 = vsel %vm1645, %v8395, %v8568
          %v8908 = vsel %vm1645, %v8396, %v8570
          %v8909 = vsel %vm1645, %v8397, %v8572
          %v8910 = vsel %vm1645, %v8398, %v8574
          %v8911 = vsel %vm1645, %v8399, %v8576
          %v8912 = vsel %vm1645, %v8400, %v8578
          %v8913 = vsel %vm1645, %v8401, %v8580
          %v8914 = vsel %vm1645, %v8402, %v8582
          %v8915 = vsel %vm1645, %v8403, %v8584
          %v8916 = vsel %vm1645, %v8404, %v8586
          %v8917 = vsel %vm1645, %v8405, %v8588
          %v8918 = vsel %vm1645, %v8406, %v8590
          %v8919 = vsel %vm1645, %v8407, %v8592
          %v8920 = vsel %vm1645, %v8408, %v8594
          %v8921 = vsel %vm1645, %v8409, %v8596
          %v8922 = vsel %vm1645, %v8410, %v8598
          %v8923 = vsel %vm1645, %v8411, %v8600
          %v8924 = vsel %vm1645, %v8412, %v8602
          %v8925 = vsel %vm1645, %v8413, %v8604
          %v8926 = vsel %vm1645, %v8414, %v8606
          %vm8927 = vcmask 523264
          %v8928 = vsel %vm8927, %v8895, %v8672
          %v8929 = vsel %vm8927, %v8896, %v8674
          %v8930 = vsel %vm8927, %v8897, %v8676
          %v8931 = vsel %vm8927, %v8898, %v8678
          %v8932 = vsel %vm8927, %v8899, %v8680
          %v8933 = vsel %vm8927, %v8900, %v8682
          %v8934 = vsel %vm8927, %v8901, %v8684
          %v8935 = vsel %vm8927, %v8902, %v8686
          %v8936 = vsel %vm8927, %v8903, %v8688
          %v8937 = vsel %vm8927, %v8904, %v8690
          %v8938 = vsel %vm8927, %v8905, %v8692
          %v8939 = vsel %vm8927, %v8906, %v8694
          %v8940 = vsel %vm8927, %v8907, %v8696
          %v8941 = vsel %vm8927, %v8908, %v8698
          %v8942 = vsel %vm8927, %v8909, %v8700
          %v8943 = vsel %vm8927, %v8910, %v8702
          %v8944 = vsel %vm8927, %v8911, %v8704
          %v8945 = vsel %vm8927, %v8912, %v8706
          %v8946 = vsel %vm8927, %v8913, %v8708
          %v8947 = vsel %vm8927, %v8914, %v8710
          %v8948 = vsel %vm8927, %v8915, %v8712
          %v8949 = vsel %vm8927, %v8916, %v8714
          %v8950 = vsel %vm8927, %v8917, %v8716
          %v8951 = vsel %vm8927, %v8918, %v8718
          %v8952 = vsel %vm8927, %v8919, %v8720
          %v8953 = vsel %vm8927, %v8920, %v8722
          %v8954 = vsel %vm8927, %v8921, %v8724
          %v8955 = vsel %vm8927, %v8922, %v8726
          %v8956 = vsel %vm8927, %v8923, %v8728
          %v8957 = vsel %vm8927, %v8924, %v8730
          %v8958 = vsel %vm8927, %v8925, %v8732
          %v8959 = vsel %vm8927, %v8926, %v8734
          %vm8960 = vcmask 785408
          %v8961 = vsel %vm8960, %v8928, %v8800
          %v8962 = vsel %vm8960, %v8929, %v8802
          %v8963 = vsel %vm8960, %v8930, %v8804
          %v8964 = vsel %vm8960, %v8931, %v8806
          %v8965 = vsel %vm8960, %v8932, %v8808
          %v8966 = vsel %vm8960, %v8933, %v8810
          %v8967 = vsel %vm8960, %v8934, %v8812
          %v8968 = vsel %vm8960, %v8935, %v8814
          %v8969 = vsel %vm8960, %v8936, %v8816
          %v8970 = vsel %vm8960, %v8937, %v8818
          %v8971 = vsel %vm8960, %v8938, %v8820
          %v8972 = vsel %vm8960, %v8939, %v8822
          %v8973 = vsel %vm8960, %v8940, %v8824
          %v8974 = vsel %vm8960, %v8941, %v8826
          %v8975 = vsel %vm8960, %v8942, %v8828
          %v8976 = vsel %vm8960, %v8943, %v8830
          %v8977 = vsel %vm8960, %v8944, %v8832
          %v8978 = vsel %vm8960, %v8945, %v8834
          %v8979 = vsel %vm8960, %v8946, %v8836
          %v8980 = vsel %vm8960, %v8947, %v8838
          %v8981 = vsel %vm8960, %v8948, %v8840
          %v8982 = vsel %vm8960, %v8949, %v8842
          %v8983 = vsel %vm8960, %v8950, %v8844
          %v8984 = vsel %vm8960, %v8951, %v8846
          %v8985 = vsel %vm8960, %v8952, %v8848
          %v8986 = vsel %vm8960, %v8953, %v8850
          %v8987 = vsel %vm8960, %v8954, %v8852
          %v8988 = vsel %vm8960, %v8955, %v8854
          %v8989 = vsel %vm8960, %v8956, %v8856
          %v8990 = vsel %vm8960, %v8957, %v8858
          %v8991 = vsel %vm8960, %v8958, %v8860
          %v8992 = vsel %vm8960, %v8959, %v8862
          %v8993 = vpack.c.bf16 %v8961, %v8961
          %v8994 = vpack.c.bf16 %v8962, %v8962
          %v8995 = vpack.c.bf16 %v8963, %v8963
          %v8996 = vpack.c.bf16 %v8964, %v8964
          %v8997 = vpack.c.bf16 %v8965, %v8965
          %v8998 = vpack.c.bf16 %v8966, %v8966
          %v8999 = vpack.c.bf16 %v8967, %v8967
          %v9000 = vpack.c.bf16 %v8968, %v8968
          %v9001 = vpack.c.bf16 %v8969, %v8969
          %v9002 = vpack.c.bf16 %v8970, %v8970
          %v9003 = vpack.c.bf16 %v8971, %v8971
          %v9004 = vpack.c.bf16 %v8972, %v8972
          %v9005 = vpack.c.bf16 %v8973, %v8973
          %v9006 = vpack.c.bf16 %v8974, %v8974
          %v9007 = vpack.c.bf16 %v8975, %v8975
          %v9008 = vpack.c.bf16 %v8976, %v8976
          %v9009 = vpack.c.bf16 %v8977, %v8977
          %v9010 = vpack.c.bf16 %v8978, %v8978
          %v9011 = vpack.c.bf16 %v8979, %v8979
          %v9012 = vpack.c.bf16 %v8980, %v8980
          %v9013 = vpack.c.bf16 %v8981, %v8981
          %v9014 = vpack.c.bf16 %v8982, %v8982
          %v9015 = vpack.c.bf16 %v8983, %v8983
          %v9016 = vpack.c.bf16 %v8984, %v8984
          %v9017 = vpack.c.bf16 %v8985, %v8985
          %v9018 = vpack.c.bf16 %v8986, %v8986
          %v9019 = vpack.c.bf16 %v8987, %v8987
          %v9020 = vpack.c.bf16 %v8988, %v8988
          %v9021 = vpack.c.bf16 %v8989, %v8989
          %v9022 = vpack.c.bf16 %v8990, %v8990
          %v9023 = vpack.c.bf16 %v8991, %v8991
          %v9024 = vpack.c.bf16 %v8992, %v8992
          %9025 = vst [vmem:[%s999] sm:$0xf] %v8993
          %9026 = vst [vmem:[%s999 + $0x4] sm:$0xf] %v8994
          %9027 = vst [vmem:[%s999 + $0x8] sm:$0xf] %v8995
          %9028 = vst [vmem:[%s999 + $0xc] sm:$0xf] %v8996
          %9029 = vst [vmem:[%s999 + $0x10] sm:$0xf] %v8997
          %9030 = vst [vmem:[%s999 + $0x14] sm:$0xf] %v8998
          %9031 = vst [vmem:[%s999 + $0x18] sm:$0xf] %v8999
          %9032 = vst [vmem:[%s999 + $0x1c] sm:$0xf] %v9000
          %9033 = vst [vmem:[%s999 + $0x20] sm:$0xf] %v9001
          %9034 = vst [vmem:[%s999 + $0x24] sm:$0xf] %v9002
          %9035 = vst [vmem:[%s999 + $0x28] sm:$0xf] %v9003
          %9036 = vst [vmem:[%s999 + $0x2c] sm:$0xf] %v9004
          %9037 = vst [vmem:[%s999 + $0x30] sm:$0xf] %v9005
          %9038 = vst [vmem:[%s999 + $0x34] sm:$0xf] %v9006
          %9039 = vst [vmem:[%s999 + $0x38] sm:$0xf] %v9007
          %9040 = vst [vmem:[%s999 + $0x3c] sm:$0xf] %v9008
          %9041 = vst [vmem:[%s999 + $0x40] sm:$0xf] %v9009
          %9042 = vst [vmem:[%s999 + $0x44] sm:$0xf] %v9010
          %9043 = vst [vmem:[%s999 + $0x48] sm:$0xf] %v9011
          %9044 = vst [vmem:[%s999 + $0x4c] sm:$0xf] %v9012
          %9045 = vst [vmem:[%s999 + $0x50] sm:$0xf] %v9013
          %9046 = vst [vmem:[%s999 + $0x54] sm:$0xf] %v9014
          %9047 = vst [vmem:[%s999 + $0x58] sm:$0xf] %v9015
          %9048 = vst [vmem:[%s999 + $0x5c] sm:$0xf] %v9016
          %9049 = vst [vmem:[%s999 + $0x60] sm:$0xf] %v9017
          %9050 = vst [vmem:[%s999 + $0x64] sm:$0xf] %v9018
          %9051 = vst [vmem:[%s999 + $0x68] sm:$0xf] %v9019
          %9052 = vst [vmem:[%s999 + $0x6c] sm:$0xf] %v9020
          %9053 = vst [vmem:[%s999 + $0x70] sm:$0xf] %v9021
          %9054 = vst [vmem:[%s999 + $0x74] sm:$0xf] %v9022
          %9055 = vst [vmem:[%s999 + $0x78] sm:$0xf] %v9023
          %9056 = vst [vmem:[%s999 + $0x7c] sm:$0xf] %v9024
        $region163: #{tpu_custom_call.1} parent=142 // pred_fallthru
          _
        %s9057 = sand.u32 %s130, 1
        %s9058 = scalar_lea.sflag [#allocation9], %s9057
        %s9059 = sand.u32 %s130, 1
        %s9060 = smul.addr %s9059, 128
        %s9061 = scalar_lea.vmem [#allocation8], %s9060
        // Predicated region
        $region164: #{tpu_custom_call.1} parent=142 // pred_check
          %p9062 = pneg %p140
        $region165: #{tpu_custom_call.1} parent=142 // pred_check_branch
          %9064 = sbr.rel (%p9062) target = $region167
        $region166: #{tpu_custom_call.1} parent=142 // pred_region
          %s9065 = smul.u32 32, %s23
          %9067 = vsyncadd %s9058, 0
          %s9068 = smul.addr %s22, 64
          %s9069 = sadd.s32 %s9065, %s9068
          %s9070 = smul.addr %s9069, 4
          %s9071 = scalar_lea.hbm %s3, %s9070
          %s9072 = sshll.u32 %s9061, 4
          %s9073 = int_to_ptr.vmem [resolvable:$true] %s9072
          %s9074 = sshll.u32 %s9071, 4
          %s9075 = int_to_ptr.hbm [resolvable:$true] %s9074
          %9080 = dma.vmem_to_hbm [thread:$0]  %s9073, 2048, %s9075, %s9058, 64, 64, 4
        $region167: #{tpu_custom_call.1} parent=142 // pred_fallthru
          _
      $region143: #{tpu_custom_call.1} parent=5 // pred_fallthru
        _
      %p9081 = scmp.le.s32.totalorder 2, %s12
      // Predicated region
      $region168: #{tpu_custom_call.1} parent=5 // pred_check
        %p9082 = pneg %p9081
      $region169: #{tpu_custom_call.1} parent=5 // pred_check_branch
        %9084 = sbr.rel (%p9082) target = $region171
      $region170: #{tpu_custom_call.1} parent=5 // pred_region
        %s9085 = ssub.s32 %s12, 2
        // Predicated region
        $region172: #{tpu_custom_call.1} parent=170 // pred_check
          %p9086 = pneg %p146
        $region173: #{tpu_custom_call.1} parent=170 // pred_check_branch
          %9088 = sbr.rel (%p9086) target = $region175
        $region174: #{tpu_custom_call.1} parent=170 // pred_region
          %s9089 = sand.u32 %s131, 1
          %s9090 = scalar_lea.sflag [#allocation9], %s9089
          %s9091 = sand.u32 %s131, 1
          %s9092 = smul.addr %s9091, 128
          %s9093 = scalar_lea.vmem [#allocation8], %s9092
          %9095 = dma.done %s9090, 2048
        $region175: #{tpu_custom_call.1} parent=170 // pred_fallthru
          _
      $region171: #{tpu_custom_call.1} parent=5 // pred_fallthru
        _
    $region6: #{tpu_custom_call.1} parent=1 // loop_footer
      %s16 = sadd.s32 1, %s12
    $region7: #{tpu_custom_call.1} parent=1 // loop_footer_branch
      %11 = sbr.rel target = $region3
    $region8: #{tpu_custom_call.1} parent=1 // loop_exit
      _
    %9096 = vsyncpa [#allocation9], 1
    %s9097 = scalar_lea.sflag [#allocation9], 1
    %9098 = vsyncpa %s9097, 1

</llo_original>
